<compile_context>
chip_gen: v7x
topology: tpu7x:2x2x1
jax: 0.10.0
libtpu: 0.0.40
codegen_flags: <defaults>
</compile_context>

<pallas_src>
import jax
import jax.numpy as jnp
from jax.experimental import pallas as pl
from jax.experimental.pallas import tpu as pltpu

HP = 128  # padded hidden width: each GRU gate occupies one full 128-lane block


# ---------------------------------------------------------------------------
# Kernel
# ---------------------------------------------------------------------------
def _gru_from_gates(gi, gh, h, hp):
    """PyTorch GRU cell given precomputed input/hidden gate projections."""
    i_r, i_z, i_n = gi[:, :hp], gi[:, hp:2 * hp], gi[:, 2 * hp:]
    h_r, h_z, h_n = gh[:, :hp], gh[:, hp:2 * hp], gh[:, 2 * hp:]
    r = jax.nn.sigmoid(i_r + h_r)
    z = jax.nn.sigmoid(i_z + h_z)
    n = jnp.tanh(i_n + r * h_n)
    return (1.0 - z) * n + z * h


def seq2seq_kernel(
    # data
    src_flat_ref, src_len_ref, trg_eid0_ref, trg_rate0_ref,
    # encoder GRU (gate-padded, pre-transposed)
    w_ih_e_ref, w_hh_e_ref, b_ih_e_ref, b_hh_e_ref,
    # decoder
    emb_ref,
    w_ih_d_emb_ref, w_ih_d_rate_ref, w_hh_d_ref, b_ih_d_ref, b_hh_d_ref,
    w_pe_ref, b_pe_ref,
    w_r1_emb_ref, w_r1_h_ref, b_r1_ref, w_r2_ref, b_r2_ref,
    # outputs
    eid_out_ref, rate_out_ref,
):
    B = src_len_ref.shape[0]
    S = src_flat_ref.shape[0] // B
    T = eid_out_ref.shape[0]
    E = emb_ref.shape[0]
    hp = w_hh_e_ref.shape[0]
    f32 = jnp.float32

    # ---- hoist all loop-invariant loads --------------------------------------
    w_ih_e = w_ih_e_ref[...]
    w_hh_e = w_hh_e_ref[...]
    b_ih_e = b_ih_e_ref[...]
    b_hh_e = b_hh_e_ref[...]
    emb_tab = emb_ref[...]
    w_ih_d_emb = w_ih_d_emb_ref[...]
    w_ih_d_rate = w_ih_d_rate_ref[...]
    w_hh_d = w_hh_d_ref[...]
    b_ih_d = b_ih_d_ref[...]
    b_hh_d = b_hh_d_ref[...]
    w_pe = w_pe_ref[...]
    b_pe = b_pe_ref[...]
    w_r1_emb = w_r1_emb_ref[...]
    w_r1_h = w_r1_h_ref[...]
    b_r1 = b_r1_ref[...]
    w_r2 = w_r2_ref[...]
    b_r2 = b_r2_ref[...]

    lens = src_len_ref[...]                                  # (B, 1) int32
    iota_e = jax.lax.broadcasted_iota(jnp.int32, (B, E), 1)  # (B, E)
    iota_t = jax.lax.broadcasted_iota(jnp.int32, (B, T), 1)  # (B, T)

    # -------------------- Encoder ---------------------------------------------
    # One big input projection for all S steps (off the serial critical path).
    gi_all = jnp.dot(src_flat_ref[...], w_ih_e,
                     preferred_element_type=f32) + b_ih_e    # (S*B, 3*hp)

    h = jnp.zeros((B, hp), f32)
    for t in range(S):                                       # fully unrolled
        gi = gi_all[t * B:(t + 1) * B, :]                    # sublane-aligned slice
        gh = jnp.dot(h, w_hh_e, preferred_element_type=f32) + b_hh_e
        h_new = _gru_from_gates(gi, gh, h, hp)
        h = jnp.where(lens > t, h_new, h)                    # packed-sequence mask

    # -------------------- Decoder init ----------------------------------------
    onehot = (iota_e == trg_eid0_ref[...]).astype(f32)       # (B, E)
    rate = trg_rate0_ref[...]                                # (B, 1)

    eid_out_ref[0] = jnp.zeros((B, E), f32)                  # row 0 stays zero
    rate_acc = jnp.zeros((B, T), f32)                        # lane-dense rate accumulator

    # -------------------- Decoder greedy roll-out (fully unrolled) ------------
    for i in range(1, T):
        emb_e = jnp.dot(onehot, emb_tab, preferred_element_type=f32)       # (B, EMB)
        gi = (jnp.dot(emb_e, w_ih_d_emb, preferred_element_type=f32)
              + rate * w_ih_d_rate + b_ih_d)                                # (B, 3*hp)
        gh = jnp.dot(h, w_hh_d, preferred_element_type=f32) + b_hh_d
        h = _gru_from_gates(gi, gh, h, hp)                                  # (B, hp)

        logits = jnp.dot(h, w_pe, preferred_element_type=f32) + b_pe       # (B, E)

        # argmax feedback straight from logits (first max on ties)
        mx = jnp.max(logits, axis=1, keepdims=True)                         # (B, 1)
        cand = jnp.where(logits == mx, iota_e, E)
        idx = jnp.min(cand, axis=1, keepdims=True)                          # (B, 1)
        onehot = (iota_e == idx).astype(f32)                                # (B, E)

        # log_softmax as a side branch for the stored output
        shifted = logits - mx
        lse = jnp.log(jnp.sum(jnp.exp(shifted), axis=1, keepdims=True))
        eid_out_ref[i] = shifted - lse                                      # lane-dense (B, E) store

        # rate head: split-weight linear -> relu -> VPU multiply + lane reduce -> sigmoid
        emb2 = jnp.dot(onehot, emb_tab, preferred_element_type=f32)         # (B, EMB)
        r1 = (jnp.dot(emb2, w_r1_emb, preferred_element_type=f32)
              + jnp.dot(h, w_r1_h, preferred_element_type=f32) + b_r1)      # (B, hp)
        r1 = jnp.maximum(r1, 0.0)
        r2 = jnp.sum(r1 * w_r2, axis=1, keepdims=True) + b_r2               # (B, 1)
        rate = jax.nn.sigmoid(r2)

        rate_acc = rate_acc + jnp.where(iota_t == i, rate, 0.0)

    rate_out_ref[...] = rate_acc                                            # single (B, T) store


# ---------------------------------------------------------------------------
# Wrapper: pad / split / transpose weights, call the kernel
# ---------------------------------------------------------------------------
def _gate_pad_rows(w, h, hp):
    """(3h, In) -> (3hp, In): each gate's rows placed at [g*hp : g*hp+h], rest zero."""
    parts = [jnp.pad(w[g * h:(g + 1) * h], ((0, hp - h), (0, 0))) for g in range(3)]
    return jnp.concatenate(parts, axis=0)


def _gate_pad_vec(b, h, hp):
    parts = [jnp.pad(b[g * h:(g + 1) * h], (0, hp - h)) for g in range(3)]
    return jnp.concatenate(parts, axis=0)


def seq2seq_multi_forward(src, src_len, trg_eid, trg_rate, params, hp=HP):
    """Pallas implementation of Seq2SeqMulti.forward (teacher_forcing_ratio=0)."""
    S, B, _ = src.shape
    T = trg_eid.shape[0]
    H = params["hidden_size"]
    E = params["eid_size"]
    EMB = params["embedding"].shape[1]
    p = params
    f32 = jnp.float32

    # encoder GRU (pre-transposed, gate blocks padded to hp lanes)
    w_ih_e_t = _gate_pad_rows(p["enc_w_ih"], H, hp).T                              # (IN, 3hp)
    w_hh_e_t = _gate_pad_rows(jnp.pad(p["enc_w_hh"], ((0, 0), (0, hp - H))), H, hp).T  # (hp, 3hp)
    b_ih_e = _gate_pad_vec(p["enc_b_ih"], H, hp).reshape(1, 3 * hp)
    b_hh_e = _gate_pad_vec(p["enc_b_hh"], H, hp).reshape(1, 3 * hp)

    # decoder GRU: split input weight into embedding columns and the rate column
    w_ih_d_emb_t = _gate_pad_rows(p["dec_w_ih"][:, :EMB], H, hp).T                 # (EMB, 3hp)
    w_ih_d_rate = _gate_pad_vec(p["dec_w_ih"][:, EMB], H, hp).reshape(1, 3 * hp)   # (1, 3hp)
    w_hh_d_t = _gate_pad_rows(jnp.pad(p["dec_w_hh"], ((0, 0), (0, hp - H))), H, hp).T
    b_ih_d = _gate_pad_vec(p["dec_b_ih"], H, hp).reshape(1, 3 * hp)
    b_hh_d = _gate_pad_vec(p["dec_b_hh"], H, hp).reshape(1, 3 * hp)

    # heads (hidden dim padded to hp; pre_rate_1 concat split into emb / h parts)
    w_pe_t = jnp.pad(p["pre_eid_w"], ((0, 0), (0, hp - H))).T                      # (hp, E)
    b_pe = p["pre_eid_b"].reshape(1, E)
    w_r1_emb_t = jnp.pad(p["pre_rate_1_w"][:, :EMB].T, ((0, 0), (0, hp - H)))      # (EMB, hp)
    w_r1_h_t = jnp.pad(p["pre_rate_1_w"][:, EMB:].T, ((0, hp - H), (0, hp - H)))   # (hp, hp)
    b_r1 = jnp.pad(p["pre_rate_1_b"], (0, hp - H)).reshape(1, hp)
    w_r2 = jnp.pad(p["pre_rate_2_w"].reshape(-1), (0, hp - H)).reshape(1, hp)
    b_r2 = p["pre_rate_2_b"].reshape(1, 1)

    inputs = (
        src.astype(f32).reshape(S * B, src.shape[2]),
        src_len.reshape(B, 1).astype(jnp.int32),
        trg_eid[0].reshape(B, 1).astype(jnp.int32),
        trg_rate[0].reshape(B, 1).astype(f32),
        w_ih_e_t, w_hh_e_t, b_ih_e, b_hh_e,
        p["embedding"].astype(f32),
        w_ih_d_emb_t, w_ih_d_rate, w_hh_d_t, b_ih_d, b_hh_d,
        w_pe_t, b_pe,
        w_r1_emb_t, w_r1_h_t, b_r1, w_r2, b_r2,
    )

    vmem = pl.BlockSpec(memory_space=pltpu.MemorySpace.VMEM)
    eid_res, rate_bt = pl.pallas_call(
        seq2seq_kernel,
        out_shape=(
            jax.ShapeDtypeStruct((T, B, E), f32),
            jax.ShapeDtypeStruct((B, T), f32),      # lane-dense; transposed below
        ),
        in_specs=[vmem] * len(inputs),
        out_specs=(vmem, vmem),
    )(*inputs)
    return eid_res, rate_bt.T


# ---------------------------------------------------------------------------
# Pure-JAX reference (mirrors the PyTorch code) for a correctness check
# ---------------------------------------------------------------------------
def reference_forward(src, src_len, trg_eid, trg_rate, p):
    H = p["hidden_size"]
    S, B, _ = src.shape
    T = trg_eid.shape[0]
    E = p["eid_size"]

    def gru(x, h, wih, whh, bih, bhh):
        gi = x @ wih.T + bih
        gh = h @ whh.T + bhh
        i_r, i_z, i_n = gi[:, :H], gi[:, H:2 * H], gi[:, 2 * H:]
        h_r, h_z, h_n = gh[:, :H], gh[:, H:2 * H], gh[:, 2 * H:]
        r = jax.nn.sigmoid(i_r + h_r)
        z = jax.nn.sigmoid(i_z + h_z)
        n = jnp.tanh(i_n + r * h_n)
        return (1.0 - z) * n + z * h

    h = jnp.zeros((B, H), jnp.float32)
    for t in range(S):
        hn = gru(src[t], h, p["enc_w_ih"], p["enc_w_hh"], p["enc_b_ih"], p["enc_b_hh"])
        h = jnp.where((src_len > t)[:, None], hn, h)

    eid = trg_eid[0]
    rate = trg_rate[0]
    eid_res = jnp.zeros((T, B, E), jnp.float32)
    rate_res = jnp.zeros((T, B), jnp.float32)
    for i in range(1, T):
        emb_e = p["embedding"][eid]
        x = jnp.concatenate([emb_e, rate[:, None]], axis=1)
        h = gru(x, h, p["dec_w_ih"], p["dec_w_hh"], p["dec_b_ih"], p["dec_b_hh"])
        logits = h @ p["pre_eid_w"].T + p["pre_eid_b"]
        lp = jax.nn.log_softmax(logits, axis=1)
        eid_res = eid_res.at[i].set(lp)
        idx = jnp.argmax(lp, axis=1)
        emb2 = p["embedding"][idx]
        r1 = jnp.concatenate([emb2, h], axis=1) @ p["pre_rate_1_w"].T + p["pre_rate_1_b"]
        r2 = jax.nn.relu(r1) @ p["pre_rate_2_w"].T + p["pre_rate_2_b"]
        rate = jax.nn.sigmoid(r2)[:, 0]
        rate_res = rate_res.at[i].set(rate)
        eid = idx
    return eid_res, rate_res


# ---------------------------------------------------------------------------
# Main
# ---------------------------------------------------------------------------
if __name__ == "__main__":
    # Model hyper-parameters (DecoderMulti variant, rate_size = 1, dropout = 0).
    INPUT_DIM = 4      # Encoder input_dim
    HID = 32           # hid_dim == hidden_size
    EMB = 16           # embedding_size
    EID = 128          # eid_size
    B, S, T = 8, 8, 8  # batch, src seq len, trg seq len

    key = jax.random.PRNGKey(0)
    ks = jax.random.split(key, 20)

    def init(k, shape, scale=0.1):
        return (scale * jax.random.normal(k, shape)).astype(jnp.float32)

    params = {
        "hidden_size": HID, "eid_size": EID,
        # Encoder GRU
        "enc_w_ih": init(ks[0], (3 * HID, INPUT_DIM)),
        "enc_w_hh": init(ks[1], (3 * HID, HID)),
        "enc_b_ih": init(ks[2], (3 * HID,)),
        "enc_b_hh": init(ks[3], (3 * HID,)),
        # Decoder embedding + GRU (input = emb + rate_size)
        "embedding": init(ks[4], (EID, EMB), scale=1.0),
        "dec_w_ih": init(ks[5], (3 * HID, EMB + 1)),
        "dec_w_hh": init(ks[6], (3 * HID, HID)),
        "dec_b_ih": init(ks[7], (3 * HID,)),
        "dec_b_hh": init(ks[8], (3 * HID,)),
        # heads
        "pre_eid_w": init(ks[9], (EID, HID)),
        "pre_eid_b": init(ks[10], (EID,)),
        "pre_rate_1_w": init(ks[11], (HID, HID + EMB)),
        "pre_rate_1_b": init(ks[12], (HID,)),
        "pre_rate_2_w": init(ks[13], (1, HID)),
        "pre_rate_2_b": init(ks[14], (1,)),
    }

    src = init(ks[15], (S, B, INPUT_DIM), scale=1.0)
    # descending lengths in [1, S] (pack_padded_sequence convention)
    src_len = jnp.sort(
        jax.random.randint(ks[16], (B,), 1, S + 1), descending=True
    ).astype(jnp.int32)
    trg_eid = jax.random.randint(ks[17], (T, B), 0, EID).astype(jnp.int32)
    trg_rate = jax.random.uniform(ks[18], (T, B), dtype=jnp.float32)

    eid_out, rate_out = seq2seq_multi_forward(src, src_len, trg_eid, trg_rate, params)
    jax.block_until_ready((eid_out, rate_out))

    # correctness check against a pure-JAX reference of the PyTorch forward
    eid_ref, rate_ref = reference_forward(src, src_len, trg_eid, trg_rate, params)
    assert eid_out.shape == (T, B, EID) and rate_out.shape == (T, B)
    assert jnp.allclose(eid_out, eid_ref, atol=1e-3, rtol=1e-3)
    assert jnp.allclose(rate_out, rate_ref, atol=1e-3, rtol=1e-3)

    print("KERNEL_OK")
</pallas_src>

<mosaic_0001>
module attributes {stable_mosaic.version = 11 : i64} {
  func.func @seq2seq_kernel(%arg0: memref<64x4xf32, #tpu.memory_space<vmem>>, %arg1: memref<8x1xi32, #tpu.memory_space<vmem>>, %arg2: memref<8x1xi32, #tpu.memory_space<vmem>>, %arg3: memref<8x1xf32, #tpu.memory_space<vmem>>, %arg4: memref<4x384xf32, #tpu.memory_space<vmem>>, %arg5: memref<128x384xf32, #tpu.memory_space<vmem>>, %arg6: memref<1x384xf32, #tpu.memory_space<vmem>>, %arg7: memref<1x384xf32, #tpu.memory_space<vmem>>, %arg8: memref<128x16xf32, #tpu.memory_space<vmem>>, %arg9: memref<16x384xf32, #tpu.memory_space<vmem>>, %arg10: memref<1x384xf32, #tpu.memory_space<vmem>>, %arg11: memref<128x384xf32, #tpu.memory_space<vmem>>, %arg12: memref<1x384xf32, #tpu.memory_space<vmem>>, %arg13: memref<1x384xf32, #tpu.memory_space<vmem>>, %arg14: memref<128x128xf32, #tpu.memory_space<vmem>>, %arg15: memref<1x128xf32, #tpu.memory_space<vmem>>, %arg16: memref<16x128xf32, #tpu.memory_space<vmem>>, %arg17: memref<128x128xf32, #tpu.memory_space<vmem>>, %arg18: memref<1x128xf32, #tpu.memory_space<vmem>>, %arg19: memref<1x128xf32, #tpu.memory_space<vmem>>, %arg20: memref<1x1xf32, #tpu.memory_space<vmem>>, %arg21: memref<8x8x128xf32, #tpu.memory_space<vmem>>, %arg22: memref<8x8xf32, #tpu.memory_space<vmem>>) attributes {dimension_semantics = [], scalar_prefetch = 0 : i64, scratch_operands = 0 : i64, tpu.core_type = #tpu.core_type<tc>} {
    %c0 = arith.constant 0 : index
    %c0_0 = arith.constant 0 : index
    %0 = vector.load %arg4[%c0, %c0_0] : memref<4x384xf32, #tpu.memory_space<vmem>>, vector<4x384xf32>
    %c0_1 = arith.constant 0 : index
    %c0_2 = arith.constant 0 : index
    %1 = vector.load %arg5[%c0_1, %c0_2] : memref<128x384xf32, #tpu.memory_space<vmem>>, vector<128x384xf32>
    %c0_3 = arith.constant 0 : index
    %c0_4 = arith.constant 0 : index
    %2 = vector.load %arg6[%c0_3, %c0_4] : memref<1x384xf32, #tpu.memory_space<vmem>>, vector<1x384xf32>
    %c0_5 = arith.constant 0 : index
    %c0_6 = arith.constant 0 : index
    %3 = vector.load %arg7[%c0_5, %c0_6] : memref<1x384xf32, #tpu.memory_space<vmem>>, vector<1x384xf32>
    %c0_7 = arith.constant 0 : index
    %c0_8 = arith.constant 0 : index
    %4 = vector.load %arg8[%c0_7, %c0_8] : memref<128x16xf32, #tpu.memory_space<vmem>>, vector<128x16xf32>
    %c0_9 = arith.constant 0 : index
    %c0_10 = arith.constant 0 : index
    %5 = vector.load %arg9[%c0_9, %c0_10] : memref<16x384xf32, #tpu.memory_space<vmem>>, vector<16x384xf32>
    %c0_11 = arith.constant 0 : index
    %c0_12 = arith.constant 0 : index
    %6 = vector.load %arg10[%c0_11, %c0_12] : memref<1x384xf32, #tpu.memory_space<vmem>>, vector<1x384xf32>
    %c0_13 = arith.constant 0 : index
    %c0_14 = arith.constant 0 : index
    %7 = vector.load %arg11[%c0_13, %c0_14] : memref<128x384xf32, #tpu.memory_space<vmem>>, vector<128x384xf32>
    %c0_15 = arith.constant 0 : index
    %c0_16 = arith.constant 0 : index
    %8 = vector.load %arg12[%c0_15, %c0_16] : memref<1x384xf32, #tpu.memory_space<vmem>>, vector<1x384xf32>
    %c0_17 = arith.constant 0 : index
    %c0_18 = arith.constant 0 : index
    %9 = vector.load %arg13[%c0_17, %c0_18] : memref<1x384xf32, #tpu.memory_space<vmem>>, vector<1x384xf32>
    %c0_19 = arith.constant 0 : index
    %c0_20 = arith.constant 0 : index
    %10 = vector.load %arg14[%c0_19, %c0_20] : memref<128x128xf32, #tpu.memory_space<vmem>>, vector<128x128xf32>
    %c0_21 = arith.constant 0 : index
    %c0_22 = arith.constant 0 : index
    %11 = vector.load %arg15[%c0_21, %c0_22] : memref<1x128xf32, #tpu.memory_space<vmem>>, vector<1x128xf32>
    %c0_23 = arith.constant 0 : index
    %c0_24 = arith.constant 0 : index
    %12 = vector.load %arg16[%c0_23, %c0_24] : memref<16x128xf32, #tpu.memory_space<vmem>>, vector<16x128xf32>
    %c0_25 = arith.constant 0 : index
    %c0_26 = arith.constant 0 : index
    %13 = vector.load %arg17[%c0_25, %c0_26] : memref<128x128xf32, #tpu.memory_space<vmem>>, vector<128x128xf32>
    %c0_27 = arith.constant 0 : index
    %c0_28 = arith.constant 0 : index
    %14 = vector.load %arg18[%c0_27, %c0_28] : memref<1x128xf32, #tpu.memory_space<vmem>>, vector<1x128xf32>
    %c0_29 = arith.constant 0 : index
    %c0_30 = arith.constant 0 : index
    %15 = vector.load %arg19[%c0_29, %c0_30] : memref<1x128xf32, #tpu.memory_space<vmem>>, vector<1x128xf32>
    %c0_31 = arith.constant 0 : index
    %c0_32 = arith.constant 0 : index
    %16 = vector.load %arg20[%c0_31, %c0_32] : memref<1x1xf32, #tpu.memory_space<vmem>>, vector<1x1xf32>
    %c0_33 = arith.constant 0 : index
    %c0_34 = arith.constant 0 : index
    %17 = vector.load %arg1[%c0_33, %c0_34] : memref<8x1xi32, #tpu.memory_space<vmem>>, vector<8x1xi32>
    %18 = tpu.iota {dimensions = array<i32: 1>} : vector<8x128xi32>
    %19 = tpu.iota {dimensions = array<i32: 1>} : vector<8x8xi32>
    %c0_35 = arith.constant 0 : index
    %c0_36 = arith.constant 0 : index
    %20 = vector.load %arg0[%c0_35, %c0_36] : memref<64x4xf32, #tpu.memory_space<vmem>>, vector<64x4xf32>
    %cst = arith.constant dense<0.000000e+00> : vector<64x384xf32>
    %21 = tpu.matmul %20, %0, %cst {dimension_numbers = #tpu.dot_dimension_numbers<[1], [0], [0], [1], [0, 0, 1, 1], [], []>} : vector<64x4xf32>, vector<4x384xf32>, vector<64x384xf32> -> vector<64x384xf32>
    %22 = vector.broadcast %2 : vector<1x384xf32> to vector<64x384xf32>
    %23 = arith.addf %21, %22 : vector<64x384xf32>
    %cst_37 = arith.constant 0.000000e+00 : f32
    %24 = vector.broadcast %cst_37 : f32 to vector<8x128xf32>
    %25 = vector.extract_strided_slice %23 {offsets = [0, 0], sizes = [8, 384], strides = [1, 1]} : vector<64x384xf32> to vector<8x384xf32>
    %cst_38 = arith.constant dense<0.000000e+00> : vector<8x384xf32>
    %26 = tpu.matmul %24, %1, %cst_38 {dimension_numbers = #tpu.dot_dimension_numbers<[1], [0], [0], [1], [0, 0, 1, 1], [], []>} : vector<8x128xf32>, vector<128x384xf32>, vector<8x384xf32> -> vector<8x384xf32>
    %27 = vector.broadcast %3 : vector<1x384xf32> to vector<8x384xf32>
    %28 = arith.addf %26, %27 : vector<8x384xf32>
    %29 = vector.extract_strided_slice %25 {offsets = [0, 0], sizes = [8, 128], strides = [1, 1]} : vector<8x384xf32> to vector<8x128xf32>
    %30 = vector.extract_strided_slice %25 {offsets = [0, 128], sizes = [8, 128], strides = [1, 1]} : vector<8x384xf32> to vector<8x128xf32>
    %31 = vector.extract_strided_slice %25 {offsets = [0, 256], sizes = [8, 128], strides = [1, 1]} : vector<8x384xf32> to vector<8x128xf32>
    %32 = vector.extract_strided_slice %28 {offsets = [0, 0], sizes = [8, 128], strides = [1, 1]} : vector<8x384xf32> to vector<8x128xf32>
    %33 = vector.extract_strided_slice %28 {offsets = [0, 128], sizes = [8, 128], strides = [1, 1]} : vector<8x384xf32> to vector<8x128xf32>
    %34 = vector.extract_strided_slice %28 {offsets = [0, 256], sizes = [8, 128], strides = [1, 1]} : vector<8x384xf32> to vector<8x128xf32>
    %35 = arith.addf %29, %32 : vector<8x128xf32>
    %36 = arith.negf %35 : vector<8x128xf32>
    %37 = math.exp %36 : vector<8x128xf32>
    %cst_39 = arith.constant 1.000000e+00 : f32
    %38 = vector.broadcast %cst_39 : f32 to vector<8x128xf32>
    %39 = arith.addf %38, %37 : vector<8x128xf32>
    %40 = arith.divf %38, %39 : vector<8x128xf32>
    %41 = arith.addf %30, %33 : vector<8x128xf32>
    %42 = arith.negf %41 : vector<8x128xf32>
    %43 = math.exp %42 : vector<8x128xf32>
    %cst_40 = arith.constant 1.000000e+00 : f32
    %44 = vector.broadcast %cst_40 : f32 to vector<8x128xf32>
    %45 = arith.addf %44, %43 : vector<8x128xf32>
    %46 = arith.divf %44, %45 : vector<8x128xf32>
    %47 = arith.mulf %40, %34 : vector<8x128xf32>
    %48 = arith.addf %31, %47 : vector<8x128xf32>
    %49 = math.tanh %48 : vector<8x128xf32>
    %cst_41 = arith.constant 1.000000e+00 : f32
    %50 = vector.broadcast %cst_41 : f32 to vector<8x128xf32>
    %51 = arith.subf %50, %46 : vector<8x128xf32>
    %52 = arith.mulf %51, %49 : vector<8x128xf32>
    %53 = arith.mulf %46, %24 : vector<8x128xf32>
    %54 = arith.addf %52, %53 : vector<8x128xf32>
    %c0_i32 = arith.constant 0 : i32
    %55 = vector.broadcast %c0_i32 : i32 to vector<8x1xi32>
    %56 = arith.cmpi sgt, %17, %55 : vector<8x1xi32>
    %57 = vector.shape_cast %56 : vector<8x1xi1> to vector<8x1xi1>
    %58 = vector.broadcast %57 : vector<8x1xi1> to vector<8x128xi1>
    %59 = arith.select %58, %54, %24 : vector<8x128xi1>, vector<8x128xf32>
    %60 = vector.extract_strided_slice %23 {offsets = [8, 0], sizes = [8, 384], strides = [1, 1]} : vector<64x384xf32> to vector<8x384xf32>
    %cst_42 = arith.constant dense<0.000000e+00> : vector<8x384xf32>
    %61 = tpu.matmul %59, %1, %cst_42 {dimension_numbers = #tpu.dot_dimension_numbers<[1], [0], [0], [1], [0, 0, 1, 1], [], []>} : vector<8x128xf32>, vector<128x384xf32>, vector<8x384xf32> -> vector<8x384xf32>
    %62 = vector.broadcast %3 : vector<1x384xf32> to vector<8x384xf32>
    %63 = arith.addf %61, %62 : vector<8x384xf32>
    %64 = vector.extract_strided_slice %60 {offsets = [0, 0], sizes = [8, 128], strides = [1, 1]} : vector<8x384xf32> to vector<8x128xf32>
    %65 = vector.extract_strided_slice %60 {offsets = [0, 128], sizes = [8, 128], strides = [1, 1]} : vector<8x384xf32> to vector<8x128xf32>
    %66 = vector.extract_strided_slice %60 {offsets = [0, 256], sizes = [8, 128], strides = [1, 1]} : vector<8x384xf32> to vector<8x128xf32>
    %67 = vector.extract_strided_slice %63 {offsets = [0, 0], sizes = [8, 128], strides = [1, 1]} : vector<8x384xf32> to vector<8x128xf32>
    %68 = vector.extract_strided_slice %63 {offsets = [0, 128], sizes = [8, 128], strides = [1, 1]} : vector<8x384xf32> to vector<8x128xf32>
    %69 = vector.extract_strided_slice %63 {offsets = [0, 256], sizes = [8, 128], strides = [1, 1]} : vector<8x384xf32> to vector<8x128xf32>
    %70 = arith.addf %64, %67 : vector<8x128xf32>
    %71 = arith.negf %70 : vector<8x128xf32>
    %72 = math.exp %71 : vector<8x128xf32>
    %cst_43 = arith.constant 1.000000e+00 : f32
    %73 = vector.broadcast %cst_43 : f32 to vector<8x128xf32>
    %74 = arith.addf %73, %72 : vector<8x128xf32>
    %75 = arith.divf %73, %74 : vector<8x128xf32>
    %76 = arith.addf %65, %68 : vector<8x128xf32>
    %77 = arith.negf %76 : vector<8x128xf32>
    %78 = math.exp %77 : vector<8x128xf32>
    %cst_44 = arith.constant 1.000000e+00 : f32
    %79 = vector.broadcast %cst_44 : f32 to vector<8x128xf32>
    %80 = arith.addf %79, %78 : vector<8x128xf32>
    %81 = arith.divf %79, %80 : vector<8x128xf32>
    %82 = arith.mulf %75, %69 : vector<8x128xf32>
    %83 = arith.addf %66, %82 : vector<8x128xf32>
    %84 = math.tanh %83 : vector<8x128xf32>
    %cst_45 = arith.constant 1.000000e+00 : f32
    %85 = vector.broadcast %cst_45 : f32 to vector<8x128xf32>
    %86 = arith.subf %85, %81 : vector<8x128xf32>
    %87 = arith.mulf %86, %84 : vector<8x128xf32>
    %88 = arith.mulf %81, %59 : vector<8x128xf32>
    %89 = arith.addf %87, %88 : vector<8x128xf32>
    %c1_i32 = arith.constant 1 : i32
    %90 = vector.broadcast %c1_i32 : i32 to vector<8x1xi32>
    %91 = arith.cmpi sgt, %17, %90 : vector<8x1xi32>
    %92 = vector.shape_cast %91 : vector<8x1xi1> to vector<8x1xi1>
    %93 = vector.broadcast %92 : vector<8x1xi1> to vector<8x128xi1>
    %94 = arith.select %93, %89, %59 : vector<8x128xi1>, vector<8x128xf32>
    %95 = vector.extract_strided_slice %23 {offsets = [16, 0], sizes = [8, 384], strides = [1, 1]} : vector<64x384xf32> to vector<8x384xf32>
    %cst_46 = arith.constant dense<0.000000e+00> : vector<8x384xf32>
    %96 = tpu.matmul %94, %1, %cst_46 {dimension_numbers = #tpu.dot_dimension_numbers<[1], [0], [0], [1], [0, 0, 1, 1], [], []>} : vector<8x128xf32>, vector<128x384xf32>, vector<8x384xf32> -> vector<8x384xf32>
    %97 = vector.broadcast %3 : vector<1x384xf32> to vector<8x384xf32>
    %98 = arith.addf %96, %97 : vector<8x384xf32>
    %99 = vector.extract_strided_slice %95 {offsets = [0, 0], sizes = [8, 128], strides = [1, 1]} : vector<8x384xf32> to vector<8x128xf32>
    %100 = vector.extract_strided_slice %95 {offsets = [0, 128], sizes = [8, 128], strides = [1, 1]} : vector<8x384xf32> to vector<8x128xf32>
    %101 = vector.extract_strided_slice %95 {offsets = [0, 256], sizes = [8, 128], strides = [1, 1]} : vector<8x384xf32> to vector<8x128xf32>
    %102 = vector.extract_strided_slice %98 {offsets = [0, 0], sizes = [8, 128], strides = [1, 1]} : vector<8x384xf32> to vector<8x128xf32>
    %103 = vector.extract_strided_slice %98 {offsets = [0, 128], sizes = [8, 128], strides = [1, 1]} : vector<8x384xf32> to vector<8x128xf32>
    %104 = vector.extract_strided_slice %98 {offsets = [0, 256], sizes = [8, 128], strides = [1, 1]} : vector<8x384xf32> to vector<8x128xf32>
    %105 = arith.addf %99, %102 : vector<8x128xf32>
    %106 = arith.negf %105 : vector<8x128xf32>
    %107 = math.exp %106 : vector<8x128xf32>
    %cst_47 = arith.constant 1.000000e+00 : f32
    %108 = vector.broadcast %cst_47 : f32 to vector<8x128xf32>
    %109 = arith.addf %108, %107 : vector<8x128xf32>
    %110 = arith.divf %108, %109 : vector<8x128xf32>
    %111 = arith.addf %100, %103 : vector<8x128xf32>
    %112 = arith.negf %111 : vector<8x128xf32>
    %113 = math.exp %112 : vector<8x128xf32>
    %cst_48 = arith.constant 1.000000e+00 : f32
    %114 = vector.broadcast %cst_48 : f32 to vector<8x128xf32>
    %115 = arith.addf %114, %113 : vector<8x128xf32>
    %116 = arith.divf %114, %115 : vector<8x128xf32>
    %117 = arith.mulf %110, %104 : vector<8x128xf32>
    %118 = arith.addf %101, %117 : vector<8x128xf32>
    %119 = math.tanh %118 : vector<8x128xf32>
    %cst_49 = arith.constant 1.000000e+00 : f32
    %120 = vector.broadcast %cst_49 : f32 to vector<8x128xf32>
    %121 = arith.subf %120, %116 : vector<8x128xf32>
    %122 = arith.mulf %121, %119 : vector<8x128xf32>
    %123 = arith.mulf %116, %94 : vector<8x128xf32>
    %124 = arith.addf %122, %123 : vector<8x128xf32>
    %c2_i32 = arith.constant 2 : i32
    %125 = vector.broadcast %c2_i32 : i32 to vector<8x1xi32>
    %126 = arith.cmpi sgt, %17, %125 : vector<8x1xi32>
    %127 = vector.shape_cast %126 : vector<8x1xi1> to vector<8x1xi1>
    %128 = vector.broadcast %127 : vector<8x1xi1> to vector<8x128xi1>
    %129 = arith.select %128, %124, %94 : vector<8x128xi1>, vector<8x128xf32>
    %130 = vector.extract_strided_slice %23 {offsets = [24, 0], sizes = [8, 384], strides = [1, 1]} : vector<64x384xf32> to vector<8x384xf32>
    %cst_50 = arith.constant dense<0.000000e+00> : vector<8x384xf32>
    %131 = tpu.matmul %129, %1, %cst_50 {dimension_numbers = #tpu.dot_dimension_numbers<[1], [0], [0], [1], [0, 0, 1, 1], [], []>} : vector<8x128xf32>, vector<128x384xf32>, vector<8x384xf32> -> vector<8x384xf32>
    %132 = vector.broadcast %3 : vector<1x384xf32> to vector<8x384xf32>
    %133 = arith.addf %131, %132 : vector<8x384xf32>
    %134 = vector.extract_strided_slice %130 {offsets = [0, 0], sizes = [8, 128], strides = [1, 1]} : vector<8x384xf32> to vector<8x128xf32>
    %135 = vector.extract_strided_slice %130 {offsets = [0, 128], sizes = [8, 128], strides = [1, 1]} : vector<8x384xf32> to vector<8x128xf32>
    %136 = vector.extract_strided_slice %130 {offsets = [0, 256], sizes = [8, 128], strides = [1, 1]} : vector<8x384xf32> to vector<8x128xf32>
    %137 = vector.extract_strided_slice %133 {offsets = [0, 0], sizes = [8, 128], strides = [1, 1]} : vector<8x384xf32> to vector<8x128xf32>
    %138 = vector.extract_strided_slice %133 {offsets = [0, 128], sizes = [8, 128], strides = [1, 1]} : vector<8x384xf32> to vector<8x128xf32>
    %139 = vector.extract_strided_slice %133 {offsets = [0, 256], sizes = [8, 128], strides = [1, 1]} : vector<8x384xf32> to vector<8x128xf32>
    %140 = arith.addf %134, %137 : vector<8x128xf32>
    %141 = arith.negf %140 : vector<8x128xf32>
    %142 = math.exp %141 : vector<8x128xf32>
    %cst_51 = arith.constant 1.000000e+00 : f32
    %143 = vector.broadcast %cst_51 : f32 to vector<8x128xf32>
    %144 = arith.addf %143, %142 : vector<8x128xf32>
    %145 = arith.divf %143, %144 : vector<8x128xf32>
    %146 = arith.addf %135, %138 : vector<8x128xf32>
    %147 = arith.negf %146 : vector<8x128xf32>
    %148 = math.exp %147 : vector<8x128xf32>
    %cst_52 = arith.constant 1.000000e+00 : f32
    %149 = vector.broadcast %cst_52 : f32 to vector<8x128xf32>
    %150 = arith.addf %149, %148 : vector<8x128xf32>
    %151 = arith.divf %149, %150 : vector<8x128xf32>
    %152 = arith.mulf %145, %139 : vector<8x128xf32>
    %153 = arith.addf %136, %152 : vector<8x128xf32>
    %154 = math.tanh %153 : vector<8x128xf32>
    %cst_53 = arith.constant 1.000000e+00 : f32
    %155 = vector.broadcast %cst_53 : f32 to vector<8x128xf32>
    %156 = arith.subf %155, %151 : vector<8x128xf32>
    %157 = arith.mulf %156, %154 : vector<8x128xf32>
    %158 = arith.mulf %151, %129 : vector<8x128xf32>
    %159 = arith.addf %157, %158 : vector<8x128xf32>
    %c3_i32 = arith.constant 3 : i32
    %160 = vector.broadcast %c3_i32 : i32 to vector<8x1xi32>
    %161 = arith.cmpi sgt, %17, %160 : vector<8x1xi32>
    %162 = vector.shape_cast %161 : vector<8x1xi1> to vector<8x1xi1>
    %163 = vector.broadcast %162 : vector<8x1xi1> to vector<8x128xi1>
    %164 = arith.select %163, %159, %129 : vector<8x128xi1>, vector<8x128xf32>
    %165 = vector.extract_strided_slice %23 {offsets = [32, 0], sizes = [8, 384], strides = [1, 1]} : vector<64x384xf32> to vector<8x384xf32>
    %cst_54 = arith.constant dense<0.000000e+00> : vector<8x384xf32>
    %166 = tpu.matmul %164, %1, %cst_54 {dimension_numbers = #tpu.dot_dimension_numbers<[1], [0], [0], [1], [0, 0, 1, 1], [], []>} : vector<8x128xf32>, vector<128x384xf32>, vector<8x384xf32> -> vector<8x384xf32>
    %167 = vector.broadcast %3 : vector<1x384xf32> to vector<8x384xf32>
    %168 = arith.addf %166, %167 : vector<8x384xf32>
    %169 = vector.extract_strided_slice %165 {offsets = [0, 0], sizes = [8, 128], strides = [1, 1]} : vector<8x384xf32> to vector<8x128xf32>
    %170 = vector.extract_strided_slice %165 {offsets = [0, 128], sizes = [8, 128], strides = [1, 1]} : vector<8x384xf32> to vector<8x128xf32>
    %171 = vector.extract_strided_slice %165 {offsets = [0, 256], sizes = [8, 128], strides = [1, 1]} : vector<8x384xf32> to vector<8x128xf32>
    %172 = vector.extract_strided_slice %168 {offsets = [0, 0], sizes = [8, 128], strides = [1, 1]} : vector<8x384xf32> to vector<8x128xf32>
    %173 = vector.extract_strided_slice %168 {offsets = [0, 128], sizes = [8, 128], strides = [1, 1]} : vector<8x384xf32> to vector<8x128xf32>
    %174 = vector.extract_strided_slice %168 {offsets = [0, 256], sizes = [8, 128], strides = [1, 1]} : vector<8x384xf32> to vector<8x128xf32>
    %175 = arith.addf %169, %172 : vector<8x128xf32>
    %176 = arith.negf %175 : vector<8x128xf32>
    %177 = math.exp %176 : vector<8x128xf32>
    %cst_55 = arith.constant 1.000000e+00 : f32
    %178 = vector.broadcast %cst_55 : f32 to vector<8x128xf32>
    %179 = arith.addf %178, %177 : vector<8x128xf32>
    %180 = arith.divf %178, %179 : vector<8x128xf32>
    %181 = arith.addf %170, %173 : vector<8x128xf32>
    %182 = arith.negf %181 : vector<8x128xf32>
    %183 = math.exp %182 : vector<8x128xf32>
    %cst_56 = arith.constant 1.000000e+00 : f32
    %184 = vector.broadcast %cst_56 : f32 to vector<8x128xf32>
    %185 = arith.addf %184, %183 : vector<8x128xf32>
    %186 = arith.divf %184, %185 : vector<8x128xf32>
    %187 = arith.mulf %180, %174 : vector<8x128xf32>
    %188 = arith.addf %171, %187 : vector<8x128xf32>
    %189 = math.tanh %188 : vector<8x128xf32>
    %cst_57 = arith.constant 1.000000e+00 : f32
    %190 = vector.broadcast %cst_57 : f32 to vector<8x128xf32>
    %191 = arith.subf %190, %186 : vector<8x128xf32>
    %192 = arith.mulf %191, %189 : vector<8x128xf32>
    %193 = arith.mulf %186, %164 : vector<8x128xf32>
    %194 = arith.addf %192, %193 : vector<8x128xf32>
    %c4_i32 = arith.constant 4 : i32
    %195 = vector.broadcast %c4_i32 : i32 to vector<8x1xi32>
    %196 = arith.cmpi sgt, %17, %195 : vector<8x1xi32>
    %197 = vector.shape_cast %196 : vector<8x1xi1> to vector<8x1xi1>
    %198 = vector.broadcast %197 : vector<8x1xi1> to vector<8x128xi1>
    %199 = arith.select %198, %194, %164 : vector<8x128xi1>, vector<8x128xf32>
    %200 = vector.extract_strided_slice %23 {offsets = [40, 0], sizes = [8, 384], strides = [1, 1]} : vector<64x384xf32> to vector<8x384xf32>
    %cst_58 = arith.constant dense<0.000000e+00> : vector<8x384xf32>
    %201 = tpu.matmul %199, %1, %cst_58 {dimension_numbers = #tpu.dot_dimension_numbers<[1], [0], [0], [1], [0, 0, 1, 1], [], []>} : vector<8x128xf32>, vector<128x384xf32>, vector<8x384xf32> -> vector<8x384xf32>
    %202 = vector.broadcast %3 : vector<1x384xf32> to vector<8x384xf32>
    %203 = arith.addf %201, %202 : vector<8x384xf32>
    %204 = vector.extract_strided_slice %200 {offsets = [0, 0], sizes = [8, 128], strides = [1, 1]} : vector<8x384xf32> to vector<8x128xf32>
    %205 = vector.extract_strided_slice %200 {offsets = [0, 128], sizes = [8, 128], strides = [1, 1]} : vector<8x384xf32> to vector<8x128xf32>
    %206 = vector.extract_strided_slice %200 {offsets = [0, 256], sizes = [8, 128], strides = [1, 1]} : vector<8x384xf32> to vector<8x128xf32>
    %207 = vector.extract_strided_slice %203 {offsets = [0, 0], sizes = [8, 128], strides = [1, 1]} : vector<8x384xf32> to vector<8x128xf32>
    %208 = vector.extract_strided_slice %203 {offsets = [0, 128], sizes = [8, 128], strides = [1, 1]} : vector<8x384xf32> to vector<8x128xf32>
    %209 = vector.extract_strided_slice %203 {offsets = [0, 256], sizes = [8, 128], strides = [1, 1]} : vector<8x384xf32> to vector<8x128xf32>
    %210 = arith.addf %204, %207 : vector<8x128xf32>
    %211 = arith.negf %210 : vector<8x128xf32>
    %212 = math.exp %211 : vector<8x128xf32>
    %cst_59 = arith.constant 1.000000e+00 : f32
    %213 = vector.broadcast %cst_59 : f32 to vector<8x128xf32>
    %214 = arith.addf %213, %212 : vector<8x128xf32>
    %215 = arith.divf %213, %214 : vector<8x128xf32>
    %216 = arith.addf %205, %208 : vector<8x128xf32>
    %217 = arith.negf %216 : vector<8x128xf32>
    %218 = math.exp %217 : vector<8x128xf32>
    %cst_60 = arith.constant 1.000000e+00 : f32
    %219 = vector.broadcast %cst_60 : f32 to vector<8x128xf32>
    %220 = arith.addf %219, %218 : vector<8x128xf32>
    %221 = arith.divf %219, %220 : vector<8x128xf32>
    %222 = arith.mulf %215, %209 : vector<8x128xf32>
    %223 = arith.addf %206, %222 : vector<8x128xf32>
    %224 = math.tanh %223 : vector<8x128xf32>
    %cst_61 = arith.constant 1.000000e+00 : f32
    %225 = vector.broadcast %cst_61 : f32 to vector<8x128xf32>
    %226 = arith.subf %225, %221 : vector<8x128xf32>
    %227 = arith.mulf %226, %224 : vector<8x128xf32>
    %228 = arith.mulf %221, %199 : vector<8x128xf32>
    %229 = arith.addf %227, %228 : vector<8x128xf32>
    %c5_i32 = arith.constant 5 : i32
    %230 = vector.broadcast %c5_i32 : i32 to vector<8x1xi32>
    %231 = arith.cmpi sgt, %17, %230 : vector<8x1xi32>
    %232 = vector.shape_cast %231 : vector<8x1xi1> to vector<8x1xi1>
    %233 = vector.broadcast %232 : vector<8x1xi1> to vector<8x128xi1>
    %234 = arith.select %233, %229, %199 : vector<8x128xi1>, vector<8x128xf32>
    %235 = vector.extract_strided_slice %23 {offsets = [48, 0], sizes = [8, 384], strides = [1, 1]} : vector<64x384xf32> to vector<8x384xf32>
    %cst_62 = arith.constant dense<0.000000e+00> : vector<8x384xf32>
    %236 = tpu.matmul %234, %1, %cst_62 {dimension_numbers = #tpu.dot_dimension_numbers<[1], [0], [0], [1], [0, 0, 1, 1], [], []>} : vector<8x128xf32>, vector<128x384xf32>, vector<8x384xf32> -> vector<8x384xf32>
    %237 = vector.broadcast %3 : vector<1x384xf32> to vector<8x384xf32>
    %238 = arith.addf %236, %237 : vector<8x384xf32>
    %239 = vector.extract_strided_slice %235 {offsets = [0, 0], sizes = [8, 128], strides = [1, 1]} : vector<8x384xf32> to vector<8x128xf32>
    %240 = vector.extract_strided_slice %235 {offsets = [0, 128], sizes = [8, 128], strides = [1, 1]} : vector<8x384xf32> to vector<8x128xf32>
    %241 = vector.extract_strided_slice %235 {offsets = [0, 256], sizes = [8, 128], strides = [1, 1]} : vector<8x384xf32> to vector<8x128xf32>
    %242 = vector.extract_strided_slice %238 {offsets = [0, 0], sizes = [8, 128], strides = [1, 1]} : vector<8x384xf32> to vector<8x128xf32>
    %243 = vector.extract_strided_slice %238 {offsets = [0, 128], sizes = [8, 128], strides = [1, 1]} : vector<8x384xf32> to vector<8x128xf32>
    %244 = vector.extract_strided_slice %238 {offsets = [0, 256], sizes = [8, 128], strides = [1, 1]} : vector<8x384xf32> to vector<8x128xf32>
    %245 = arith.addf %239, %242 : vector<8x128xf32>
    %246 = arith.negf %245 : vector<8x128xf32>
    %247 = math.exp %246 : vector<8x128xf32>
    %cst_63 = arith.constant 1.000000e+00 : f32
    %248 = vector.broadcast %cst_63 : f32 to vector<8x128xf32>
    %249 = arith.addf %248, %247 : vector<8x128xf32>
    %250 = arith.divf %248, %249 : vector<8x128xf32>
    %251 = arith.addf %240, %243 : vector<8x128xf32>
    %252 = arith.negf %251 : vector<8x128xf32>
    %253 = math.exp %252 : vector<8x128xf32>
    %cst_64 = arith.constant 1.000000e+00 : f32
    %254 = vector.broadcast %cst_64 : f32 to vector<8x128xf32>
    %255 = arith.addf %254, %253 : vector<8x128xf32>
    %256 = arith.divf %254, %255 : vector<8x128xf32>
    %257 = arith.mulf %250, %244 : vector<8x128xf32>
    %258 = arith.addf %241, %257 : vector<8x128xf32>
    %259 = math.tanh %258 : vector<8x128xf32>
    %cst_65 = arith.constant 1.000000e+00 : f32
    %260 = vector.broadcast %cst_65 : f32 to vector<8x128xf32>
    %261 = arith.subf %260, %256 : vector<8x128xf32>
    %262 = arith.mulf %261, %259 : vector<8x128xf32>
    %263 = arith.mulf %256, %234 : vector<8x128xf32>
    %264 = arith.addf %262, %263 : vector<8x128xf32>
    %c6_i32 = arith.constant 6 : i32
    %265 = vector.broadcast %c6_i32 : i32 to vector<8x1xi32>
    %266 = arith.cmpi sgt, %17, %265 : vector<8x1xi32>
    %267 = vector.shape_cast %266 : vector<8x1xi1> to vector<8x1xi1>
    %268 = vector.broadcast %267 : vector<8x1xi1> to vector<8x128xi1>
    %269 = arith.select %268, %264, %234 : vector<8x128xi1>, vector<8x128xf32>
    %270 = vector.extract_strided_slice %23 {offsets = [56, 0], sizes = [8, 384], strides = [1, 1]} : vector<64x384xf32> to vector<8x384xf32>
    %cst_66 = arith.constant dense<0.000000e+00> : vector<8x384xf32>
    %271 = tpu.matmul %269, %1, %cst_66 {dimension_numbers = #tpu.dot_dimension_numbers<[1], [0], [0], [1], [0, 0, 1, 1], [], []>} : vector<8x128xf32>, vector<128x384xf32>, vector<8x384xf32> -> vector<8x384xf32>
    %272 = vector.broadcast %3 : vector<1x384xf32> to vector<8x384xf32>
    %273 = arith.addf %271, %272 : vector<8x384xf32>
    %274 = vector.extract_strided_slice %270 {offsets = [0, 0], sizes = [8, 128], strides = [1, 1]} : vector<8x384xf32> to vector<8x128xf32>
    %275 = vector.extract_strided_slice %270 {offsets = [0, 128], sizes = [8, 128], strides = [1, 1]} : vector<8x384xf32> to vector<8x128xf32>
    %276 = vector.extract_strided_slice %270 {offsets = [0, 256], sizes = [8, 128], strides = [1, 1]} : vector<8x384xf32> to vector<8x128xf32>
    %277 = vector.extract_strided_slice %273 {offsets = [0, 0], sizes = [8, 128], strides = [1, 1]} : vector<8x384xf32> to vector<8x128xf32>
    %278 = vector.extract_strided_slice %273 {offsets = [0, 128], sizes = [8, 128], strides = [1, 1]} : vector<8x384xf32> to vector<8x128xf32>
    %279 = vector.extract_strided_slice %273 {offsets = [0, 256], sizes = [8, 128], strides = [1, 1]} : vector<8x384xf32> to vector<8x128xf32>
    %280 = arith.addf %274, %277 : vector<8x128xf32>
    %281 = arith.negf %280 : vector<8x128xf32>
    %282 = math.exp %281 : vector<8x128xf32>
    %cst_67 = arith.constant 1.000000e+00 : f32
    %283 = vector.broadcast %cst_67 : f32 to vector<8x128xf32>
    %284 = arith.addf %283, %282 : vector<8x128xf32>
    %285 = arith.divf %283, %284 : vector<8x128xf32>
    %286 = arith.addf %275, %278 : vector<8x128xf32>
    %287 = arith.negf %286 : vector<8x128xf32>
    %288 = math.exp %287 : vector<8x128xf32>
    %cst_68 = arith.constant 1.000000e+00 : f32
    %289 = vector.broadcast %cst_68 : f32 to vector<8x128xf32>
    %290 = arith.addf %289, %288 : vector<8x128xf32>
    %291 = arith.divf %289, %290 : vector<8x128xf32>
    %292 = arith.mulf %285, %279 : vector<8x128xf32>
    %293 = arith.addf %276, %292 : vector<8x128xf32>
    %294 = math.tanh %293 : vector<8x128xf32>
    %cst_69 = arith.constant 1.000000e+00 : f32
    %295 = vector.broadcast %cst_69 : f32 to vector<8x128xf32>
    %296 = arith.subf %295, %291 : vector<8x128xf32>
    %297 = arith.mulf %296, %294 : vector<8x128xf32>
    %298 = arith.mulf %291, %269 : vector<8x128xf32>
    %299 = arith.addf %297, %298 : vector<8x128xf32>
    %c7_i32 = arith.constant 7 : i32
    %300 = vector.broadcast %c7_i32 : i32 to vector<8x1xi32>
    %301 = arith.cmpi sgt, %17, %300 : vector<8x1xi32>
    %302 = vector.shape_cast %301 : vector<8x1xi1> to vector<8x1xi1>
    %303 = vector.broadcast %302 : vector<8x1xi1> to vector<8x128xi1>
    %304 = arith.select %303, %299, %269 : vector<8x128xi1>, vector<8x128xf32>
    %c0_70 = arith.constant 0 : index
    %c0_71 = arith.constant 0 : index
    %305 = vector.load %arg2[%c0_70, %c0_71] : memref<8x1xi32, #tpu.memory_space<vmem>>, vector<8x1xi32>
    %306 = vector.broadcast %305 : vector<8x1xi32> to vector<8x128xi32>
    %307 = arith.cmpi eq, %18, %306 : vector<8x128xi32>
    %308 = arith.extui %307 : vector<8x128xi1> to vector<8x128xi32>
    %309 = arith.sitofp %308 : vector<8x128xi32> to vector<8x128xf32>
    %c0_72 = arith.constant 0 : index
    %c0_73 = arith.constant 0 : index
    %310 = vector.load %arg3[%c0_72, %c0_73] : memref<8x1xf32, #tpu.memory_space<vmem>>, vector<8x1xf32>
    %cst_74 = arith.constant 0.000000e+00 : f32
    %311 = vector.broadcast %cst_74 : f32 to vector<8x128xf32>
    %c0_75 = arith.constant 0 : index
    %c0_76 = arith.constant 0 : index
    %c0_77 = arith.constant 0 : index
    %312 = vector.load %arg21[%c0_75, %c0_76, %c0_77] : memref<8x8x128xf32, #tpu.memory_space<vmem>>, vector<1x8x128xf32>
    %313 = vector.shape_cast %312 : vector<1x8x128xf32> to vector<8x128xf32>
    %314 = vector.shape_cast %311 : vector<8x128xf32> to vector<1x8x128xf32>
    tpu.vector_store %arg21[%c0_75, %c0_76, %c0_77], %314 {strides = array<i32>} : memref<8x8x128xf32, #tpu.memory_space<vmem>>, vector<1x8x128xf32>,
    %cst_78 = arith.constant 0.000000e+00 : f32
    %315 = vector.broadcast %cst_78 : f32 to vector<8x8xf32>
    %cst_79 = arith.constant dense<0.000000e+00> : vector<8x16xf32>
    %316 = tpu.matmul %309, %4, %cst_79 {dimension_numbers = #tpu.dot_dimension_numbers<[1], [0], [0], [1], [0, 0, 1, 1], [], []>} : vector<8x128xf32>, vector<128x16xf32>, vector<8x16xf32> -> vector<8x16xf32>
    %cst_80 = arith.constant dense<0.000000e+00> : vector<8x384xf32>
    %317 = tpu.matmul %316, %5, %cst_80 {dimension_numbers = #tpu.dot_dimension_numbers<[1], [0], [0], [1], [0, 0, 1, 1], [], []>} : vector<8x16xf32>, vector<16x384xf32>, vector<8x384xf32> -> vector<8x384xf32>
    %318 = vector.broadcast %310 : vector<8x1xf32> to vector<8x384xf32>
    %319 = vector.broadcast %6 : vector<1x384xf32> to vector<8x384xf32>
    %320 = arith.mulf %318, %319 : vector<8x384xf32>
    %321 = arith.addf %317, %320 : vector<8x384xf32>
    %322 = vector.broadcast %8 : vector<1x384xf32> to vector<8x384xf32>
    %323 = arith.addf %321, %322 : vector<8x384xf32>
    %cst_81 = arith.constant dense<0.000000e+00> : vector<8x384xf32>
    %324 = tpu.matmul %304, %7, %cst_81 {dimension_numbers = #tpu.dot_dimension_numbers<[1], [0], [0], [1], [0, 0, 1, 1], [], []>} : vector<8x128xf32>, vector<128x384xf32>, vector<8x384xf32> -> vector<8x384xf32>
    %325 = vector.broadcast %9 : vector<1x384xf32> to vector<8x384xf32>
    %326 = arith.addf %324, %325 : vector<8x384xf32>
    %327 = vector.extract_strided_slice %323 {offsets = [0, 0], sizes = [8, 128], strides = [1, 1]} : vector<8x384xf32> to vector<8x128xf32>
    %328 = vector.extract_strided_slice %323 {offsets = [0, 128], sizes = [8, 128], strides = [1, 1]} : vector<8x384xf32> to vector<8x128xf32>
    %329 = vector.extract_strided_slice %323 {offsets = [0, 256], sizes = [8, 128], strides = [1, 1]} : vector<8x384xf32> to vector<8x128xf32>
    %330 = vector.extract_strided_slice %326 {offsets = [0, 0], sizes = [8, 128], strides = [1, 1]} : vector<8x384xf32> to vector<8x128xf32>
    %331 = vector.extract_strided_slice %326 {offsets = [0, 128], sizes = [8, 128], strides = [1, 1]} : vector<8x384xf32> to vector<8x128xf32>
    %332 = vector.extract_strided_slice %326 {offsets = [0, 256], sizes = [8, 128], strides = [1, 1]} : vector<8x384xf32> to vector<8x128xf32>
    %333 = arith.addf %327, %330 : vector<8x128xf32>
    %334 = arith.negf %333 : vector<8x128xf32>
    %335 = math.exp %334 : vector<8x128xf32>
    %cst_82 = arith.constant 1.000000e+00 : f32
    %336 = vector.broadcast %cst_82 : f32 to vector<8x128xf32>
    %337 = arith.addf %336, %335 : vector<8x128xf32>
    %338 = arith.divf %336, %337 : vector<8x128xf32>
    %339 = arith.addf %328, %331 : vector<8x128xf32>
    %340 = arith.negf %339 : vector<8x128xf32>
    %341 = math.exp %340 : vector<8x128xf32>
    %cst_83 = arith.constant 1.000000e+00 : f32
    %342 = vector.broadcast %cst_83 : f32 to vector<8x128xf32>
    %343 = arith.addf %342, %341 : vector<8x128xf32>
    %344 = arith.divf %342, %343 : vector<8x128xf32>
    %345 = arith.mulf %338, %332 : vector<8x128xf32>
    %346 = arith.addf %329, %345 : vector<8x128xf32>
    %347 = math.tanh %346 : vector<8x128xf32>
    %cst_84 = arith.constant 1.000000e+00 : f32
    %348 = vector.broadcast %cst_84 : f32 to vector<8x128xf32>
    %349 = arith.subf %348, %344 : vector<8x128xf32>
    %350 = arith.mulf %349, %347 : vector<8x128xf32>
    %351 = arith.mulf %344, %304 : vector<8x128xf32>
    %352 = arith.addf %350, %351 : vector<8x128xf32>
    %cst_85 = arith.constant dense<0.000000e+00> : vector<8x128xf32>
    %353 = tpu.matmul %352, %10, %cst_85 {dimension_numbers = #tpu.dot_dimension_numbers<[1], [0], [0], [1], [0, 0, 1, 1], [], []>} : vector<8x128xf32>, vector<128x128xf32>, vector<8x128xf32> -> vector<8x128xf32>
    %354 = vector.broadcast %11 : vector<1x128xf32> to vector<8x128xf32>
    %355 = arith.addf %353, %354 : vector<8x128xf32>
    %cst_86 = arith.constant dense<0xFF800000> : vector<8xf32>
    %356 = vector.multi_reduction <maximumf>, %355, %cst_86 [1] : vector<8x128xf32> to vector<8xf32>
    %357 = vector.shape_cast %356 : vector<8xf32> to vector<8x1xf32>
    %358 = vector.broadcast %357 : vector<8x1xf32> to vector<8x128xf32>
    %359 = arith.cmpf oeq, %355, %358 : vector<8x128xf32>
    %c128_i32 = arith.constant 128 : i32
    %360 = vector.broadcast %c128_i32 : i32 to vector<8x128xi32>
    %361 = arith.select %359, %18, %360 : vector<8x128xi1>, vector<8x128xi32>
    %cst_87 = arith.constant dense<2147483647> : vector<8xi32>
    %362 = vector.multi_reduction <minsi>, %361, %cst_87 [1] : vector<8x128xi32> to vector<8xi32>
    %363 = vector.shape_cast %362 : vector<8xi32> to vector<8x1xi32>
    %364 = vector.broadcast %363 : vector<8x1xi32> to vector<8x128xi32>
    %365 = arith.cmpi eq, %18, %364 : vector<8x128xi32>
    %366 = arith.extui %365 : vector<8x128xi1> to vector<8x128xi32>
    %367 = arith.sitofp %366 : vector<8x128xi32> to vector<8x128xf32>
    %368 = vector.broadcast %357 : vector<8x1xf32> to vector<8x128xf32>
    %369 = arith.subf %355, %368 : vector<8x128xf32>
    %370 = math.exp %369 : vector<8x128xf32>
    %cst_88 = arith.constant dense<0.000000e+00> : vector<8xf32>
    %371 = vector.multi_reduction <add>, %370, %cst_88 [1] : vector<8x128xf32> to vector<8xf32>
    %372 = vector.shape_cast %371 : vector<8xf32> to vector<8x1xf32>
    %373 = math.log %372 : vector<8x1xf32>
    %374 = vector.broadcast %373 : vector<8x1xf32> to vector<8x128xf32>
    %375 = arith.subf %369, %374 : vector<8x128xf32>
    %c1 = arith.constant 1 : index
    %c0_89 = arith.constant 0 : index
    %c0_90 = arith.constant 0 : index
    %376 = vector.load %arg21[%c1, %c0_89, %c0_90] : memref<8x8x128xf32, #tpu.memory_space<vmem>>, vector<1x8x128xf32>
    %377 = vector.shape_cast %376 : vector<1x8x128xf32> to vector<8x128xf32>
    %378 = vector.shape_cast %375 : vector<8x128xf32> to vector<1x8x128xf32>
    tpu.vector_store %arg21[%c1, %c0_89, %c0_90], %378 {strides = array<i32>} : memref<8x8x128xf32, #tpu.memory_space<vmem>>, vector<1x8x128xf32>,
    %cst_91 = arith.constant dense<0.000000e+00> : vector<8x16xf32>
    %379 = tpu.matmul %367, %4, %cst_91 {dimension_numbers = #tpu.dot_dimension_numbers<[1], [0], [0], [1], [0, 0, 1, 1], [], []>} : vector<8x128xf32>, vector<128x16xf32>, vector<8x16xf32> -> vector<8x16xf32>
    %cst_92 = arith.constant dense<0.000000e+00> : vector<8x128xf32>
    %380 = tpu.matmul %379, %12, %cst_92 {dimension_numbers = #tpu.dot_dimension_numbers<[1], [0], [0], [1], [0, 0, 1, 1], [], []>} : vector<8x16xf32>, vector<16x128xf32>, vector<8x128xf32> -> vector<8x128xf32>
    %cst_93 = arith.constant dense<0.000000e+00> : vector<8x128xf32>
    %381 = tpu.matmul %352, %13, %cst_93 {dimension_numbers = #tpu.dot_dimension_numbers<[1], [0], [0], [1], [0, 0, 1, 1], [], []>} : vector<8x128xf32>, vector<128x128xf32>, vector<8x128xf32> -> vector<8x128xf32>
    %382 = arith.addf %380, %381 : vector<8x128xf32>
    %383 = vector.broadcast %14 : vector<1x128xf32> to vector<8x128xf32>
    %384 = arith.addf %382, %383 : vector<8x128xf32>
    %cst_94 = arith.constant 0.000000e+00 : f32
    %385 = vector.broadcast %cst_94 : f32 to vector<8x128xf32>
    %386 = arith.maximumf %384, %385 : vector<8x128xf32>
    %387 = vector.broadcast %15 : vector<1x128xf32> to vector<8x128xf32>
    %388 = arith.mulf %386, %387 : vector<8x128xf32>
    %cst_95 = arith.constant dense<0.000000e+00> : vector<8xf32>
    %389 = vector.multi_reduction <add>, %388, %cst_95 [1] : vector<8x128xf32> to vector<8xf32>
    %390 = vector.shape_cast %389 : vector<8xf32> to vector<8x1xf32>
    %391 = vector.broadcast %16 : vector<1x1xf32> to vector<8x1xf32>
    %392 = arith.addf %390, %391 : vector<8x1xf32>
    %393 = arith.negf %392 : vector<8x1xf32>
    %394 = math.exp %393 : vector<8x1xf32>
    %cst_96 = arith.constant 1.000000e+00 : f32
    %395 = vector.broadcast %cst_96 : f32 to vector<8x1xf32>
    %396 = arith.addf %395, %394 : vector<8x1xf32>
    %397 = arith.divf %395, %396 : vector<8x1xf32>
    %c1_i32_97 = arith.constant 1 : i32
    %398 = vector.broadcast %c1_i32_97 : i32 to vector<8x8xi32>
    %399 = arith.cmpi eq, %19, %398 : vector<8x8xi32>
    %cst_98 = arith.constant 0.000000e+00 : f32
    %400 = vector.shape_cast %397 : vector<8x1xf32> to vector<8x1xf32>
    %401 = vector.broadcast %400 : vector<8x1xf32> to vector<8x8xf32>
    %402 = vector.broadcast %cst_98 : f32 to vector<8x8xf32>
    %403 = arith.select %399, %401, %402 : vector<8x8xi1>, vector<8x8xf32>
    %404 = arith.addf %315, %403 : vector<8x8xf32>
    %cst_99 = arith.constant dense<0.000000e+00> : vector<8x16xf32>
    %405 = tpu.matmul %367, %4, %cst_99 {dimension_numbers = #tpu.dot_dimension_numbers<[1], [0], [0], [1], [0, 0, 1, 1], [], []>} : vector<8x128xf32>, vector<128x16xf32>, vector<8x16xf32> -> vector<8x16xf32>
    %cst_100 = arith.constant dense<0.000000e+00> : vector<8x384xf32>
    %406 = tpu.matmul %405, %5, %cst_100 {dimension_numbers = #tpu.dot_dimension_numbers<[1], [0], [0], [1], [0, 0, 1, 1], [], []>} : vector<8x16xf32>, vector<16x384xf32>, vector<8x384xf32> -> vector<8x384xf32>
    %407 = vector.broadcast %397 : vector<8x1xf32> to vector<8x384xf32>
    %408 = vector.broadcast %6 : vector<1x384xf32> to vector<8x384xf32>
    %409 = arith.mulf %407, %408 : vector<8x384xf32>
    %410 = arith.addf %406, %409 : vector<8x384xf32>
    %411 = vector.broadcast %8 : vector<1x384xf32> to vector<8x384xf32>
    %412 = arith.addf %410, %411 : vector<8x384xf32>
    %cst_101 = arith.constant dense<0.000000e+00> : vector<8x384xf32>
    %413 = tpu.matmul %352, %7, %cst_101 {dimension_numbers = #tpu.dot_dimension_numbers<[1], [0], [0], [1], [0, 0, 1, 1], [], []>} : vector<8x128xf32>, vector<128x384xf32>, vector<8x384xf32> -> vector<8x384xf32>
    %414 = vector.broadcast %9 : vector<1x384xf32> to vector<8x384xf32>
    %415 = arith.addf %413, %414 : vector<8x384xf32>
    %416 = vector.extract_strided_slice %412 {offsets = [0, 0], sizes = [8, 128], strides = [1, 1]} : vector<8x384xf32> to vector<8x128xf32>
    %417 = vector.extract_strided_slice %412 {offsets = [0, 128], sizes = [8, 128], strides = [1, 1]} : vector<8x384xf32> to vector<8x128xf32>
    %418 = vector.extract_strided_slice %412 {offsets = [0, 256], sizes = [8, 128], strides = [1, 1]} : vector<8x384xf32> to vector<8x128xf32>
    %419 = vector.extract_strided_slice %415 {offsets = [0, 0], sizes = [8, 128], strides = [1, 1]} : vector<8x384xf32> to vector<8x128xf32>
    %420 = vector.extract_strided_slice %415 {offsets = [0, 128], sizes = [8, 128], strides = [1, 1]} : vector<8x384xf32> to vector<8x128xf32>
    %421 = vector.extract_strided_slice %415 {offsets = [0, 256], sizes = [8, 128], strides = [1, 1]} : vector<8x384xf32> to vector<8x128xf32>
    %422 = arith.addf %416, %419 : vector<8x128xf32>
    %423 = arith.negf %422 : vector<8x128xf32>
    %424 = math.exp %423 : vector<8x128xf32>
    %cst_102 = arith.constant 1.000000e+00 : f32
    %425 = vector.broadcast %cst_102 : f32 to vector<8x128xf32>
    %426 = arith.addf %425, %424 : vector<8x128xf32>
    %427 = arith.divf %425, %426 : vector<8x128xf32>
    %428 = arith.addf %417, %420 : vector<8x128xf32>
    %429 = arith.negf %428 : vector<8x128xf32>
    %430 = math.exp %429 : vector<8x128xf32>
    %cst_103 = arith.constant 1.000000e+00 : f32
    %431 = vector.broadcast %cst_103 : f32 to vector<8x128xf32>
    %432 = arith.addf %431, %430 : vector<8x128xf32>
    %433 = arith.divf %431, %432 : vector<8x128xf32>
    %434 = arith.mulf %427, %421 : vector<8x128xf32>
    %435 = arith.addf %418, %434 : vector<8x128xf32>
    %436 = math.tanh %435 : vector<8x128xf32>
    %cst_104 = arith.constant 1.000000e+00 : f32
    %437 = vector.broadcast %cst_104 : f32 to vector<8x128xf32>
    %438 = arith.subf %437, %433 : vector<8x128xf32>
    %439 = arith.mulf %438, %436 : vector<8x128xf32>
    %440 = arith.mulf %433, %352 : vector<8x128xf32>
    %441 = arith.addf %439, %440 : vector<8x128xf32>
    %cst_105 = arith.constant dense<0.000000e+00> : vector<8x128xf32>
    %442 = tpu.matmul %441, %10, %cst_105 {dimension_numbers = #tpu.dot_dimension_numbers<[1], [0], [0], [1], [0, 0, 1, 1], [], []>} : vector<8x128xf32>, vector<128x128xf32>, vector<8x128xf32> -> vector<8x128xf32>
    %443 = vector.broadcast %11 : vector<1x128xf32> to vector<8x128xf32>
    %444 = arith.addf %442, %443 : vector<8x128xf32>
    %cst_106 = arith.constant dense<0xFF800000> : vector<8xf32>
    %445 = vector.multi_reduction <maximumf>, %444, %cst_106 [1] : vector<8x128xf32> to vector<8xf32>
    %446 = vector.shape_cast %445 : vector<8xf32> to vector<8x1xf32>
    %447 = vector.broadcast %446 : vector<8x1xf32> to vector<8x128xf32>
    %448 = arith.cmpf oeq, %444, %447 : vector<8x128xf32>
    %c128_i32_107 = arith.constant 128 : i32
    %449 = vector.broadcast %c128_i32_107 : i32 to vector<8x128xi32>
    %450 = arith.select %448, %18, %449 : vector<8x128xi1>, vector<8x128xi32>
    %cst_108 = arith.constant dense<2147483647> : vector<8xi32>
    %451 = vector.multi_reduction <minsi>, %450, %cst_108 [1] : vector<8x128xi32> to vector<8xi32>
    %452 = vector.shape_cast %451 : vector<8xi32> to vector<8x1xi32>
    %453 = vector.broadcast %452 : vector<8x1xi32> to vector<8x128xi32>
    %454 = arith.cmpi eq, %18, %453 : vector<8x128xi32>
    %455 = arith.extui %454 : vector<8x128xi1> to vector<8x128xi32>
    %456 = arith.sitofp %455 : vector<8x128xi32> to vector<8x128xf32>
    %457 = vector.broadcast %446 : vector<8x1xf32> to vector<8x128xf32>
    %458 = arith.subf %444, %457 : vector<8x128xf32>
    %459 = math.exp %458 : vector<8x128xf32>
    %cst_109 = arith.constant dense<0.000000e+00> : vector<8xf32>
    %460 = vector.multi_reduction <add>, %459, %cst_109 [1] : vector<8x128xf32> to vector<8xf32>
    %461 = vector.shape_cast %460 : vector<8xf32> to vector<8x1xf32>
    %462 = math.log %461 : vector<8x1xf32>
    %463 = vector.broadcast %462 : vector<8x1xf32> to vector<8x128xf32>
    %464 = arith.subf %458, %463 : vector<8x128xf32>
    %c2 = arith.constant 2 : index
    %c0_110 = arith.constant 0 : index
    %c0_111 = arith.constant 0 : index
    %465 = vector.load %arg21[%c2, %c0_110, %c0_111] : memref<8x8x128xf32, #tpu.memory_space<vmem>>, vector<1x8x128xf32>
    %466 = vector.shape_cast %465 : vector<1x8x128xf32> to vector<8x128xf32>
    %467 = vector.shape_cast %464 : vector<8x128xf32> to vector<1x8x128xf32>
    tpu.vector_store %arg21[%c2, %c0_110, %c0_111], %467 {strides = array<i32>} : memref<8x8x128xf32, #tpu.memory_space<vmem>>, vector<1x8x128xf32>,
    %cst_112 = arith.constant dense<0.000000e+00> : vector<8x16xf32>
    %468 = tpu.matmul %456, %4, %cst_112 {dimension_numbers = #tpu.dot_dimension_numbers<[1], [0], [0], [1], [0, 0, 1, 1], [], []>} : vector<8x128xf32>, vector<128x16xf32>, vector<8x16xf32> -> vector<8x16xf32>
    %cst_113 = arith.constant dense<0.000000e+00> : vector<8x128xf32>
    %469 = tpu.matmul %468, %12, %cst_113 {dimension_numbers = #tpu.dot_dimension_numbers<[1], [0], [0], [1], [0, 0, 1, 1], [], []>} : vector<8x16xf32>, vector<16x128xf32>, vector<8x128xf32> -> vector<8x128xf32>
    %cst_114 = arith.constant dense<0.000000e+00> : vector<8x128xf32>
    %470 = tpu.matmul %441, %13, %cst_114 {dimension_numbers = #tpu.dot_dimension_numbers<[1], [0], [0], [1], [0, 0, 1, 1], [], []>} : vector<8x128xf32>, vector<128x128xf32>, vector<8x128xf32> -> vector<8x128xf32>
    %471 = arith.addf %469, %470 : vector<8x128xf32>
    %472 = vector.broadcast %14 : vector<1x128xf32> to vector<8x128xf32>
    %473 = arith.addf %471, %472 : vector<8x128xf32>
    %cst_115 = arith.constant 0.000000e+00 : f32
    %474 = vector.broadcast %cst_115 : f32 to vector<8x128xf32>
    %475 = arith.maximumf %473, %474 : vector<8x128xf32>
    %476 = vector.broadcast %15 : vector<1x128xf32> to vector<8x128xf32>
    %477 = arith.mulf %475, %476 : vector<8x128xf32>
    %cst_116 = arith.constant dense<0.000000e+00> : vector<8xf32>
    %478 = vector.multi_reduction <add>, %477, %cst_116 [1] : vector<8x128xf32> to vector<8xf32>
    %479 = vector.shape_cast %478 : vector<8xf32> to vector<8x1xf32>
    %480 = vector.broadcast %16 : vector<1x1xf32> to vector<8x1xf32>
    %481 = arith.addf %479, %480 : vector<8x1xf32>
    %482 = arith.negf %481 : vector<8x1xf32>
    %483 = math.exp %482 : vector<8x1xf32>
    %cst_117 = arith.constant 1.000000e+00 : f32
    %484 = vector.broadcast %cst_117 : f32 to vector<8x1xf32>
    %485 = arith.addf %484, %483 : vector<8x1xf32>
    %486 = arith.divf %484, %485 : vector<8x1xf32>
    %c2_i32_118 = arith.constant 2 : i32
    %487 = vector.broadcast %c2_i32_118 : i32 to vector<8x8xi32>
    %488 = arith.cmpi eq, %19, %487 : vector<8x8xi32>
    %cst_119 = arith.constant 0.000000e+00 : f32
    %489 = vector.shape_cast %486 : vector<8x1xf32> to vector<8x1xf32>
    %490 = vector.broadcast %489 : vector<8x1xf32> to vector<8x8xf32>
    %491 = vector.broadcast %cst_119 : f32 to vector<8x8xf32>
    %492 = arith.select %488, %490, %491 : vector<8x8xi1>, vector<8x8xf32>
    %493 = arith.addf %404, %492 : vector<8x8xf32>
    %cst_120 = arith.constant dense<0.000000e+00> : vector<8x16xf32>
    %494 = tpu.matmul %456, %4, %cst_120 {dimension_numbers = #tpu.dot_dimension_numbers<[1], [0], [0], [1], [0, 0, 1, 1], [], []>} : vector<8x128xf32>, vector<128x16xf32>, vector<8x16xf32> -> vector<8x16xf32>
    %cst_121 = arith.constant dense<0.000000e+00> : vector<8x384xf32>
    %495 = tpu.matmul %494, %5, %cst_121 {dimension_numbers = #tpu.dot_dimension_numbers<[1], [0], [0], [1], [0, 0, 1, 1], [], []>} : vector<8x16xf32>, vector<16x384xf32>, vector<8x384xf32> -> vector<8x384xf32>
    %496 = vector.broadcast %486 : vector<8x1xf32> to vector<8x384xf32>
    %497 = vector.broadcast %6 : vector<1x384xf32> to vector<8x384xf32>
    %498 = arith.mulf %496, %497 : vector<8x384xf32>
    %499 = arith.addf %495, %498 : vector<8x384xf32>
    %500 = vector.broadcast %8 : vector<1x384xf32> to vector<8x384xf32>
    %501 = arith.addf %499, %500 : vector<8x384xf32>
    %cst_122 = arith.constant dense<0.000000e+00> : vector<8x384xf32>
    %502 = tpu.matmul %441, %7, %cst_122 {dimension_numbers = #tpu.dot_dimension_numbers<[1], [0], [0], [1], [0, 0, 1, 1], [], []>} : vector<8x128xf32>, vector<128x384xf32>, vector<8x384xf32> -> vector<8x384xf32>
    %503 = vector.broadcast %9 : vector<1x384xf32> to vector<8x384xf32>
    %504 = arith.addf %502, %503 : vector<8x384xf32>
    %505 = vector.extract_strided_slice %501 {offsets = [0, 0], sizes = [8, 128], strides = [1, 1]} : vector<8x384xf32> to vector<8x128xf32>
    %506 = vector.extract_strided_slice %501 {offsets = [0, 128], sizes = [8, 128], strides = [1, 1]} : vector<8x384xf32> to vector<8x128xf32>
    %507 = vector.extract_strided_slice %501 {offsets = [0, 256], sizes = [8, 128], strides = [1, 1]} : vector<8x384xf32> to vector<8x128xf32>
    %508 = vector.extract_strided_slice %504 {offsets = [0, 0], sizes = [8, 128], strides = [1, 1]} : vector<8x384xf32> to vector<8x128xf32>
    %509 = vector.extract_strided_slice %504 {offsets = [0, 128], sizes = [8, 128], strides = [1, 1]} : vector<8x384xf32> to vector<8x128xf32>
    %510 = vector.extract_strided_slice %504 {offsets = [0, 256], sizes = [8, 128], strides = [1, 1]} : vector<8x384xf32> to vector<8x128xf32>
    %511 = arith.addf %505, %508 : vector<8x128xf32>
    %512 = arith.negf %511 : vector<8x128xf32>
    %513 = math.exp %512 : vector<8x128xf32>
    %cst_123 = arith.constant 1.000000e+00 : f32
    %514 = vector.broadcast %cst_123 : f32 to vector<8x128xf32>
    %515 = arith.addf %514, %513 : vector<8x128xf32>
    %516 = arith.divf %514, %515 : vector<8x128xf32>
    %517 = arith.addf %506, %509 : vector<8x128xf32>
    %518 = arith.negf %517 : vector<8x128xf32>
    %519 = math.exp %518 : vector<8x128xf32>
    %cst_124 = arith.constant 1.000000e+00 : f32
    %520 = vector.broadcast %cst_124 : f32 to vector<8x128xf32>
    %521 = arith.addf %520, %519 : vector<8x128xf32>
    %522 = arith.divf %520, %521 : vector<8x128xf32>
    %523 = arith.mulf %516, %510 : vector<8x128xf32>
    %524 = arith.addf %507, %523 : vector<8x128xf32>
    %525 = math.tanh %524 : vector<8x128xf32>
    %cst_125 = arith.constant 1.000000e+00 : f32
    %526 = vector.broadcast %cst_125 : f32 to vector<8x128xf32>
    %527 = arith.subf %526, %522 : vector<8x128xf32>
    %528 = arith.mulf %527, %525 : vector<8x128xf32>
    %529 = arith.mulf %522, %441 : vector<8x128xf32>
    %530 = arith.addf %528, %529 : vector<8x128xf32>
    %cst_126 = arith.constant dense<0.000000e+00> : vector<8x128xf32>
    %531 = tpu.matmul %530, %10, %cst_126 {dimension_numbers = #tpu.dot_dimension_numbers<[1], [0], [0], [1], [0, 0, 1, 1], [], []>} : vector<8x128xf32>, vector<128x128xf32>, vector<8x128xf32> -> vector<8x128xf32>
    %532 = vector.broadcast %11 : vector<1x128xf32> to vector<8x128xf32>
    %533 = arith.addf %531, %532 : vector<8x128xf32>
    %cst_127 = arith.constant dense<0xFF800000> : vector<8xf32>
    %534 = vector.multi_reduction <maximumf>, %533, %cst_127 [1] : vector<8x128xf32> to vector<8xf32>
    %535 = vector.shape_cast %534 : vector<8xf32> to vector<8x1xf32>
    %536 = vector.broadcast %535 : vector<8x1xf32> to vector<8x128xf32>
    %537 = arith.cmpf oeq, %533, %536 : vector<8x128xf32>
    %c128_i32_128 = arith.constant 128 : i32
    %538 = vector.broadcast %c128_i32_128 : i32 to vector<8x128xi32>
    %539 = arith.select %537, %18, %538 : vector<8x128xi1>, vector<8x128xi32>
    %cst_129 = arith.constant dense<2147483647> : vector<8xi32>
    %540 = vector.multi_reduction <minsi>, %539, %cst_129 [1] : vector<8x128xi32> to vector<8xi32>
    %541 = vector.shape_cast %540 : vector<8xi32> to vector<8x1xi32>
    %542 = vector.broadcast %541 : vector<8x1xi32> to vector<8x128xi32>
    %543 = arith.cmpi eq, %18, %542 : vector<8x128xi32>
    %544 = arith.extui %543 : vector<8x128xi1> to vector<8x128xi32>
    %545 = arith.sitofp %544 : vector<8x128xi32> to vector<8x128xf32>
    %546 = vector.broadcast %535 : vector<8x1xf32> to vector<8x128xf32>
    %547 = arith.subf %533, %546 : vector<8x128xf32>
    %548 = math.exp %547 : vector<8x128xf32>
    %cst_130 = arith.constant dense<0.000000e+00> : vector<8xf32>
    %549 = vector.multi_reduction <add>, %548, %cst_130 [1] : vector<8x128xf32> to vector<8xf32>
    %550 = vector.shape_cast %549 : vector<8xf32> to vector<8x1xf32>
    %551 = math.log %550 : vector<8x1xf32>
    %552 = vector.broadcast %551 : vector<8x1xf32> to vector<8x128xf32>
    %553 = arith.subf %547, %552 : vector<8x128xf32>
    %c3 = arith.constant 3 : index
    %c0_131 = arith.constant 0 : index
    %c0_132 = arith.constant 0 : index
    %554 = vector.load %arg21[%c3, %c0_131, %c0_132] : memref<8x8x128xf32, #tpu.memory_space<vmem>>, vector<1x8x128xf32>
    %555 = vector.shape_cast %554 : vector<1x8x128xf32> to vector<8x128xf32>
    %556 = vector.shape_cast %553 : vector<8x128xf32> to vector<1x8x128xf32>
    tpu.vector_store %arg21[%c3, %c0_131, %c0_132], %556 {strides = array<i32>} : memref<8x8x128xf32, #tpu.memory_space<vmem>>, vector<1x8x128xf32>,
    %cst_133 = arith.constant dense<0.000000e+00> : vector<8x16xf32>
    %557 = tpu.matmul %545, %4, %cst_133 {dimension_numbers = #tpu.dot_dimension_numbers<[1], [0], [0], [1], [0, 0, 1, 1], [], []>} : vector<8x128xf32>, vector<128x16xf32>, vector<8x16xf32> -> vector<8x16xf32>
    %cst_134 = arith.constant dense<0.000000e+00> : vector<8x128xf32>
    %558 = tpu.matmul %557, %12, %cst_134 {dimension_numbers = #tpu.dot_dimension_numbers<[1], [0], [0], [1], [0, 0, 1, 1], [], []>} : vector<8x16xf32>, vector<16x128xf32>, vector<8x128xf32> -> vector<8x128xf32>
    %cst_135 = arith.constant dense<0.000000e+00> : vector<8x128xf32>
    %559 = tpu.matmul %530, %13, %cst_135 {dimension_numbers = #tpu.dot_dimension_numbers<[1], [0], [0], [1], [0, 0, 1, 1], [], []>} : vector<8x128xf32>, vector<128x128xf32>, vector<8x128xf32> -> vector<8x128xf32>
    %560 = arith.addf %558, %559 : vector<8x128xf32>
    %561 = vector.broadcast %14 : vector<1x128xf32> to vector<8x128xf32>
    %562 = arith.addf %560, %561 : vector<8x128xf32>
    %cst_136 = arith.constant 0.000000e+00 : f32
    %563 = vector.broadcast %cst_136 : f32 to vector<8x128xf32>
    %564 = arith.maximumf %562, %563 : vector<8x128xf32>
    %565 = vector.broadcast %15 : vector<1x128xf32> to vector<8x128xf32>
    %566 = arith.mulf %564, %565 : vector<8x128xf32>
    %cst_137 = arith.constant dense<0.000000e+00> : vector<8xf32>
    %567 = vector.multi_reduction <add>, %566, %cst_137 [1] : vector<8x128xf32> to vector<8xf32>
    %568 = vector.shape_cast %567 : vector<8xf32> to vector<8x1xf32>
    %569 = vector.broadcast %16 : vector<1x1xf32> to vector<8x1xf32>
    %570 = arith.addf %568, %569 : vector<8x1xf32>
    %571 = arith.negf %570 : vector<8x1xf32>
    %572 = math.exp %571 : vector<8x1xf32>
    %cst_138 = arith.constant 1.000000e+00 : f32
    %573 = vector.broadcast %cst_138 : f32 to vector<8x1xf32>
    %574 = arith.addf %573, %572 : vector<8x1xf32>
    %575 = arith.divf %573, %574 : vector<8x1xf32>
    %c3_i32_139 = arith.constant 3 : i32
    %576 = vector.broadcast %c3_i32_139 : i32 to vector<8x8xi32>
    %577 = arith.cmpi eq, %19, %576 : vector<8x8xi32>
    %cst_140 = arith.constant 0.000000e+00 : f32
    %578 = vector.shape_cast %575 : vector<8x1xf32> to vector<8x1xf32>
    %579 = vector.broadcast %578 : vector<8x1xf32> to vector<8x8xf32>
    %580 = vector.broadcast %cst_140 : f32 to vector<8x8xf32>
    %581 = arith.select %577, %579, %580 : vector<8x8xi1>, vector<8x8xf32>
    %582 = arith.addf %493, %581 : vector<8x8xf32>
    %cst_141 = arith.constant dense<0.000000e+00> : vector<8x16xf32>
    %583 = tpu.matmul %545, %4, %cst_141 {dimension_numbers = #tpu.dot_dimension_numbers<[1], [0], [0], [1], [0, 0, 1, 1], [], []>} : vector<8x128xf32>, vector<128x16xf32>, vector<8x16xf32> -> vector<8x16xf32>
    %cst_142 = arith.constant dense<0.000000e+00> : vector<8x384xf32>
    %584 = tpu.matmul %583, %5, %cst_142 {dimension_numbers = #tpu.dot_dimension_numbers<[1], [0], [0], [1], [0, 0, 1, 1], [], []>} : vector<8x16xf32>, vector<16x384xf32>, vector<8x384xf32> -> vector<8x384xf32>
    %585 = vector.broadcast %575 : vector<8x1xf32> to vector<8x384xf32>
    %586 = vector.broadcast %6 : vector<1x384xf32> to vector<8x384xf32>
    %587 = arith.mulf %585, %586 : vector<8x384xf32>
    %588 = arith.addf %584, %587 : vector<8x384xf32>
    %589 = vector.broadcast %8 : vector<1x384xf32> to vector<8x384xf32>
    %590 = arith.addf %588, %589 : vector<8x384xf32>
    %cst_143 = arith.constant dense<0.000000e+00> : vector<8x384xf32>
    %591 = tpu.matmul %530, %7, %cst_143 {dimension_numbers = #tpu.dot_dimension_numbers<[1], [0], [0], [1], [0, 0, 1, 1], [], []>} : vector<8x128xf32>, vector<128x384xf32>, vector<8x384xf32> -> vector<8x384xf32>
    %592 = vector.broadcast %9 : vector<1x384xf32> to vector<8x384xf32>
    %593 = arith.addf %591, %592 : vector<8x384xf32>
    %594 = vector.extract_strided_slice %590 {offsets = [0, 0], sizes = [8, 128], strides = [1, 1]} : vector<8x384xf32> to vector<8x128xf32>
    %595 = vector.extract_strided_slice %590 {offsets = [0, 128], sizes = [8, 128], strides = [1, 1]} : vector<8x384xf32> to vector<8x128xf32>
    %596 = vector.extract_strided_slice %590 {offsets = [0, 256], sizes = [8, 128], strides = [1, 1]} : vector<8x384xf32> to vector<8x128xf32>
    %597 = vector.extract_strided_slice %593 {offsets = [0, 0], sizes = [8, 128], strides = [1, 1]} : vector<8x384xf32> to vector<8x128xf32>
    %598 = vector.extract_strided_slice %593 {offsets = [0, 128], sizes = [8, 128], strides = [1, 1]} : vector<8x384xf32> to vector<8x128xf32>
    %599 = vector.extract_strided_slice %593 {offsets = [0, 256], sizes = [8, 128], strides = [1, 1]} : vector<8x384xf32> to vector<8x128xf32>
    %600 = arith.addf %594, %597 : vector<8x128xf32>
    %601 = arith.negf %600 : vector<8x128xf32>
    %602 = math.exp %601 : vector<8x128xf32>
    %cst_144 = arith.constant 1.000000e+00 : f32
    %603 = vector.broadcast %cst_144 : f32 to vector<8x128xf32>
    %604 = arith.addf %603, %602 : vector<8x128xf32>
    %605 = arith.divf %603, %604 : vector<8x128xf32>
    %606 = arith.addf %595, %598 : vector<8x128xf32>
    %607 = arith.negf %606 : vector<8x128xf32>
    %608 = math.exp %607 : vector<8x128xf32>
    %cst_145 = arith.constant 1.000000e+00 : f32
    %609 = vector.broadcast %cst_145 : f32 to vector<8x128xf32>
    %610 = arith.addf %609, %608 : vector<8x128xf32>
    %611 = arith.divf %609, %610 : vector<8x128xf32>
    %612 = arith.mulf %605, %599 : vector<8x128xf32>
    %613 = arith.addf %596, %612 : vector<8x128xf32>
    %614 = math.tanh %613 : vector<8x128xf32>
    %cst_146 = arith.constant 1.000000e+00 : f32
    %615 = vector.broadcast %cst_146 : f32 to vector<8x128xf32>
    %616 = arith.subf %615, %611 : vector<8x128xf32>
    %617 = arith.mulf %616, %614 : vector<8x128xf32>
    %618 = arith.mulf %611, %530 : vector<8x128xf32>
    %619 = arith.addf %617, %618 : vector<8x128xf32>
    %cst_147 = arith.constant dense<0.000000e+00> : vector<8x128xf32>
    %620 = tpu.matmul %619, %10, %cst_147 {dimension_numbers = #tpu.dot_dimension_numbers<[1], [0], [0], [1], [0, 0, 1, 1], [], []>} : vector<8x128xf32>, vector<128x128xf32>, vector<8x128xf32> -> vector<8x128xf32>
    %621 = vector.broadcast %11 : vector<1x128xf32> to vector<8x128xf32>
    %622 = arith.addf %620, %621 : vector<8x128xf32>
    %cst_148 = arith.constant dense<0xFF800000> : vector<8xf32>
    %623 = vector.multi_reduction <maximumf>, %622, %cst_148 [1] : vector<8x128xf32> to vector<8xf32>
    %624 = vector.shape_cast %623 : vector<8xf32> to vector<8x1xf32>
    %625 = vector.broadcast %624 : vector<8x1xf32> to vector<8x128xf32>
    %626 = arith.cmpf oeq, %622, %625 : vector<8x128xf32>
    %c128_i32_149 = arith.constant 128 : i32
    %627 = vector.broadcast %c128_i32_149 : i32 to vector<8x128xi32>
    %628 = arith.select %626, %18, %627 : vector<8x128xi1>, vector<8x128xi32>
    %cst_150 = arith.constant dense<2147483647> : vector<8xi32>
    %629 = vector.multi_reduction <minsi>, %628, %cst_150 [1] : vector<8x128xi32> to vector<8xi32>
    %630 = vector.shape_cast %629 : vector<8xi32> to vector<8x1xi32>
    %631 = vector.broadcast %630 : vector<8x1xi32> to vector<8x128xi32>
    %632 = arith.cmpi eq, %18, %631 : vector<8x128xi32>
    %633 = arith.extui %632 : vector<8x128xi1> to vector<8x128xi32>
    %634 = arith.sitofp %633 : vector<8x128xi32> to vector<8x128xf32>
    %635 = vector.broadcast %624 : vector<8x1xf32> to vector<8x128xf32>
    %636 = arith.subf %622, %635 : vector<8x128xf32>
    %637 = math.exp %636 : vector<8x128xf32>
    %cst_151 = arith.constant dense<0.000000e+00> : vector<8xf32>
    %638 = vector.multi_reduction <add>, %637, %cst_151 [1] : vector<8x128xf32> to vector<8xf32>
    %639 = vector.shape_cast %638 : vector<8xf32> to vector<8x1xf32>
    %640 = math.log %639 : vector<8x1xf32>
    %641 = vector.broadcast %640 : vector<8x1xf32> to vector<8x128xf32>
    %642 = arith.subf %636, %641 : vector<8x128xf32>
    %c4 = arith.constant 4 : index
    %c0_152 = arith.constant 0 : index
    %c0_153 = arith.constant 0 : index
    %643 = vector.load %arg21[%c4, %c0_152, %c0_153] : memref<8x8x128xf32, #tpu.memory_space<vmem>>, vector<1x8x128xf32>
    %644 = vector.shape_cast %643 : vector<1x8x128xf32> to vector<8x128xf32>
    %645 = vector.shape_cast %642 : vector<8x128xf32> to vector<1x8x128xf32>
    tpu.vector_store %arg21[%c4, %c0_152, %c0_153], %645 {strides = array<i32>} : memref<8x8x128xf32, #tpu.memory_space<vmem>>, vector<1x8x128xf32>,
    %cst_154 = arith.constant dense<0.000000e+00> : vector<8x16xf32>
    %646 = tpu.matmul %634, %4, %cst_154 {dimension_numbers = #tpu.dot_dimension_numbers<[1], [0], [0], [1], [0, 0, 1, 1], [], []>} : vector<8x128xf32>, vector<128x16xf32>, vector<8x16xf32> -> vector<8x16xf32>
    %cst_155 = arith.constant dense<0.000000e+00> : vector<8x128xf32>
    %647 = tpu.matmul %646, %12, %cst_155 {dimension_numbers = #tpu.dot_dimension_numbers<[1], [0], [0], [1], [0, 0, 1, 1], [], []>} : vector<8x16xf32>, vector<16x128xf32>, vector<8x128xf32> -> vector<8x128xf32>
    %cst_156 = arith.constant dense<0.000000e+00> : vector<8x128xf32>
    %648 = tpu.matmul %619, %13, %cst_156 {dimension_numbers = #tpu.dot_dimension_numbers<[1], [0], [0], [1], [0, 0, 1, 1], [], []>} : vector<8x128xf32>, vector<128x128xf32>, vector<8x128xf32> -> vector<8x128xf32>
    %649 = arith.addf %647, %648 : vector<8x128xf32>
    %650 = vector.broadcast %14 : vector<1x128xf32> to vector<8x128xf32>
    %651 = arith.addf %649, %650 : vector<8x128xf32>
    %cst_157 = arith.constant 0.000000e+00 : f32
    %652 = vector.broadcast %cst_157 : f32 to vector<8x128xf32>
    %653 = arith.maximumf %651, %652 : vector<8x128xf32>
    %654 = vector.broadcast %15 : vector<1x128xf32> to vector<8x128xf32>
    %655 = arith.mulf %653, %654 : vector<8x128xf32>
    %cst_158 = arith.constant dense<0.000000e+00> : vector<8xf32>
    %656 = vector.multi_reduction <add>, %655, %cst_158 [1] : vector<8x128xf32> to vector<8xf32>
    %657 = vector.shape_cast %656 : vector<8xf32> to vector<8x1xf32>
    %658 = vector.broadcast %16 : vector<1x1xf32> to vector<8x1xf32>
    %659 = arith.addf %657, %658 : vector<8x1xf32>
    %660 = arith.negf %659 : vector<8x1xf32>
    %661 = math.exp %660 : vector<8x1xf32>
    %cst_159 = arith.constant 1.000000e+00 : f32
    %662 = vector.broadcast %cst_159 : f32 to vector<8x1xf32>
    %663 = arith.addf %662, %661 : vector<8x1xf32>
    %664 = arith.divf %662, %663 : vector<8x1xf32>
    %c4_i32_160 = arith.constant 4 : i32
    %665 = vector.broadcast %c4_i32_160 : i32 to vector<8x8xi32>
    %666 = arith.cmpi eq, %19, %665 : vector<8x8xi32>
    %cst_161 = arith.constant 0.000000e+00 : f32
    %667 = vector.shape_cast %664 : vector<8x1xf32> to vector<8x1xf32>
    %668 = vector.broadcast %667 : vector<8x1xf32> to vector<8x8xf32>
    %669 = vector.broadcast %cst_161 : f32 to vector<8x8xf32>
    %670 = arith.select %666, %668, %669 : vector<8x8xi1>, vector<8x8xf32>
    %671 = arith.addf %582, %670 : vector<8x8xf32>
    %cst_162 = arith.constant dense<0.000000e+00> : vector<8x16xf32>
    %672 = tpu.matmul %634, %4, %cst_162 {dimension_numbers = #tpu.dot_dimension_numbers<[1], [0], [0], [1], [0, 0, 1, 1], [], []>} : vector<8x128xf32>, vector<128x16xf32>, vector<8x16xf32> -> vector<8x16xf32>
    %cst_163 = arith.constant dense<0.000000e+00> : vector<8x384xf32>
    %673 = tpu.matmul %672, %5, %cst_163 {dimension_numbers = #tpu.dot_dimension_numbers<[1], [0], [0], [1], [0, 0, 1, 1], [], []>} : vector<8x16xf32>, vector<16x384xf32>, vector<8x384xf32> -> vector<8x384xf32>
    %674 = vector.broadcast %664 : vector<8x1xf32> to vector<8x384xf32>
    %675 = vector.broadcast %6 : vector<1x384xf32> to vector<8x384xf32>
    %676 = arith.mulf %674, %675 : vector<8x384xf32>
    %677 = arith.addf %673, %676 : vector<8x384xf32>
    %678 = vector.broadcast %8 : vector<1x384xf32> to vector<8x384xf32>
    %679 = arith.addf %677, %678 : vector<8x384xf32>
    %cst_164 = arith.constant dense<0.000000e+00> : vector<8x384xf32>
    %680 = tpu.matmul %619, %7, %cst_164 {dimension_numbers = #tpu.dot_dimension_numbers<[1], [0], [0], [1], [0, 0, 1, 1], [], []>} : vector<8x128xf32>, vector<128x384xf32>, vector<8x384xf32> -> vector<8x384xf32>
    %681 = vector.broadcast %9 : vector<1x384xf32> to vector<8x384xf32>
    %682 = arith.addf %680, %681 : vector<8x384xf32>
    %683 = vector.extract_strided_slice %679 {offsets = [0, 0], sizes = [8, 128], strides = [1, 1]} : vector<8x384xf32> to vector<8x128xf32>
    %684 = vector.extract_strided_slice %679 {offsets = [0, 128], sizes = [8, 128], strides = [1, 1]} : vector<8x384xf32> to vector<8x128xf32>
    %685 = vector.extract_strided_slice %679 {offsets = [0, 256], sizes = [8, 128], strides = [1, 1]} : vector<8x384xf32> to vector<8x128xf32>
    %686 = vector.extract_strided_slice %682 {offsets = [0, 0], sizes = [8, 128], strides = [1, 1]} : vector<8x384xf32> to vector<8x128xf32>
    %687 = vector.extract_strided_slice %682 {offsets = [0, 128], sizes = [8, 128], strides = [1, 1]} : vector<8x384xf32> to vector<8x128xf32>
    %688 = vector.extract_strided_slice %682 {offsets = [0, 256], sizes = [8, 128], strides = [1, 1]} : vector<8x384xf32> to vector<8x128xf32>
    %689 = arith.addf %683, %686 : vector<8x128xf32>
    %690 = arith.negf %689 : vector<8x128xf32>
    %691 = math.exp %690 : vector<8x128xf32>
    %cst_165 = arith.constant 1.000000e+00 : f32
    %692 = vector.broadcast %cst_165 : f32 to vector<8x128xf32>
    %693 = arith.addf %692, %691 : vector<8x128xf32>
    %694 = arith.divf %692, %693 : vector<8x128xf32>
    %695 = arith.addf %684, %687 : vector<8x128xf32>
    %696 = arith.negf %695 : vector<8x128xf32>
    %697 = math.exp %696 : vector<8x128xf32>
    %cst_166 = arith.constant 1.000000e+00 : f32
    %698 = vector.broadcast %cst_166 : f32 to vector<8x128xf32>
    %699 = arith.addf %698, %697 : vector<8x128xf32>
    %700 = arith.divf %698, %699 : vector<8x128xf32>
    %701 = arith.mulf %694, %688 : vector<8x128xf32>
    %702 = arith.addf %685, %701 : vector<8x128xf32>
    %703 = math.tanh %702 : vector<8x128xf32>
    %cst_167 = arith.constant 1.000000e+00 : f32
    %704 = vector.broadcast %cst_167 : f32 to vector<8x128xf32>
    %705 = arith.subf %704, %700 : vector<8x128xf32>
    %706 = arith.mulf %705, %703 : vector<8x128xf32>
    %707 = arith.mulf %700, %619 : vector<8x128xf32>
    %708 = arith.addf %706, %707 : vector<8x128xf32>
    %cst_168 = arith.constant dense<0.000000e+00> : vector<8x128xf32>
    %709 = tpu.matmul %708, %10, %cst_168 {dimension_numbers = #tpu.dot_dimension_numbers<[1], [0], [0], [1], [0, 0, 1, 1], [], []>} : vector<8x128xf32>, vector<128x128xf32>, vector<8x128xf32> -> vector<8x128xf32>
    %710 = vector.broadcast %11 : vector<1x128xf32> to vector<8x128xf32>
    %711 = arith.addf %709, %710 : vector<8x128xf32>
    %cst_169 = arith.constant dense<0xFF800000> : vector<8xf32>
    %712 = vector.multi_reduction <maximumf>, %711, %cst_169 [1] : vector<8x128xf32> to vector<8xf32>
    %713 = vector.shape_cast %712 : vector<8xf32> to vector<8x1xf32>
    %714 = vector.broadcast %713 : vector<8x1xf32> to vector<8x128xf32>
    %715 = arith.cmpf oeq, %711, %714 : vector<8x128xf32>
    %c128_i32_170 = arith.constant 128 : i32
    %716 = vector.broadcast %c128_i32_170 : i32 to vector<8x128xi32>
    %717 = arith.select %715, %18, %716 : vector<8x128xi1>, vector<8x128xi32>
    %cst_171 = arith.constant dense<2147483647> : vector<8xi32>
    %718 = vector.multi_reduction <minsi>, %717, %cst_171 [1] : vector<8x128xi32> to vector<8xi32>
    %719 = vector.shape_cast %718 : vector<8xi32> to vector<8x1xi32>
    %720 = vector.broadcast %719 : vector<8x1xi32> to vector<8x128xi32>
    %721 = arith.cmpi eq, %18, %720 : vector<8x128xi32>
    %722 = arith.extui %721 : vector<8x128xi1> to vector<8x128xi32>
    %723 = arith.sitofp %722 : vector<8x128xi32> to vector<8x128xf32>
    %724 = vector.broadcast %713 : vector<8x1xf32> to vector<8x128xf32>
    %725 = arith.subf %711, %724 : vector<8x128xf32>
    %726 = math.exp %725 : vector<8x128xf32>
    %cst_172 = arith.constant dense<0.000000e+00> : vector<8xf32>
    %727 = vector.multi_reduction <add>, %726, %cst_172 [1] : vector<8x128xf32> to vector<8xf32>
    %728 = vector.shape_cast %727 : vector<8xf32> to vector<8x1xf32>
    %729 = math.log %728 : vector<8x1xf32>
    %730 = vector.broadcast %729 : vector<8x1xf32> to vector<8x128xf32>
    %731 = arith.subf %725, %730 : vector<8x128xf32>
    %c5 = arith.constant 5 : index
    %c0_173 = arith.constant 0 : index
    %c0_174 = arith.constant 0 : index
    %732 = vector.load %arg21[%c5, %c0_173, %c0_174] : memref<8x8x128xf32, #tpu.memory_space<vmem>>, vector<1x8x128xf32>
    %733 = vector.shape_cast %732 : vector<1x8x128xf32> to vector<8x128xf32>
    %734 = vector.shape_cast %731 : vector<8x128xf32> to vector<1x8x128xf32>
    tpu.vector_store %arg21[%c5, %c0_173, %c0_174], %734 {strides = array<i32>} : memref<8x8x128xf32, #tpu.memory_space<vmem>>, vector<1x8x128xf32>,
    %cst_175 = arith.constant dense<0.000000e+00> : vector<8x16xf32>
    %735 = tpu.matmul %723, %4, %cst_175 {dimension_numbers = #tpu.dot_dimension_numbers<[1], [0], [0], [1], [0, 0, 1, 1], [], []>} : vector<8x128xf32>, vector<128x16xf32>, vector<8x16xf32> -> vector<8x16xf32>
    %cst_176 = arith.constant dense<0.000000e+00> : vector<8x128xf32>
    %736 = tpu.matmul %735, %12, %cst_176 {dimension_numbers = #tpu.dot_dimension_numbers<[1], [0], [0], [1], [0, 0, 1, 1], [], []>} : vector<8x16xf32>, vector<16x128xf32>, vector<8x128xf32> -> vector<8x128xf32>
    %cst_177 = arith.constant dense<0.000000e+00> : vector<8x128xf32>
    %737 = tpu.matmul %708, %13, %cst_177 {dimension_numbers = #tpu.dot_dimension_numbers<[1], [0], [0], [1], [0, 0, 1, 1], [], []>} : vector<8x128xf32>, vector<128x128xf32>, vector<8x128xf32> -> vector<8x128xf32>
    %738 = arith.addf %736, %737 : vector<8x128xf32>
    %739 = vector.broadcast %14 : vector<1x128xf32> to vector<8x128xf32>
    %740 = arith.addf %738, %739 : vector<8x128xf32>
    %cst_178 = arith.constant 0.000000e+00 : f32
    %741 = vector.broadcast %cst_178 : f32 to vector<8x128xf32>
    %742 = arith.maximumf %740, %741 : vector<8x128xf32>
    %743 = vector.broadcast %15 : vector<1x128xf32> to vector<8x128xf32>
    %744 = arith.mulf %742, %743 : vector<8x128xf32>
    %cst_179 = arith.constant dense<0.000000e+00> : vector<8xf32>
    %745 = vector.multi_reduction <add>, %744, %cst_179 [1] : vector<8x128xf32> to vector<8xf32>
    %746 = vector.shape_cast %745 : vector<8xf32> to vector<8x1xf32>
    %747 = vector.broadcast %16 : vector<1x1xf32> to vector<8x1xf32>
    %748 = arith.addf %746, %747 : vector<8x1xf32>
    %749 = arith.negf %748 : vector<8x1xf32>
    %750 = math.exp %749 : vector<8x1xf32>
    %cst_180 = arith.constant 1.000000e+00 : f32
    %751 = vector.broadcast %cst_180 : f32 to vector<8x1xf32>
    %752 = arith.addf %751, %750 : vector<8x1xf32>
    %753 = arith.divf %751, %752 : vector<8x1xf32>
    %c5_i32_181 = arith.constant 5 : i32
    %754 = vector.broadcast %c5_i32_181 : i32 to vector<8x8xi32>
    %755 = arith.cmpi eq, %19, %754 : vector<8x8xi32>
    %cst_182 = arith.constant 0.000000e+00 : f32
    %756 = vector.shape_cast %753 : vector<8x1xf32> to vector<8x1xf32>
    %757 = vector.broadcast %756 : vector<8x1xf32> to vector<8x8xf32>
    %758 = vector.broadcast %cst_182 : f32 to vector<8x8xf32>
    %759 = arith.select %755, %757, %758 : vector<8x8xi1>, vector<8x8xf32>
    %760 = arith.addf %671, %759 : vector<8x8xf32>
    %cst_183 = arith.constant dense<0.000000e+00> : vector<8x16xf32>
    %761 = tpu.matmul %723, %4, %cst_183 {dimension_numbers = #tpu.dot_dimension_numbers<[1], [0], [0], [1], [0, 0, 1, 1], [], []>} : vector<8x128xf32>, vector<128x16xf32>, vector<8x16xf32> -> vector<8x16xf32>
    %cst_184 = arith.constant dense<0.000000e+00> : vector<8x384xf32>
    %762 = tpu.matmul %761, %5, %cst_184 {dimension_numbers = #tpu.dot_dimension_numbers<[1], [0], [0], [1], [0, 0, 1, 1], [], []>} : vector<8x16xf32>, vector<16x384xf32>, vector<8x384xf32> -> vector<8x384xf32>
    %763 = vector.broadcast %753 : vector<8x1xf32> to vector<8x384xf32>
    %764 = vector.broadcast %6 : vector<1x384xf32> to vector<8x384xf32>
    %765 = arith.mulf %763, %764 : vector<8x384xf32>
    %766 = arith.addf %762, %765 : vector<8x384xf32>
    %767 = vector.broadcast %8 : vector<1x384xf32> to vector<8x384xf32>
    %768 = arith.addf %766, %767 : vector<8x384xf32>
    %cst_185 = arith.constant dense<0.000000e+00> : vector<8x384xf32>
    %769 = tpu.matmul %708, %7, %cst_185 {dimension_numbers = #tpu.dot_dimension_numbers<[1], [0], [0], [1], [0, 0, 1, 1], [], []>} : vector<8x128xf32>, vector<128x384xf32>, vector<8x384xf32> -> vector<8x384xf32>
    %770 = vector.broadcast %9 : vector<1x384xf32> to vector<8x384xf32>
    %771 = arith.addf %769, %770 : vector<8x384xf32>
    %772 = vector.extract_strided_slice %768 {offsets = [0, 0], sizes = [8, 128], strides = [1, 1]} : vector<8x384xf32> to vector<8x128xf32>
    %773 = vector.extract_strided_slice %768 {offsets = [0, 128], sizes = [8, 128], strides = [1, 1]} : vector<8x384xf32> to vector<8x128xf32>
    %774 = vector.extract_strided_slice %768 {offsets = [0, 256], sizes = [8, 128], strides = [1, 1]} : vector<8x384xf32> to vector<8x128xf32>
    %775 = vector.extract_strided_slice %771 {offsets = [0, 0], sizes = [8, 128], strides = [1, 1]} : vector<8x384xf32> to vector<8x128xf32>
    %776 = vector.extract_strided_slice %771 {offsets = [0, 128], sizes = [8, 128], strides = [1, 1]} : vector<8x384xf32> to vector<8x128xf32>
    %777 = vector.extract_strided_slice %771 {offsets = [0, 256], sizes = [8, 128], strides = [1, 1]} : vector<8x384xf32> to vector<8x128xf32>
    %778 = arith.addf %772, %775 : vector<8x128xf32>
    %779 = arith.negf %778 : vector<8x128xf32>
    %780 = math.exp %779 : vector<8x128xf32>
    %cst_186 = arith.constant 1.000000e+00 : f32
    %781 = vector.broadcast %cst_186 : f32 to vector<8x128xf32>
    %782 = arith.addf %781, %780 : vector<8x128xf32>
    %783 = arith.divf %781, %782 : vector<8x128xf32>
    %784 = arith.addf %773, %776 : vector<8x128xf32>
    %785 = arith.negf %784 : vector<8x128xf32>
    %786 = math.exp %785 : vector<8x128xf32>
    %cst_187 = arith.constant 1.000000e+00 : f32
    %787 = vector.broadcast %cst_187 : f32 to vector<8x128xf32>
    %788 = arith.addf %787, %786 : vector<8x128xf32>
    %789 = arith.divf %787, %788 : vector<8x128xf32>
    %790 = arith.mulf %783, %777 : vector<8x128xf32>
    %791 = arith.addf %774, %790 : vector<8x128xf32>
    %792 = math.tanh %791 : vector<8x128xf32>
    %cst_188 = arith.constant 1.000000e+00 : f32
    %793 = vector.broadcast %cst_188 : f32 to vector<8x128xf32>
    %794 = arith.subf %793, %789 : vector<8x128xf32>
    %795 = arith.mulf %794, %792 : vector<8x128xf32>
    %796 = arith.mulf %789, %708 : vector<8x128xf32>
    %797 = arith.addf %795, %796 : vector<8x128xf32>
    %cst_189 = arith.constant dense<0.000000e+00> : vector<8x128xf32>
    %798 = tpu.matmul %797, %10, %cst_189 {dimension_numbers = #tpu.dot_dimension_numbers<[1], [0], [0], [1], [0, 0, 1, 1], [], []>} : vector<8x128xf32>, vector<128x128xf32>, vector<8x128xf32> -> vector<8x128xf32>
    %799 = vector.broadcast %11 : vector<1x128xf32> to vector<8x128xf32>
    %800 = arith.addf %798, %799 : vector<8x128xf32>
    %cst_190 = arith.constant dense<0xFF800000> : vector<8xf32>
    %801 = vector.multi_reduction <maximumf>, %800, %cst_190 [1] : vector<8x128xf32> to vector<8xf32>
    %802 = vector.shape_cast %801 : vector<8xf32> to vector<8x1xf32>
    %803 = vector.broadcast %802 : vector<8x1xf32> to vector<8x128xf32>
    %804 = arith.cmpf oeq, %800, %803 : vector<8x128xf32>
    %c128_i32_191 = arith.constant 128 : i32
    %805 = vector.broadcast %c128_i32_191 : i32 to vector<8x128xi32>
    %806 = arith.select %804, %18, %805 : vector<8x128xi1>, vector<8x128xi32>
    %cst_192 = arith.constant dense<2147483647> : vector<8xi32>
    %807 = vector.multi_reduction <minsi>, %806, %cst_192 [1] : vector<8x128xi32> to vector<8xi32>
    %808 = vector.shape_cast %807 : vector<8xi32> to vector<8x1xi32>
    %809 = vector.broadcast %808 : vector<8x1xi32> to vector<8x128xi32>
    %810 = arith.cmpi eq, %18, %809 : vector<8x128xi32>
    %811 = arith.extui %810 : vector<8x128xi1> to vector<8x128xi32>
    %812 = arith.sitofp %811 : vector<8x128xi32> to vector<8x128xf32>
    %813 = vector.broadcast %802 : vector<8x1xf32> to vector<8x128xf32>
    %814 = arith.subf %800, %813 : vector<8x128xf32>
    %815 = math.exp %814 : vector<8x128xf32>
    %cst_193 = arith.constant dense<0.000000e+00> : vector<8xf32>
    %816 = vector.multi_reduction <add>, %815, %cst_193 [1] : vector<8x128xf32> to vector<8xf32>
    %817 = vector.shape_cast %816 : vector<8xf32> to vector<8x1xf32>
    %818 = math.log %817 : vector<8x1xf32>
    %819 = vector.broadcast %818 : vector<8x1xf32> to vector<8x128xf32>
    %820 = arith.subf %814, %819 : vector<8x128xf32>
    %c6 = arith.constant 6 : index
    %c0_194 = arith.constant 0 : index
    %c0_195 = arith.constant 0 : index
    %821 = vector.load %arg21[%c6, %c0_194, %c0_195] : memref<8x8x128xf32, #tpu.memory_space<vmem>>, vector<1x8x128xf32>
    %822 = vector.shape_cast %821 : vector<1x8x128xf32> to vector<8x128xf32>
    %823 = vector.shape_cast %820 : vector<8x128xf32> to vector<1x8x128xf32>
    tpu.vector_store %arg21[%c6, %c0_194, %c0_195], %823 {strides = array<i32>} : memref<8x8x128xf32, #tpu.memory_space<vmem>>, vector<1x8x128xf32>,
    %cst_196 = arith.constant dense<0.000000e+00> : vector<8x16xf32>
    %824 = tpu.matmul %812, %4, %cst_196 {dimension_numbers = #tpu.dot_dimension_numbers<[1], [0], [0], [1], [0, 0, 1, 1], [], []>} : vector<8x128xf32>, vector<128x16xf32>, vector<8x16xf32> -> vector<8x16xf32>
    %cst_197 = arith.constant dense<0.000000e+00> : vector<8x128xf32>
    %825 = tpu.matmul %824, %12, %cst_197 {dimension_numbers = #tpu.dot_dimension_numbers<[1], [0], [0], [1], [0, 0, 1, 1], [], []>} : vector<8x16xf32>, vector<16x128xf32>, vector<8x128xf32> -> vector<8x128xf32>
    %cst_198 = arith.constant dense<0.000000e+00> : vector<8x128xf32>
    %826 = tpu.matmul %797, %13, %cst_198 {dimension_numbers = #tpu.dot_dimension_numbers<[1], [0], [0], [1], [0, 0, 1, 1], [], []>} : vector<8x128xf32>, vector<128x128xf32>, vector<8x128xf32> -> vector<8x128xf32>
    %827 = arith.addf %825, %826 : vector<8x128xf32>
    %828 = vector.broadcast %14 : vector<1x128xf32> to vector<8x128xf32>
    %829 = arith.addf %827, %828 : vector<8x128xf32>
    %cst_199 = arith.constant 0.000000e+00 : f32
    %830 = vector.broadcast %cst_199 : f32 to vector<8x128xf32>
    %831 = arith.maximumf %829, %830 : vector<8x128xf32>
    %832 = vector.broadcast %15 : vector<1x128xf32> to vector<8x128xf32>
    %833 = arith.mulf %831, %832 : vector<8x128xf32>
    %cst_200 = arith.constant dense<0.000000e+00> : vector<8xf32>
    %834 = vector.multi_reduction <add>, %833, %cst_200 [1] : vector<8x128xf32> to vector<8xf32>
    %835 = vector.shape_cast %834 : vector<8xf32> to vector<8x1xf32>
    %836 = vector.broadcast %16 : vector<1x1xf32> to vector<8x1xf32>
    %837 = arith.addf %835, %836 : vector<8x1xf32>
    %838 = arith.negf %837 : vector<8x1xf32>
    %839 = math.exp %838 : vector<8x1xf32>
    %cst_201 = arith.constant 1.000000e+00 : f32
    %840 = vector.broadcast %cst_201 : f32 to vector<8x1xf32>
    %841 = arith.addf %840, %839 : vector<8x1xf32>
    %842 = arith.divf %840, %841 : vector<8x1xf32>
    %c6_i32_202 = arith.constant 6 : i32
    %843 = vector.broadcast %c6_i32_202 : i32 to vector<8x8xi32>
    %844 = arith.cmpi eq, %19, %843 : vector<8x8xi32>
    %cst_203 = arith.constant 0.000000e+00 : f32
    %845 = vector.shape_cast %842 : vector<8x1xf32> to vector<8x1xf32>
    %846 = vector.broadcast %845 : vector<8x1xf32> to vector<8x8xf32>
    %847 = vector.broadcast %cst_203 : f32 to vector<8x8xf32>
    %848 = arith.select %844, %846, %847 : vector<8x8xi1>, vector<8x8xf32>
    %849 = arith.addf %760, %848 : vector<8x8xf32>
    %cst_204 = arith.constant dense<0.000000e+00> : vector<8x16xf32>
    %850 = tpu.matmul %812, %4, %cst_204 {dimension_numbers = #tpu.dot_dimension_numbers<[1], [0], [0], [1], [0, 0, 1, 1], [], []>} : vector<8x128xf32>, vector<128x16xf32>, vector<8x16xf32> -> vector<8x16xf32>
    %cst_205 = arith.constant dense<0.000000e+00> : vector<8x384xf32>
    %851 = tpu.matmul %850, %5, %cst_205 {dimension_numbers = #tpu.dot_dimension_numbers<[1], [0], [0], [1], [0, 0, 1, 1], [], []>} : vector<8x16xf32>, vector<16x384xf32>, vector<8x384xf32> -> vector<8x384xf32>
    %852 = vector.broadcast %842 : vector<8x1xf32> to vector<8x384xf32>
    %853 = vector.broadcast %6 : vector<1x384xf32> to vector<8x384xf32>
    %854 = arith.mulf %852, %853 : vector<8x384xf32>
    %855 = arith.addf %851, %854 : vector<8x384xf32>
    %856 = vector.broadcast %8 : vector<1x384xf32> to vector<8x384xf32>
    %857 = arith.addf %855, %856 : vector<8x384xf32>
    %cst_206 = arith.constant dense<0.000000e+00> : vector<8x384xf32>
    %858 = tpu.matmul %797, %7, %cst_206 {dimension_numbers = #tpu.dot_dimension_numbers<[1], [0], [0], [1], [0, 0, 1, 1], [], []>} : vector<8x128xf32>, vector<128x384xf32>, vector<8x384xf32> -> vector<8x384xf32>
    %859 = vector.broadcast %9 : vector<1x384xf32> to vector<8x384xf32>
    %860 = arith.addf %858, %859 : vector<8x384xf32>
    %861 = vector.extract_strided_slice %857 {offsets = [0, 0], sizes = [8, 128], strides = [1, 1]} : vector<8x384xf32> to vector<8x128xf32>
    %862 = vector.extract_strided_slice %857 {offsets = [0, 128], sizes = [8, 128], strides = [1, 1]} : vector<8x384xf32> to vector<8x128xf32>
    %863 = vector.extract_strided_slice %857 {offsets = [0, 256], sizes = [8, 128], strides = [1, 1]} : vector<8x384xf32> to vector<8x128xf32>
    %864 = vector.extract_strided_slice %860 {offsets = [0, 0], sizes = [8, 128], strides = [1, 1]} : vector<8x384xf32> to vector<8x128xf32>
    %865 = vector.extract_strided_slice %860 {offsets = [0, 128], sizes = [8, 128], strides = [1, 1]} : vector<8x384xf32> to vector<8x128xf32>
    %866 = vector.extract_strided_slice %860 {offsets = [0, 256], sizes = [8, 128], strides = [1, 1]} : vector<8x384xf32> to vector<8x128xf32>
    %867 = arith.addf %861, %864 : vector<8x128xf32>
    %868 = arith.negf %867 : vector<8x128xf32>
    %869 = math.exp %868 : vector<8x128xf32>
    %cst_207 = arith.constant 1.000000e+00 : f32
    %870 = vector.broadcast %cst_207 : f32 to vector<8x128xf32>
    %871 = arith.addf %870, %869 : vector<8x128xf32>
    %872 = arith.divf %870, %871 : vector<8x128xf32>
    %873 = arith.addf %862, %865 : vector<8x128xf32>
    %874 = arith.negf %873 : vector<8x128xf32>
    %875 = math.exp %874 : vector<8x128xf32>
    %cst_208 = arith.constant 1.000000e+00 : f32
    %876 = vector.broadcast %cst_208 : f32 to vector<8x128xf32>
    %877 = arith.addf %876, %875 : vector<8x128xf32>
    %878 = arith.divf %876, %877 : vector<8x128xf32>
    %879 = arith.mulf %872, %866 : vector<8x128xf32>
    %880 = arith.addf %863, %879 : vector<8x128xf32>
    %881 = math.tanh %880 : vector<8x128xf32>
    %cst_209 = arith.constant 1.000000e+00 : f32
    %882 = vector.broadcast %cst_209 : f32 to vector<8x128xf32>
    %883 = arith.subf %882, %878 : vector<8x128xf32>
    %884 = arith.mulf %883, %881 : vector<8x128xf32>
    %885 = arith.mulf %878, %797 : vector<8x128xf32>
    %886 = arith.addf %884, %885 : vector<8x128xf32>
    %cst_210 = arith.constant dense<0.000000e+00> : vector<8x128xf32>
    %887 = tpu.matmul %886, %10, %cst_210 {dimension_numbers = #tpu.dot_dimension_numbers<[1], [0], [0], [1], [0, 0, 1, 1], [], []>} : vector<8x128xf32>, vector<128x128xf32>, vector<8x128xf32> -> vector<8x128xf32>
    %888 = vector.broadcast %11 : vector<1x128xf32> to vector<8x128xf32>
    %889 = arith.addf %887, %888 : vector<8x128xf32>
    %cst_211 = arith.constant dense<0xFF800000> : vector<8xf32>
    %890 = vector.multi_reduction <maximumf>, %889, %cst_211 [1] : vector<8x128xf32> to vector<8xf32>
    %891 = vector.shape_cast %890 : vector<8xf32> to vector<8x1xf32>
    %892 = vector.broadcast %891 : vector<8x1xf32> to vector<8x128xf32>
    %893 = arith.cmpf oeq, %889, %892 : vector<8x128xf32>
    %c128_i32_212 = arith.constant 128 : i32
    %894 = vector.broadcast %c128_i32_212 : i32 to vector<8x128xi32>
    %895 = arith.select %893, %18, %894 : vector<8x128xi1>, vector<8x128xi32>
    %cst_213 = arith.constant dense<2147483647> : vector<8xi32>
    %896 = vector.multi_reduction <minsi>, %895, %cst_213 [1] : vector<8x128xi32> to vector<8xi32>
    %897 = vector.shape_cast %896 : vector<8xi32> to vector<8x1xi32>
    %898 = vector.broadcast %897 : vector<8x1xi32> to vector<8x128xi32>
    %899 = arith.cmpi eq, %18, %898 : vector<8x128xi32>
    %900 = arith.extui %899 : vector<8x128xi1> to vector<8x128xi32>
    %901 = arith.sitofp %900 : vector<8x128xi32> to vector<8x128xf32>
    %902 = vector.broadcast %891 : vector<8x1xf32> to vector<8x128xf32>
    %903 = arith.subf %889, %902 : vector<8x128xf32>
    %904 = math.exp %903 : vector<8x128xf32>
    %cst_214 = arith.constant dense<0.000000e+00> : vector<8xf32>
    %905 = vector.multi_reduction <add>, %904, %cst_214 [1] : vector<8x128xf32> to vector<8xf32>
    %906 = vector.shape_cast %905 : vector<8xf32> to vector<8x1xf32>
    %907 = math.log %906 : vector<8x1xf32>
    %908 = vector.broadcast %907 : vector<8x1xf32> to vector<8x128xf32>
    %909 = arith.subf %903, %908 : vector<8x128xf32>
    %c7 = arith.constant 7 : index
    %c0_215 = arith.constant 0 : index
    %c0_216 = arith.constant 0 : index
    %910 = vector.load %arg21[%c7, %c0_215, %c0_216] : memref<8x8x128xf32, #tpu.memory_space<vmem>>, vector<1x8x128xf32>
    %911 = vector.shape_cast %910 : vector<1x8x128xf32> to vector<8x128xf32>
    %912 = vector.shape_cast %909 : vector<8x128xf32> to vector<1x8x128xf32>
    tpu.vector_store %arg21[%c7, %c0_215, %c0_216], %912 {strides = array<i32>} : memref<8x8x128xf32, #tpu.memory_space<vmem>>, vector<1x8x128xf32>,
    %cst_217 = arith.constant dense<0.000000e+00> : vector<8x16xf32>
    %913 = tpu.matmul %901, %4, %cst_217 {dimension_numbers = #tpu.dot_dimension_numbers<[1], [0], [0], [1], [0, 0, 1, 1], [], []>} : vector<8x128xf32>, vector<128x16xf32>, vector<8x16xf32> -> vector<8x16xf32>
    %cst_218 = arith.constant dense<0.000000e+00> : vector<8x128xf32>
    %914 = tpu.matmul %913, %12, %cst_218 {dimension_numbers = #tpu.dot_dimension_numbers<[1], [0], [0], [1], [0, 0, 1, 1], [], []>} : vector<8x16xf32>, vector<16x128xf32>, vector<8x128xf32> -> vector<8x128xf32>
    %cst_219 = arith.constant dense<0.000000e+00> : vector<8x128xf32>
    %915 = tpu.matmul %886, %13, %cst_219 {dimension_numbers = #tpu.dot_dimension_numbers<[1], [0], [0], [1], [0, 0, 1, 1], [], []>} : vector<8x128xf32>, vector<128x128xf32>, vector<8x128xf32> -> vector<8x128xf32>
    %916 = arith.addf %914, %915 : vector<8x128xf32>
    %917 = vector.broadcast %14 : vector<1x128xf32> to vector<8x128xf32>
    %918 = arith.addf %916, %917 : vector<8x128xf32>
    %cst_220 = arith.constant 0.000000e+00 : f32
    %919 = vector.broadcast %cst_220 : f32 to vector<8x128xf32>
    %920 = arith.maximumf %918, %919 : vector<8x128xf32>
    %921 = vector.broadcast %15 : vector<1x128xf32> to vector<8x128xf32>
    %922 = arith.mulf %920, %921 : vector<8x128xf32>
    %cst_221 = arith.constant dense<0.000000e+00> : vector<8xf32>
    %923 = vector.multi_reduction <add>, %922, %cst_221 [1] : vector<8x128xf32> to vector<8xf32>
    %924 = vector.shape_cast %923 : vector<8xf32> to vector<8x1xf32>
    %925 = vector.broadcast %16 : vector<1x1xf32> to vector<8x1xf32>
    %926 = arith.addf %924, %925 : vector<8x1xf32>
    %927 = arith.negf %926 : vector<8x1xf32>
    %928 = math.exp %927 : vector<8x1xf32>
    %cst_222 = arith.constant 1.000000e+00 : f32
    %929 = vector.broadcast %cst_222 : f32 to vector<8x1xf32>
    %930 = arith.addf %929, %928 : vector<8x1xf32>
    %931 = arith.divf %929, %930 : vector<8x1xf32>
    %c7_i32_223 = arith.constant 7 : i32
    %932 = vector.broadcast %c7_i32_223 : i32 to vector<8x8xi32>
    %933 = arith.cmpi eq, %19, %932 : vector<8x8xi32>
    %cst_224 = arith.constant 0.000000e+00 : f32
    %934 = vector.shape_cast %931 : vector<8x1xf32> to vector<8x1xf32>
    %935 = vector.broadcast %934 : vector<8x1xf32> to vector<8x8xf32>
    %936 = vector.broadcast %cst_224 : f32 to vector<8x8xf32>
    %937 = arith.select %933, %935, %936 : vector<8x8xi1>, vector<8x8xf32>
    %938 = arith.addf %849, %937 : vector<8x8xf32>
    %c0_225 = arith.constant 0 : index
    %c0_226 = arith.constant 0 : index
    %939 = vector.load %arg22[%c0_225, %c0_226] : memref<8x8xf32, #tpu.memory_space<vmem>>, vector<8x8xf32>
    tpu.vector_store %arg22[%c0_225, %c0_226], %938 {strides = array<i32>} : memref<8x8xf32, #tpu.memory_space<vmem>>, vector<8x8xf32>,
    return
  }
}

</mosaic_0001>

<llo_original>
// kernel: tpu_custom_call.1
$region0: #{tpu_custom_call.1}
  #allocation0 [shape = 'u32[]', space=smem, size = 0x4, offset = 0x4, fixed_abs, tag = 'smem constant byte address 0x4 - core index']
  #allocation1 [shape = 'u32[144,128]{1,0:T(1,128)}', space=vmem, size = 0x12000, scoped, tag = 'internal scratch']
  #allocation2 [shape = 'f32[1,1]{1,0:T(1,128)S(1)}', space=vmem, size = 0x200, scoped, tag = 'scoped memory for tpu_custom_call.1']
  %s0 = inlined_call_operand.vmem [shape: f32[64,4], index: 0, kind: input, shape index: {}]
  %s1 = inlined_call_operand.vmem [shape: s32[8,1], index: 1, kind: input, shape index: {}]
  %s2 = inlined_call_operand.vmem [shape: s32[8,1], index: 2, kind: input, shape index: {}]
  %s3 = inlined_call_operand.vmem [shape: f32[8,1], index: 3, kind: input, shape index: {}]
  %s4 = inlined_call_operand.hbm [shape: f32[4,384], index: 4, kind: input, shape index: {}]
  %s5 = inlined_call_operand.hbm [shape: f32[128,384], index: 5, kind: input, shape index: {}]
  %s6 = inlined_call_operand.hbm [shape: f32[1,384], index: 6, kind: input, shape index: {}]
  %s7 = inlined_call_operand.hbm [shape: f32[1,384], index: 7, kind: input, shape index: {}]
  %s8 = inlined_call_operand.vmem [shape: f32[128,16], index: 8, kind: input, shape index: {}]
  %s9 = inlined_call_operand.hbm [shape: f32[16,384], index: 9, kind: input, shape index: {}]
  %s10 = inlined_call_operand.vmem [shape: f32[1,384], index: 10, kind: input, shape index: {}]
  %s11 = inlined_call_operand.hbm [shape: f32[128,384], index: 11, kind: input, shape index: {}]
  %s12 = inlined_call_operand.vmem [shape: f32[1,384], index: 12, kind: input, shape index: {}]
  %s13 = inlined_call_operand.vmem [shape: f32[1,384], index: 13, kind: input, shape index: {}]
  %s14 = inlined_call_operand.vmem [shape: f32[128,128], index: 14, kind: input, shape index: {}]
  %s15 = inlined_call_operand.vmem [shape: f32[1,128], index: 15, kind: input, shape index: {}]
  %s16 = inlined_call_operand.vmem [shape: f32[16,128], index: 16, kind: input, shape index: {}]
  %s17 = inlined_call_operand.vmem [shape: f32[128,128], index: 17, kind: input, shape index: {}]
  %s18 = inlined_call_operand.vmem [shape: f32[1,128], index: 18, kind: input, shape index: {}]
  %s19 = inlined_call_operand.vmem [shape: f32[1,128], index: 19, kind: input, shape index: {}]
  %s20 = inlined_call_operand.<no memory space> [shape: f32[1,1], index: 20, kind: input, shape index: {}]
  %s21 = inlined_call_operand.hbm [shape: f32[8,8,128], index: 21, kind: output, shape index: {0}]
  %s22 = inlined_call_operand.hbm [shape: f32[8,8], index: 22, kind: output, shape index: {1}]
  %23 = xla_tuple %s21, %s22
  %s24 = sld [smem:[#allocation0]]
  $region126: #{tpu_custom_call.1} parent=0
    _
  %s26 = ssub.s32 1, %s24
  %s27 = scalar_select 0, %s26, %s24
  %v28 = vstv %s20
  %29 = vst [vmem:[#allocation2] sm:$0x1] %v28
  $region1: #{tpu_custom_call.1} parent=0
    #allocation3 [shape = 'u8[6144]{0}', space=vmem, size = 0x1800, scoped, tag = 'input window, operand 4, single buffered']
    #allocation4 [shape = 's32[1]{0}', space=sflag, size = 0x4, scoped, tag = 'scoped memory for tpu_custom_call.1']
    #allocation5 [shape = 's32[1]{0}', space=sflag, size = 0x4, scoped, tag = 'scoped memory for tpu_custom_call.1']
    #allocation6 [shape = 'u8[196608]{0}', space=vmem, size = 0x30000, scoped, tag = 'input window, operand 5, single buffered']
    #allocation7 [shape = 's32[1]{0}', space=sflag, size = 0x4, scoped, tag = 'scoped memory for tpu_custom_call.1']
    #allocation8 [shape = 'u8[1536]{0}', space=vmem, size = 0x800, scoped, tag = 'input window, operand 6, single buffered']
    #allocation9 [shape = 'u8[1536]{0}', space=vmem, size = 0x800, scoped, tag = 'input window, operand 7, single buffered']
    #allocation10 [shape = 's32[1]{0}', space=sflag, size = 0x4, scoped, tag = 'scoped memory for tpu_custom_call.1']
    #allocation11 [shape = 'u8[24576]{0}', space=vmem, size = 0x6000, scoped, tag = 'input window, operand 9, single buffered']
    #allocation12 [shape = 'u8[196608]{0}', space=vmem, size = 0x30000, scoped, tag = 'input window, operand 11, single buffered']
    #allocation13 [shape = 's32[1]{0}', space=sflag, size = 0x4, scoped, tag = 'scoped memory for tpu_custom_call.1']
    #allocation14 [shape = 'u8[32768]{0}', space=vmem, size = 0x8000, scoped, tag = 'output window, operand 0, single buffered']
    #allocation15 [shape = 'u8[4096]{0}', space=vmem, size = 0x1000, scoped, tag = 'output window, operand 1, single buffered']
    #allocation16 [shape = 's32[1]{0}', space=sflag, size = 0x4, scoped, tag = 'scoped memory for tpu_custom_call.1']
    %30 = vsyncpa [#allocation4], 0
    %31 = vsyncpa [#allocation7], 0
    %32 = vsyncpa [#allocation10], 0
    %33 = vsyncpa [#allocation13], 0
    %34 = vsyncpa [#allocation5], 0
    %35 = vsyncpa [#allocation16], 0
    // Predicated region
    $region2: #{tpu_custom_call.1} parent=1 // pred_check
      _
    $region3: #{tpu_custom_call.1} parent=1 // pred_check_branch
      %37 = sbr.rel (0) target = $region5
    $region4: #{tpu_custom_call.1} parent=1 // pred_region
      _
    $region5: #{tpu_custom_call.1} parent=1 // pred_fallthru
      _
    // Predicated region
    $region6: #{tpu_custom_call.1} parent=1 // pred_check
      _
    $region7: #{tpu_custom_call.1} parent=1 // pred_check_branch
      %39 = sbr.rel (0) target = $region9
    $region8: #{tpu_custom_call.1} parent=1 // pred_region
      _
    $region9: #{tpu_custom_call.1} parent=1 // pred_fallthru
      _
    // Predicated region
    $region10: #{tpu_custom_call.1} parent=1 // pred_check
      _
    $region11: #{tpu_custom_call.1} parent=1 // pred_check_branch
      %41 = sbr.rel (0) target = $region13
    $region12: #{tpu_custom_call.1} parent=1 // pred_region
      _
    $region13: #{tpu_custom_call.1} parent=1 // pred_fallthru
      _
    // Predicated region
    $region14: #{tpu_custom_call.1} parent=1 // pred_check
      _
    $region15: #{tpu_custom_call.1} parent=1 // pred_check_branch
      %43 = sbr.rel (0) target = $region17
    $region16: #{tpu_custom_call.1} parent=1 // pred_region
      _
    $region17: #{tpu_custom_call.1} parent=1 // pred_fallthru
      _
    // Predicated region
    $region18: #{tpu_custom_call.1} parent=1 // pred_check
      _
    $region19: #{tpu_custom_call.1} parent=1 // pred_check_branch
      %45 = sbr.rel (0) target = $region21
    $region20: #{tpu_custom_call.1} parent=1 // pred_region
      %s47 = ssub.s32 192, 192
      %48 = vsyncadd [#allocation4], %s47
      %s50 = sshll.u32 [#allocation3], 4
      %s51 = int_to_ptr.vmem [resolvable:$true] %s50
      %53 = dma.hbm_to_vmem [thread:$0]  %s4, 192, %s51, [#allocation4]
    $region21: #{tpu_custom_call.1} parent=1 // pred_fallthru
      _
    // Predicated region
    $region22: #{tpu_custom_call.1} parent=1 // pred_check
      _
    $region23: #{tpu_custom_call.1} parent=1 // pred_check_branch
      %55 = sbr.rel (0) target = $region25
    $region24: #{tpu_custom_call.1} parent=1 // pred_region
      %s57 = ssub.s32 6144, 6144
      %58 = vsyncadd [#allocation7], %s57
      %s59 = sshll.u32 [#allocation6], 4
      %s60 = int_to_ptr.vmem [resolvable:$true] %s59
      %65 = dma.hbm_to_vmem [thread:$0]  %s5, 6144, %s60, [#allocation7], 384, 384, 24
    $region25: #{tpu_custom_call.1} parent=1 // pred_fallthru
      _
    // Predicated region
    $region26: #{tpu_custom_call.1} parent=1 // pred_check
      _
    $region27: #{tpu_custom_call.1} parent=1 // pred_check_branch
      %67 = sbr.rel (0) target = $region29
    $region28: #{tpu_custom_call.1} parent=1 // pred_region
      %s69 = ssub.s32 48, 48
      %70 = vsyncadd [#allocation7], %s69
      %s72 = sshll.u32 [#allocation8], 4
      %s73 = int_to_ptr.vmem [resolvable:$true] %s72
      %75 = dma.hbm_to_vmem [thread:$0]  %s6, 48, %s73, [#allocation7]
    $region29: #{tpu_custom_call.1} parent=1 // pred_fallthru
      _
    // Predicated region
    $region30: #{tpu_custom_call.1} parent=1 // pred_check
      _
    $region31: #{tpu_custom_call.1} parent=1 // pred_check_branch
      %77 = sbr.rel (0) target = $region33
    $region32: #{tpu_custom_call.1} parent=1 // pred_region
      %s79 = ssub.s32 48, 48
      %80 = vsyncadd [#allocation10], %s79
      %s82 = sshll.u32 [#allocation9], 4
      %s83 = int_to_ptr.vmem [resolvable:$true] %s82
      %85 = dma.hbm_to_vmem [thread:$0]  %s7, 48, %s83, [#allocation10]
    $region33: #{tpu_custom_call.1} parent=1 // pred_fallthru
      _
    // Predicated region
    $region34: #{tpu_custom_call.1} parent=1 // pred_check
      _
    $region35: #{tpu_custom_call.1} parent=1 // pred_check_branch
      %87 = sbr.rel (0) target = $region37
    $region36: #{tpu_custom_call.1} parent=1 // pred_region
      _
    $region37: #{tpu_custom_call.1} parent=1 // pred_fallthru
      _
    // Predicated region
    $region38: #{tpu_custom_call.1} parent=1 // pred_check
      _
    $region39: #{tpu_custom_call.1} parent=1 // pred_check_branch
      %89 = sbr.rel (0) target = $region41
    $region40: #{tpu_custom_call.1} parent=1 // pred_region
      %s91 = ssub.s32 768, 768
      %92 = vsyncadd [#allocation10], %s91
      %s93 = sshll.u32 [#allocation11], 4
      %s94 = int_to_ptr.vmem [resolvable:$true] %s93
      %99 = dma.hbm_to_vmem [thread:$0]  %s9, 768, %s94, [#allocation10], 384, 384, 24
    $region41: #{tpu_custom_call.1} parent=1 // pred_fallthru
      _
    // Predicated region
    $region42: #{tpu_custom_call.1} parent=1 // pred_check
      _
    $region43: #{tpu_custom_call.1} parent=1 // pred_check_branch
      %101 = sbr.rel (0) target = $region45
    $region44: #{tpu_custom_call.1} parent=1 // pred_region
      _
    $region45: #{tpu_custom_call.1} parent=1 // pred_fallthru
      _
    // Predicated region
    $region46: #{tpu_custom_call.1} parent=1 // pred_check
      _
    $region47: #{tpu_custom_call.1} parent=1 // pred_check_branch
      %103 = sbr.rel (0) target = $region49
    $region48: #{tpu_custom_call.1} parent=1 // pred_region
      %s105 = ssub.s32 6144, 6144
      %106 = vsyncadd [#allocation13], %s105
      %s107 = sshll.u32 [#allocation12], 4
      %s108 = int_to_ptr.vmem [resolvable:$true] %s107
      %113 = dma.hbm_to_vmem [thread:$0]  %s11, 6144, %s108, [#allocation13], 384, 384, 24
    $region49: #{tpu_custom_call.1} parent=1 // pred_fallthru
      _
    // Predicated region
    $region50: #{tpu_custom_call.1} parent=1 // pred_check
      _
    $region51: #{tpu_custom_call.1} parent=1 // pred_check_branch
      %115 = sbr.rel (0) target = $region53
    $region52: #{tpu_custom_call.1} parent=1 // pred_region
      _
    $region53: #{tpu_custom_call.1} parent=1 // pred_fallthru
      _
    // Predicated region
    $region54: #{tpu_custom_call.1} parent=1 // pred_check
      _
    $region55: #{tpu_custom_call.1} parent=1 // pred_check_branch
      %117 = sbr.rel (0) target = $region57
    $region56: #{tpu_custom_call.1} parent=1 // pred_region
      _
    $region57: #{tpu_custom_call.1} parent=1 // pred_fallthru
      _
    // Predicated region
    $region58: #{tpu_custom_call.1} parent=1 // pred_check
      _
    $region59: #{tpu_custom_call.1} parent=1 // pred_check_branch
      %119 = sbr.rel (0) target = $region61
    $region60: #{tpu_custom_call.1} parent=1 // pred_region
      _
    $region61: #{tpu_custom_call.1} parent=1 // pred_fallthru
      _
    // Predicated region
    $region62: #{tpu_custom_call.1} parent=1 // pred_check
      _
    $region63: #{tpu_custom_call.1} parent=1 // pred_check_branch
      %121 = sbr.rel (0) target = $region65
    $region64: #{tpu_custom_call.1} parent=1 // pred_region
      _
    $region65: #{tpu_custom_call.1} parent=1 // pred_fallthru
      _
    // Predicated region
    $region66: #{tpu_custom_call.1} parent=1 // pred_check
      _
    $region67: #{tpu_custom_call.1} parent=1 // pred_check_branch
      %123 = sbr.rel (0) target = $region69
    $region68: #{tpu_custom_call.1} parent=1 // pred_region
      _
    $region69: #{tpu_custom_call.1} parent=1 // pred_fallthru
      _
    // Predicated region
    $region70: #{tpu_custom_call.1} parent=1 // pred_check
      _
    $region71: #{tpu_custom_call.1} parent=1 // pred_check_branch
      %125 = sbr.rel (0) target = $region73
    $region72: #{tpu_custom_call.1} parent=1 // pred_region
      _
    $region73: #{tpu_custom_call.1} parent=1 // pred_fallthru
      _
    // Predicated region
    $region74: #{tpu_custom_call.1} parent=1 // pred_check
      _
    $region75: #{tpu_custom_call.1} parent=1 // pred_check_branch
      %127 = sbr.rel (0) target = $region77
    $region76: #{tpu_custom_call.1} parent=1 // pred_region
      _
    $region77: #{tpu_custom_call.1} parent=1 // pred_fallthru
      _
    // Predicated region
    $region78: #{tpu_custom_call.1} parent=1 // pred_check
      _
    $region79: #{tpu_custom_call.1} parent=1 // pred_check_branch
      %129 = sbr.rel (0) target = $region81
    $region80: #{tpu_custom_call.1} parent=1 // pred_region
      _
    $region81: #{tpu_custom_call.1} parent=1 // pred_fallthru
      _
    // Predicated region
    $region82: #{tpu_custom_call.1} parent=1 // pred_check
      _
    $region83: #{tpu_custom_call.1} parent=1 // pred_check_branch
      %131 = sbr.rel (0) target = $region85
    $region84: #{tpu_custom_call.1} parent=1 // pred_region
      _
    $region85: #{tpu_custom_call.1} parent=1 // pred_fallthru
      _
    // Predicated region
    $region86: #{tpu_custom_call.1} parent=1 // pred_check
      _
    $region87: #{tpu_custom_call.1} parent=1 // pred_check_branch
      %133 = sbr.rel (0) target = $region89
    $region88: #{tpu_custom_call.1} parent=1 // pred_region
      %134 = dma.done [#allocation4], 192
    $region89: #{tpu_custom_call.1} parent=1 // pred_fallthru
      _
    // Predicated region
    $region90: #{tpu_custom_call.1} parent=1 // pred_check
      _
    $region91: #{tpu_custom_call.1} parent=1 // pred_check_branch
      %136 = sbr.rel (0) target = $region93
    $region92: #{tpu_custom_call.1} parent=1 // pred_region
      %137 = dma.done [#allocation7], 6144
    $region93: #{tpu_custom_call.1} parent=1 // pred_fallthru
      _
    // Predicated region
    $region94: #{tpu_custom_call.1} parent=1 // pred_check
      _
    $region95: #{tpu_custom_call.1} parent=1 // pred_check_branch
      %139 = sbr.rel (0) target = $region97
    $region96: #{tpu_custom_call.1} parent=1 // pred_region
      %140 = dma.done [#allocation7], 48
    $region97: #{tpu_custom_call.1} parent=1 // pred_fallthru
      _
    // Predicated region
    $region98: #{tpu_custom_call.1} parent=1 // pred_check
      _
    $region99: #{tpu_custom_call.1} parent=1 // pred_check_branch
      %142 = sbr.rel (0) target = $region101
    $region100: #{tpu_custom_call.1} parent=1 // pred_region
      %143 = dma.done [#allocation10], 48
    $region101: #{tpu_custom_call.1} parent=1 // pred_fallthru
      _
    // Predicated region
    $region102: #{tpu_custom_call.1} parent=1 // pred_check
      _
    $region103: #{tpu_custom_call.1} parent=1 // pred_check_branch
      %145 = sbr.rel (0) target = $region105
    $region104: #{tpu_custom_call.1} parent=1 // pred_region
      %146 = dma.done [#allocation10], 768
    $region105: #{tpu_custom_call.1} parent=1 // pred_fallthru
      _
    // Predicated region
    $region106: #{tpu_custom_call.1} parent=1 // pred_check
      _
    $region107: #{tpu_custom_call.1} parent=1 // pred_check_branch
      %148 = sbr.rel (0) target = $region109
    $region108: #{tpu_custom_call.1} parent=1 // pred_region
      %149 = dma.done [#allocation13], 6144
    $region109: #{tpu_custom_call.1} parent=1 // pred_fallthru
      _
    %v150 = vld [vmem:[#allocation3] sm:$0xff]
    %v151 = vld [vmem:[#allocation3 + $0x8] sm:$0xf]
    %v152 = vld [vmem:[#allocation6] sm:$0xff]
    %v153 = vld [vmem:[#allocation6 + $0x8] sm:$0xff]
    %v154 = vld [vmem:[#allocation6 + $0x10] sm:$0xff]
    %v155 = vld [vmem:[#allocation6 + $0x18] sm:$0xff]
    %v156 = vld [vmem:[#allocation6 + $0x20] sm:$0xff]
    %v157 = vld [vmem:[#allocation6 + $0x28] sm:$0xff]
    %v158 = vld [vmem:[#allocation6 + $0x30] sm:$0xff]
    %v159 = vld [vmem:[#allocation6 + $0x38] sm:$0xff]
    %v160 = vld [vmem:[#allocation6 + $0x40] sm:$0xff]
    %v161 = vld [vmem:[#allocation6 + $0x48] sm:$0xff]
    %v162 = vld [vmem:[#allocation6 + $0x50] sm:$0xff]
    %v163 = vld [vmem:[#allocation6 + $0x58] sm:$0xff]
    %v164 = vld [vmem:[#allocation6 + $0x60] sm:$0xff]
    %v165 = vld [vmem:[#allocation6 + $0x68] sm:$0xff]
    %v166 = vld [vmem:[#allocation6 + $0x70] sm:$0xff]
    %v167 = vld [vmem:[#allocation6 + $0x78] sm:$0xff]
    %v168 = vld [vmem:[#allocation6 + $0x80] sm:$0xff]
    %v169 = vld [vmem:[#allocation6 + $0x88] sm:$0xff]
    %v170 = vld [vmem:[#allocation6 + $0x90] sm:$0xff]
    %v171 = vld [vmem:[#allocation6 + $0x98] sm:$0xff]
    %v172 = vld [vmem:[#allocation6 + $0xa0] sm:$0xff]
    %v173 = vld [vmem:[#allocation6 + $0xa8] sm:$0xff]
    %v174 = vld [vmem:[#allocation6 + $0xb0] sm:$0xff]
    %v175 = vld [vmem:[#allocation6 + $0xb8] sm:$0xff]
    %v176 = vld [vmem:[#allocation6 + $0xc0] sm:$0xff]
    %v177 = vld [vmem:[#allocation6 + $0xc8] sm:$0xff]
    %v178 = vld [vmem:[#allocation6 + $0xd0] sm:$0xff]
    %v179 = vld [vmem:[#allocation6 + $0xd8] sm:$0xff]
    %v180 = vld [vmem:[#allocation6 + $0xe0] sm:$0xff]
    %v181 = vld [vmem:[#allocation6 + $0xe8] sm:$0xff]
    %v182 = vld [vmem:[#allocation6 + $0xf0] sm:$0xff]
    %v183 = vld [vmem:[#allocation6 + $0xf8] sm:$0xff]
    %v184 = vld [vmem:[#allocation6 + $0x100] sm:$0xff]
    %v185 = vld [vmem:[#allocation6 + $0x108] sm:$0xff]
    %v186 = vld [vmem:[#allocation6 + $0x110] sm:$0xff]
    %v187 = vld [vmem:[#allocation6 + $0x118] sm:$0xff]
    %v188 = vld [vmem:[#allocation6 + $0x120] sm:$0xff]
    %v189 = vld [vmem:[#allocation6 + $0x128] sm:$0xff]
    %v190 = vld [vmem:[#allocation6 + $0x130] sm:$0xff]
    %v191 = vld [vmem:[#allocation6 + $0x138] sm:$0xff]
    %v192 = vld [vmem:[#allocation6 + $0x140] sm:$0xff]
    %v193 = vld [vmem:[#allocation6 + $0x148] sm:$0xff]
    %v194 = vld [vmem:[#allocation6 + $0x150] sm:$0xff]
    %v195 = vld [vmem:[#allocation6 + $0x158] sm:$0xff]
    %v196 = vld [vmem:[#allocation6 + $0x160] sm:$0xff]
    %v197 = vld [vmem:[#allocation6 + $0x168] sm:$0xff]
    %v198 = vld [vmem:[#allocation6 + $0x170] sm:$0xff]
    %v199 = vld [vmem:[#allocation6 + $0x178] sm:$0xff]
    %v200 = vld [vmem:[#allocation8] sm:$0x7]
    %v201 = vld [vmem:[#allocation9] sm:$0x7]
    %v202 = vld [vmem:[%s8] sm:$0xff]
    %v203 = vld [vmem:[%s8 + $0x8] sm:$0xff]
    %v204 = vld [vmem:[%s8 + $0x10] sm:$0xff]
    %v205 = vld [vmem:[%s8 + $0x18] sm:$0xff]
    %v206 = vld [vmem:[%s8 + $0x20] sm:$0xff]
    %v207 = vld [vmem:[%s8 + $0x28] sm:$0xff]
    %v208 = vld [vmem:[%s8 + $0x30] sm:$0xff]
    %v209 = vld [vmem:[%s8 + $0x38] sm:$0xff]
    %v210 = vld [vmem:[%s8 + $0x40] sm:$0xff]
    %v211 = vld [vmem:[%s8 + $0x48] sm:$0xff]
    %v212 = vld [vmem:[%s8 + $0x50] sm:$0xff]
    %v213 = vld [vmem:[%s8 + $0x58] sm:$0xff]
    %v214 = vld [vmem:[%s8 + $0x60] sm:$0xff]
    %v215 = vld [vmem:[%s8 + $0x68] sm:$0xff]
    %v216 = vld [vmem:[%s8 + $0x70] sm:$0xff]
    %v217 = vld [vmem:[%s8 + $0x78] sm:$0xff]
    %v218 = vld [vmem:[#allocation11] sm:$0xff]
    %v219 = vld [vmem:[#allocation11 + $0x8] sm:$0xff]
    %v220 = vld [vmem:[#allocation11 + $0x10] sm:$0xff]
    %v221 = vld [vmem:[#allocation11 + $0x18] sm:$0xff]
    %v222 = vld [vmem:[#allocation11 + $0x20] sm:$0xff]
    %v223 = vld [vmem:[#allocation11 + $0x28] sm:$0xff]
    %v224 = vld [vmem:[%s10] sm:$0x7]
    %v225 = vld [vmem:[#allocation12] sm:$0xff]
    %v226 = vld [vmem:[#allocation12 + $0x8] sm:$0xff]
    %v227 = vld [vmem:[#allocation12 + $0x10] sm:$0xff]
    %v228 = vld [vmem:[#allocation12 + $0x18] sm:$0xff]
    %v229 = vld [vmem:[#allocation12 + $0x20] sm:$0xff]
    %v230 = vld [vmem:[#allocation12 + $0x28] sm:$0xff]
    %v231 = vld [vmem:[#allocation12 + $0x30] sm:$0xff]
    %v232 = vld [vmem:[#allocation12 + $0x38] sm:$0xff]
    %v233 = vld [vmem:[#allocation12 + $0x40] sm:$0xff]
    %v234 = vld [vmem:[#allocation12 + $0x48] sm:$0xff]
    %v235 = vld [vmem:[#allocation12 + $0x50] sm:$0xff]
    %v236 = vld [vmem:[#allocation12 + $0x58] sm:$0xff]
    %v237 = vld [vmem:[#allocation12 + $0x60] sm:$0xff]
    %v238 = vld [vmem:[#allocation12 + $0x68] sm:$0xff]
    %v239 = vld [vmem:[#allocation12 + $0x70] sm:$0xff]
    %v240 = vld [vmem:[#allocation12 + $0x78] sm:$0xff]
    %v241 = vld [vmem:[#allocation12 + $0x80] sm:$0xff]
    %v242 = vld [vmem:[#allocation12 + $0x88] sm:$0xff]
    %v243 = vld [vmem:[#allocation12 + $0x90] sm:$0xff]
    %v244 = vld [vmem:[#allocation12 + $0x98] sm:$0xff]
    %v245 = vld [vmem:[#allocation12 + $0xa0] sm:$0xff]
    %v246 = vld [vmem:[#allocation12 + $0xa8] sm:$0xff]
    %v247 = vld [vmem:[#allocation12 + $0xb0] sm:$0xff]
    %v248 = vld [vmem:[#allocation12 + $0xb8] sm:$0xff]
    %v249 = vld [vmem:[#allocation12 + $0xc0] sm:$0xff]
    %v250 = vld [vmem:[#allocation12 + $0xc8] sm:$0xff]
    %v251 = vld [vmem:[#allocation12 + $0xd0] sm:$0xff]
    %v252 = vld [vmem:[#allocation12 + $0xd8] sm:$0xff]
    %v253 = vld [vmem:[#allocation12 + $0xe0] sm:$0xff]
    %v254 = vld [vmem:[#allocation12 + $0xe8] sm:$0xff]
    %v255 = vld [vmem:[#allocation12 + $0xf0] sm:$0xff]
    %v256 = vld [vmem:[#allocation12 + $0xf8] sm:$0xff]
    %v257 = vld [vmem:[#allocation12 + $0x100] sm:$0xff]
    %v258 = vld [vmem:[#allocation12 + $0x108] sm:$0xff]
    %v259 = vld [vmem:[#allocation12 + $0x110] sm:$0xff]
    %v260 = vld [vmem:[#allocation12 + $0x118] sm:$0xff]
    %v261 = vld [vmem:[#allocation12 + $0x120] sm:$0xff]
    %v262 = vld [vmem:[#allocation12 + $0x128] sm:$0xff]
    %v263 = vld [vmem:[#allocation12 + $0x130] sm:$0xff]
    %v264 = vld [vmem:[#allocation12 + $0x138] sm:$0xff]
    %v265 = vld [vmem:[#allocation12 + $0x140] sm:$0xff]
    %v266 = vld [vmem:[#allocation12 + $0x148] sm:$0xff]
    %v267 = vld [vmem:[#allocation12 + $0x150] sm:$0xff]
    %v268 = vld [vmem:[#allocation12 + $0x158] sm:$0xff]
    %v269 = vld [vmem:[#allocation12 + $0x160] sm:$0xff]
    %v270 = vld [vmem:[#allocation12 + $0x168] sm:$0xff]
    %v271 = vld [vmem:[#allocation12 + $0x170] sm:$0xff]
    %v272 = vld [vmem:[#allocation12 + $0x178] sm:$0xff]
    %v273 = vld [vmem:[%s12] sm:$0x7]
    %v274 = vld [vmem:[%s13] sm:$0x7]
    %v275 = vld [vmem:[%s14] sm:$0xff]
    %v276 = vld [vmem:[%s14 + $0x8] sm:$0xff]
    %v277 = vld [vmem:[%s14 + $0x10] sm:$0xff]
    %v278 = vld [vmem:[%s14 + $0x18] sm:$0xff]
    %v279 = vld [vmem:[%s14 + $0x20] sm:$0xff]
    %v280 = vld [vmem:[%s14 + $0x28] sm:$0xff]
    %v281 = vld [vmem:[%s14 + $0x30] sm:$0xff]
    %v282 = vld [vmem:[%s14 + $0x38] sm:$0xff]
    %v283 = vld [vmem:[%s14 + $0x40] sm:$0xff]
    %v284 = vld [vmem:[%s14 + $0x48] sm:$0xff]
    %v285 = vld [vmem:[%s14 + $0x50] sm:$0xff]
    %v286 = vld [vmem:[%s14 + $0x58] sm:$0xff]
    %v287 = vld [vmem:[%s14 + $0x60] sm:$0xff]
    %v288 = vld [vmem:[%s14 + $0x68] sm:$0xff]
    %v289 = vld [vmem:[%s14 + $0x70] sm:$0xff]
    %v290 = vld [vmem:[%s14 + $0x78] sm:$0xff]
    %v291 = vld [vmem:[%s15] sm:$0x1]
    %v292 = vld [vmem:[%s16] sm:$0xff]
    %v293 = vld [vmem:[%s16 + $0x8] sm:$0xff]
    %v294 = vld [vmem:[%s17] sm:$0xff]
    %v295 = vld [vmem:[%s17 + $0x8] sm:$0xff]
    %v296 = vld [vmem:[%s17 + $0x10] sm:$0xff]
    %v297 = vld [vmem:[%s17 + $0x18] sm:$0xff]
    %v298 = vld [vmem:[%s17 + $0x20] sm:$0xff]
    %v299 = vld [vmem:[%s17 + $0x28] sm:$0xff]
    %v300 = vld [vmem:[%s17 + $0x30] sm:$0xff]
    %v301 = vld [vmem:[%s17 + $0x38] sm:$0xff]
    %v302 = vld [vmem:[%s17 + $0x40] sm:$0xff]
    %v303 = vld [vmem:[%s17 + $0x48] sm:$0xff]
    %v304 = vld [vmem:[%s17 + $0x50] sm:$0xff]
    %v305 = vld [vmem:[%s17 + $0x58] sm:$0xff]
    %v306 = vld [vmem:[%s17 + $0x60] sm:$0xff]
    %v307 = vld [vmem:[%s17 + $0x68] sm:$0xff]
    %v308 = vld [vmem:[%s17 + $0x70] sm:$0xff]
    %v309 = vld [vmem:[%s17 + $0x78] sm:$0xff]
    %v310 = vld [vmem:[%s18] sm:$0x1]
    %v311 = vld [vmem:[%s19] sm:$0x1]
    %v312 = vld [vmem:[#allocation2] sm:$0x1]
    %v313 = vld [vmem:[%s1] sm:$0xff]
    %v314 = vlaneseq
    %v315 = vand.u32 %v314, 127
    %v316 = vld [vmem:[%s0] sm:$0xff]
    %v317 = vld [vmem:[%s0 + $0x8] sm:$0xff]
    %v318 = vld [vmem:[%s0 + $0x10] sm:$0xff]
    %v319 = vld [vmem:[%s0 + $0x18] sm:$0xff]
    %v320 = vld [vmem:[%s0 + $0x20] sm:$0xff]
    %v321 = vld [vmem:[%s0 + $0x28] sm:$0xff]
    %v322 = vld [vmem:[%s0 + $0x30] sm:$0xff]
    %v323 = vld [vmem:[%s0 + $0x38] sm:$0xff]
    %v325 = vlaneseq
    %v326 = vshrl.u32 %v325, 7
    %v327 = vsub.s32 0, %v326
    %v328 = vrot.slane %v200, %v327
    %v329 = vlaneseq
    %v330 = vshrl.u32 %v329, 7
    %v331 = vsub.s32 1, %v330
    %v332 = vrot.slane %v200, %v331
    %v333 = vlaneseq
    %v334 = vshrl.u32 %v333, 7
    %v335 = vsub.s32 2, %v334
    %v336 = vrot.slane %v200, %v335
    %v342 = vcombine.high %v150, %v150
    %vm343 = vcmask 31744
    %v345 = vsel %vm343, %v316, 0
    %v348 = vsel %vm343, %v317, 0
    %v351 = vsel %vm343, %v318, 0
    %v354 = vsel %vm343, %v319, 0
    %v357 = vsel %vm343, %v320, 0
    %v360 = vsel %vm343, %v321, 0
    %v363 = vsel %vm343, %v322, 0
    %v366 = vsel %vm343, %v323, 0
    %vm368 = vcmask 1043456
    %v369 = vsel %vm368, %v150, 0
    %v371 = vsel %vm368, %v342, 0
    %v373 = vsel %vm368, %v151, 0
    %375 = vmatprep.subr.mxu0 %v371
    %376 = vmatpush1.msra.mxu0 %v369
    %377 = vmatprep.subr.mxu0 0.0
    %378 = vmatpush1.msra.mxu0 0.0
    %379 = vmatprep.subr.mxu0 0.0
    %380 = vmatpush1.msra.mxu0 0.0
    %381 = vmatprep.subr.mxu0 0.0
    %382 = vmatpush1.msra.mxu0 0.0
    %383 = vmatprep.subr.mxu0 0.0
    %384 = vmatpush1.msra.mxu0 0.0
    %385 = vmatprep.subr.mxu0 0.0
    %386 = vmatpush1.msra.mxu0 0.0
    %387 = vmatprep.subr.mxu0 0.0
    %388 = vmatpush1.msra.mxu0 0.0
    %389 = vmatprep.subr.mxu0 0.0
    %390 = vmatpush1.msra.mxu0 0.0
    %391 = vmatprep.subr.mxu0 0.0
    %392 = vmatpush1.msra.mxu0 0.0
    %393 = vmatprep.subr.mxu0 0.0
    %394 = vmatpush1.msra.mxu0 0.0
    %395 = vmatprep.subr.mxu0 0.0
    %396 = vmatpush1.msra.mxu0 0.0
    %397 = vmatprep.subr.mxu0 0.0
    %398 = vmatpush1.msra.mxu0 0.0
    %399 = vmatprep.subr.mxu0 0.0
    %400 = vmatpush1.msra.mxu0 0.0
    %401 = vmatprep.subr.mxu0 0.0
    %402 = vmatpush1.msra.mxu0 0.0
    %403 = vmatprep.subr.mxu0 0.0
    %404 = vmatpush1.msra.mxu0 0.0
    %405 = vmatprep.subr.mxu0 0.0
    %406 = vmatpush1.msra.mxu0 0.0
    %407 = vmatprep.subr.mxu0 0.0
    %408 = vmatpush1.msra.mxu0 0.0
    %409 = vmatprep.subr.mxu0 0.0
    %410 = vmatpush1.msra.mxu0 0.0
    %411 = vmatprep.subr.mxu0 0.0
    %412 = vmatpush1.msra.mxu0 0.0
    %413 = vmatprep.subr.mxu0 0.0
    %414 = vmatpush1.msra.mxu0 0.0
    %415 = vmatprep.subr.mxu0 0.0
    %416 = vmatpush1.msra.mxu0 0.0
    %417 = vmatprep.subr.mxu0 0.0
    %418 = vmatpush1.msra.mxu0 0.0
    %419 = vmatprep.subr.mxu0 0.0
    %420 = vmatpush1.msra.mxu0 0.0
    %421 = vmatprep.subr.mxu0 0.0
    %422 = vmatpush1.msra.mxu0 0.0
    %423 = vmatprep.subr.mxu0 0.0
    %424 = vmatpush1.msra.mxu0 0.0
    %425 = vmatprep.subr.mxu0 0.0
    %426 = vmatpush1.msra.mxu0 0.0
    %427 = vmatprep.subr.mxu0 0.0
    %428 = vmatpush1.msra.mxu0 0.0
    %429 = vmatprep.subr.mxu0 0.0
    %430 = vmatpush1.msra.mxu0 0.0
    %431 = vmatprep.subr.mxu0 0.0
    %432 = vmatpush1.msra.mxu0 0.0
    %433 = vmatprep.subr.mxu0 0.0
    %434 = vmatpush1.msra.mxu0 0.0
    %435 = vmatprep.subr.mxu0 0.0
    %436 = vmatpush1.msra.mxu0 0.0
    %437 = vmatprep.subr.mxu0 0.0
    %438 = vmatpush1.msra.mxu0 0.0
    %439 = vmatprep.mubr.f32.mxu0 0.0
    %440 = vmatmul.mubr.f32.gmra.mrb[0].mxu0 %v345
    %v441 = vpop.f32.mrb[0].mxu0
    %v442 = vadd.f32 %v328, %v441
    %v443 = vpop.f32.mrb[0].mxu0
    %v444 = vadd.f32 %v332, %v443
    %445 = vmatprep.mubr.f32.mxu0 0.0
    %446 = vmatmul.mubr.f32.gmra.mrb[0].mxu0 %v348
    %v447 = vpop.f32.mrb[0].mxu0
    %v448 = vadd.f32 %v328, %v447
    %v449 = vpop.f32.mrb[0].mxu0
    %v450 = vadd.f32 %v332, %v449
    %451 = vmatprep.mubr.f32.mxu0 0.0
    %452 = vmatmul.mubr.f32.gmra.mrb[0].mxu0 %v351
    %v453 = vpop.f32.mrb[0].mxu0
    %v454 = vadd.f32 %v328, %v453
    %v455 = vpop.f32.mrb[0].mxu0
    %v456 = vadd.f32 %v332, %v455
    %457 = vmatprep.mubr.f32.mxu0 0.0
    %458 = vmatmul.mubr.f32.gmra.mrb[0].mxu0 %v354
    %v459 = vpop.f32.mrb[0].mxu0
    %v460 = vadd.f32 %v328, %v459
    %v461 = vpop.f32.mrb[0].mxu0
    %v462 = vadd.f32 %v332, %v461
    %463 = vmatprep.mubr.f32.mxu0 0.0
    %464 = vmatmul.mubr.f32.gmra.mrb[0].mxu0 %v357
    %v465 = vpop.f32.mrb[0].mxu0
    %v466 = vadd.f32 %v328, %v465
    %v467 = vpop.f32.mrb[0].mxu0
    %v468 = vadd.f32 %v332, %v467
    %469 = vmatprep.mubr.f32.mxu0 0.0
    %470 = vmatmul.mubr.f32.gmra.mrb[0].mxu0 %v360
    %v471 = vpop.f32.mrb[0].mxu0
    %v472 = vadd.f32 %v328, %v471
    %v473 = vpop.f32.mrb[0].mxu0
    %v474 = vadd.f32 %v332, %v473
    %475 = vmatprep.mubr.f32.mxu0 0.0
    %476 = vmatmul.mubr.f32.gmra.mrb[0].mxu0 %v363
    %v477 = vpop.f32.mrb[0].mxu0
    %v478 = vadd.f32 %v328, %v477
    %v479 = vpop.f32.mrb[0].mxu0
    %v480 = vadd.f32 %v332, %v479
    %481 = vmatprep.mubr.f32.mxu0 0.0
    %482 = vmatmul.mubr.f32.gmra.mrb[0].mxu0 %v366
    %v483 = vpop.f32.mrb[0].mxu0
    %v484 = vadd.f32 %v328, %v483
    %v485 = vpop.f32.mrb[0].mxu0
    %v486 = vadd.f32 %v332, %v485
    %487 = vdwg.mxu0
    %488 = vmatprep.subr.mxu0 0.0
    %489 = vmatpush1.msra.mxu0 %v373
    %490 = vmatprep.subr.mxu0 0.0
    %491 = vmatpush1.msra.mxu0 0.0
    %492 = vmatprep.subr.mxu0 0.0
    %493 = vmatpush1.msra.mxu0 0.0
    %494 = vmatprep.subr.mxu0 0.0
    %495 = vmatpush1.msra.mxu0 0.0
    %496 = vmatprep.subr.mxu0 0.0
    %497 = vmatpush1.msra.mxu0 0.0
    %498 = vmatprep.subr.mxu0 0.0
    %499 = vmatpush1.msra.mxu0 0.0
    %500 = vmatprep.subr.mxu0 0.0
    %501 = vmatpush1.msra.mxu0 0.0
    %502 = vmatprep.subr.mxu0 0.0
    %503 = vmatpush1.msra.mxu0 0.0
    %504 = vmatprep.subr.mxu0 0.0
    %505 = vmatpush1.msra.mxu0 0.0
    %506 = vmatprep.subr.mxu0 0.0
    %507 = vmatpush1.msra.mxu0 0.0
    %508 = vmatprep.subr.mxu0 0.0
    %509 = vmatpush1.msra.mxu0 0.0
    %510 = vmatprep.subr.mxu0 0.0
    %511 = vmatpush1.msra.mxu0 0.0
    %512 = vmatprep.subr.mxu0 0.0
    %513 = vmatpush1.msra.mxu0 0.0
    %514 = vmatprep.subr.mxu0 0.0
    %515 = vmatpush1.msra.mxu0 0.0
    %516 = vmatprep.subr.mxu0 0.0
    %517 = vmatpush1.msra.mxu0 0.0
    %518 = vmatprep.subr.mxu0 0.0
    %519 = vmatpush1.msra.mxu0 0.0
    %520 = vmatprep.subr.mxu0 0.0
    %521 = vmatpush1.msra.mxu0 0.0
    %522 = vmatprep.subr.mxu0 0.0
    %523 = vmatpush1.msra.mxu0 0.0
    %524 = vmatprep.subr.mxu0 0.0
    %525 = vmatpush1.msra.mxu0 0.0
    %526 = vmatprep.subr.mxu0 0.0
    %527 = vmatpush1.msra.mxu0 0.0
    %528 = vmatprep.subr.mxu0 0.0
    %529 = vmatpush1.msra.mxu0 0.0
    %530 = vmatprep.subr.mxu0 0.0
    %531 = vmatpush1.msra.mxu0 0.0
    %532 = vmatprep.subr.mxu0 0.0
    %533 = vmatpush1.msra.mxu0 0.0
    %534 = vmatprep.subr.mxu0 0.0
    %535 = vmatpush1.msra.mxu0 0.0
    %536 = vmatprep.subr.mxu0 0.0
    %537 = vmatpush1.msra.mxu0 0.0
    %538 = vmatprep.subr.mxu0 0.0
    %539 = vmatpush1.msra.mxu0 0.0
    %540 = vmatprep.subr.mxu0 0.0
    %541 = vmatpush1.msra.mxu0 0.0
    %542 = vmatprep.subr.mxu0 0.0
    %543 = vmatpush1.msra.mxu0 0.0
    %544 = vmatprep.subr.mxu0 0.0
    %545 = vmatpush1.msra.mxu0 0.0
    %546 = vmatprep.subr.mxu0 0.0
    %547 = vmatpush1.msra.mxu0 0.0
    %548 = vmatprep.subr.mxu0 0.0
    %549 = vmatpush1.msra.mxu0 0.0
    %550 = vmatprep.subr.mxu0 0.0
    %551 = vmatpush1.msra.mxu0 0.0
    %552 = vmatprep.mubr.f32.mxu0 0.0
    %553 = vmatmul.mubr.f32.gmra.mrb[0].mxu0 %v345
    %v554 = vpop.f32.mrb[0].mxu0
    %v555 = vadd.f32 %v336, %v554
    %v556 = vpop.f32.mrb[0].mxu0
    %557 = vmatprep.mubr.f32.mxu0 0.0
    %558 = vmatmul.mubr.f32.gmra.mrb[0].mxu0 %v348
    %v559 = vpop.f32.mrb[0].mxu0
    %v560 = vadd.f32 %v336, %v559
    %v561 = vpop.f32.mrb[0].mxu0
    %562 = vmatprep.mubr.f32.mxu0 0.0
    %563 = vmatmul.mubr.f32.gmra.mrb[0].mxu0 %v351
    %v564 = vpop.f32.mrb[0].mxu0
    %v565 = vadd.f32 %v336, %v564
    %v566 = vpop.f32.mrb[0].mxu0
    %567 = vmatprep.mubr.f32.mxu0 0.0
    %568 = vmatmul.mubr.f32.gmra.mrb[0].mxu0 %v354
    %v569 = vpop.f32.mrb[0].mxu0
    %v570 = vadd.f32 %v336, %v569
    %v571 = vpop.f32.mrb[0].mxu0
    %572 = vmatprep.mubr.f32.mxu0 0.0
    %573 = vmatmul.mubr.f32.gmra.mrb[0].mxu0 %v357
    %v574 = vpop.f32.mrb[0].mxu0
    %v575 = vadd.f32 %v336, %v574
    %v576 = vpop.f32.mrb[0].mxu0
    %577 = vmatprep.mubr.f32.mxu0 0.0
    %578 = vmatmul.mubr.f32.gmra.mrb[0].mxu0 %v360
    %v579 = vpop.f32.mrb[0].mxu0
    %v580 = vadd.f32 %v336, %v579
    %v581 = vpop.f32.mrb[0].mxu0
    %582 = vmatprep.mubr.f32.mxu0 0.0
    %583 = vmatmul.mubr.f32.gmra.mrb[0].mxu0 %v363
    %v584 = vpop.f32.mrb[0].mxu0
    %v585 = vadd.f32 %v336, %v584
    %v586 = vpop.f32.mrb[0].mxu0
    %587 = vmatprep.mubr.f32.mxu0 0.0
    %588 = vmatmul.mubr.f32.gmra.mrb[0].mxu0 %v366
    %v589 = vpop.f32.mrb[0].mxu0
    %v590 = vadd.f32 %v336, %v589
    %v591 = vpop.f32.mrb[0].mxu0
    %592 = vdwg.mxu0
    %v594 = vlaneseq
    %v595 = vshrl.u32 %v594, 7
    %v596 = vsub.s32 0, %v595
    %v597 = vrot.slane %v201, %v596
    %v598 = vlaneseq
    %v599 = vshrl.u32 %v598, 7
    %v600 = vsub.s32 1, %v599
    %v601 = vrot.slane %v201, %v600
    %v602 = vlaneseq
    %v603 = vshrl.u32 %v602, 7
    %v604 = vsub.s32 2, %v603
    %v605 = vrot.slane %v201, %v604
    %609 = vmatprep.subr.mxu0 %v153
    %610 = vmatpush1.msra.mxu0 %v152
    %611 = vmatprep.subr.mxu0 %v156
    %612 = vmatpush1.msra.mxu0 %v155
    %613 = vmatprep.subr.mxu0 %v159
    %614 = vmatpush1.msra.mxu0 %v158
    %615 = vmatprep.subr.mxu0 %v162
    %616 = vmatpush1.msra.mxu0 %v161
    %617 = vmatprep.subr.mxu0 %v165
    %618 = vmatpush1.msra.mxu0 %v164
    %619 = vmatprep.subr.mxu0 %v168
    %620 = vmatpush1.msra.mxu0 %v167
    %621 = vmatprep.subr.mxu0 %v171
    %622 = vmatpush1.msra.mxu0 %v170
    %623 = vmatprep.subr.mxu0 %v174
    %624 = vmatpush1.msra.mxu0 %v173
    %625 = vmatprep.subr.mxu0 %v177
    %626 = vmatpush1.msra.mxu0 %v176
    %627 = vmatprep.subr.mxu0 %v180
    %628 = vmatpush1.msra.mxu0 %v179
    %629 = vmatprep.subr.mxu0 %v183
    %630 = vmatpush1.msra.mxu0 %v182
    %631 = vmatprep.subr.mxu0 %v186
    %632 = vmatpush1.msra.mxu0 %v185
    %633 = vmatprep.subr.mxu0 %v189
    %634 = vmatpush1.msra.mxu0 %v188
    %635 = vmatprep.subr.mxu0 %v192
    %636 = vmatpush1.msra.mxu0 %v191
    %637 = vmatprep.subr.mxu0 %v195
    %638 = vmatpush1.msra.mxu0 %v194
    %639 = vmatprep.subr.mxu0 %v198
    %640 = vmatpush1.msra.mxu0 %v197
    %641 = vmatprep.subr.mxu0 0.0
    %642 = vmatpush1.msra.mxu0 0.0
    %643 = vmatprep.subr.mxu0 0.0
    %644 = vmatpush1.msra.mxu0 0.0
    %645 = vmatprep.subr.mxu0 0.0
    %646 = vmatpush1.msra.mxu0 0.0
    %647 = vmatprep.subr.mxu0 0.0
    %648 = vmatpush1.msra.mxu0 0.0
    %649 = vmatprep.subr.mxu0 0.0
    %650 = vmatpush1.msra.mxu0 0.0
    %651 = vmatprep.subr.mxu0 0.0
    %652 = vmatpush1.msra.mxu0 0.0
    %653 = vmatprep.subr.mxu0 0.0
    %654 = vmatpush1.msra.mxu0 0.0
    %655 = vmatprep.subr.mxu0 0.0
    %656 = vmatpush1.msra.mxu0 0.0
    %657 = vmatprep.subr.mxu0 0.0
    %658 = vmatpush1.msra.mxu0 0.0
    %659 = vmatprep.subr.mxu0 0.0
    %660 = vmatpush1.msra.mxu0 0.0
    %661 = vmatprep.subr.mxu0 0.0
    %662 = vmatpush1.msra.mxu0 0.0
    %663 = vmatprep.subr.mxu0 0.0
    %664 = vmatpush1.msra.mxu0 0.0
    %665 = vmatprep.subr.mxu0 0.0
    %666 = vmatpush1.msra.mxu0 0.0
    %667 = vmatprep.subr.mxu0 0.0
    %668 = vmatpush1.msra.mxu0 0.0
    %669 = vmatprep.subr.mxu0 0.0
    %670 = vmatpush1.msra.mxu0 0.0
    %671 = vmatprep.subr.mxu0 0.0
    %672 = vmatpush1.msra.mxu0 0.0
    %673 = vmatprep.mubr.f32.mxu0 0.0
    %674 = vmatmul.mubr.f32.gmra.mrb[0].mxu0 0.0
    %v675 = vpop.f32.mrb[0].mxu0
    %v676 = vadd.f32 %v597, %v675
    %v677 = vpop.f32.mrb[0].mxu0
    %v678 = vadd.f32 %v601, %v677
    %679 = vdwg.mxu0
    %680 = vmatprep.subr.mxu0 0.0
    %681 = vmatpush1.msra.mxu0 %v154
    %682 = vmatprep.subr.mxu0 0.0
    %683 = vmatpush1.msra.mxu0 %v157
    %684 = vmatprep.subr.mxu0 0.0
    %685 = vmatpush1.msra.mxu0 %v160
    %686 = vmatprep.subr.mxu0 0.0
    %687 = vmatpush1.msra.mxu0 %v163
    %688 = vmatprep.subr.mxu0 0.0
    %689 = vmatpush1.msra.mxu0 %v166
    %690 = vmatprep.subr.mxu0 0.0
    %691 = vmatpush1.msra.mxu0 %v169
    %692 = vmatprep.subr.mxu0 0.0
    %693 = vmatpush1.msra.mxu0 %v172
    %694 = vmatprep.subr.mxu0 0.0
    %695 = vmatpush1.msra.mxu0 %v175
    %696 = vmatprep.subr.mxu0 0.0
    %697 = vmatpush1.msra.mxu0 %v178
    %698 = vmatprep.subr.mxu0 0.0
    %699 = vmatpush1.msra.mxu0 %v181
    %700 = vmatprep.subr.mxu0 0.0
    %701 = vmatpush1.msra.mxu0 %v184
    %702 = vmatprep.subr.mxu0 0.0
    %703 = vmatpush1.msra.mxu0 %v187
    %704 = vmatprep.subr.mxu0 0.0
    %705 = vmatpush1.msra.mxu0 %v190
    %706 = vmatprep.subr.mxu0 0.0
    %707 = vmatpush1.msra.mxu0 %v193
    %708 = vmatprep.subr.mxu0 0.0
    %709 = vmatpush1.msra.mxu0 %v196
    %710 = vmatprep.subr.mxu0 0.0
    %711 = vmatpush1.msra.mxu0 %v199
    %712 = vmatprep.subr.mxu0 0.0
    %713 = vmatpush1.msra.mxu0 0.0
    %714 = vmatprep.subr.mxu0 0.0
    %715 = vmatpush1.msra.mxu0 0.0
    %716 = vmatprep.subr.mxu0 0.0
    %717 = vmatpush1.msra.mxu0 0.0
    %718 = vmatprep.subr.mxu0 0.0
    %719 = vmatpush1.msra.mxu0 0.0
    %720 = vmatprep.subr.mxu0 0.0
    %721 = vmatpush1.msra.mxu0 0.0
    %722 = vmatprep.subr.mxu0 0.0
    %723 = vmatpush1.msra.mxu0 0.0
    %724 = vmatprep.subr.mxu0 0.0
    %725 = vmatpush1.msra.mxu0 0.0
    %726 = vmatprep.subr.mxu0 0.0
    %727 = vmatpush1.msra.mxu0 0.0
    %728 = vmatprep.subr.mxu0 0.0
    %729 = vmatpush1.msra.mxu0 0.0
    %730 = vmatprep.subr.mxu0 0.0
    %731 = vmatpush1.msra.mxu0 0.0
    %732 = vmatprep.subr.mxu0 0.0
    %733 = vmatpush1.msra.mxu0 0.0
    %734 = vmatprep.subr.mxu0 0.0
    %735 = vmatpush1.msra.mxu0 0.0
    %736 = vmatprep.subr.mxu0 0.0
    %737 = vmatpush1.msra.mxu0 0.0
    %738 = vmatprep.subr.mxu0 0.0
    %739 = vmatpush1.msra.mxu0 0.0
    %740 = vmatprep.subr.mxu0 0.0
    %741 = vmatpush1.msra.mxu0 0.0
    %742 = vmatprep.subr.mxu0 0.0
    %743 = vmatpush1.msra.mxu0 0.0
    %744 = vmatprep.mubr.f32.mxu0 0.0
    %745 = vmatmul.mubr.f32.gmra.mrb[0].mxu0 0.0
    %v746 = vpop.f32.mrb[0].mxu0
    %v747 = vadd.f32 %v605, %v746
    %v748 = vpop.f32.mrb[0].mxu0
    %749 = vdwg.mxu0
    %v750 = vadd.f32 %v442, %v676
    %v751 = vxor.u32 %v750, 2147483648
    %v752 = vmul.f32 %v751, 1.442695
    %v753 = vpow.pop %v752
    %v754 = vadd.f32 %v753, 1.0
    %v755 = vrcp.pop %v754
    %v756 = vmul.f32 1.0, %v755
    %v757 = vadd.f32 %v444, %v678
    %v758 = vxor.u32 %v757, 2147483648
    %v759 = vmul.f32 %v758, 1.442695
    %v760 = vpow.pop %v759
    %v761 = vadd.f32 %v760, 1.0
    %v762 = vrcp.pop %v761
    %v763 = vmul.f32 1.0, %v762
    %v764 = vmul.f32 %v756, %v747
    %v765 = vadd.f32 %v555, %v764
    %v766 = vtanh.pop %v765
    %v767 = vsub.f32 1.0, %v763
    %v768 = vmul.f32 %v767, %v766
    %v769 = vmul.f32 %v763, 0.0
    %v770 = vadd.f32 %v768, %v769
    %vm771 = vcmp.gt.s32.totalorder %v313, 0
    %v772 = vsel %vm771, 1, 0
    %773 = vset.pattern.permute.xlu0 0
    %774 = vperm.xlu0 %773, %v772
    %v775 = vpop.permute.xlu0 %774
    %vm776 = vcmp.eq.s32.totalorder %v775, 1
    %v777 = vsel %vm776, %v770, 0.0
    %778 = vmatprep.subr.mxu0 %v153
    %779 = vmatpush1.msra.mxu0 %v152
    %780 = vmatprep.subr.mxu0 %v156
    %781 = vmatpush1.msra.mxu0 %v155
    %782 = vmatprep.subr.mxu0 %v159
    %783 = vmatpush1.msra.mxu0 %v158
    %784 = vmatprep.subr.mxu0 %v162
    %785 = vmatpush1.msra.mxu0 %v161
    %786 = vmatprep.subr.mxu0 %v165
    %787 = vmatpush1.msra.mxu0 %v164
    %788 = vmatprep.subr.mxu0 %v168
    %789 = vmatpush1.msra.mxu0 %v167
    %790 = vmatprep.subr.mxu0 %v171
    %791 = vmatpush1.msra.mxu0 %v170
    %792 = vmatprep.subr.mxu0 %v174
    %793 = vmatpush1.msra.mxu0 %v173
    %794 = vmatprep.subr.mxu0 %v177
    %795 = vmatpush1.msra.mxu0 %v176
    %796 = vmatprep.subr.mxu0 %v180
    %797 = vmatpush1.msra.mxu0 %v179
    %798 = vmatprep.subr.mxu0 %v183
    %799 = vmatpush1.msra.mxu0 %v182
    %800 = vmatprep.subr.mxu0 %v186
    %801 = vmatpush1.msra.mxu0 %v185
    %802 = vmatprep.subr.mxu0 %v189
    %803 = vmatpush1.msra.mxu0 %v188
    %804 = vmatprep.subr.mxu0 %v192
    %805 = vmatpush1.msra.mxu0 %v191
    %806 = vmatprep.subr.mxu0 %v195
    %807 = vmatpush1.msra.mxu0 %v194
    %808 = vmatprep.subr.mxu0 %v198
    %809 = vmatpush1.msra.mxu0 %v197
    %810 = vmatprep.subr.mxu0 0.0
    %811 = vmatpush1.msra.mxu0 0.0
    %812 = vmatprep.subr.mxu0 0.0
    %813 = vmatpush1.msra.mxu0 0.0
    %814 = vmatprep.subr.mxu0 0.0
    %815 = vmatpush1.msra.mxu0 0.0
    %816 = vmatprep.subr.mxu0 0.0
    %817 = vmatpush1.msra.mxu0 0.0
    %818 = vmatprep.subr.mxu0 0.0
    %819 = vmatpush1.msra.mxu0 0.0
    %820 = vmatprep.subr.mxu0 0.0
    %821 = vmatpush1.msra.mxu0 0.0
    %822 = vmatprep.subr.mxu0 0.0
    %823 = vmatpush1.msra.mxu0 0.0
    %824 = vmatprep.subr.mxu0 0.0
    %825 = vmatpush1.msra.mxu0 0.0
    %826 = vmatprep.subr.mxu0 0.0
    %827 = vmatpush1.msra.mxu0 0.0
    %828 = vmatprep.subr.mxu0 0.0
    %829 = vmatpush1.msra.mxu0 0.0
    %830 = vmatprep.subr.mxu0 0.0
    %831 = vmatpush1.msra.mxu0 0.0
    %832 = vmatprep.subr.mxu0 0.0
    %833 = vmatpush1.msra.mxu0 0.0
    %834 = vmatprep.subr.mxu0 0.0
    %835 = vmatpush1.msra.mxu0 0.0
    %836 = vmatprep.subr.mxu0 0.0
    %837 = vmatpush1.msra.mxu0 0.0
    %838 = vmatprep.subr.mxu0 0.0
    %839 = vmatpush1.msra.mxu0 0.0
    %840 = vmatprep.subr.mxu0 0.0
    %841 = vmatpush1.msra.mxu0 0.0
    %842 = vmatprep.mubr.f32.mxu0 0.0
    %843 = vmatmul.mubr.f32.gmra.mrb[0].mxu0 %v777
    %v844 = vpop.f32.mrb[0].mxu0
    %v845 = vadd.f32 %v597, %v844
    %v846 = vpop.f32.mrb[0].mxu0
    %v847 = vadd.f32 %v601, %v846
    %848 = vdwg.mxu0
    %849 = vmatprep.subr.mxu0 0.0
    %850 = vmatpush1.msra.mxu0 %v154
    %851 = vmatprep.subr.mxu0 0.0
    %852 = vmatpush1.msra.mxu0 %v157
    %853 = vmatprep.subr.mxu0 0.0
    %854 = vmatpush1.msra.mxu0 %v160
    %855 = vmatprep.subr.mxu0 0.0
    %856 = vmatpush1.msra.mxu0 %v163
    %857 = vmatprep.subr.mxu0 0.0
    %858 = vmatpush1.msra.mxu0 %v166
    %859 = vmatprep.subr.mxu0 0.0
    %860 = vmatpush1.msra.mxu0 %v169
    %861 = vmatprep.subr.mxu0 0.0
    %862 = vmatpush1.msra.mxu0 %v172
    %863 = vmatprep.subr.mxu0 0.0
    %864 = vmatpush1.msra.mxu0 %v175
    %865 = vmatprep.subr.mxu0 0.0
    %866 = vmatpush1.msra.mxu0 %v178
    %867 = vmatprep.subr.mxu0 0.0
    %868 = vmatpush1.msra.mxu0 %v181
    %869 = vmatprep.subr.mxu0 0.0
    %870 = vmatpush1.msra.mxu0 %v184
    %871 = vmatprep.subr.mxu0 0.0
    %872 = vmatpush1.msra.mxu0 %v187
    %873 = vmatprep.subr.mxu0 0.0
    %874 = vmatpush1.msra.mxu0 %v190
    %875 = vmatprep.subr.mxu0 0.0
    %876 = vmatpush1.msra.mxu0 %v193
    %877 = vmatprep.subr.mxu0 0.0
    %878 = vmatpush1.msra.mxu0 %v196
    %879 = vmatprep.subr.mxu0 0.0
    %880 = vmatpush1.msra.mxu0 %v199
    %881 = vmatprep.subr.mxu0 0.0
    %882 = vmatpush1.msra.mxu0 0.0
    %883 = vmatprep.subr.mxu0 0.0
    %884 = vmatpush1.msra.mxu0 0.0
    %885 = vmatprep.subr.mxu0 0.0
    %886 = vmatpush1.msra.mxu0 0.0
    %887 = vmatprep.subr.mxu0 0.0
    %888 = vmatpush1.msra.mxu0 0.0
    %889 = vmatprep.subr.mxu0 0.0
    %890 = vmatpush1.msra.mxu0 0.0
    %891 = vmatprep.subr.mxu0 0.0
    %892 = vmatpush1.msra.mxu0 0.0
    %893 = vmatprep.subr.mxu0 0.0
    %894 = vmatpush1.msra.mxu0 0.0
    %895 = vmatprep.subr.mxu0 0.0
    %896 = vmatpush1.msra.mxu0 0.0
    %897 = vmatprep.subr.mxu0 0.0
    %898 = vmatpush1.msra.mxu0 0.0
    %899 = vmatprep.subr.mxu0 0.0
    %900 = vmatpush1.msra.mxu0 0.0
    %901 = vmatprep.subr.mxu0 0.0
    %902 = vmatpush1.msra.mxu0 0.0
    %903 = vmatprep.subr.mxu0 0.0
    %904 = vmatpush1.msra.mxu0 0.0
    %905 = vmatprep.subr.mxu0 0.0
    %906 = vmatpush1.msra.mxu0 0.0
    %907 = vmatprep.subr.mxu0 0.0
    %908 = vmatpush1.msra.mxu0 0.0
    %909 = vmatprep.subr.mxu0 0.0
    %910 = vmatpush1.msra.mxu0 0.0
    %911 = vmatprep.subr.mxu0 0.0
    %912 = vmatpush1.msra.mxu0 0.0
    %913 = vmatprep.mubr.f32.mxu0 0.0
    %914 = vmatmul.mubr.f32.gmra.mrb[0].mxu0 %v777
    %v915 = vpop.f32.mrb[0].mxu0
    %v916 = vadd.f32 %v605, %v915
    %v917 = vpop.f32.mrb[0].mxu0
    %918 = vdwg.mxu0
    %v919 = vadd.f32 %v448, %v845
    %v920 = vxor.u32 %v919, 2147483648
    %v921 = vmul.f32 %v920, 1.442695
    %v922 = vpow.pop %v921
    %v923 = vadd.f32 %v922, 1.0
    %v924 = vrcp.pop %v923
    %v925 = vmul.f32 1.0, %v924
    %v926 = vadd.f32 %v450, %v847
    %v927 = vxor.u32 %v926, 2147483648
    %v928 = vmul.f32 %v927, 1.442695
    %v929 = vpow.pop %v928
    %v930 = vadd.f32 %v929, 1.0
    %v931 = vrcp.pop %v930
    %v932 = vmul.f32 1.0, %v931
    %v933 = vmul.f32 %v925, %v916
    %v934 = vadd.f32 %v560, %v933
    %v935 = vtanh.pop %v934
    %v936 = vsub.f32 1.0, %v932
    %v937 = vmul.f32 %v936, %v935
    %v938 = vmul.f32 %v932, %v777
    %v939 = vadd.f32 %v937, %v938
    %vm940 = vcmp.gt.s32.totalorder %v313, 1
    %v941 = vsel %vm940, 1, 0
    %942 = vset.pattern.permute.xlu0 0
    %943 = vperm.xlu0 %942, %v941
    %v944 = vpop.permute.xlu0 %943
    %vm945 = vcmp.eq.s32.totalorder %v944, 1
    %v946 = vsel %vm945, %v939, %v777
    %947 = vmatprep.subr.mxu0 %v153
    %948 = vmatpush1.msra.mxu0 %v152
    %949 = vmatprep.subr.mxu0 %v156
    %950 = vmatpush1.msra.mxu0 %v155
    %951 = vmatprep.subr.mxu0 %v159
    %952 = vmatpush1.msra.mxu0 %v158
    %953 = vmatprep.subr.mxu0 %v162
    %954 = vmatpush1.msra.mxu0 %v161
    %955 = vmatprep.subr.mxu0 %v165
    %956 = vmatpush1.msra.mxu0 %v164
    %957 = vmatprep.subr.mxu0 %v168
    %958 = vmatpush1.msra.mxu0 %v167
    %959 = vmatprep.subr.mxu0 %v171
    %960 = vmatpush1.msra.mxu0 %v170
    %961 = vmatprep.subr.mxu0 %v174
    %962 = vmatpush1.msra.mxu0 %v173
    %963 = vmatprep.subr.mxu0 %v177
    %964 = vmatpush1.msra.mxu0 %v176
    %965 = vmatprep.subr.mxu0 %v180
    %966 = vmatpush1.msra.mxu0 %v179
    %967 = vmatprep.subr.mxu0 %v183
    %968 = vmatpush1.msra.mxu0 %v182
    %969 = vmatprep.subr.mxu0 %v186
    %970 = vmatpush1.msra.mxu0 %v185
    %971 = vmatprep.subr.mxu0 %v189
    %972 = vmatpush1.msra.mxu0 %v188
    %973 = vmatprep.subr.mxu0 %v192
    %974 = vmatpush1.msra.mxu0 %v191
    %975 = vmatprep.subr.mxu0 %v195
    %976 = vmatpush1.msra.mxu0 %v194
    %977 = vmatprep.subr.mxu0 %v198
    %978 = vmatpush1.msra.mxu0 %v197
    %979 = vmatprep.subr.mxu0 0.0
    %980 = vmatpush1.msra.mxu0 0.0
    %981 = vmatprep.subr.mxu0 0.0
    %982 = vmatpush1.msra.mxu0 0.0
    %983 = vmatprep.subr.mxu0 0.0
    %984 = vmatpush1.msra.mxu0 0.0
    %985 = vmatprep.subr.mxu0 0.0
    %986 = vmatpush1.msra.mxu0 0.0
    %987 = vmatprep.subr.mxu0 0.0
    %988 = vmatpush1.msra.mxu0 0.0
    %989 = vmatprep.subr.mxu0 0.0
    %990 = vmatpush1.msra.mxu0 0.0
    %991 = vmatprep.subr.mxu0 0.0
    %992 = vmatpush1.msra.mxu0 0.0
    %993 = vmatprep.subr.mxu0 0.0
    %994 = vmatpush1.msra.mxu0 0.0
    %995 = vmatprep.subr.mxu0 0.0
    %996 = vmatpush1.msra.mxu0 0.0
    %997 = vmatprep.subr.mxu0 0.0
    %998 = vmatpush1.msra.mxu0 0.0
    %999 = vmatprep.subr.mxu0 0.0
    %1000 = vmatpush1.msra.mxu0 0.0
    %1001 = vmatprep.subr.mxu0 0.0
    %1002 = vmatpush1.msra.mxu0 0.0
    %1003 = vmatprep.subr.mxu0 0.0
    %1004 = vmatpush1.msra.mxu0 0.0
    %1005 = vmatprep.subr.mxu0 0.0
    %1006 = vmatpush1.msra.mxu0 0.0
    %1007 = vmatprep.subr.mxu0 0.0
    %1008 = vmatpush1.msra.mxu0 0.0
    %1009 = vmatprep.subr.mxu0 0.0
    %1010 = vmatpush1.msra.mxu0 0.0
    %1011 = vmatprep.mubr.f32.mxu0 0.0
    %1012 = vmatmul.mubr.f32.gmra.mrb[0].mxu0 %v946
    %v1013 = vpop.f32.mrb[0].mxu0
    %v1014 = vadd.f32 %v597, %v1013
    %v1015 = vpop.f32.mrb[0].mxu0
    %v1016 = vadd.f32 %v601, %v1015
    %1017 = vdwg.mxu0
    %1018 = vmatprep.subr.mxu0 0.0
    %1019 = vmatpush1.msra.mxu0 %v154
    %1020 = vmatprep.subr.mxu0 0.0
    %1021 = vmatpush1.msra.mxu0 %v157
    %1022 = vmatprep.subr.mxu0 0.0
    %1023 = vmatpush1.msra.mxu0 %v160
    %1024 = vmatprep.subr.mxu0 0.0
    %1025 = vmatpush1.msra.mxu0 %v163
    %1026 = vmatprep.subr.mxu0 0.0
    %1027 = vmatpush1.msra.mxu0 %v166
    %1028 = vmatprep.subr.mxu0 0.0
    %1029 = vmatpush1.msra.mxu0 %v169
    %1030 = vmatprep.subr.mxu0 0.0
    %1031 = vmatpush1.msra.mxu0 %v172
    %1032 = vmatprep.subr.mxu0 0.0
    %1033 = vmatpush1.msra.mxu0 %v175
    %1034 = vmatprep.subr.mxu0 0.0
    %1035 = vmatpush1.msra.mxu0 %v178
    %1036 = vmatprep.subr.mxu0 0.0
    %1037 = vmatpush1.msra.mxu0 %v181
    %1038 = vmatprep.subr.mxu0 0.0
    %1039 = vmatpush1.msra.mxu0 %v184
    %1040 = vmatprep.subr.mxu0 0.0
    %1041 = vmatpush1.msra.mxu0 %v187
    %1042 = vmatprep.subr.mxu0 0.0
    %1043 = vmatpush1.msra.mxu0 %v190
    %1044 = vmatprep.subr.mxu0 0.0
    %1045 = vmatpush1.msra.mxu0 %v193
    %1046 = vmatprep.subr.mxu0 0.0
    %1047 = vmatpush1.msra.mxu0 %v196
    %1048 = vmatprep.subr.mxu0 0.0
    %1049 = vmatpush1.msra.mxu0 %v199
    %1050 = vmatprep.subr.mxu0 0.0
    %1051 = vmatpush1.msra.mxu0 0.0
    %1052 = vmatprep.subr.mxu0 0.0
    %1053 = vmatpush1.msra.mxu0 0.0
    %1054 = vmatprep.subr.mxu0 0.0
    %1055 = vmatpush1.msra.mxu0 0.0
    %1056 = vmatprep.subr.mxu0 0.0
    %1057 = vmatpush1.msra.mxu0 0.0
    %1058 = vmatprep.subr.mxu0 0.0
    %1059 = vmatpush1.msra.mxu0 0.0
    %1060 = vmatprep.subr.mxu0 0.0
    %1061 = vmatpush1.msra.mxu0 0.0
    %1062 = vmatprep.subr.mxu0 0.0
    %1063 = vmatpush1.msra.mxu0 0.0
    %1064 = vmatprep.subr.mxu0 0.0
    %1065 = vmatpush1.msra.mxu0 0.0
    %1066 = vmatprep.subr.mxu0 0.0
    %1067 = vmatpush1.msra.mxu0 0.0
    %1068 = vmatprep.subr.mxu0 0.0
    %1069 = vmatpush1.msra.mxu0 0.0
    %1070 = vmatprep.subr.mxu0 0.0
    %1071 = vmatpush1.msra.mxu0 0.0
    %1072 = vmatprep.subr.mxu0 0.0
    %1073 = vmatpush1.msra.mxu0 0.0
    %1074 = vmatprep.subr.mxu0 0.0
    %1075 = vmatpush1.msra.mxu0 0.0
    %1076 = vmatprep.subr.mxu0 0.0
    %1077 = vmatpush1.msra.mxu0 0.0
    %1078 = vmatprep.subr.mxu0 0.0
    %1079 = vmatpush1.msra.mxu0 0.0
    %1080 = vmatprep.subr.mxu0 0.0
    %1081 = vmatpush1.msra.mxu0 0.0
    %1082 = vmatprep.mubr.f32.mxu0 0.0
    %1083 = vmatmul.mubr.f32.gmra.mrb[0].mxu0 %v946
    %v1084 = vpop.f32.mrb[0].mxu0
    %v1085 = vadd.f32 %v605, %v1084
    %v1086 = vpop.f32.mrb[0].mxu0
    %1087 = vdwg.mxu0
    %v1088 = vadd.f32 %v454, %v1014
    %v1089 = vxor.u32 %v1088, 2147483648
    %v1090 = vmul.f32 %v1089, 1.442695
    %v1091 = vpow.pop %v1090
    %v1092 = vadd.f32 %v1091, 1.0
    %v1093 = vrcp.pop %v1092
    %v1094 = vmul.f32 1.0, %v1093
    %v1095 = vadd.f32 %v456, %v1016
    %v1096 = vxor.u32 %v1095, 2147483648
    %v1097 = vmul.f32 %v1096, 1.442695
    %v1098 = vpow.pop %v1097
    %v1099 = vadd.f32 %v1098, 1.0
    %v1100 = vrcp.pop %v1099
    %v1101 = vmul.f32 1.0, %v1100
    %v1102 = vmul.f32 %v1094, %v1085
    %v1103 = vadd.f32 %v565, %v1102
    %v1104 = vtanh.pop %v1103
    %v1105 = vsub.f32 1.0, %v1101
    %v1106 = vmul.f32 %v1105, %v1104
    %v1107 = vmul.f32 %v1101, %v946
    %v1108 = vadd.f32 %v1106, %v1107
    %vm1109 = vcmp.gt.s32.totalorder %v313, 2
    %v1110 = vsel %vm1109, 1, 0
    %1111 = vset.pattern.permute.xlu0 0
    %1112 = vperm.xlu0 %1111, %v1110
    %v1113 = vpop.permute.xlu0 %1112
    %vm1114 = vcmp.eq.s32.totalorder %v1113, 1
    %v1115 = vsel %vm1114, %v1108, %v946
    %1116 = vmatprep.subr.mxu0 %v153
    %1117 = vmatpush1.msra.mxu0 %v152
    %1118 = vmatprep.subr.mxu0 %v156
    %1119 = vmatpush1.msra.mxu0 %v155
    %1120 = vmatprep.subr.mxu0 %v159
    %1121 = vmatpush1.msra.mxu0 %v158
    %1122 = vmatprep.subr.mxu0 %v162
    %1123 = vmatpush1.msra.mxu0 %v161
    %1124 = vmatprep.subr.mxu0 %v165
    %1125 = vmatpush1.msra.mxu0 %v164
    %1126 = vmatprep.subr.mxu0 %v168
    %1127 = vmatpush1.msra.mxu0 %v167
    %1128 = vmatprep.subr.mxu0 %v171
    %1129 = vmatpush1.msra.mxu0 %v170
    %1130 = vmatprep.subr.mxu0 %v174
    %1131 = vmatpush1.msra.mxu0 %v173
    %1132 = vmatprep.subr.mxu0 %v177
    %1133 = vmatpush1.msra.mxu0 %v176
    %1134 = vmatprep.subr.mxu0 %v180
    %1135 = vmatpush1.msra.mxu0 %v179
    %1136 = vmatprep.subr.mxu0 %v183
    %1137 = vmatpush1.msra.mxu0 %v182
    %1138 = vmatprep.subr.mxu0 %v186
    %1139 = vmatpush1.msra.mxu0 %v185
    %1140 = vmatprep.subr.mxu0 %v189
    %1141 = vmatpush1.msra.mxu0 %v188
    %1142 = vmatprep.subr.mxu0 %v192
    %1143 = vmatpush1.msra.mxu0 %v191
    %1144 = vmatprep.subr.mxu0 %v195
    %1145 = vmatpush1.msra.mxu0 %v194
    %1146 = vmatprep.subr.mxu0 %v198
    %1147 = vmatpush1.msra.mxu0 %v197
    %1148 = vmatprep.subr.mxu0 0.0
    %1149 = vmatpush1.msra.mxu0 0.0
    %1150 = vmatprep.subr.mxu0 0.0
    %1151 = vmatpush1.msra.mxu0 0.0
    %1152 = vmatprep.subr.mxu0 0.0
    %1153 = vmatpush1.msra.mxu0 0.0
    %1154 = vmatprep.subr.mxu0 0.0
    %1155 = vmatpush1.msra.mxu0 0.0
    %1156 = vmatprep.subr.mxu0 0.0
    %1157 = vmatpush1.msra.mxu0 0.0
    %1158 = vmatprep.subr.mxu0 0.0
    %1159 = vmatpush1.msra.mxu0 0.0
    %1160 = vmatprep.subr.mxu0 0.0
    %1161 = vmatpush1.msra.mxu0 0.0
    %1162 = vmatprep.subr.mxu0 0.0
    %1163 = vmatpush1.msra.mxu0 0.0
    %1164 = vmatprep.subr.mxu0 0.0
    %1165 = vmatpush1.msra.mxu0 0.0
    %1166 = vmatprep.subr.mxu0 0.0
    %1167 = vmatpush1.msra.mxu0 0.0
    %1168 = vmatprep.subr.mxu0 0.0
    %1169 = vmatpush1.msra.mxu0 0.0
    %1170 = vmatprep.subr.mxu0 0.0
    %1171 = vmatpush1.msra.mxu0 0.0
    %1172 = vmatprep.subr.mxu0 0.0
    %1173 = vmatpush1.msra.mxu0 0.0
    %1174 = vmatprep.subr.mxu0 0.0
    %1175 = vmatpush1.msra.mxu0 0.0
    %1176 = vmatprep.subr.mxu0 0.0
    %1177 = vmatpush1.msra.mxu0 0.0
    %1178 = vmatprep.subr.mxu0 0.0
    %1179 = vmatpush1.msra.mxu0 0.0
    %1180 = vmatprep.mubr.f32.mxu0 0.0
    %1181 = vmatmul.mubr.f32.gmra.mrb[0].mxu0 %v1115
    %v1182 = vpop.f32.mrb[0].mxu0
    %v1183 = vadd.f32 %v597, %v1182
    %v1184 = vpop.f32.mrb[0].mxu0
    %v1185 = vadd.f32 %v601, %v1184
    %1186 = vdwg.mxu0
    %1187 = vmatprep.subr.mxu0 0.0
    %1188 = vmatpush1.msra.mxu0 %v154
    %1189 = vmatprep.subr.mxu0 0.0
    %1190 = vmatpush1.msra.mxu0 %v157
    %1191 = vmatprep.subr.mxu0 0.0
    %1192 = vmatpush1.msra.mxu0 %v160
    %1193 = vmatprep.subr.mxu0 0.0
    %1194 = vmatpush1.msra.mxu0 %v163
    %1195 = vmatprep.subr.mxu0 0.0
    %1196 = vmatpush1.msra.mxu0 %v166
    %1197 = vmatprep.subr.mxu0 0.0
    %1198 = vmatpush1.msra.mxu0 %v169
    %1199 = vmatprep.subr.mxu0 0.0
    %1200 = vmatpush1.msra.mxu0 %v172
    %1201 = vmatprep.subr.mxu0 0.0
    %1202 = vmatpush1.msra.mxu0 %v175
    %1203 = vmatprep.subr.mxu0 0.0
    %1204 = vmatpush1.msra.mxu0 %v178
    %1205 = vmatprep.subr.mxu0 0.0
    %1206 = vmatpush1.msra.mxu0 %v181
    %1207 = vmatprep.subr.mxu0 0.0
    %1208 = vmatpush1.msra.mxu0 %v184
    %1209 = vmatprep.subr.mxu0 0.0
    %1210 = vmatpush1.msra.mxu0 %v187
    %1211 = vmatprep.subr.mxu0 0.0
    %1212 = vmatpush1.msra.mxu0 %v190
    %1213 = vmatprep.subr.mxu0 0.0
    %1214 = vmatpush1.msra.mxu0 %v193
    %1215 = vmatprep.subr.mxu0 0.0
    %1216 = vmatpush1.msra.mxu0 %v196
    %1217 = vmatprep.subr.mxu0 0.0
    %1218 = vmatpush1.msra.mxu0 %v199
    %1219 = vmatprep.subr.mxu0 0.0
    %1220 = vmatpush1.msra.mxu0 0.0
    %1221 = vmatprep.subr.mxu0 0.0
    %1222 = vmatpush1.msra.mxu0 0.0
    %1223 = vmatprep.subr.mxu0 0.0
    %1224 = vmatpush1.msra.mxu0 0.0
    %1225 = vmatprep.subr.mxu0 0.0
    %1226 = vmatpush1.msra.mxu0 0.0
    %1227 = vmatprep.subr.mxu0 0.0
    %1228 = vmatpush1.msra.mxu0 0.0
    %1229 = vmatprep.subr.mxu0 0.0
    %1230 = vmatpush1.msra.mxu0 0.0
    %1231 = vmatprep.subr.mxu0 0.0
    %1232 = vmatpush1.msra.mxu0 0.0
    %1233 = vmatprep.subr.mxu0 0.0
    %1234 = vmatpush1.msra.mxu0 0.0
    %1235 = vmatprep.subr.mxu0 0.0
    %1236 = vmatpush1.msra.mxu0 0.0
    %1237 = vmatprep.subr.mxu0 0.0
    %1238 = vmatpush1.msra.mxu0 0.0
    %1239 = vmatprep.subr.mxu0 0.0
    %1240 = vmatpush1.msra.mxu0 0.0
    %1241 = vmatprep.subr.mxu0 0.0
    %1242 = vmatpush1.msra.mxu0 0.0
    %1243 = vmatprep.subr.mxu0 0.0
    %1244 = vmatpush1.msra.mxu0 0.0
    %1245 = vmatprep.subr.mxu0 0.0
    %1246 = vmatpush1.msra.mxu0 0.0
    %1247 = vmatprep.subr.mxu0 0.0
    %1248 = vmatpush1.msra.mxu0 0.0
    %1249 = vmatprep.subr.mxu0 0.0
    %1250 = vmatpush1.msra.mxu0 0.0
    %1251 = vmatprep.mubr.f32.mxu0 0.0
    %1252 = vmatmul.mubr.f32.gmra.mrb[0].mxu0 %v1115
    %v1253 = vpop.f32.mrb[0].mxu0
    %v1254 = vadd.f32 %v605, %v1253
    %v1255 = vpop.f32.mrb[0].mxu0
    %1256 = vdwg.mxu0
    %v1257 = vadd.f32 %v460, %v1183
    %v1258 = vxor.u32 %v1257, 2147483648
    %v1259 = vmul.f32 %v1258, 1.442695
    %v1260 = vpow.pop %v1259
    %v1261 = vadd.f32 %v1260, 1.0
    %v1262 = vrcp.pop %v1261
    %v1263 = vmul.f32 1.0, %v1262
    %v1264 = vadd.f32 %v462, %v1185
    %v1265 = vxor.u32 %v1264, 2147483648
    %v1266 = vmul.f32 %v1265, 1.442695
    %v1267 = vpow.pop %v1266
    %v1268 = vadd.f32 %v1267, 1.0
    %v1269 = vrcp.pop %v1268
    %v1270 = vmul.f32 1.0, %v1269
    %v1271 = vmul.f32 %v1263, %v1254
    %v1272 = vadd.f32 %v570, %v1271
    %v1273 = vtanh.pop %v1272
    %v1274 = vsub.f32 1.0, %v1270
    %v1275 = vmul.f32 %v1274, %v1273
    %v1276 = vmul.f32 %v1270, %v1115
    %v1277 = vadd.f32 %v1275, %v1276
    %vm1278 = vcmp.gt.s32.totalorder %v313, 3
    %v1279 = vsel %vm1278, 1, 0
    %1280 = vset.pattern.permute.xlu0 0
    %1281 = vperm.xlu0 %1280, %v1279
    %v1282 = vpop.permute.xlu0 %1281
    %vm1283 = vcmp.eq.s32.totalorder %v1282, 1
    %v1284 = vsel %vm1283, %v1277, %v1115
    %1285 = vmatprep.subr.mxu0 %v153
    %1286 = vmatpush1.msra.mxu0 %v152
    %1287 = vmatprep.subr.mxu0 %v156
    %1288 = vmatpush1.msra.mxu0 %v155
    %1289 = vmatprep.subr.mxu0 %v159
    %1290 = vmatpush1.msra.mxu0 %v158
    %1291 = vmatprep.subr.mxu0 %v162
    %1292 = vmatpush1.msra.mxu0 %v161
    %1293 = vmatprep.subr.mxu0 %v165
    %1294 = vmatpush1.msra.mxu0 %v164
    %1295 = vmatprep.subr.mxu0 %v168
    %1296 = vmatpush1.msra.mxu0 %v167
    %1297 = vmatprep.subr.mxu0 %v171
    %1298 = vmatpush1.msra.mxu0 %v170
    %1299 = vmatprep.subr.mxu0 %v174
    %1300 = vmatpush1.msra.mxu0 %v173
    %1301 = vmatprep.subr.mxu0 %v177
    %1302 = vmatpush1.msra.mxu0 %v176
    %1303 = vmatprep.subr.mxu0 %v180
    %1304 = vmatpush1.msra.mxu0 %v179
    %1305 = vmatprep.subr.mxu0 %v183
    %1306 = vmatpush1.msra.mxu0 %v182
    %1307 = vmatprep.subr.mxu0 %v186
    %1308 = vmatpush1.msra.mxu0 %v185
    %1309 = vmatprep.subr.mxu0 %v189
    %1310 = vmatpush1.msra.mxu0 %v188
    %1311 = vmatprep.subr.mxu0 %v192
    %1312 = vmatpush1.msra.mxu0 %v191
    %1313 = vmatprep.subr.mxu0 %v195
    %1314 = vmatpush1.msra.mxu0 %v194
    %1315 = vmatprep.subr.mxu0 %v198
    %1316 = vmatpush1.msra.mxu0 %v197
    %1317 = vmatprep.subr.mxu0 0.0
    %1318 = vmatpush1.msra.mxu0 0.0
    %1319 = vmatprep.subr.mxu0 0.0
    %1320 = vmatpush1.msra.mxu0 0.0
    %1321 = vmatprep.subr.mxu0 0.0
    %1322 = vmatpush1.msra.mxu0 0.0
    %1323 = vmatprep.subr.mxu0 0.0
    %1324 = vmatpush1.msra.mxu0 0.0
    %1325 = vmatprep.subr.mxu0 0.0
    %1326 = vmatpush1.msra.mxu0 0.0
    %1327 = vmatprep.subr.mxu0 0.0
    %1328 = vmatpush1.msra.mxu0 0.0
    %1329 = vmatprep.subr.mxu0 0.0
    %1330 = vmatpush1.msra.mxu0 0.0
    %1331 = vmatprep.subr.mxu0 0.0
    %1332 = vmatpush1.msra.mxu0 0.0
    %1333 = vmatprep.subr.mxu0 0.0
    %1334 = vmatpush1.msra.mxu0 0.0
    %1335 = vmatprep.subr.mxu0 0.0
    %1336 = vmatpush1.msra.mxu0 0.0
    %1337 = vmatprep.subr.mxu0 0.0
    %1338 = vmatpush1.msra.mxu0 0.0
    %1339 = vmatprep.subr.mxu0 0.0
    %1340 = vmatpush1.msra.mxu0 0.0
    %1341 = vmatprep.subr.mxu0 0.0
    %1342 = vmatpush1.msra.mxu0 0.0
    %1343 = vmatprep.subr.mxu0 0.0
    %1344 = vmatpush1.msra.mxu0 0.0
    %1345 = vmatprep.subr.mxu0 0.0
    %1346 = vmatpush1.msra.mxu0 0.0
    %1347 = vmatprep.subr.mxu0 0.0
    %1348 = vmatpush1.msra.mxu0 0.0
    %1349 = vmatprep.mubr.f32.mxu0 0.0
    %1350 = vmatmul.mubr.f32.gmra.mrb[0].mxu0 %v1284
    %v1351 = vpop.f32.mrb[0].mxu0
    %v1352 = vadd.f32 %v597, %v1351
    %v1353 = vpop.f32.mrb[0].mxu0
    %v1354 = vadd.f32 %v601, %v1353
    %1355 = vdwg.mxu0
    %1356 = vmatprep.subr.mxu0 0.0
    %1357 = vmatpush1.msra.mxu0 %v154
    %1358 = vmatprep.subr.mxu0 0.0
    %1359 = vmatpush1.msra.mxu0 %v157
    %1360 = vmatprep.subr.mxu0 0.0
    %1361 = vmatpush1.msra.mxu0 %v160
    %1362 = vmatprep.subr.mxu0 0.0
    %1363 = vmatpush1.msra.mxu0 %v163
    %1364 = vmatprep.subr.mxu0 0.0
    %1365 = vmatpush1.msra.mxu0 %v166
    %1366 = vmatprep.subr.mxu0 0.0
    %1367 = vmatpush1.msra.mxu0 %v169
    %1368 = vmatprep.subr.mxu0 0.0
    %1369 = vmatpush1.msra.mxu0 %v172
    %1370 = vmatprep.subr.mxu0 0.0
    %1371 = vmatpush1.msra.mxu0 %v175
    %1372 = vmatprep.subr.mxu0 0.0
    %1373 = vmatpush1.msra.mxu0 %v178
    %1374 = vmatprep.subr.mxu0 0.0
    %1375 = vmatpush1.msra.mxu0 %v181
    %1376 = vmatprep.subr.mxu0 0.0
    %1377 = vmatpush1.msra.mxu0 %v184
    %1378 = vmatprep.subr.mxu0 0.0
    %1379 = vmatpush1.msra.mxu0 %v187
    %1380 = vmatprep.subr.mxu0 0.0
    %1381 = vmatpush1.msra.mxu0 %v190
    %1382 = vmatprep.subr.mxu0 0.0
    %1383 = vmatpush1.msra.mxu0 %v193
    %1384 = vmatprep.subr.mxu0 0.0
    %1385 = vmatpush1.msra.mxu0 %v196
    %1386 = vmatprep.subr.mxu0 0.0
    %1387 = vmatpush1.msra.mxu0 %v199
    %1388 = vmatprep.subr.mxu0 0.0
    %1389 = vmatpush1.msra.mxu0 0.0
    %1390 = vmatprep.subr.mxu0 0.0
    %1391 = vmatpush1.msra.mxu0 0.0
    %1392 = vmatprep.subr.mxu0 0.0
    %1393 = vmatpush1.msra.mxu0 0.0
    %1394 = vmatprep.subr.mxu0 0.0
    %1395 = vmatpush1.msra.mxu0 0.0
    %1396 = vmatprep.subr.mxu0 0.0
    %1397 = vmatpush1.msra.mxu0 0.0
    %1398 = vmatprep.subr.mxu0 0.0
    %1399 = vmatpush1.msra.mxu0 0.0
    %1400 = vmatprep.subr.mxu0 0.0
    %1401 = vmatpush1.msra.mxu0 0.0
    %1402 = vmatprep.subr.mxu0 0.0
    %1403 = vmatpush1.msra.mxu0 0.0
    %1404 = vmatprep.subr.mxu0 0.0
    %1405 = vmatpush1.msra.mxu0 0.0
    %1406 = vmatprep.subr.mxu0 0.0
    %1407 = vmatpush1.msra.mxu0 0.0
    %1408 = vmatprep.subr.mxu0 0.0
    %1409 = vmatpush1.msra.mxu0 0.0
    %1410 = vmatprep.subr.mxu0 0.0
    %1411 = vmatpush1.msra.mxu0 0.0
    %1412 = vmatprep.subr.mxu0 0.0
    %1413 = vmatpush1.msra.mxu0 0.0
    %1414 = vmatprep.subr.mxu0 0.0
    %1415 = vmatpush1.msra.mxu0 0.0
    %1416 = vmatprep.subr.mxu0 0.0
    %1417 = vmatpush1.msra.mxu0 0.0
    %1418 = vmatprep.subr.mxu0 0.0
    %1419 = vmatpush1.msra.mxu0 0.0
    %1420 = vmatprep.mubr.f32.mxu0 0.0
    %1421 = vmatmul.mubr.f32.gmra.mrb[0].mxu0 %v1284
    %v1422 = vpop.f32.mrb[0].mxu0
    %v1423 = vadd.f32 %v605, %v1422
    %v1424 = vpop.f32.mrb[0].mxu0
    %1425 = vdwg.mxu0
    %v1426 = vadd.f32 %v466, %v1352
    %v1427 = vxor.u32 %v1426, 2147483648
    %v1428 = vmul.f32 %v1427, 1.442695
    %v1429 = vpow.pop %v1428
    %v1430 = vadd.f32 %v1429, 1.0
    %v1431 = vrcp.pop %v1430
    %v1432 = vmul.f32 1.0, %v1431
    %v1433 = vadd.f32 %v468, %v1354
    %v1434 = vxor.u32 %v1433, 2147483648
    %v1435 = vmul.f32 %v1434, 1.442695
    %v1436 = vpow.pop %v1435
    %v1437 = vadd.f32 %v1436, 1.0
    %v1438 = vrcp.pop %v1437
    %v1439 = vmul.f32 1.0, %v1438
    %v1440 = vmul.f32 %v1432, %v1423
    %v1441 = vadd.f32 %v575, %v1440
    %v1442 = vtanh.pop %v1441
    %v1443 = vsub.f32 1.0, %v1439
    %v1444 = vmul.f32 %v1443, %v1442
    %v1445 = vmul.f32 %v1439, %v1284
    %v1446 = vadd.f32 %v1444, %v1445
    %vm1447 = vcmp.gt.s32.totalorder %v313, 4
    %v1448 = vsel %vm1447, 1, 0
    %1449 = vset.pattern.permute.xlu0 0
    %1450 = vperm.xlu0 %1449, %v1448
    %v1451 = vpop.permute.xlu0 %1450
    %vm1452 = vcmp.eq.s32.totalorder %v1451, 1
    %v1453 = vsel %vm1452, %v1446, %v1284
    %1454 = vmatprep.subr.mxu0 %v153
    %1455 = vmatpush1.msra.mxu0 %v152
    %1456 = vmatprep.subr.mxu0 %v156
    %1457 = vmatpush1.msra.mxu0 %v155
    %1458 = vmatprep.subr.mxu0 %v159
    %1459 = vmatpush1.msra.mxu0 %v158
    %1460 = vmatprep.subr.mxu0 %v162
    %1461 = vmatpush1.msra.mxu0 %v161
    %1462 = vmatprep.subr.mxu0 %v165
    %1463 = vmatpush1.msra.mxu0 %v164
    %1464 = vmatprep.subr.mxu0 %v168
    %1465 = vmatpush1.msra.mxu0 %v167
    %1466 = vmatprep.subr.mxu0 %v171
    %1467 = vmatpush1.msra.mxu0 %v170
    %1468 = vmatprep.subr.mxu0 %v174
    %1469 = vmatpush1.msra.mxu0 %v173
    %1470 = vmatprep.subr.mxu0 %v177
    %1471 = vmatpush1.msra.mxu0 %v176
    %1472 = vmatprep.subr.mxu0 %v180
    %1473 = vmatpush1.msra.mxu0 %v179
    %1474 = vmatprep.subr.mxu0 %v183
    %1475 = vmatpush1.msra.mxu0 %v182
    %1476 = vmatprep.subr.mxu0 %v186
    %1477 = vmatpush1.msra.mxu0 %v185
    %1478 = vmatprep.subr.mxu0 %v189
    %1479 = vmatpush1.msra.mxu0 %v188
    %1480 = vmatprep.subr.mxu0 %v192
    %1481 = vmatpush1.msra.mxu0 %v191
    %1482 = vmatprep.subr.mxu0 %v195
    %1483 = vmatpush1.msra.mxu0 %v194
    %1484 = vmatprep.subr.mxu0 %v198
    %1485 = vmatpush1.msra.mxu0 %v197
    %1486 = vmatprep.subr.mxu0 0.0
    %1487 = vmatpush1.msra.mxu0 0.0
    %1488 = vmatprep.subr.mxu0 0.0
    %1489 = vmatpush1.msra.mxu0 0.0
    %1490 = vmatprep.subr.mxu0 0.0
    %1491 = vmatpush1.msra.mxu0 0.0
    %1492 = vmatprep.subr.mxu0 0.0
    %1493 = vmatpush1.msra.mxu0 0.0
    %1494 = vmatprep.subr.mxu0 0.0
    %1495 = vmatpush1.msra.mxu0 0.0
    %1496 = vmatprep.subr.mxu0 0.0
    %1497 = vmatpush1.msra.mxu0 0.0
    %1498 = vmatprep.subr.mxu0 0.0
    %1499 = vmatpush1.msra.mxu0 0.0
    %1500 = vmatprep.subr.mxu0 0.0
    %1501 = vmatpush1.msra.mxu0 0.0
    %1502 = vmatprep.subr.mxu0 0.0
    %1503 = vmatpush1.msra.mxu0 0.0
    %1504 = vmatprep.subr.mxu0 0.0
    %1505 = vmatpush1.msra.mxu0 0.0
    %1506 = vmatprep.subr.mxu0 0.0
    %1507 = vmatpush1.msra.mxu0 0.0
    %1508 = vmatprep.subr.mxu0 0.0
    %1509 = vmatpush1.msra.mxu0 0.0
    %1510 = vmatprep.subr.mxu0 0.0
    %1511 = vmatpush1.msra.mxu0 0.0
    %1512 = vmatprep.subr.mxu0 0.0
    %1513 = vmatpush1.msra.mxu0 0.0
    %1514 = vmatprep.subr.mxu0 0.0
    %1515 = vmatpush1.msra.mxu0 0.0
    %1516 = vmatprep.subr.mxu0 0.0
    %1517 = vmatpush1.msra.mxu0 0.0
    %1518 = vmatprep.mubr.f32.mxu0 0.0
    %1519 = vmatmul.mubr.f32.gmra.mrb[0].mxu0 %v1453
    %v1520 = vpop.f32.mrb[0].mxu0
    %v1521 = vadd.f32 %v597, %v1520
    %v1522 = vpop.f32.mrb[0].mxu0
    %v1523 = vadd.f32 %v601, %v1522
    %1524 = vdwg.mxu0
    %1525 = vmatprep.subr.mxu0 0.0
    %1526 = vmatpush1.msra.mxu0 %v154
    %1527 = vmatprep.subr.mxu0 0.0
    %1528 = vmatpush1.msra.mxu0 %v157
    %1529 = vmatprep.subr.mxu0 0.0
    %1530 = vmatpush1.msra.mxu0 %v160
    %1531 = vmatprep.subr.mxu0 0.0
    %1532 = vmatpush1.msra.mxu0 %v163
    %1533 = vmatprep.subr.mxu0 0.0
    %1534 = vmatpush1.msra.mxu0 %v166
    %1535 = vmatprep.subr.mxu0 0.0
    %1536 = vmatpush1.msra.mxu0 %v169
    %1537 = vmatprep.subr.mxu0 0.0
    %1538 = vmatpush1.msra.mxu0 %v172
    %1539 = vmatprep.subr.mxu0 0.0
    %1540 = vmatpush1.msra.mxu0 %v175
    %1541 = vmatprep.subr.mxu0 0.0
    %1542 = vmatpush1.msra.mxu0 %v178
    %1543 = vmatprep.subr.mxu0 0.0
    %1544 = vmatpush1.msra.mxu0 %v181
    %1545 = vmatprep.subr.mxu0 0.0
    %1546 = vmatpush1.msra.mxu0 %v184
    %1547 = vmatprep.subr.mxu0 0.0
    %1548 = vmatpush1.msra.mxu0 %v187
    %1549 = vmatprep.subr.mxu0 0.0
    %1550 = vmatpush1.msra.mxu0 %v190
    %1551 = vmatprep.subr.mxu0 0.0
    %1552 = vmatpush1.msra.mxu0 %v193
    %1553 = vmatprep.subr.mxu0 0.0
    %1554 = vmatpush1.msra.mxu0 %v196
    %1555 = vmatprep.subr.mxu0 0.0
    %1556 = vmatpush1.msra.mxu0 %v199
    %1557 = vmatprep.subr.mxu0 0.0
    %1558 = vmatpush1.msra.mxu0 0.0
    %1559 = vmatprep.subr.mxu0 0.0
    %1560 = vmatpush1.msra.mxu0 0.0
    %1561 = vmatprep.subr.mxu0 0.0
    %1562 = vmatpush1.msra.mxu0 0.0
    %1563 = vmatprep.subr.mxu0 0.0
    %1564 = vmatpush1.msra.mxu0 0.0
    %1565 = vmatprep.subr.mxu0 0.0
    %1566 = vmatpush1.msra.mxu0 0.0
    %1567 = vmatprep.subr.mxu0 0.0
    %1568 = vmatpush1.msra.mxu0 0.0
    %1569 = vmatprep.subr.mxu0 0.0
    %1570 = vmatpush1.msra.mxu0 0.0
    %1571 = vmatprep.subr.mxu0 0.0
    %1572 = vmatpush1.msra.mxu0 0.0
    %1573 = vmatprep.subr.mxu0 0.0
    %1574 = vmatpush1.msra.mxu0 0.0
    %1575 = vmatprep.subr.mxu0 0.0
    %1576 = vmatpush1.msra.mxu0 0.0
    %1577 = vmatprep.subr.mxu0 0.0
    %1578 = vmatpush1.msra.mxu0 0.0
    %1579 = vmatprep.subr.mxu0 0.0
    %1580 = vmatpush1.msra.mxu0 0.0
    %1581 = vmatprep.subr.mxu0 0.0
    %1582 = vmatpush1.msra.mxu0 0.0
    %1583 = vmatprep.subr.mxu0 0.0
    %1584 = vmatpush1.msra.mxu0 0.0
    %1585 = vmatprep.subr.mxu0 0.0
    %1586 = vmatpush1.msra.mxu0 0.0
    %1587 = vmatprep.subr.mxu0 0.0
    %1588 = vmatpush1.msra.mxu0 0.0
    %1589 = vmatprep.mubr.f32.mxu0 0.0
    %1590 = vmatmul.mubr.f32.gmra.mrb[0].mxu0 %v1453
    %v1591 = vpop.f32.mrb[0].mxu0
    %v1592 = vadd.f32 %v605, %v1591
    %v1593 = vpop.f32.mrb[0].mxu0
    %1594 = vdwg.mxu0
    %v1595 = vadd.f32 %v472, %v1521
    %v1596 = vxor.u32 %v1595, 2147483648
    %v1597 = vmul.f32 %v1596, 1.442695
    %v1598 = vpow.pop %v1597
    %v1599 = vadd.f32 %v1598, 1.0
    %v1600 = vrcp.pop %v1599
    %v1601 = vmul.f32 1.0, %v1600
    %v1602 = vadd.f32 %v474, %v1523
    %v1603 = vxor.u32 %v1602, 2147483648
    %v1604 = vmul.f32 %v1603, 1.442695
    %v1605 = vpow.pop %v1604
    %v1606 = vadd.f32 %v1605, 1.0
    %v1607 = vrcp.pop %v1606
    %v1608 = vmul.f32 1.0, %v1607
    %v1609 = vmul.f32 %v1601, %v1592
    %v1610 = vadd.f32 %v580, %v1609
    %v1611 = vtanh.pop %v1610
    %v1612 = vsub.f32 1.0, %v1608
    %v1613 = vmul.f32 %v1612, %v1611
    %v1614 = vmul.f32 %v1608, %v1453
    %v1615 = vadd.f32 %v1613, %v1614
    %vm1616 = vcmp.gt.s32.totalorder %v313, 5
    %v1617 = vsel %vm1616, 1, 0
    %1618 = vset.pattern.permute.xlu0 0
    %1619 = vperm.xlu0 %1618, %v1617
    %v1620 = vpop.permute.xlu0 %1619
    %vm1621 = vcmp.eq.s32.totalorder %v1620, 1
    %v1622 = vsel %vm1621, %v1615, %v1453
    %1623 = vmatprep.subr.mxu0 %v153
    %1624 = vmatpush1.msra.mxu0 %v152
    %1625 = vmatprep.subr.mxu0 %v156
    %1626 = vmatpush1.msra.mxu0 %v155
    %1627 = vmatprep.subr.mxu0 %v159
    %1628 = vmatpush1.msra.mxu0 %v158
    %1629 = vmatprep.subr.mxu0 %v162
    %1630 = vmatpush1.msra.mxu0 %v161
    %1631 = vmatprep.subr.mxu0 %v165
    %1632 = vmatpush1.msra.mxu0 %v164
    %1633 = vmatprep.subr.mxu0 %v168
    %1634 = vmatpush1.msra.mxu0 %v167
    %1635 = vmatprep.subr.mxu0 %v171
    %1636 = vmatpush1.msra.mxu0 %v170
    %1637 = vmatprep.subr.mxu0 %v174
    %1638 = vmatpush1.msra.mxu0 %v173
    %1639 = vmatprep.subr.mxu0 %v177
    %1640 = vmatpush1.msra.mxu0 %v176
    %1641 = vmatprep.subr.mxu0 %v180
    %1642 = vmatpush1.msra.mxu0 %v179
    %1643 = vmatprep.subr.mxu0 %v183
    %1644 = vmatpush1.msra.mxu0 %v182
    %1645 = vmatprep.subr.mxu0 %v186
    %1646 = vmatpush1.msra.mxu0 %v185
    %1647 = vmatprep.subr.mxu0 %v189
    %1648 = vmatpush1.msra.mxu0 %v188
    %1649 = vmatprep.subr.mxu0 %v192
    %1650 = vmatpush1.msra.mxu0 %v191
    %1651 = vmatprep.subr.mxu0 %v195
    %1652 = vmatpush1.msra.mxu0 %v194
    %1653 = vmatprep.subr.mxu0 %v198
    %1654 = vmatpush1.msra.mxu0 %v197
    %1655 = vmatprep.subr.mxu0 0.0
    %1656 = vmatpush1.msra.mxu0 0.0
    %1657 = vmatprep.subr.mxu0 0.0
    %1658 = vmatpush1.msra.mxu0 0.0
    %1659 = vmatprep.subr.mxu0 0.0
    %1660 = vmatpush1.msra.mxu0 0.0
    %1661 = vmatprep.subr.mxu0 0.0
    %1662 = vmatpush1.msra.mxu0 0.0
    %1663 = vmatprep.subr.mxu0 0.0
    %1664 = vmatpush1.msra.mxu0 0.0
    %1665 = vmatprep.subr.mxu0 0.0
    %1666 = vmatpush1.msra.mxu0 0.0
    %1667 = vmatprep.subr.mxu0 0.0
    %1668 = vmatpush1.msra.mxu0 0.0
    %1669 = vmatprep.subr.mxu0 0.0
    %1670 = vmatpush1.msra.mxu0 0.0
    %1671 = vmatprep.subr.mxu0 0.0
    %1672 = vmatpush1.msra.mxu0 0.0
    %1673 = vmatprep.subr.mxu0 0.0
    %1674 = vmatpush1.msra.mxu0 0.0
    %1675 = vmatprep.subr.mxu0 0.0
    %1676 = vmatpush1.msra.mxu0 0.0
    %1677 = vmatprep.subr.mxu0 0.0
    %1678 = vmatpush1.msra.mxu0 0.0
    %1679 = vmatprep.subr.mxu0 0.0
    %1680 = vmatpush1.msra.mxu0 0.0
    %1681 = vmatprep.subr.mxu0 0.0
    %1682 = vmatpush1.msra.mxu0 0.0
    %1683 = vmatprep.subr.mxu0 0.0
    %1684 = vmatpush1.msra.mxu0 0.0
    %1685 = vmatprep.subr.mxu0 0.0
    %1686 = vmatpush1.msra.mxu0 0.0
    %1687 = vmatprep.mubr.f32.mxu0 0.0
    %1688 = vmatmul.mubr.f32.gmra.mrb[0].mxu0 %v1622
    %v1689 = vpop.f32.mrb[0].mxu0
    %v1690 = vadd.f32 %v597, %v1689
    %v1691 = vpop.f32.mrb[0].mxu0
    %v1692 = vadd.f32 %v601, %v1691
    %1693 = vdwg.mxu0
    %1694 = vmatprep.subr.mxu0 0.0
    %1695 = vmatpush1.msra.mxu0 %v154
    %1696 = vmatprep.subr.mxu0 0.0
    %1697 = vmatpush1.msra.mxu0 %v157
    %1698 = vmatprep.subr.mxu0 0.0
    %1699 = vmatpush1.msra.mxu0 %v160
    %1700 = vmatprep.subr.mxu0 0.0
    %1701 = vmatpush1.msra.mxu0 %v163
    %1702 = vmatprep.subr.mxu0 0.0
    %1703 = vmatpush1.msra.mxu0 %v166
    %1704 = vmatprep.subr.mxu0 0.0
    %1705 = vmatpush1.msra.mxu0 %v169
    %1706 = vmatprep.subr.mxu0 0.0
    %1707 = vmatpush1.msra.mxu0 %v172
    %1708 = vmatprep.subr.mxu0 0.0
    %1709 = vmatpush1.msra.mxu0 %v175
    %1710 = vmatprep.subr.mxu0 0.0
    %1711 = vmatpush1.msra.mxu0 %v178
    %1712 = vmatprep.subr.mxu0 0.0
    %1713 = vmatpush1.msra.mxu0 %v181
    %1714 = vmatprep.subr.mxu0 0.0
    %1715 = vmatpush1.msra.mxu0 %v184
    %1716 = vmatprep.subr.mxu0 0.0
    %1717 = vmatpush1.msra.mxu0 %v187
    %1718 = vmatprep.subr.mxu0 0.0
    %1719 = vmatpush1.msra.mxu0 %v190
    %1720 = vmatprep.subr.mxu0 0.0
    %1721 = vmatpush1.msra.mxu0 %v193
    %1722 = vmatprep.subr.mxu0 0.0
    %1723 = vmatpush1.msra.mxu0 %v196
    %1724 = vmatprep.subr.mxu0 0.0
    %1725 = vmatpush1.msra.mxu0 %v199
    %1726 = vmatprep.subr.mxu0 0.0
    %1727 = vmatpush1.msra.mxu0 0.0
    %1728 = vmatprep.subr.mxu0 0.0
    %1729 = vmatpush1.msra.mxu0 0.0
    %1730 = vmatprep.subr.mxu0 0.0
    %1731 = vmatpush1.msra.mxu0 0.0
    %1732 = vmatprep.subr.mxu0 0.0
    %1733 = vmatpush1.msra.mxu0 0.0
    %1734 = vmatprep.subr.mxu0 0.0
    %1735 = vmatpush1.msra.mxu0 0.0
    %1736 = vmatprep.subr.mxu0 0.0
    %1737 = vmatpush1.msra.mxu0 0.0
    %1738 = vmatprep.subr.mxu0 0.0
    %1739 = vmatpush1.msra.mxu0 0.0
    %1740 = vmatprep.subr.mxu0 0.0
    %1741 = vmatpush1.msra.mxu0 0.0
    %1742 = vmatprep.subr.mxu0 0.0
    %1743 = vmatpush1.msra.mxu0 0.0
    %1744 = vmatprep.subr.mxu0 0.0
    %1745 = vmatpush1.msra.mxu0 0.0
    %1746 = vmatprep.subr.mxu0 0.0
    %1747 = vmatpush1.msra.mxu0 0.0
    %1748 = vmatprep.subr.mxu0 0.0
    %1749 = vmatpush1.msra.mxu0 0.0
    %1750 = vmatprep.subr.mxu0 0.0
    %1751 = vmatpush1.msra.mxu0 0.0
    %1752 = vmatprep.subr.mxu0 0.0
    %1753 = vmatpush1.msra.mxu0 0.0
    %1754 = vmatprep.subr.mxu0 0.0
    %1755 = vmatpush1.msra.mxu0 0.0
    %1756 = vmatprep.subr.mxu0 0.0
    %1757 = vmatpush1.msra.mxu0 0.0
    %1758 = vmatprep.mubr.f32.mxu0 0.0
    %1759 = vmatmul.mubr.f32.gmra.mrb[0].mxu0 %v1622
    %v1760 = vpop.f32.mrb[0].mxu0
    %v1761 = vadd.f32 %v605, %v1760
    %v1762 = vpop.f32.mrb[0].mxu0
    %1763 = vdwg.mxu0
    %v1764 = vadd.f32 %v478, %v1690
    %v1765 = vxor.u32 %v1764, 2147483648
    %v1766 = vmul.f32 %v1765, 1.442695
    %v1767 = vpow.pop %v1766
    %v1768 = vadd.f32 %v1767, 1.0
    %v1769 = vrcp.pop %v1768
    %v1770 = vmul.f32 1.0, %v1769
    %v1771 = vadd.f32 %v480, %v1692
    %v1772 = vxor.u32 %v1771, 2147483648
    %v1773 = vmul.f32 %v1772, 1.442695
    %v1774 = vpow.pop %v1773
    %v1775 = vadd.f32 %v1774, 1.0
    %v1776 = vrcp.pop %v1775
    %v1777 = vmul.f32 1.0, %v1776
    %v1778 = vmul.f32 %v1770, %v1761
    %v1779 = vadd.f32 %v585, %v1778
    %v1780 = vtanh.pop %v1779
    %v1781 = vsub.f32 1.0, %v1777
    %v1782 = vmul.f32 %v1781, %v1780
    %v1783 = vmul.f32 %v1777, %v1622
    %v1784 = vadd.f32 %v1782, %v1783
    %vm1785 = vcmp.gt.s32.totalorder %v313, 6
    %v1786 = vsel %vm1785, 1, 0
    %1787 = vset.pattern.permute.xlu0 0
    %1788 = vperm.xlu0 %1787, %v1786
    %v1789 = vpop.permute.xlu0 %1788
    %vm1790 = vcmp.eq.s32.totalorder %v1789, 1
    %v1791 = vsel %vm1790, %v1784, %v1622
    %1792 = vmatprep.subr.mxu0 %v153
    %1793 = vmatpush1.msra.mxu0 %v152
    %1794 = vmatprep.subr.mxu0 %v156
    %1795 = vmatpush1.msra.mxu0 %v155
    %1796 = vmatprep.subr.mxu0 %v159
    %1797 = vmatpush1.msra.mxu0 %v158
    %1798 = vmatprep.subr.mxu0 %v162
    %1799 = vmatpush1.msra.mxu0 %v161
    %1800 = vmatprep.subr.mxu0 %v165
    %1801 = vmatpush1.msra.mxu0 %v164
    %1802 = vmatprep.subr.mxu0 %v168
    %1803 = vmatpush1.msra.mxu0 %v167
    %1804 = vmatprep.subr.mxu0 %v171
    %1805 = vmatpush1.msra.mxu0 %v170
    %1806 = vmatprep.subr.mxu0 %v174
    %1807 = vmatpush1.msra.mxu0 %v173
    %1808 = vmatprep.subr.mxu0 %v177
    %1809 = vmatpush1.msra.mxu0 %v176
    %1810 = vmatprep.subr.mxu0 %v180
    %1811 = vmatpush1.msra.mxu0 %v179
    %1812 = vmatprep.subr.mxu0 %v183
    %1813 = vmatpush1.msra.mxu0 %v182
    %1814 = vmatprep.subr.mxu0 %v186
    %1815 = vmatpush1.msra.mxu0 %v185
    %1816 = vmatprep.subr.mxu0 %v189
    %1817 = vmatpush1.msra.mxu0 %v188
    %1818 = vmatprep.subr.mxu0 %v192
    %1819 = vmatpush1.msra.mxu0 %v191
    %1820 = vmatprep.subr.mxu0 %v195
    %1821 = vmatpush1.msra.mxu0 %v194
    %1822 = vmatprep.subr.mxu0 %v198
    %1823 = vmatpush1.msra.mxu0 %v197
    %1824 = vmatprep.subr.mxu0 0.0
    %1825 = vmatpush1.msra.mxu0 0.0
    %1826 = vmatprep.subr.mxu0 0.0
    %1827 = vmatpush1.msra.mxu0 0.0
    %1828 = vmatprep.subr.mxu0 0.0
    %1829 = vmatpush1.msra.mxu0 0.0
    %1830 = vmatprep.subr.mxu0 0.0
    %1831 = vmatpush1.msra.mxu0 0.0
    %1832 = vmatprep.subr.mxu0 0.0
    %1833 = vmatpush1.msra.mxu0 0.0
    %1834 = vmatprep.subr.mxu0 0.0
    %1835 = vmatpush1.msra.mxu0 0.0
    %1836 = vmatprep.subr.mxu0 0.0
    %1837 = vmatpush1.msra.mxu0 0.0
    %1838 = vmatprep.subr.mxu0 0.0
    %1839 = vmatpush1.msra.mxu0 0.0
    %1840 = vmatprep.subr.mxu0 0.0
    %1841 = vmatpush1.msra.mxu0 0.0
    %1842 = vmatprep.subr.mxu0 0.0
    %1843 = vmatpush1.msra.mxu0 0.0
    %1844 = vmatprep.subr.mxu0 0.0
    %1845 = vmatpush1.msra.mxu0 0.0
    %1846 = vmatprep.subr.mxu0 0.0
    %1847 = vmatpush1.msra.mxu0 0.0
    %1848 = vmatprep.subr.mxu0 0.0
    %1849 = vmatpush1.msra.mxu0 0.0
    %1850 = vmatprep.subr.mxu0 0.0
    %1851 = vmatpush1.msra.mxu0 0.0
    %1852 = vmatprep.subr.mxu0 0.0
    %1853 = vmatpush1.msra.mxu0 0.0
    %1854 = vmatprep.subr.mxu0 0.0
    %1855 = vmatpush1.msra.mxu0 0.0
    %1856 = vmatprep.mubr.f32.mxu0 0.0
    %1857 = vmatmul.mubr.f32.gmra.mrb[0].mxu0 %v1791
    %v1858 = vpop.f32.mrb[0].mxu0
    %v1859 = vadd.f32 %v597, %v1858
    %v1860 = vpop.f32.mrb[0].mxu0
    %v1861 = vadd.f32 %v601, %v1860
    %1862 = vdwg.mxu0
    %1863 = vmatprep.subr.mxu0 0.0
    %1864 = vmatpush1.msra.mxu0 %v154
    %1865 = vmatprep.subr.mxu0 0.0
    %1866 = vmatpush1.msra.mxu0 %v157
    %1867 = vmatprep.subr.mxu0 0.0
    %1868 = vmatpush1.msra.mxu0 %v160
    %1869 = vmatprep.subr.mxu0 0.0
    %1870 = vmatpush1.msra.mxu0 %v163
    %1871 = vmatprep.subr.mxu0 0.0
    %1872 = vmatpush1.msra.mxu0 %v166
    %1873 = vmatprep.subr.mxu0 0.0
    %1874 = vmatpush1.msra.mxu0 %v169
    %1875 = vmatprep.subr.mxu0 0.0
    %1876 = vmatpush1.msra.mxu0 %v172
    %1877 = vmatprep.subr.mxu0 0.0
    %1878 = vmatpush1.msra.mxu0 %v175
    %1879 = vmatprep.subr.mxu0 0.0
    %1880 = vmatpush1.msra.mxu0 %v178
    %1881 = vmatprep.subr.mxu0 0.0
    %1882 = vmatpush1.msra.mxu0 %v181
    %1883 = vmatprep.subr.mxu0 0.0
    %1884 = vmatpush1.msra.mxu0 %v184
    %1885 = vmatprep.subr.mxu0 0.0
    %1886 = vmatpush1.msra.mxu0 %v187
    %1887 = vmatprep.subr.mxu0 0.0
    %1888 = vmatpush1.msra.mxu0 %v190
    %1889 = vmatprep.subr.mxu0 0.0
    %1890 = vmatpush1.msra.mxu0 %v193
    %1891 = vmatprep.subr.mxu0 0.0
    %1892 = vmatpush1.msra.mxu0 %v196
    %1893 = vmatprep.subr.mxu0 0.0
    %1894 = vmatpush1.msra.mxu0 %v199
    %1895 = vmatprep.subr.mxu0 0.0
    %1896 = vmatpush1.msra.mxu0 0.0
    %1897 = vmatprep.subr.mxu0 0.0
    %1898 = vmatpush1.msra.mxu0 0.0
    %1899 = vmatprep.subr.mxu0 0.0
    %1900 = vmatpush1.msra.mxu0 0.0
    %1901 = vmatprep.subr.mxu0 0.0
    %1902 = vmatpush1.msra.mxu0 0.0
    %1903 = vmatprep.subr.mxu0 0.0
    %1904 = vmatpush1.msra.mxu0 0.0
    %1905 = vmatprep.subr.mxu0 0.0
    %1906 = vmatpush1.msra.mxu0 0.0
    %1907 = vmatprep.subr.mxu0 0.0
    %1908 = vmatpush1.msra.mxu0 0.0
    %1909 = vmatprep.subr.mxu0 0.0
    %1910 = vmatpush1.msra.mxu0 0.0
    %1911 = vmatprep.subr.mxu0 0.0
    %1912 = vmatpush1.msra.mxu0 0.0
    %1913 = vmatprep.subr.mxu0 0.0
    %1914 = vmatpush1.msra.mxu0 0.0
    %1915 = vmatprep.subr.mxu0 0.0
    %1916 = vmatpush1.msra.mxu0 0.0
    %1917 = vmatprep.subr.mxu0 0.0
    %1918 = vmatpush1.msra.mxu0 0.0
    %1919 = vmatprep.subr.mxu0 0.0
    %1920 = vmatpush1.msra.mxu0 0.0
    %1921 = vmatprep.subr.mxu0 0.0
    %1922 = vmatpush1.msra.mxu0 0.0
    %1923 = vmatprep.subr.mxu0 0.0
    %1924 = vmatpush1.msra.mxu0 0.0
    %1925 = vmatprep.subr.mxu0 0.0
    %1926 = vmatpush1.msra.mxu0 0.0
    %1927 = vmatprep.mubr.f32.mxu0 0.0
    %1928 = vmatmul.mubr.f32.gmra.mrb[0].mxu0 %v1791
    %v1929 = vpop.f32.mrb[0].mxu0
    %v1930 = vadd.f32 %v605, %v1929
    %v1931 = vpop.f32.mrb[0].mxu0
    %1932 = vdwg.mxu0
    %v1933 = vadd.f32 %v484, %v1859
    %v1934 = vxor.u32 %v1933, 2147483648
    %v1935 = vmul.f32 %v1934, 1.442695
    %v1936 = vpow.pop %v1935
    %v1937 = vadd.f32 %v1936, 1.0
    %v1938 = vrcp.pop %v1937
    %v1939 = vmul.f32 1.0, %v1938
    %v1940 = vadd.f32 %v486, %v1861
    %v1941 = vxor.u32 %v1940, 2147483648
    %v1942 = vmul.f32 %v1941, 1.442695
    %v1943 = vpow.pop %v1942
    %v1944 = vadd.f32 %v1943, 1.0
    %v1945 = vrcp.pop %v1944
    %v1946 = vmul.f32 1.0, %v1945
    %v1947 = vmul.f32 %v1939, %v1930
    %v1948 = vadd.f32 %v590, %v1947
    %v1949 = vtanh.pop %v1948
    %v1950 = vsub.f32 1.0, %v1946
    %v1951 = vmul.f32 %v1950, %v1949
    %v1952 = vmul.f32 %v1946, %v1791
    %v1953 = vadd.f32 %v1951, %v1952
    %vm1954 = vcmp.gt.s32.totalorder %v313, 7
    %v1955 = vsel %vm1954, 1, 0
    %1956 = vset.pattern.permute.xlu0 0
    %1957 = vperm.xlu0 %1956, %v1955
    %v1958 = vpop.permute.xlu0 %1957
    %vm1959 = vcmp.eq.s32.totalorder %v1958, 1
    %v1960 = vsel %vm1959, %v1953, %v1791
    %v1961 = vld [vmem:[%s2] sm:$0xff]
    %1962 = vset.pattern.permute.xlu0 0
    %1963 = vperm.xlu0 %1962, %v1961
    %v1964 = vpop.permute.xlu0 %1963
    %vm1965 = vcmp.eq.s32.totalorder %v315, %v1964
    %v1966 = vsel %vm1965, 1, 0
    %v1967 = vcvt.s32.f32 %v1966
    %v1968 = vld [vmem:[%s3] sm:$0xff]
    %1969 = vst [vmem:[#allocation14] sm:$0xff] 0.0
    %1970 = vmatprep.subr.mxu0 0.0
    %1971 = vmatpush1.msra.mxu0 %v202
    %1972 = vmatprep.subr.mxu0 0.0
    %1973 = vmatpush1.msra.mxu0 %v203
    %1974 = vmatprep.subr.mxu0 0.0
    %1975 = vmatpush1.msra.mxu0 %v204
    %1976 = vmatprep.subr.mxu0 0.0
    %1977 = vmatpush1.msra.mxu0 %v205
    %1978 = vmatprep.subr.mxu0 0.0
    %1979 = vmatpush1.msra.mxu0 %v206
    %1980 = vmatprep.subr.mxu0 0.0
    %1981 = vmatpush1.msra.mxu0 %v207
    %1982 = vmatprep.subr.mxu0 0.0
    %1983 = vmatpush1.msra.mxu0 %v208
    %1984 = vmatprep.subr.mxu0 0.0
    %1985 = vmatpush1.msra.mxu0 %v209
    %1986 = vmatprep.subr.mxu0 0.0
    %1987 = vmatpush1.msra.mxu0 %v210
    %1988 = vmatprep.subr.mxu0 0.0
    %1989 = vmatpush1.msra.mxu0 %v211
    %1990 = vmatprep.subr.mxu0 0.0
    %1991 = vmatpush1.msra.mxu0 %v212
    %1992 = vmatprep.subr.mxu0 0.0
    %1993 = vmatpush1.msra.mxu0 %v213
    %1994 = vmatprep.subr.mxu0 0.0
    %1995 = vmatpush1.msra.mxu0 %v214
    %1996 = vmatprep.subr.mxu0 0.0
    %1997 = vmatpush1.msra.mxu0 %v215
    %1998 = vmatprep.subr.mxu0 0.0
    %1999 = vmatpush1.msra.mxu0 %v216
    %2000 = vmatprep.subr.mxu0 0.0
    %2001 = vmatpush1.msra.mxu0 %v217
    %2002 = vmatprep.subr.mxu0 0.0
    %2003 = vmatpush1.msra.mxu0 0.0
    %2004 = vmatprep.subr.mxu0 0.0
    %2005 = vmatpush1.msra.mxu0 0.0
    %2006 = vmatprep.subr.mxu0 0.0
    %2007 = vmatpush1.msra.mxu0 0.0
    %2008 = vmatprep.subr.mxu0 0.0
    %2009 = vmatpush1.msra.mxu0 0.0
    %2010 = vmatprep.subr.mxu0 0.0
    %2011 = vmatpush1.msra.mxu0 0.0
    %2012 = vmatprep.subr.mxu0 0.0
    %2013 = vmatpush1.msra.mxu0 0.0
    %2014 = vmatprep.subr.mxu0 0.0
    %2015 = vmatpush1.msra.mxu0 0.0
    %2016 = vmatprep.subr.mxu0 0.0
    %2017 = vmatpush1.msra.mxu0 0.0
    %2018 = vmatprep.subr.mxu0 0.0
    %2019 = vmatpush1.msra.mxu0 0.0
    %2020 = vmatprep.subr.mxu0 0.0
    %2021 = vmatpush1.msra.mxu0 0.0
    %2022 = vmatprep.subr.mxu0 0.0
    %2023 = vmatpush1.msra.mxu0 0.0
    %2024 = vmatprep.subr.mxu0 0.0
    %2025 = vmatpush1.msra.mxu0 0.0
    %2026 = vmatprep.subr.mxu0 0.0
    %2027 = vmatpush1.msra.mxu0 0.0
    %2028 = vmatprep.subr.mxu0 0.0
    %2029 = vmatpush1.msra.mxu0 0.0
    %2030 = vmatprep.subr.mxu0 0.0
    %2031 = vmatpush1.msra.mxu0 0.0
    %2032 = vmatprep.subr.mxu0 0.0
    %2033 = vmatpush1.msra.mxu0 0.0
    %2034 = vmatprep.mubr.f32.mxu0 0.0
    %2035 = vmatmul.mubr.f32.gmra.mrb[0].mxu0 %v1967
    %v2036 = vpop.f32.mrb[0].mxu0
    %v2037 = vadd.f32 0.0, %v2036
    %v2038 = vpop.f32.mrb[0].mxu0
    %2039 = vdwg.mxu0
    %2041 = vset.pattern.permute.xlu0 0
    %2042 = vperm.xlu0 %2041, %v1968
    %v2043 = vpop.permute.xlu0 %2042
    %v2046 = vlaneseq
    %v2047 = vshrl.u32 %v2046, 7
    %v2048 = vsub.s32 0, %v2047
    %v2049 = vrot.slane %v224, %v2048
    %v2050 = vlaneseq
    %v2051 = vshrl.u32 %v2050, 7
    %v2052 = vsub.s32 1, %v2051
    %v2053 = vrot.slane %v224, %v2052
    %v2054 = vlaneseq
    %v2055 = vshrl.u32 %v2054, 7
    %v2056 = vsub.s32 2, %v2055
    %v2057 = vrot.slane %v224, %v2056
    %v2061 = vmul.f32 %v2043, %v2049
    %v2062 = vmul.f32 %v2043, %v2053
    %v2063 = vmul.f32 %v2043, %v2057
    %vm2064 = vcmask 130048
    %v2066 = vsel %vm2064, %v2037, 0
    %2068 = vmatprep.subr.mxu0 %v219
    %2069 = vmatpush1.msra.mxu0 %v218
    %2070 = vmatprep.subr.mxu0 %v222
    %2071 = vmatpush1.msra.mxu0 %v221
    %2072 = vmatprep.subr.mxu0 0.0
    %2073 = vmatpush1.msra.mxu0 0.0
    %2074 = vmatprep.subr.mxu0 0.0
    %2075 = vmatpush1.msra.mxu0 0.0
    %2076 = vmatprep.subr.mxu0 0.0
    %2077 = vmatpush1.msra.mxu0 0.0
    %2078 = vmatprep.subr.mxu0 0.0
    %2079 = vmatpush1.msra.mxu0 0.0
    %2080 = vmatprep.subr.mxu0 0.0
    %2081 = vmatpush1.msra.mxu0 0.0
    %2082 = vmatprep.subr.mxu0 0.0
    %2083 = vmatpush1.msra.mxu0 0.0
    %2084 = vmatprep.subr.mxu0 0.0
    %2085 = vmatpush1.msra.mxu0 0.0
    %2086 = vmatprep.subr.mxu0 0.0
    %2087 = vmatpush1.msra.mxu0 0.0
    %2088 = vmatprep.subr.mxu0 0.0
    %2089 = vmatpush1.msra.mxu0 0.0
    %2090 = vmatprep.subr.mxu0 0.0
    %2091 = vmatpush1.msra.mxu0 0.0
    %2092 = vmatprep.subr.mxu0 0.0
    %2093 = vmatpush1.msra.mxu0 0.0
    %2094 = vmatprep.subr.mxu0 0.0
    %2095 = vmatpush1.msra.mxu0 0.0
    %2096 = vmatprep.subr.mxu0 0.0
    %2097 = vmatpush1.msra.mxu0 0.0
    %2098 = vmatprep.subr.mxu0 0.0
    %2099 = vmatpush1.msra.mxu0 0.0
    %2100 = vmatprep.subr.mxu0 0.0
    %2101 = vmatpush1.msra.mxu0 0.0
    %2102 = vmatprep.subr.mxu0 0.0
    %2103 = vmatpush1.msra.mxu0 0.0
    %2104 = vmatprep.subr.mxu0 0.0
    %2105 = vmatpush1.msra.mxu0 0.0
    %2106 = vmatprep.subr.mxu0 0.0
    %2107 = vmatpush1.msra.mxu0 0.0
    %2108 = vmatprep.subr.mxu0 0.0
    %2109 = vmatpush1.msra.mxu0 0.0
    %2110 = vmatprep.subr.mxu0 0.0
    %2111 = vmatpush1.msra.mxu0 0.0
    %2112 = vmatprep.subr.mxu0 0.0
    %2113 = vmatpush1.msra.mxu0 0.0
    %2114 = vmatprep.subr.mxu0 0.0
    %2115 = vmatpush1.msra.mxu0 0.0
    %2116 = vmatprep.subr.mxu0 0.0
    %2117 = vmatpush1.msra.mxu0 0.0
    %2118 = vmatprep.subr.mxu0 0.0
    %2119 = vmatpush1.msra.mxu0 0.0
    %2120 = vmatprep.subr.mxu0 0.0
    %2121 = vmatpush1.msra.mxu0 0.0
    %2122 = vmatprep.subr.mxu0 0.0
    %2123 = vmatpush1.msra.mxu0 0.0
    %2124 = vmatprep.subr.mxu0 0.0
    %2125 = vmatpush1.msra.mxu0 0.0
    %2126 = vmatprep.subr.mxu0 0.0
    %2127 = vmatpush1.msra.mxu0 0.0
    %2128 = vmatprep.subr.mxu0 0.0
    %2129 = vmatpush1.msra.mxu0 0.0
    %2130 = vmatprep.subr.mxu0 0.0
    %2131 = vmatpush1.msra.mxu0 0.0
    %2132 = vmatprep.mubr.f32.mxu0 0.0
    %2133 = vmatmul.mubr.f32.gmra.mrb[0].mxu0 %v2066
    %v2134 = vpop.f32.mrb[0].mxu0
    %v2135 = vadd.f32 %v2061, %v2134
    %v2136 = vpop.f32.mrb[0].mxu0
    %v2137 = vadd.f32 %v2062, %v2136
    %2138 = vdwg.mxu0
    %2139 = vmatprep.subr.mxu0 0.0
    %2140 = vmatpush1.msra.mxu0 %v220
    %2141 = vmatprep.subr.mxu0 0.0
    %2142 = vmatpush1.msra.mxu0 %v223
    %2143 = vmatprep.subr.mxu0 0.0
    %2144 = vmatpush1.msra.mxu0 0.0
    %2145 = vmatprep.subr.mxu0 0.0
    %2146 = vmatpush1.msra.mxu0 0.0
    %2147 = vmatprep.subr.mxu0 0.0
    %2148 = vmatpush1.msra.mxu0 0.0
    %2149 = vmatprep.subr.mxu0 0.0
    %2150 = vmatpush1.msra.mxu0 0.0
    %2151 = vmatprep.subr.mxu0 0.0
    %2152 = vmatpush1.msra.mxu0 0.0
    %2153 = vmatprep.subr.mxu0 0.0
    %2154 = vmatpush1.msra.mxu0 0.0
    %2155 = vmatprep.subr.mxu0 0.0
    %2156 = vmatpush1.msra.mxu0 0.0
    %2157 = vmatprep.subr.mxu0 0.0
    %2158 = vmatpush1.msra.mxu0 0.0
    %2159 = vmatprep.subr.mxu0 0.0
    %2160 = vmatpush1.msra.mxu0 0.0
    %2161 = vmatprep.subr.mxu0 0.0
    %2162 = vmatpush1.msra.mxu0 0.0
    %2163 = vmatprep.subr.mxu0 0.0
    %2164 = vmatpush1.msra.mxu0 0.0
    %2165 = vmatprep.subr.mxu0 0.0
    %2166 = vmatpush1.msra.mxu0 0.0
    %2167 = vmatprep.subr.mxu0 0.0
    %2168 = vmatpush1.msra.mxu0 0.0
    %2169 = vmatprep.subr.mxu0 0.0
    %2170 = vmatpush1.msra.mxu0 0.0
    %2171 = vmatprep.subr.mxu0 0.0
    %2172 = vmatpush1.msra.mxu0 0.0
    %2173 = vmatprep.subr.mxu0 0.0
    %2174 = vmatpush1.msra.mxu0 0.0
    %2175 = vmatprep.subr.mxu0 0.0
    %2176 = vmatpush1.msra.mxu0 0.0
    %2177 = vmatprep.subr.mxu0 0.0
    %2178 = vmatpush1.msra.mxu0 0.0
    %2179 = vmatprep.subr.mxu0 0.0
    %2180 = vmatpush1.msra.mxu0 0.0
    %2181 = vmatprep.subr.mxu0 0.0
    %2182 = vmatpush1.msra.mxu0 0.0
    %2183 = vmatprep.subr.mxu0 0.0
    %2184 = vmatpush1.msra.mxu0 0.0
    %2185 = vmatprep.subr.mxu0 0.0
    %2186 = vmatpush1.msra.mxu0 0.0
    %2187 = vmatprep.subr.mxu0 0.0
    %2188 = vmatpush1.msra.mxu0 0.0
    %2189 = vmatprep.subr.mxu0 0.0
    %2190 = vmatpush1.msra.mxu0 0.0
    %2191 = vmatprep.subr.mxu0 0.0
    %2192 = vmatpush1.msra.mxu0 0.0
    %2193 = vmatprep.subr.mxu0 0.0
    %2194 = vmatpush1.msra.mxu0 0.0
    %2195 = vmatprep.subr.mxu0 0.0
    %2196 = vmatpush1.msra.mxu0 0.0
    %2197 = vmatprep.subr.mxu0 0.0
    %2198 = vmatpush1.msra.mxu0 0.0
    %2199 = vmatprep.subr.mxu0 0.0
    %2200 = vmatpush1.msra.mxu0 0.0
    %2201 = vmatprep.subr.mxu0 0.0
    %2202 = vmatpush1.msra.mxu0 0.0
    %2203 = vmatprep.mubr.f32.mxu0 0.0
    %2204 = vmatmul.mubr.f32.gmra.mrb[0].mxu0 %v2066
    %v2205 = vpop.f32.mrb[0].mxu0
    %v2206 = vadd.f32 %v2063, %v2205
    %v2207 = vpop.f32.mrb[0].mxu0
    %2208 = vdwg.mxu0
    %v2210 = vlaneseq
    %v2211 = vshrl.u32 %v2210, 7
    %v2212 = vsub.s32 0, %v2211
    %v2213 = vrot.slane %v273, %v2212
    %v2214 = vlaneseq
    %v2215 = vshrl.u32 %v2214, 7
    %v2216 = vsub.s32 1, %v2215
    %v2217 = vrot.slane %v273, %v2216
    %v2218 = vlaneseq
    %v2219 = vshrl.u32 %v2218, 7
    %v2220 = vsub.s32 2, %v2219
    %v2221 = vrot.slane %v273, %v2220
    %v2225 = vadd.f32 %v2135, %v2213
    %v2226 = vadd.f32 %v2137, %v2217
    %v2227 = vadd.f32 %v2206, %v2221
    %v2229 = vlaneseq
    %v2230 = vshrl.u32 %v2229, 7
    %v2231 = vsub.s32 0, %v2230
    %v2232 = vrot.slane %v274, %v2231
    %v2233 = vlaneseq
    %v2234 = vshrl.u32 %v2233, 7
    %v2235 = vsub.s32 1, %v2234
    %v2236 = vrot.slane %v274, %v2235
    %v2237 = vlaneseq
    %v2238 = vshrl.u32 %v2237, 7
    %v2239 = vsub.s32 2, %v2238
    %v2240 = vrot.slane %v274, %v2239
    %2244 = vmatprep.subr.mxu0 %v226
    %2245 = vmatpush1.msra.mxu0 %v225
    %2246 = vmatprep.subr.mxu0 %v229
    %2247 = vmatpush1.msra.mxu0 %v228
    %2248 = vmatprep.subr.mxu0 %v232
    %2249 = vmatpush1.msra.mxu0 %v231
    %2250 = vmatprep.subr.mxu0 %v235
    %2251 = vmatpush1.msra.mxu0 %v234
    %2252 = vmatprep.subr.mxu0 %v238
    %2253 = vmatpush1.msra.mxu0 %v237
    %2254 = vmatprep.subr.mxu0 %v241
    %2255 = vmatpush1.msra.mxu0 %v240
    %2256 = vmatprep.subr.mxu0 %v244
    %2257 = vmatpush1.msra.mxu0 %v243
    %2258 = vmatprep.subr.mxu0 %v247
    %2259 = vmatpush1.msra.mxu0 %v246
    %2260 = vmatprep.subr.mxu0 %v250
    %2261 = vmatpush1.msra.mxu0 %v249
    %2262 = vmatprep.subr.mxu0 %v253
    %2263 = vmatpush1.msra.mxu0 %v252
    %2264 = vmatprep.subr.mxu0 %v256
    %2265 = vmatpush1.msra.mxu0 %v255
    %2266 = vmatprep.subr.mxu0 %v259
    %2267 = vmatpush1.msra.mxu0 %v258
    %2268 = vmatprep.subr.mxu0 %v262
    %2269 = vmatpush1.msra.mxu0 %v261
    %2270 = vmatprep.subr.mxu0 %v265
    %2271 = vmatpush1.msra.mxu0 %v264
    %2272 = vmatprep.subr.mxu0 %v268
    %2273 = vmatpush1.msra.mxu0 %v267
    %2274 = vmatprep.subr.mxu0 %v271
    %2275 = vmatpush1.msra.mxu0 %v270
    %2276 = vmatprep.subr.mxu0 0.0
    %2277 = vmatpush1.msra.mxu0 0.0
    %2278 = vmatprep.subr.mxu0 0.0
    %2279 = vmatpush1.msra.mxu0 0.0
    %2280 = vmatprep.subr.mxu0 0.0
    %2281 = vmatpush1.msra.mxu0 0.0
    %2282 = vmatprep.subr.mxu0 0.0
    %2283 = vmatpush1.msra.mxu0 0.0
    %2284 = vmatprep.subr.mxu0 0.0
    %2285 = vmatpush1.msra.mxu0 0.0
    %2286 = vmatprep.subr.mxu0 0.0
    %2287 = vmatpush1.msra.mxu0 0.0
    %2288 = vmatprep.subr.mxu0 0.0
    %2289 = vmatpush1.msra.mxu0 0.0
    %2290 = vmatprep.subr.mxu0 0.0
    %2291 = vmatpush1.msra.mxu0 0.0
    %2292 = vmatprep.subr.mxu0 0.0
    %2293 = vmatpush1.msra.mxu0 0.0
    %2294 = vmatprep.subr.mxu0 0.0
    %2295 = vmatpush1.msra.mxu0 0.0
    %2296 = vmatprep.subr.mxu0 0.0
    %2297 = vmatpush1.msra.mxu0 0.0
    %2298 = vmatprep.subr.mxu0 0.0
    %2299 = vmatpush1.msra.mxu0 0.0
    %2300 = vmatprep.subr.mxu0 0.0
    %2301 = vmatpush1.msra.mxu0 0.0
    %2302 = vmatprep.subr.mxu0 0.0
    %2303 = vmatpush1.msra.mxu0 0.0
    %2304 = vmatprep.subr.mxu0 0.0
    %2305 = vmatpush1.msra.mxu0 0.0
    %2306 = vmatprep.subr.mxu0 0.0
    %2307 = vmatpush1.msra.mxu0 0.0
    %2308 = vmatprep.mubr.f32.mxu0 0.0
    %2309 = vmatmul.mubr.f32.gmra.mrb[0].mxu0 %v1960
    %v2310 = vpop.f32.mrb[0].mxu0
    %v2311 = vadd.f32 %v2232, %v2310
    %v2312 = vpop.f32.mrb[0].mxu0
    %v2313 = vadd.f32 %v2236, %v2312
    %2314 = vdwg.mxu0
    %2315 = vmatprep.subr.mxu0 0.0
    %2316 = vmatpush1.msra.mxu0 %v227
    %2317 = vmatprep.subr.mxu0 0.0
    %2318 = vmatpush1.msra.mxu0 %v230
    %2319 = vmatprep.subr.mxu0 0.0
    %2320 = vmatpush1.msra.mxu0 %v233
    %2321 = vmatprep.subr.mxu0 0.0
    %2322 = vmatpush1.msra.mxu0 %v236
    %2323 = vmatprep.subr.mxu0 0.0
    %2324 = vmatpush1.msra.mxu0 %v239
    %2325 = vmatprep.subr.mxu0 0.0
    %2326 = vmatpush1.msra.mxu0 %v242
    %2327 = vmatprep.subr.mxu0 0.0
    %2328 = vmatpush1.msra.mxu0 %v245
    %2329 = vmatprep.subr.mxu0 0.0
    %2330 = vmatpush1.msra.mxu0 %v248
    %2331 = vmatprep.subr.mxu0 0.0
    %2332 = vmatpush1.msra.mxu0 %v251
    %2333 = vmatprep.subr.mxu0 0.0
    %2334 = vmatpush1.msra.mxu0 %v254
    %2335 = vmatprep.subr.mxu0 0.0
    %2336 = vmatpush1.msra.mxu0 %v257
    %2337 = vmatprep.subr.mxu0 0.0
    %2338 = vmatpush1.msra.mxu0 %v260
    %2339 = vmatprep.subr.mxu0 0.0
    %2340 = vmatpush1.msra.mxu0 %v263
    %2341 = vmatprep.subr.mxu0 0.0
    %2342 = vmatpush1.msra.mxu0 %v266
    %2343 = vmatprep.subr.mxu0 0.0
    %2344 = vmatpush1.msra.mxu0 %v269
    %2345 = vmatprep.subr.mxu0 0.0
    %2346 = vmatpush1.msra.mxu0 %v272
    %2347 = vmatprep.subr.mxu0 0.0
    %2348 = vmatpush1.msra.mxu0 0.0
    %2349 = vmatprep.subr.mxu0 0.0
    %2350 = vmatpush1.msra.mxu0 0.0
    %2351 = vmatprep.subr.mxu0 0.0
    %2352 = vmatpush1.msra.mxu0 0.0
    %2353 = vmatprep.subr.mxu0 0.0
    %2354 = vmatpush1.msra.mxu0 0.0
    %2355 = vmatprep.subr.mxu0 0.0
    %2356 = vmatpush1.msra.mxu0 0.0
    %2357 = vmatprep.subr.mxu0 0.0
    %2358 = vmatpush1.msra.mxu0 0.0
    %2359 = vmatprep.subr.mxu0 0.0
    %2360 = vmatpush1.msra.mxu0 0.0
    %2361 = vmatprep.subr.mxu0 0.0
    %2362 = vmatpush1.msra.mxu0 0.0
    %2363 = vmatprep.subr.mxu0 0.0
    %2364 = vmatpush1.msra.mxu0 0.0
    %2365 = vmatprep.subr.mxu0 0.0
    %2366 = vmatpush1.msra.mxu0 0.0
    %2367 = vmatprep.subr.mxu0 0.0
    %2368 = vmatpush1.msra.mxu0 0.0
    %2369 = vmatprep.subr.mxu0 0.0
    %2370 = vmatpush1.msra.mxu0 0.0
    %2371 = vmatprep.subr.mxu0 0.0
    %2372 = vmatpush1.msra.mxu0 0.0
    %2373 = vmatprep.subr.mxu0 0.0
    %2374 = vmatpush1.msra.mxu0 0.0
    %2375 = vmatprep.subr.mxu0 0.0
    %2376 = vmatpush1.msra.mxu0 0.0
    %2377 = vmatprep.subr.mxu0 0.0
    %2378 = vmatpush1.msra.mxu0 0.0
    %2379 = vmatprep.mubr.f32.mxu0 0.0
    %2380 = vmatmul.mubr.f32.gmra.mrb[0].mxu0 %v1960
    %v2381 = vpop.f32.mrb[0].mxu0
    %v2382 = vadd.f32 %v2240, %v2381
    %v2383 = vpop.f32.mrb[0].mxu0
    %2384 = vdwg.mxu0
    %v2385 = vadd.f32 %v2225, %v2311
    %v2386 = vxor.u32 %v2385, 2147483648
    %v2387 = vmul.f32 %v2386, 1.442695
    %v2388 = vpow.pop %v2387
    %v2389 = vadd.f32 %v2388, 1.0
    %v2390 = vrcp.pop %v2389
    %v2391 = vmul.f32 1.0, %v2390
    %v2392 = vadd.f32 %v2226, %v2313
    %v2393 = vxor.u32 %v2392, 2147483648
    %v2394 = vmul.f32 %v2393, 1.442695
    %v2395 = vpow.pop %v2394
    %v2396 = vadd.f32 %v2395, 1.0
    %v2397 = vrcp.pop %v2396
    %v2398 = vmul.f32 1.0, %v2397
    %v2399 = vmul.f32 %v2391, %v2382
    %v2400 = vadd.f32 %v2227, %v2399
    %v2401 = vtanh.pop %v2400
    %v2402 = vsub.f32 1.0, %v2398
    %v2403 = vmul.f32 %v2402, %v2401
    %v2404 = vmul.f32 %v2398, %v1960
    %v2405 = vadd.f32 %v2403, %v2404
    %v2407 = vlaneseq
    %v2408 = vshrl.u32 %v2407, 7
    %v2409 = vsub.s32 0, %v2408
    %v2410 = vrot.slane %v291, %v2409
    %2412 = vmatprep.subr.mxu0 0.0
    %2413 = vmatpush1.msra.mxu0 %v275
    %2414 = vmatprep.subr.mxu0 0.0
    %2415 = vmatpush1.msra.mxu0 %v276
    %2416 = vmatprep.subr.mxu0 0.0
    %2417 = vmatpush1.msra.mxu0 %v277
    %2418 = vmatprep.subr.mxu0 0.0
    %2419 = vmatpush1.msra.mxu0 %v278
    %2420 = vmatprep.subr.mxu0 0.0
    %2421 = vmatpush1.msra.mxu0 %v279
    %2422 = vmatprep.subr.mxu0 0.0
    %2423 = vmatpush1.msra.mxu0 %v280
    %2424 = vmatprep.subr.mxu0 0.0
    %2425 = vmatpush1.msra.mxu0 %v281
    %2426 = vmatprep.subr.mxu0 0.0
    %2427 = vmatpush1.msra.mxu0 %v282
    %2428 = vmatprep.subr.mxu0 0.0
    %2429 = vmatpush1.msra.mxu0 %v283
    %2430 = vmatprep.subr.mxu0 0.0
    %2431 = vmatpush1.msra.mxu0 %v284
    %2432 = vmatprep.subr.mxu0 0.0
    %2433 = vmatpush1.msra.mxu0 %v285
    %2434 = vmatprep.subr.mxu0 0.0
    %2435 = vmatpush1.msra.mxu0 %v286
    %2436 = vmatprep.subr.mxu0 0.0
    %2437 = vmatpush1.msra.mxu0 %v287
    %2438 = vmatprep.subr.mxu0 0.0
    %2439 = vmatpush1.msra.mxu0 %v288
    %2440 = vmatprep.subr.mxu0 0.0
    %2441 = vmatpush1.msra.mxu0 %v289
    %2442 = vmatprep.subr.mxu0 0.0
    %2443 = vmatpush1.msra.mxu0 %v290
    %2444 = vmatprep.subr.mxu0 0.0
    %2445 = vmatpush1.msra.mxu0 0.0
    %2446 = vmatprep.subr.mxu0 0.0
    %2447 = vmatpush1.msra.mxu0 0.0
    %2448 = vmatprep.subr.mxu0 0.0
    %2449 = vmatpush1.msra.mxu0 0.0
    %2450 = vmatprep.subr.mxu0 0.0
    %2451 = vmatpush1.msra.mxu0 0.0
    %2452 = vmatprep.subr.mxu0 0.0
    %2453 = vmatpush1.msra.mxu0 0.0
    %2454 = vmatprep.subr.mxu0 0.0
    %2455 = vmatpush1.msra.mxu0 0.0
    %2456 = vmatprep.subr.mxu0 0.0
    %2457 = vmatpush1.msra.mxu0 0.0
    %2458 = vmatprep.subr.mxu0 0.0
    %2459 = vmatpush1.msra.mxu0 0.0
    %2460 = vmatprep.subr.mxu0 0.0
    %2461 = vmatpush1.msra.mxu0 0.0
    %2462 = vmatprep.subr.mxu0 0.0
    %2463 = vmatpush1.msra.mxu0 0.0
    %2464 = vmatprep.subr.mxu0 0.0
    %2465 = vmatpush1.msra.mxu0 0.0
    %2466 = vmatprep.subr.mxu0 0.0
    %2467 = vmatpush1.msra.mxu0 0.0
    %2468 = vmatprep.subr.mxu0 0.0
    %2469 = vmatpush1.msra.mxu0 0.0
    %2470 = vmatprep.subr.mxu0 0.0
    %2471 = vmatpush1.msra.mxu0 0.0
    %2472 = vmatprep.subr.mxu0 0.0
    %2473 = vmatpush1.msra.mxu0 0.0
    %2474 = vmatprep.subr.mxu0 0.0
    %2475 = vmatpush1.msra.mxu0 0.0
    %2476 = vmatprep.mubr.f32.mxu0 0.0
    %2477 = vmatmul.mubr.f32.gmra.mrb[0].mxu0 %v2405
    %v2478 = vpop.f32.mrb[0].mxu0
    %v2479 = vadd.f32 %v2410, %v2478
    %v2480 = vpop.f32.mrb[0].mxu0
    %2481 = vdwg.mxu0
    %2482 = vmax.xlane.f32.xlu0 %v2479
    %v2483 = vpop.xlane.xlu0 %2482
    %vm2484 = vcmp.eq.f32.partialorder %v2479, %v2483
    %v2485 = vsel %vm2484, %v315, 128
    %v2486 = vand.u32 %v2485, 65535
    %v2487 = vshra.s32 %v2485, 16
    %v2488 = vcvt.s32.f32 %v2486
    %v2489 = vcvt.s32.f32 %v2487
    %2490 = vmin.xlane.f32.xlu0 %v2489
    %v2491 = vpop.xlane.xlu0 %2490
    %vm2492 = vcmp.eq.f32.partialorder %v2489, %v2491
    %v2493 = vsel %vm2492, %v2488, inf
    %2494 = vmin.xlane.f32.xlu0 %v2493
    %v2495 = vpop.xlane.xlu0 %2494
    %v2496 = vcvt.f32.s32 %v2495
    %v2497 = vcvt.f32.s32 %v2491
    %v2498 = vshll.u32 %v2497, 16
    %v2499 = vadd.s32 %v2498, %v2496
    %vm2500 = vcmp.eq.s32.totalorder %v315, %v2499
    %v2501 = vsel %vm2500, 1, 0
    %v2502 = vcvt.s32.f32 %v2501
    %v2503 = vsub.f32 %v2479, %v2483
    %v2504 = vmul.f32 %v2503, 1.442695
    %v2505 = vpow.pop %v2504
    %2506 = vadd.xlane.f32.xlu0 %v2505
    %v2507 = vpop.xlane.xlu0 %2506
    %v2508 = vlog2.pop %v2507
    %v2509 = vmul.f32 %v2508, 0.6931472
    %v2510 = vsub.f32 %v2503, %v2509
    %s2511 = scalar_lea.vmem [#allocation14], 8
    %2512 = vst [vmem:[%s2511] sm:$0xff] %v2510
    %2513 = vmatprep.subr.mxu0 0.0
    %2514 = vmatpush1.msra.mxu0 %v202
    %2515 = vmatprep.subr.mxu0 0.0
    %2516 = vmatpush1.msra.mxu0 %v203
    %2517 = vmatprep.subr.mxu0 0.0
    %2518 = vmatpush1.msra.mxu0 %v204
    %2519 = vmatprep.subr.mxu0 0.0
    %2520 = vmatpush1.msra.mxu0 %v205
    %2521 = vmatprep.subr.mxu0 0.0
    %2522 = vmatpush1.msra.mxu0 %v206
    %2523 = vmatprep.subr.mxu0 0.0
    %2524 = vmatpush1.msra.mxu0 %v207
    %2525 = vmatprep.subr.mxu0 0.0
    %2526 = vmatpush1.msra.mxu0 %v208
    %2527 = vmatprep.subr.mxu0 0.0
    %2528 = vmatpush1.msra.mxu0 %v209
    %2529 = vmatprep.subr.mxu0 0.0
    %2530 = vmatpush1.msra.mxu0 %v210
    %2531 = vmatprep.subr.mxu0 0.0
    %2532 = vmatpush1.msra.mxu0 %v211
    %2533 = vmatprep.subr.mxu0 0.0
    %2534 = vmatpush1.msra.mxu0 %v212
    %2535 = vmatprep.subr.mxu0 0.0
    %2536 = vmatpush1.msra.mxu0 %v213
    %2537 = vmatprep.subr.mxu0 0.0
    %2538 = vmatpush1.msra.mxu0 %v214
    %2539 = vmatprep.subr.mxu0 0.0
    %2540 = vmatpush1.msra.mxu0 %v215
    %2541 = vmatprep.subr.mxu0 0.0
    %2542 = vmatpush1.msra.mxu0 %v216
    %2543 = vmatprep.subr.mxu0 0.0
    %2544 = vmatpush1.msra.mxu0 %v217
    %2545 = vmatprep.subr.mxu0 0.0
    %2546 = vmatpush1.msra.mxu0 0.0
    %2547 = vmatprep.subr.mxu0 0.0
    %2548 = vmatpush1.msra.mxu0 0.0
    %2549 = vmatprep.subr.mxu0 0.0
    %2550 = vmatpush1.msra.mxu0 0.0
    %2551 = vmatprep.subr.mxu0 0.0
    %2552 = vmatpush1.msra.mxu0 0.0
    %2553 = vmatprep.subr.mxu0 0.0
    %2554 = vmatpush1.msra.mxu0 0.0
    %2555 = vmatprep.subr.mxu0 0.0
    %2556 = vmatpush1.msra.mxu0 0.0
    %2557 = vmatprep.subr.mxu0 0.0
    %2558 = vmatpush1.msra.mxu0 0.0
    %2559 = vmatprep.subr.mxu0 0.0
    %2560 = vmatpush1.msra.mxu0 0.0
    %2561 = vmatprep.subr.mxu0 0.0
    %2562 = vmatpush1.msra.mxu0 0.0
    %2563 = vmatprep.subr.mxu0 0.0
    %2564 = vmatpush1.msra.mxu0 0.0
    %2565 = vmatprep.subr.mxu0 0.0
    %2566 = vmatpush1.msra.mxu0 0.0
    %2567 = vmatprep.subr.mxu0 0.0
    %2568 = vmatpush1.msra.mxu0 0.0
    %2569 = vmatprep.subr.mxu0 0.0
    %2570 = vmatpush1.msra.mxu0 0.0
    %2571 = vmatprep.subr.mxu0 0.0
    %2572 = vmatpush1.msra.mxu0 0.0
    %2573 = vmatprep.subr.mxu0 0.0
    %2574 = vmatpush1.msra.mxu0 0.0
    %2575 = vmatprep.subr.mxu0 0.0
    %2576 = vmatpush1.msra.mxu0 0.0
    %2577 = vmatprep.mubr.f32.mxu0 0.0
    %2578 = vmatmul.mubr.f32.gmra.mrb[0].mxu0 %v2502
    %v2579 = vpop.f32.mrb[0].mxu0
    %v2580 = vadd.f32 0.0, %v2579
    %v2581 = vpop.f32.mrb[0].mxu0
    %2582 = vdwg.mxu0
    %2583 = vmatprep.subr.mxu0 0.0
    %2584 = vmatpush1.msra.mxu0 %v294
    %2585 = vmatprep.subr.mxu0 0.0
    %2586 = vmatpush1.msra.mxu0 %v295
    %2587 = vmatprep.subr.mxu0 0.0
    %2588 = vmatpush1.msra.mxu0 %v296
    %2589 = vmatprep.subr.mxu0 0.0
    %2590 = vmatpush1.msra.mxu0 %v297
    %2591 = vmatprep.subr.mxu0 0.0
    %2592 = vmatpush1.msra.mxu0 %v298
    %2593 = vmatprep.subr.mxu0 0.0
    %2594 = vmatpush1.msra.mxu0 %v299
    %2595 = vmatprep.subr.mxu0 0.0
    %2596 = vmatpush1.msra.mxu0 %v300
    %2597 = vmatprep.subr.mxu0 0.0
    %2598 = vmatpush1.msra.mxu0 %v301
    %2599 = vmatprep.subr.mxu0 0.0
    %2600 = vmatpush1.msra.mxu0 %v302
    %2601 = vmatprep.subr.mxu0 0.0
    %2602 = vmatpush1.msra.mxu0 %v303
    %2603 = vmatprep.subr.mxu0 0.0
    %2604 = vmatpush1.msra.mxu0 %v304
    %2605 = vmatprep.subr.mxu0 0.0
    %2606 = vmatpush1.msra.mxu0 %v305
    %2607 = vmatprep.subr.mxu0 0.0
    %2608 = vmatpush1.msra.mxu0 %v306
    %2609 = vmatprep.subr.mxu0 0.0
    %2610 = vmatpush1.msra.mxu0 %v307
    %2611 = vmatprep.subr.mxu0 0.0
    %2612 = vmatpush1.msra.mxu0 %v308
    %2613 = vmatprep.subr.mxu0 0.0
    %2614 = vmatpush1.msra.mxu0 %v309
    %2615 = vmatprep.subr.mxu0 0.0
    %2616 = vmatpush1.msra.mxu0 0.0
    %2617 = vmatprep.subr.mxu0 0.0
    %2618 = vmatpush1.msra.mxu0 0.0
    %2619 = vmatprep.subr.mxu0 0.0
    %2620 = vmatpush1.msra.mxu0 0.0
    %2621 = vmatprep.subr.mxu0 0.0
    %2622 = vmatpush1.msra.mxu0 0.0
    %2623 = vmatprep.subr.mxu0 0.0
    %2624 = vmatpush1.msra.mxu0 0.0
    %2625 = vmatprep.subr.mxu0 0.0
    %2626 = vmatpush1.msra.mxu0 0.0
    %2627 = vmatprep.subr.mxu0 0.0
    %2628 = vmatpush1.msra.mxu0 0.0
    %2629 = vmatprep.subr.mxu0 0.0
    %2630 = vmatpush1.msra.mxu0 0.0
    %2631 = vmatprep.subr.mxu0 0.0
    %2632 = vmatpush1.msra.mxu0 0.0
    %2633 = vmatprep.subr.mxu0 0.0
    %2634 = vmatpush1.msra.mxu0 0.0
    %2635 = vmatprep.subr.mxu0 0.0
    %2636 = vmatpush1.msra.mxu0 0.0
    %2637 = vmatprep.subr.mxu0 0.0
    %2638 = vmatpush1.msra.mxu0 0.0
    %2639 = vmatprep.subr.mxu0 0.0
    %2640 = vmatpush1.msra.mxu0 0.0
    %2641 = vmatprep.subr.mxu0 0.0
    %2642 = vmatpush1.msra.mxu0 0.0
    %2643 = vmatprep.subr.mxu0 0.0
    %2644 = vmatpush1.msra.mxu0 0.0
    %2645 = vmatprep.subr.mxu0 0.0
    %2646 = vmatpush1.msra.mxu0 0.0
    %2647 = vmatprep.mubr.f32.mxu0 0.0
    %2648 = vmatmul.mubr.f32.gmra.mrb[0].mxu0 %v2405
    %v2649 = vpop.f32.mrb[0].mxu0
    %v2650 = vadd.f32 0.0, %v2649
    %v2651 = vpop.f32.mrb[0].mxu0
    %2652 = vdwg.mxu0
    %v2654 = vsel %vm2064, %v2580, 0
    %2656 = vmatprep.subr.mxu0 0.0
    %2657 = vmatpush1.msra.mxu0 %v292
    %2658 = vmatprep.subr.mxu0 0.0
    %2659 = vmatpush1.msra.mxu0 %v293
    %2660 = vmatprep.subr.mxu0 0.0
    %2661 = vmatpush1.msra.mxu0 0.0
    %2662 = vmatprep.subr.mxu0 0.0
    %2663 = vmatpush1.msra.mxu0 0.0
    %2664 = vmatprep.subr.mxu0 0.0
    %2665 = vmatpush1.msra.mxu0 0.0
    %2666 = vmatprep.subr.mxu0 0.0
    %2667 = vmatpush1.msra.mxu0 0.0
    %2668 = vmatprep.subr.mxu0 0.0
    %2669 = vmatpush1.msra.mxu0 0.0
    %2670 = vmatprep.subr.mxu0 0.0
    %2671 = vmatpush1.msra.mxu0 0.0
    %2672 = vmatprep.subr.mxu0 0.0
    %2673 = vmatpush1.msra.mxu0 0.0
    %2674 = vmatprep.subr.mxu0 0.0
    %2675 = vmatpush1.msra.mxu0 0.0
    %2676 = vmatprep.subr.mxu0 0.0
    %2677 = vmatpush1.msra.mxu0 0.0
    %2678 = vmatprep.subr.mxu0 0.0
    %2679 = vmatpush1.msra.mxu0 0.0
    %2680 = vmatprep.subr.mxu0 0.0
    %2681 = vmatpush1.msra.mxu0 0.0
    %2682 = vmatprep.subr.mxu0 0.0
    %2683 = vmatpush1.msra.mxu0 0.0
    %2684 = vmatprep.subr.mxu0 0.0
    %2685 = vmatpush1.msra.mxu0 0.0
    %2686 = vmatprep.subr.mxu0 0.0
    %2687 = vmatpush1.msra.mxu0 0.0
    %2688 = vmatprep.subr.mxu0 0.0
    %2689 = vmatpush1.msra.mxu0 0.0
    %2690 = vmatprep.subr.mxu0 0.0
    %2691 = vmatpush1.msra.mxu0 0.0
    %2692 = vmatprep.subr.mxu0 0.0
    %2693 = vmatpush1.msra.mxu0 0.0
    %2694 = vmatprep.subr.mxu0 0.0
    %2695 = vmatpush1.msra.mxu0 0.0
    %2696 = vmatprep.subr.mxu0 0.0
    %2697 = vmatpush1.msra.mxu0 0.0
    %2698 = vmatprep.subr.mxu0 0.0
    %2699 = vmatpush1.msra.mxu0 0.0
    %2700 = vmatprep.subr.mxu0 0.0
    %2701 = vmatpush1.msra.mxu0 0.0
    %2702 = vmatprep.subr.mxu0 0.0
    %2703 = vmatpush1.msra.mxu0 0.0
    %2704 = vmatprep.subr.mxu0 0.0
    %2705 = vmatpush1.msra.mxu0 0.0
    %2706 = vmatprep.subr.mxu0 0.0
    %2707 = vmatpush1.msra.mxu0 0.0
    %2708 = vmatprep.subr.mxu0 0.0
    %2709 = vmatpush1.msra.mxu0 0.0
    %2710 = vmatprep.subr.mxu0 0.0
    %2711 = vmatpush1.msra.mxu0 0.0
    %2712 = vmatprep.subr.mxu0 0.0
    %2713 = vmatpush1.msra.mxu0 0.0
    %2714 = vmatprep.subr.mxu0 0.0
    %2715 = vmatpush1.msra.mxu0 0.0
    %2716 = vmatprep.subr.mxu0 0.0
    %2717 = vmatpush1.msra.mxu0 0.0
    %2718 = vmatprep.subr.mxu0 0.0
    %2719 = vmatpush1.msra.mxu0 0.0
    %2720 = vmatprep.mubr.f32.mxu0 0.0
    %2721 = vmatmul.mubr.f32.gmra.mrb[0].mxu0 %v2654
    %v2722 = vpop.f32.mrb[0].mxu0
    %v2723 = vadd.f32 %v2650, %v2722
    %v2724 = vpop.f32.mrb[0].mxu0
    %2725 = vdwg.mxu0
    %v2727 = vlaneseq
    %v2728 = vshrl.u32 %v2727, 7
    %v2729 = vsub.s32 0, %v2728
    %v2730 = vrot.slane %v310, %v2729
    %v2732 = vadd.f32 %v2723, %v2730
    %v2733 = vmax.f32 %v2732, 0.0
    %v2735 = vlaneseq
    %v2736 = vshrl.u32 %v2735, 7
    %v2737 = vsub.s32 0, %v2736
    %v2738 = vrot.slane %v311, %v2737
    %v2740 = vmul.f32 %v2733, %v2738
    %2741 = vadd.xlane.f32.xlu0 %v2740
    %v2742 = vpop.xlane.xlu0 %2741
    %v2744 = vlaneseq
    %v2745 = vshrl.u32 %v2744, 7
    %v2746 = vsub.s32 0, %v2745
    %v2747 = vrot.slane %v312, %v2746
    %v2749 = vadd.f32 %v2742, %v2747
    %v2750 = vxor.u32 %v2749, 2147483648
    %v2751 = vmul.f32 %v2750, 1.442695
    %v2752 = vpow.pop %v2751
    %v2753 = vadd.f32 %v2752, 1.0
    %v2754 = vrcp.pop %v2753
    %v2755 = vmul.f32 1.0, %v2754
    %vm2756 = vcmp.eq.s32.totalorder %v315, 1
    %2758 = vset.pattern.permute.xlu0 0
    %2759 = vperm.xlu0 %2758, %v2755
    %v2760 = vpop.permute.xlu0 %2759
    %v2762 = vsel %vm2756, %v2760, 0.0
    %v2763 = vadd.f32 %v2762, 0.0
    %v2764 = vmul.f32 %v2760, %v2049
    %v2765 = vmul.f32 %v2760, %v2053
    %v2766 = vmul.f32 %v2760, %v2057
    %2767 = vmatprep.subr.mxu0 %v219
    %2768 = vmatpush1.msra.mxu0 %v218
    %2769 = vmatprep.subr.mxu0 %v222
    %2770 = vmatpush1.msra.mxu0 %v221
    %2771 = vmatprep.subr.mxu0 0.0
    %2772 = vmatpush1.msra.mxu0 0.0
    %2773 = vmatprep.subr.mxu0 0.0
    %2774 = vmatpush1.msra.mxu0 0.0
    %2775 = vmatprep.subr.mxu0 0.0
    %2776 = vmatpush1.msra.mxu0 0.0
    %2777 = vmatprep.subr.mxu0 0.0
    %2778 = vmatpush1.msra.mxu0 0.0
    %2779 = vmatprep.subr.mxu0 0.0
    %2780 = vmatpush1.msra.mxu0 0.0
    %2781 = vmatprep.subr.mxu0 0.0
    %2782 = vmatpush1.msra.mxu0 0.0
    %2783 = vmatprep.subr.mxu0 0.0
    %2784 = vmatpush1.msra.mxu0 0.0
    %2785 = vmatprep.subr.mxu0 0.0
    %2786 = vmatpush1.msra.mxu0 0.0
    %2787 = vmatprep.subr.mxu0 0.0
    %2788 = vmatpush1.msra.mxu0 0.0
    %2789 = vmatprep.subr.mxu0 0.0
    %2790 = vmatpush1.msra.mxu0 0.0
    %2791 = vmatprep.subr.mxu0 0.0
    %2792 = vmatpush1.msra.mxu0 0.0
    %2793 = vmatprep.subr.mxu0 0.0
    %2794 = vmatpush1.msra.mxu0 0.0
    %2795 = vmatprep.subr.mxu0 0.0
    %2796 = vmatpush1.msra.mxu0 0.0
    %2797 = vmatprep.subr.mxu0 0.0
    %2798 = vmatpush1.msra.mxu0 0.0
    %2799 = vmatprep.subr.mxu0 0.0
    %2800 = vmatpush1.msra.mxu0 0.0
    %2801 = vmatprep.subr.mxu0 0.0
    %2802 = vmatpush1.msra.mxu0 0.0
    %2803 = vmatprep.subr.mxu0 0.0
    %2804 = vmatpush1.msra.mxu0 0.0
    %2805 = vmatprep.subr.mxu0 0.0
    %2806 = vmatpush1.msra.mxu0 0.0
    %2807 = vmatprep.subr.mxu0 0.0
    %2808 = vmatpush1.msra.mxu0 0.0
    %2809 = vmatprep.subr.mxu0 0.0
    %2810 = vmatpush1.msra.mxu0 0.0
    %2811 = vmatprep.subr.mxu0 0.0
    %2812 = vmatpush1.msra.mxu0 0.0
    %2813 = vmatprep.subr.mxu0 0.0
    %2814 = vmatpush1.msra.mxu0 0.0
    %2815 = vmatprep.subr.mxu0 0.0
    %2816 = vmatpush1.msra.mxu0 0.0
    %2817 = vmatprep.subr.mxu0 0.0
    %2818 = vmatpush1.msra.mxu0 0.0
    %2819 = vmatprep.subr.mxu0 0.0
    %2820 = vmatpush1.msra.mxu0 0.0
    %2821 = vmatprep.subr.mxu0 0.0
    %2822 = vmatpush1.msra.mxu0 0.0
    %2823 = vmatprep.subr.mxu0 0.0
    %2824 = vmatpush1.msra.mxu0 0.0
    %2825 = vmatprep.subr.mxu0 0.0
    %2826 = vmatpush1.msra.mxu0 0.0
    %2827 = vmatprep.subr.mxu0 0.0
    %2828 = vmatpush1.msra.mxu0 0.0
    %2829 = vmatprep.subr.mxu0 0.0
    %2830 = vmatpush1.msra.mxu0 0.0
    %2831 = vmatprep.mubr.f32.mxu0 0.0
    %2832 = vmatmul.mubr.f32.gmra.mrb[0].mxu0 %v2654
    %v2833 = vpop.f32.mrb[0].mxu0
    %v2834 = vadd.f32 %v2764, %v2833
    %v2835 = vpop.f32.mrb[0].mxu0
    %v2836 = vadd.f32 %v2765, %v2835
    %2837 = vdwg.mxu0
    %2838 = vmatprep.subr.mxu0 0.0
    %2839 = vmatpush1.msra.mxu0 %v220
    %2840 = vmatprep.subr.mxu0 0.0
    %2841 = vmatpush1.msra.mxu0 %v223
    %2842 = vmatprep.subr.mxu0 0.0
    %2843 = vmatpush1.msra.mxu0 0.0
    %2844 = vmatprep.subr.mxu0 0.0
    %2845 = vmatpush1.msra.mxu0 0.0
    %2846 = vmatprep.subr.mxu0 0.0
    %2847 = vmatpush1.msra.mxu0 0.0
    %2848 = vmatprep.subr.mxu0 0.0
    %2849 = vmatpush1.msra.mxu0 0.0
    %2850 = vmatprep.subr.mxu0 0.0
    %2851 = vmatpush1.msra.mxu0 0.0
    %2852 = vmatprep.subr.mxu0 0.0
    %2853 = vmatpush1.msra.mxu0 0.0
    %2854 = vmatprep.subr.mxu0 0.0
    %2855 = vmatpush1.msra.mxu0 0.0
    %2856 = vmatprep.subr.mxu0 0.0
    %2857 = vmatpush1.msra.mxu0 0.0
    %2858 = vmatprep.subr.mxu0 0.0
    %2859 = vmatpush1.msra.mxu0 0.0
    %2860 = vmatprep.subr.mxu0 0.0
    %2861 = vmatpush1.msra.mxu0 0.0
    %2862 = vmatprep.subr.mxu0 0.0
    %2863 = vmatpush1.msra.mxu0 0.0
    %2864 = vmatprep.subr.mxu0 0.0
    %2865 = vmatpush1.msra.mxu0 0.0
    %2866 = vmatprep.subr.mxu0 0.0
    %2867 = vmatpush1.msra.mxu0 0.0
    %2868 = vmatprep.subr.mxu0 0.0
    %2869 = vmatpush1.msra.mxu0 0.0
    %2870 = vmatprep.subr.mxu0 0.0
    %2871 = vmatpush1.msra.mxu0 0.0
    %2872 = vmatprep.subr.mxu0 0.0
    %2873 = vmatpush1.msra.mxu0 0.0
    %2874 = vmatprep.subr.mxu0 0.0
    %2875 = vmatpush1.msra.mxu0 0.0
    %2876 = vmatprep.subr.mxu0 0.0
    %2877 = vmatpush1.msra.mxu0 0.0
    %2878 = vmatprep.subr.mxu0 0.0
    %2879 = vmatpush1.msra.mxu0 0.0
    %2880 = vmatprep.subr.mxu0 0.0
    %2881 = vmatpush1.msra.mxu0 0.0
    %2882 = vmatprep.subr.mxu0 0.0
    %2883 = vmatpush1.msra.mxu0 0.0
    %2884 = vmatprep.subr.mxu0 0.0
    %2885 = vmatpush1.msra.mxu0 0.0
    %2886 = vmatprep.subr.mxu0 0.0
    %2887 = vmatpush1.msra.mxu0 0.0
    %2888 = vmatprep.subr.mxu0 0.0
    %2889 = vmatpush1.msra.mxu0 0.0
    %2890 = vmatprep.subr.mxu0 0.0
    %2891 = vmatpush1.msra.mxu0 0.0
    %2892 = vmatprep.subr.mxu0 0.0
    %2893 = vmatpush1.msra.mxu0 0.0
    %2894 = vmatprep.subr.mxu0 0.0
    %2895 = vmatpush1.msra.mxu0 0.0
    %2896 = vmatprep.subr.mxu0 0.0
    %2897 = vmatpush1.msra.mxu0 0.0
    %2898 = vmatprep.subr.mxu0 0.0
    %2899 = vmatpush1.msra.mxu0 0.0
    %2900 = vmatprep.subr.mxu0 0.0
    %2901 = vmatpush1.msra.mxu0 0.0
    %2902 = vmatprep.mubr.f32.mxu0 0.0
    %2903 = vmatmul.mubr.f32.gmra.mrb[0].mxu0 %v2654
    %v2904 = vpop.f32.mrb[0].mxu0
    %v2905 = vadd.f32 %v2766, %v2904
    %v2906 = vpop.f32.mrb[0].mxu0
    %2907 = vdwg.mxu0
    %v2908 = vadd.f32 %v2834, %v2213
    %v2909 = vadd.f32 %v2836, %v2217
    %v2910 = vadd.f32 %v2905, %v2221
    %2911 = vmatprep.subr.mxu0 %v226
    %2912 = vmatpush1.msra.mxu0 %v225
    %2913 = vmatprep.subr.mxu0 %v229
    %2914 = vmatpush1.msra.mxu0 %v228
    %2915 = vmatprep.subr.mxu0 %v232
    %2916 = vmatpush1.msra.mxu0 %v231
    %2917 = vmatprep.subr.mxu0 %v235
    %2918 = vmatpush1.msra.mxu0 %v234
    %2919 = vmatprep.subr.mxu0 %v238
    %2920 = vmatpush1.msra.mxu0 %v237
    %2921 = vmatprep.subr.mxu0 %v241
    %2922 = vmatpush1.msra.mxu0 %v240
    %2923 = vmatprep.subr.mxu0 %v244
    %2924 = vmatpush1.msra.mxu0 %v243
    %2925 = vmatprep.subr.mxu0 %v247
    %2926 = vmatpush1.msra.mxu0 %v246
    %2927 = vmatprep.subr.mxu0 %v250
    %2928 = vmatpush1.msra.mxu0 %v249
    %2929 = vmatprep.subr.mxu0 %v253
    %2930 = vmatpush1.msra.mxu0 %v252
    %2931 = vmatprep.subr.mxu0 %v256
    %2932 = vmatpush1.msra.mxu0 %v255
    %2933 = vmatprep.subr.mxu0 %v259
    %2934 = vmatpush1.msra.mxu0 %v258
    %2935 = vmatprep.subr.mxu0 %v262
    %2936 = vmatpush1.msra.mxu0 %v261
    %2937 = vmatprep.subr.mxu0 %v265
    %2938 = vmatpush1.msra.mxu0 %v264
    %2939 = vmatprep.subr.mxu0 %v268
    %2940 = vmatpush1.msra.mxu0 %v267
    %2941 = vmatprep.subr.mxu0 %v271
    %2942 = vmatpush1.msra.mxu0 %v270
    %2943 = vmatprep.subr.mxu0 0.0
    %2944 = vmatpush1.msra.mxu0 0.0
    %2945 = vmatprep.subr.mxu0 0.0
    %2946 = vmatpush1.msra.mxu0 0.0
    %2947 = vmatprep.subr.mxu0 0.0
    %2948 = vmatpush1.msra.mxu0 0.0
    %2949 = vmatprep.subr.mxu0 0.0
    %2950 = vmatpush1.msra.mxu0 0.0
    %2951 = vmatprep.subr.mxu0 0.0
    %2952 = vmatpush1.msra.mxu0 0.0
    %2953 = vmatprep.subr.mxu0 0.0
    %2954 = vmatpush1.msra.mxu0 0.0
    %2955 = vmatprep.subr.mxu0 0.0
    %2956 = vmatpush1.msra.mxu0 0.0
    %2957 = vmatprep.subr.mxu0 0.0
    %2958 = vmatpush1.msra.mxu0 0.0
    %2959 = vmatprep.subr.mxu0 0.0
    %2960 = vmatpush1.msra.mxu0 0.0
    %2961 = vmatprep.subr.mxu0 0.0
    %2962 = vmatpush1.msra.mxu0 0.0
    %2963 = vmatprep.subr.mxu0 0.0
    %2964 = vmatpush1.msra.mxu0 0.0
    %2965 = vmatprep.subr.mxu0 0.0
    %2966 = vmatpush1.msra.mxu0 0.0
    %2967 = vmatprep.subr.mxu0 0.0
    %2968 = vmatpush1.msra.mxu0 0.0
    %2969 = vmatprep.subr.mxu0 0.0
    %2970 = vmatpush1.msra.mxu0 0.0
    %2971 = vmatprep.subr.mxu0 0.0
    %2972 = vmatpush1.msra.mxu0 0.0
    %2973 = vmatprep.subr.mxu0 0.0
    %2974 = vmatpush1.msra.mxu0 0.0
    %2975 = vmatprep.mubr.f32.mxu0 0.0
    %2976 = vmatmul.mubr.f32.gmra.mrb[0].mxu0 %v2405
    %v2977 = vpop.f32.mrb[0].mxu0
    %v2978 = vadd.f32 %v2232, %v2977
    %v2979 = vpop.f32.mrb[0].mxu0
    %v2980 = vadd.f32 %v2236, %v2979
    %2981 = vdwg.mxu0
    %2982 = vmatprep.subr.mxu0 0.0
    %2983 = vmatpush1.msra.mxu0 %v227
    %2984 = vmatprep.subr.mxu0 0.0
    %2985 = vmatpush1.msra.mxu0 %v230
    %2986 = vmatprep.subr.mxu0 0.0
    %2987 = vmatpush1.msra.mxu0 %v233
    %2988 = vmatprep.subr.mxu0 0.0
    %2989 = vmatpush1.msra.mxu0 %v236
    %2990 = vmatprep.subr.mxu0 0.0
    %2991 = vmatpush1.msra.mxu0 %v239
    %2992 = vmatprep.subr.mxu0 0.0
    %2993 = vmatpush1.msra.mxu0 %v242
    %2994 = vmatprep.subr.mxu0 0.0
    %2995 = vmatpush1.msra.mxu0 %v245
    %2996 = vmatprep.subr.mxu0 0.0
    %2997 = vmatpush1.msra.mxu0 %v248
    %2998 = vmatprep.subr.mxu0 0.0
    %2999 = vmatpush1.msra.mxu0 %v251
    %3000 = vmatprep.subr.mxu0 0.0
    %3001 = vmatpush1.msra.mxu0 %v254
    %3002 = vmatprep.subr.mxu0 0.0
    %3003 = vmatpush1.msra.mxu0 %v257
    %3004 = vmatprep.subr.mxu0 0.0
    %3005 = vmatpush1.msra.mxu0 %v260
    %3006 = vmatprep.subr.mxu0 0.0
    %3007 = vmatpush1.msra.mxu0 %v263
    %3008 = vmatprep.subr.mxu0 0.0
    %3009 = vmatpush1.msra.mxu0 %v266
    %3010 = vmatprep.subr.mxu0 0.0
    %3011 = vmatpush1.msra.mxu0 %v269
    %3012 = vmatprep.subr.mxu0 0.0
    %3013 = vmatpush1.msra.mxu0 %v272
    %3014 = vmatprep.subr.mxu0 0.0
    %3015 = vmatpush1.msra.mxu0 0.0
    %3016 = vmatprep.subr.mxu0 0.0
    %3017 = vmatpush1.msra.mxu0 0.0
    %3018 = vmatprep.subr.mxu0 0.0
    %3019 = vmatpush1.msra.mxu0 0.0
    %3020 = vmatprep.subr.mxu0 0.0
    %3021 = vmatpush1.msra.mxu0 0.0
    %3022 = vmatprep.subr.mxu0 0.0
    %3023 = vmatpush1.msra.mxu0 0.0
    %3024 = vmatprep.subr.mxu0 0.0
    %3025 = vmatpush1.msra.mxu0 0.0
    %3026 = vmatprep.subr.mxu0 0.0
    %3027 = vmatpush1.msra.mxu0 0.0
    %3028 = vmatprep.subr.mxu0 0.0
    %3029 = vmatpush1.msra.mxu0 0.0
    %3030 = vmatprep.subr.mxu0 0.0
    %3031 = vmatpush1.msra.mxu0 0.0
    %3032 = vmatprep.subr.mxu0 0.0
    %3033 = vmatpush1.msra.mxu0 0.0
    %3034 = vmatprep.subr.mxu0 0.0
    %3035 = vmatpush1.msra.mxu0 0.0
    %3036 = vmatprep.subr.mxu0 0.0
    %3037 = vmatpush1.msra.mxu0 0.0
    %3038 = vmatprep.subr.mxu0 0.0
    %3039 = vmatpush1.msra.mxu0 0.0
    %3040 = vmatprep.subr.mxu0 0.0
    %3041 = vmatpush1.msra.mxu0 0.0
    %3042 = vmatprep.subr.mxu0 0.0
    %3043 = vmatpush1.msra.mxu0 0.0
    %3044 = vmatprep.subr.mxu0 0.0
    %3045 = vmatpush1.msra.mxu0 0.0
    %3046 = vmatprep.mubr.f32.mxu0 0.0
    %3047 = vmatmul.mubr.f32.gmra.mrb[0].mxu0 %v2405
    %v3048 = vpop.f32.mrb[0].mxu0
    %v3049 = vadd.f32 %v2240, %v3048
    %v3050 = vpop.f32.mrb[0].mxu0
    %3051 = vdwg.mxu0
    %v3052 = vadd.f32 %v2908, %v2978
    %v3053 = vxor.u32 %v3052, 2147483648
    %v3054 = vmul.f32 %v3053, 1.442695
    %v3055 = vpow.pop %v3054
    %v3056 = vadd.f32 %v3055, 1.0
    %v3057 = vrcp.pop %v3056
    %v3058 = vmul.f32 1.0, %v3057
    %v3059 = vadd.f32 %v2909, %v2980
    %v3060 = vxor.u32 %v3059, 2147483648
    %v3061 = vmul.f32 %v3060, 1.442695
    %v3062 = vpow.pop %v3061
    %v3063 = vadd.f32 %v3062, 1.0
    %v3064 = vrcp.pop %v3063
    %v3065 = vmul.f32 1.0, %v3064
    %v3066 = vmul.f32 %v3058, %v3049
    %v3067 = vadd.f32 %v2910, %v3066
    %v3068 = vtanh.pop %v3067
    %v3069 = vsub.f32 1.0, %v3065
    %v3070 = vmul.f32 %v3069, %v3068
    %v3071 = vmul.f32 %v3065, %v2405
    %v3072 = vadd.f32 %v3070, %v3071
    %3073 = vmatprep.subr.mxu0 0.0
    %3074 = vmatpush1.msra.mxu0 %v275
    %3075 = vmatprep.subr.mxu0 0.0
    %3076 = vmatpush1.msra.mxu0 %v276
    %3077 = vmatprep.subr.mxu0 0.0
    %3078 = vmatpush1.msra.mxu0 %v277
    %3079 = vmatprep.subr.mxu0 0.0
    %3080 = vmatpush1.msra.mxu0 %v278
    %3081 = vmatprep.subr.mxu0 0.0
    %3082 = vmatpush1.msra.mxu0 %v279
    %3083 = vmatprep.subr.mxu0 0.0
    %3084 = vmatpush1.msra.mxu0 %v280
    %3085 = vmatprep.subr.mxu0 0.0
    %3086 = vmatpush1.msra.mxu0 %v281
    %3087 = vmatprep.subr.mxu0 0.0
    %3088 = vmatpush1.msra.mxu0 %v282
    %3089 = vmatprep.subr.mxu0 0.0
    %3090 = vmatpush1.msra.mxu0 %v283
    %3091 = vmatprep.subr.mxu0 0.0
    %3092 = vmatpush1.msra.mxu0 %v284
    %3093 = vmatprep.subr.mxu0 0.0
    %3094 = vmatpush1.msra.mxu0 %v285
    %3095 = vmatprep.subr.mxu0 0.0
    %3096 = vmatpush1.msra.mxu0 %v286
    %3097 = vmatprep.subr.mxu0 0.0
    %3098 = vmatpush1.msra.mxu0 %v287
    %3099 = vmatprep.subr.mxu0 0.0
    %3100 = vmatpush1.msra.mxu0 %v288
    %3101 = vmatprep.subr.mxu0 0.0
    %3102 = vmatpush1.msra.mxu0 %v289
    %3103 = vmatprep.subr.mxu0 0.0
    %3104 = vmatpush1.msra.mxu0 %v290
    %3105 = vmatprep.subr.mxu0 0.0
    %3106 = vmatpush1.msra.mxu0 0.0
    %3107 = vmatprep.subr.mxu0 0.0
    %3108 = vmatpush1.msra.mxu0 0.0
    %3109 = vmatprep.subr.mxu0 0.0
    %3110 = vmatpush1.msra.mxu0 0.0
    %3111 = vmatprep.subr.mxu0 0.0
    %3112 = vmatpush1.msra.mxu0 0.0
    %3113 = vmatprep.subr.mxu0 0.0
    %3114 = vmatpush1.msra.mxu0 0.0
    %3115 = vmatprep.subr.mxu0 0.0
    %3116 = vmatpush1.msra.mxu0 0.0
    %3117 = vmatprep.subr.mxu0 0.0
    %3118 = vmatpush1.msra.mxu0 0.0
    %3119 = vmatprep.subr.mxu0 0.0
    %3120 = vmatpush1.msra.mxu0 0.0
    %3121 = vmatprep.subr.mxu0 0.0
    %3122 = vmatpush1.msra.mxu0 0.0
    %3123 = vmatprep.subr.mxu0 0.0
    %3124 = vmatpush1.msra.mxu0 0.0
    %3125 = vmatprep.subr.mxu0 0.0
    %3126 = vmatpush1.msra.mxu0 0.0
    %3127 = vmatprep.subr.mxu0 0.0
    %3128 = vmatpush1.msra.mxu0 0.0
    %3129 = vmatprep.subr.mxu0 0.0
    %3130 = vmatpush1.msra.mxu0 0.0
    %3131 = vmatprep.subr.mxu0 0.0
    %3132 = vmatpush1.msra.mxu0 0.0
    %3133 = vmatprep.subr.mxu0 0.0
    %3134 = vmatpush1.msra.mxu0 0.0
    %3135 = vmatprep.subr.mxu0 0.0
    %3136 = vmatpush1.msra.mxu0 0.0
    %3137 = vmatprep.mubr.f32.mxu0 0.0
    %3138 = vmatmul.mubr.f32.gmra.mrb[0].mxu0 %v3072
    %v3139 = vpop.f32.mrb[0].mxu0
    %v3140 = vadd.f32 %v2410, %v3139
    %v3141 = vpop.f32.mrb[0].mxu0
    %3142 = vdwg.mxu0
    %3143 = vmax.xlane.f32.xlu0 %v3140
    %v3144 = vpop.xlane.xlu0 %3143
    %vm3145 = vcmp.eq.f32.partialorder %v3140, %v3144
    %v3146 = vsel %vm3145, %v315, 128
    %v3147 = vand.u32 %v3146, 65535
    %v3148 = vshra.s32 %v3146, 16
    %v3149 = vcvt.s32.f32 %v3147
    %v3150 = vcvt.s32.f32 %v3148
    %3151 = vmin.xlane.f32.xlu0 %v3150
    %v3152 = vpop.xlane.xlu0 %3151
    %vm3153 = vcmp.eq.f32.partialorder %v3150, %v3152
    %v3154 = vsel %vm3153, %v3149, inf
    %3155 = vmin.xlane.f32.xlu0 %v3154
    %v3156 = vpop.xlane.xlu0 %3155
    %v3157 = vcvt.f32.s32 %v3156
    %v3158 = vcvt.f32.s32 %v3152
    %v3159 = vshll.u32 %v3158, 16
    %v3160 = vadd.s32 %v3159, %v3157
    %vm3161 = vcmp.eq.s32.totalorder %v315, %v3160
    %v3162 = vsel %vm3161, 1, 0
    %v3163 = vcvt.s32.f32 %v3162
    %v3164 = vsub.f32 %v3140, %v3144
    %v3165 = vmul.f32 %v3164, 1.442695
    %v3166 = vpow.pop %v3165
    %3167 = vadd.xlane.f32.xlu0 %v3166
    %v3168 = vpop.xlane.xlu0 %3167
    %v3169 = vlog2.pop %v3168
    %v3170 = vmul.f32 %v3169, 0.6931472
    %v3171 = vsub.f32 %v3164, %v3170
    %s3172 = scalar_lea.vmem [#allocation14], 16
    %3173 = vst [vmem:[%s3172] sm:$0xff] %v3171
    %3174 = vmatprep.subr.mxu0 0.0
    %3175 = vmatpush1.msra.mxu0 %v202
    %3176 = vmatprep.subr.mxu0 0.0
    %3177 = vmatpush1.msra.mxu0 %v203
    %3178 = vmatprep.subr.mxu0 0.0
    %3179 = vmatpush1.msra.mxu0 %v204
    %3180 = vmatprep.subr.mxu0 0.0
    %3181 = vmatpush1.msra.mxu0 %v205
    %3182 = vmatprep.subr.mxu0 0.0
    %3183 = vmatpush1.msra.mxu0 %v206
    %3184 = vmatprep.subr.mxu0 0.0
    %3185 = vmatpush1.msra.mxu0 %v207
    %3186 = vmatprep.subr.mxu0 0.0
    %3187 = vmatpush1.msra.mxu0 %v208
    %3188 = vmatprep.subr.mxu0 0.0
    %3189 = vmatpush1.msra.mxu0 %v209
    %3190 = vmatprep.subr.mxu0 0.0
    %3191 = vmatpush1.msra.mxu0 %v210
    %3192 = vmatprep.subr.mxu0 0.0
    %3193 = vmatpush1.msra.mxu0 %v211
    %3194 = vmatprep.subr.mxu0 0.0
    %3195 = vmatpush1.msra.mxu0 %v212
    %3196 = vmatprep.subr.mxu0 0.0
    %3197 = vmatpush1.msra.mxu0 %v213
    %3198 = vmatprep.subr.mxu0 0.0
    %3199 = vmatpush1.msra.mxu0 %v214
    %3200 = vmatprep.subr.mxu0 0.0
    %3201 = vmatpush1.msra.mxu0 %v215
    %3202 = vmatprep.subr.mxu0 0.0
    %3203 = vmatpush1.msra.mxu0 %v216
    %3204 = vmatprep.subr.mxu0 0.0
    %3205 = vmatpush1.msra.mxu0 %v217
    %3206 = vmatprep.subr.mxu0 0.0
    %3207 = vmatpush1.msra.mxu0 0.0
    %3208 = vmatprep.subr.mxu0 0.0
    %3209 = vmatpush1.msra.mxu0 0.0
    %3210 = vmatprep.subr.mxu0 0.0
    %3211 = vmatpush1.msra.mxu0 0.0
    %3212 = vmatprep.subr.mxu0 0.0
    %3213 = vmatpush1.msra.mxu0 0.0
    %3214 = vmatprep.subr.mxu0 0.0
    %3215 = vmatpush1.msra.mxu0 0.0
    %3216 = vmatprep.subr.mxu0 0.0
    %3217 = vmatpush1.msra.mxu0 0.0
    %3218 = vmatprep.subr.mxu0 0.0
    %3219 = vmatpush1.msra.mxu0 0.0
    %3220 = vmatprep.subr.mxu0 0.0
    %3221 = vmatpush1.msra.mxu0 0.0
    %3222 = vmatprep.subr.mxu0 0.0
    %3223 = vmatpush1.msra.mxu0 0.0
    %3224 = vmatprep.subr.mxu0 0.0
    %3225 = vmatpush1.msra.mxu0 0.0
    %3226 = vmatprep.subr.mxu0 0.0
    %3227 = vmatpush1.msra.mxu0 0.0
    %3228 = vmatprep.subr.mxu0 0.0
    %3229 = vmatpush1.msra.mxu0 0.0
    %3230 = vmatprep.subr.mxu0 0.0
    %3231 = vmatpush1.msra.mxu0 0.0
    %3232 = vmatprep.subr.mxu0 0.0
    %3233 = vmatpush1.msra.mxu0 0.0
    %3234 = vmatprep.subr.mxu0 0.0
    %3235 = vmatpush1.msra.mxu0 0.0
    %3236 = vmatprep.subr.mxu0 0.0
    %3237 = vmatpush1.msra.mxu0 0.0
    %3238 = vmatprep.mubr.f32.mxu0 0.0
    %3239 = vmatmul.mubr.f32.gmra.mrb[0].mxu0 %v3163
    %v3240 = vpop.f32.mrb[0].mxu0
    %v3241 = vadd.f32 0.0, %v3240
    %v3242 = vpop.f32.mrb[0].mxu0
    %3243 = vdwg.mxu0
    %3244 = vmatprep.subr.mxu0 0.0
    %3245 = vmatpush1.msra.mxu0 %v294
    %3246 = vmatprep.subr.mxu0 0.0
    %3247 = vmatpush1.msra.mxu0 %v295
    %3248 = vmatprep.subr.mxu0 0.0
    %3249 = vmatpush1.msra.mxu0 %v296
    %3250 = vmatprep.subr.mxu0 0.0
    %3251 = vmatpush1.msra.mxu0 %v297
    %3252 = vmatprep.subr.mxu0 0.0
    %3253 = vmatpush1.msra.mxu0 %v298
    %3254 = vmatprep.subr.mxu0 0.0
    %3255 = vmatpush1.msra.mxu0 %v299
    %3256 = vmatprep.subr.mxu0 0.0
    %3257 = vmatpush1.msra.mxu0 %v300
    %3258 = vmatprep.subr.mxu0 0.0
    %3259 = vmatpush1.msra.mxu0 %v301
    %3260 = vmatprep.subr.mxu0 0.0
    %3261 = vmatpush1.msra.mxu0 %v302
    %3262 = vmatprep.subr.mxu0 0.0
    %3263 = vmatpush1.msra.mxu0 %v303
    %3264 = vmatprep.subr.mxu0 0.0
    %3265 = vmatpush1.msra.mxu0 %v304
    %3266 = vmatprep.subr.mxu0 0.0
    %3267 = vmatpush1.msra.mxu0 %v305
    %3268 = vmatprep.subr.mxu0 0.0
    %3269 = vmatpush1.msra.mxu0 %v306
    %3270 = vmatprep.subr.mxu0 0.0
    %3271 = vmatpush1.msra.mxu0 %v307
    %3272 = vmatprep.subr.mxu0 0.0
    %3273 = vmatpush1.msra.mxu0 %v308
    %3274 = vmatprep.subr.mxu0 0.0
    %3275 = vmatpush1.msra.mxu0 %v309
    %3276 = vmatprep.subr.mxu0 0.0
    %3277 = vmatpush1.msra.mxu0 0.0
    %3278 = vmatprep.subr.mxu0 0.0
    %3279 = vmatpush1.msra.mxu0 0.0
    %3280 = vmatprep.subr.mxu0 0.0
    %3281 = vmatpush1.msra.mxu0 0.0
    %3282 = vmatprep.subr.mxu0 0.0
    %3283 = vmatpush1.msra.mxu0 0.0
    %3284 = vmatprep.subr.mxu0 0.0
    %3285 = vmatpush1.msra.mxu0 0.0
    %3286 = vmatprep.subr.mxu0 0.0
    %3287 = vmatpush1.msra.mxu0 0.0
    %3288 = vmatprep.subr.mxu0 0.0
    %3289 = vmatpush1.msra.mxu0 0.0
    %3290 = vmatprep.subr.mxu0 0.0
    %3291 = vmatpush1.msra.mxu0 0.0
    %3292 = vmatprep.subr.mxu0 0.0
    %3293 = vmatpush1.msra.mxu0 0.0
    %3294 = vmatprep.subr.mxu0 0.0
    %3295 = vmatpush1.msra.mxu0 0.0
    %3296 = vmatprep.subr.mxu0 0.0
    %3297 = vmatpush1.msra.mxu0 0.0
    %3298 = vmatprep.subr.mxu0 0.0
    %3299 = vmatpush1.msra.mxu0 0.0
    %3300 = vmatprep.subr.mxu0 0.0
    %3301 = vmatpush1.msra.mxu0 0.0
    %3302 = vmatprep.subr.mxu0 0.0
    %3303 = vmatpush1.msra.mxu0 0.0
    %3304 = vmatprep.subr.mxu0 0.0
    %3305 = vmatpush1.msra.mxu0 0.0
    %3306 = vmatprep.subr.mxu0 0.0
    %3307 = vmatpush1.msra.mxu0 0.0
    %3308 = vmatprep.mubr.f32.mxu0 0.0
    %3309 = vmatmul.mubr.f32.gmra.mrb[0].mxu0 %v3072
    %v3310 = vpop.f32.mrb[0].mxu0
    %v3311 = vadd.f32 0.0, %v3310
    %v3312 = vpop.f32.mrb[0].mxu0
    %3313 = vdwg.mxu0
    %v3315 = vsel %vm2064, %v3241, 0
    %3317 = vmatprep.subr.mxu0 0.0
    %3318 = vmatpush1.msra.mxu0 %v292
    %3319 = vmatprep.subr.mxu0 0.0
    %3320 = vmatpush1.msra.mxu0 %v293
    %3321 = vmatprep.subr.mxu0 0.0
    %3322 = vmatpush1.msra.mxu0 0.0
    %3323 = vmatprep.subr.mxu0 0.0
    %3324 = vmatpush1.msra.mxu0 0.0
    %3325 = vmatprep.subr.mxu0 0.0
    %3326 = vmatpush1.msra.mxu0 0.0
    %3327 = vmatprep.subr.mxu0 0.0
    %3328 = vmatpush1.msra.mxu0 0.0
    %3329 = vmatprep.subr.mxu0 0.0
    %3330 = vmatpush1.msra.mxu0 0.0
    %3331 = vmatprep.subr.mxu0 0.0
    %3332 = vmatpush1.msra.mxu0 0.0
    %3333 = vmatprep.subr.mxu0 0.0
    %3334 = vmatpush1.msra.mxu0 0.0
    %3335 = vmatprep.subr.mxu0 0.0
    %3336 = vmatpush1.msra.mxu0 0.0
    %3337 = vmatprep.subr.mxu0 0.0
    %3338 = vmatpush1.msra.mxu0 0.0
    %3339 = vmatprep.subr.mxu0 0.0
    %3340 = vmatpush1.msra.mxu0 0.0
    %3341 = vmatprep.subr.mxu0 0.0
    %3342 = vmatpush1.msra.mxu0 0.0
    %3343 = vmatprep.subr.mxu0 0.0
    %3344 = vmatpush1.msra.mxu0 0.0
    %3345 = vmatprep.subr.mxu0 0.0
    %3346 = vmatpush1.msra.mxu0 0.0
    %3347 = vmatprep.subr.mxu0 0.0
    %3348 = vmatpush1.msra.mxu0 0.0
    %3349 = vmatprep.subr.mxu0 0.0
    %3350 = vmatpush1.msra.mxu0 0.0
    %3351 = vmatprep.subr.mxu0 0.0
    %3352 = vmatpush1.msra.mxu0 0.0
    %3353 = vmatprep.subr.mxu0 0.0
    %3354 = vmatpush1.msra.mxu0 0.0
    %3355 = vmatprep.subr.mxu0 0.0
    %3356 = vmatpush1.msra.mxu0 0.0
    %3357 = vmatprep.subr.mxu0 0.0
    %3358 = vmatpush1.msra.mxu0 0.0
    %3359 = vmatprep.subr.mxu0 0.0
    %3360 = vmatpush1.msra.mxu0 0.0
    %3361 = vmatprep.subr.mxu0 0.0
    %3362 = vmatpush1.msra.mxu0 0.0
    %3363 = vmatprep.subr.mxu0 0.0
    %3364 = vmatpush1.msra.mxu0 0.0
    %3365 = vmatprep.subr.mxu0 0.0
    %3366 = vmatpush1.msra.mxu0 0.0
    %3367 = vmatprep.subr.mxu0 0.0
    %3368 = vmatpush1.msra.mxu0 0.0
    %3369 = vmatprep.subr.mxu0 0.0
    %3370 = vmatpush1.msra.mxu0 0.0
    %3371 = vmatprep.subr.mxu0 0.0
    %3372 = vmatpush1.msra.mxu0 0.0
    %3373 = vmatprep.subr.mxu0 0.0
    %3374 = vmatpush1.msra.mxu0 0.0
    %3375 = vmatprep.subr.mxu0 0.0
    %3376 = vmatpush1.msra.mxu0 0.0
    %3377 = vmatprep.subr.mxu0 0.0
    %3378 = vmatpush1.msra.mxu0 0.0
    %3379 = vmatprep.subr.mxu0 0.0
    %3380 = vmatpush1.msra.mxu0 0.0
    %3381 = vmatprep.mubr.f32.mxu0 0.0
    %3382 = vmatmul.mubr.f32.gmra.mrb[0].mxu0 %v3315
    %v3383 = vpop.f32.mrb[0].mxu0
    %v3384 = vadd.f32 %v3311, %v3383
    %v3385 = vpop.f32.mrb[0].mxu0
    %3386 = vdwg.mxu0
    %v3387 = vadd.f32 %v3384, %v2730
    %v3388 = vmax.f32 %v3387, 0.0
    %v3389 = vmul.f32 %v3388, %v2738
    %3390 = vadd.xlane.f32.xlu0 %v3389
    %v3391 = vpop.xlane.xlu0 %3390
    %v3392 = vadd.f32 %v3391, %v2747
    %v3393 = vxor.u32 %v3392, 2147483648
    %v3394 = vmul.f32 %v3393, 1.442695
    %v3395 = vpow.pop %v3394
    %v3396 = vadd.f32 %v3395, 1.0
    %v3397 = vrcp.pop %v3396
    %v3398 = vmul.f32 1.0, %v3397
    %vm3399 = vcmp.eq.s32.totalorder %v315, 2
    %3401 = vset.pattern.permute.xlu0 0
    %3402 = vperm.xlu0 %3401, %v3398
    %v3403 = vpop.permute.xlu0 %3402
    %v3405 = vsel %vm3399, %v3403, 0.0
    %v3406 = vadd.f32 %v2763, %v3405
    %v3407 = vmul.f32 %v3403, %v2049
    %v3408 = vmul.f32 %v3403, %v2053
    %v3409 = vmul.f32 %v3403, %v2057
    %3410 = vmatprep.subr.mxu0 %v219
    %3411 = vmatpush1.msra.mxu0 %v218
    %3412 = vmatprep.subr.mxu0 %v222
    %3413 = vmatpush1.msra.mxu0 %v221
    %3414 = vmatprep.subr.mxu0 0.0
    %3415 = vmatpush1.msra.mxu0 0.0
    %3416 = vmatprep.subr.mxu0 0.0
    %3417 = vmatpush1.msra.mxu0 0.0
    %3418 = vmatprep.subr.mxu0 0.0
    %3419 = vmatpush1.msra.mxu0 0.0
    %3420 = vmatprep.subr.mxu0 0.0
    %3421 = vmatpush1.msra.mxu0 0.0
    %3422 = vmatprep.subr.mxu0 0.0
    %3423 = vmatpush1.msra.mxu0 0.0
    %3424 = vmatprep.subr.mxu0 0.0
    %3425 = vmatpush1.msra.mxu0 0.0
    %3426 = vmatprep.subr.mxu0 0.0
    %3427 = vmatpush1.msra.mxu0 0.0
    %3428 = vmatprep.subr.mxu0 0.0
    %3429 = vmatpush1.msra.mxu0 0.0
    %3430 = vmatprep.subr.mxu0 0.0
    %3431 = vmatpush1.msra.mxu0 0.0
    %3432 = vmatprep.subr.mxu0 0.0
    %3433 = vmatpush1.msra.mxu0 0.0
    %3434 = vmatprep.subr.mxu0 0.0
    %3435 = vmatpush1.msra.mxu0 0.0
    %3436 = vmatprep.subr.mxu0 0.0
    %3437 = vmatpush1.msra.mxu0 0.0
    %3438 = vmatprep.subr.mxu0 0.0
    %3439 = vmatpush1.msra.mxu0 0.0
    %3440 = vmatprep.subr.mxu0 0.0
    %3441 = vmatpush1.msra.mxu0 0.0
    %3442 = vmatprep.subr.mxu0 0.0
    %3443 = vmatpush1.msra.mxu0 0.0
    %3444 = vmatprep.subr.mxu0 0.0
    %3445 = vmatpush1.msra.mxu0 0.0
    %3446 = vmatprep.subr.mxu0 0.0
    %3447 = vmatpush1.msra.mxu0 0.0
    %3448 = vmatprep.subr.mxu0 0.0
    %3449 = vmatpush1.msra.mxu0 0.0
    %3450 = vmatprep.subr.mxu0 0.0
    %3451 = vmatpush1.msra.mxu0 0.0
    %3452 = vmatprep.subr.mxu0 0.0
    %3453 = vmatpush1.msra.mxu0 0.0
    %3454 = vmatprep.subr.mxu0 0.0
    %3455 = vmatpush1.msra.mxu0 0.0
    %3456 = vmatprep.subr.mxu0 0.0
    %3457 = vmatpush1.msra.mxu0 0.0
    %3458 = vmatprep.subr.mxu0 0.0
    %3459 = vmatpush1.msra.mxu0 0.0
    %3460 = vmatprep.subr.mxu0 0.0
    %3461 = vmatpush1.msra.mxu0 0.0
    %3462 = vmatprep.subr.mxu0 0.0
    %3463 = vmatpush1.msra.mxu0 0.0
    %3464 = vmatprep.subr.mxu0 0.0
    %3465 = vmatpush1.msra.mxu0 0.0
    %3466 = vmatprep.subr.mxu0 0.0
    %3467 = vmatpush1.msra.mxu0 0.0
    %3468 = vmatprep.subr.mxu0 0.0
    %3469 = vmatpush1.msra.mxu0 0.0
    %3470 = vmatprep.subr.mxu0 0.0
    %3471 = vmatpush1.msra.mxu0 0.0
    %3472 = vmatprep.subr.mxu0 0.0
    %3473 = vmatpush1.msra.mxu0 0.0
    %3474 = vmatprep.mubr.f32.mxu0 0.0
    %3475 = vmatmul.mubr.f32.gmra.mrb[0].mxu0 %v3315
    %v3476 = vpop.f32.mrb[0].mxu0
    %v3477 = vadd.f32 %v3407, %v3476
    %v3478 = vpop.f32.mrb[0].mxu0
    %v3479 = vadd.f32 %v3408, %v3478
    %3480 = vdwg.mxu0
    %3481 = vmatprep.subr.mxu0 0.0
    %3482 = vmatpush1.msra.mxu0 %v220
    %3483 = vmatprep.subr.mxu0 0.0
    %3484 = vmatpush1.msra.mxu0 %v223
    %3485 = vmatprep.subr.mxu0 0.0
    %3486 = vmatpush1.msra.mxu0 0.0
    %3487 = vmatprep.subr.mxu0 0.0
    %3488 = vmatpush1.msra.mxu0 0.0
    %3489 = vmatprep.subr.mxu0 0.0
    %3490 = vmatpush1.msra.mxu0 0.0
    %3491 = vmatprep.subr.mxu0 0.0
    %3492 = vmatpush1.msra.mxu0 0.0
    %3493 = vmatprep.subr.mxu0 0.0
    %3494 = vmatpush1.msra.mxu0 0.0
    %3495 = vmatprep.subr.mxu0 0.0
    %3496 = vmatpush1.msra.mxu0 0.0
    %3497 = vmatprep.subr.mxu0 0.0
    %3498 = vmatpush1.msra.mxu0 0.0
    %3499 = vmatprep.subr.mxu0 0.0
    %3500 = vmatpush1.msra.mxu0 0.0
    %3501 = vmatprep.subr.mxu0 0.0
    %3502 = vmatpush1.msra.mxu0 0.0
    %3503 = vmatprep.subr.mxu0 0.0
    %3504 = vmatpush1.msra.mxu0 0.0
    %3505 = vmatprep.subr.mxu0 0.0
    %3506 = vmatpush1.msra.mxu0 0.0
    %3507 = vmatprep.subr.mxu0 0.0
    %3508 = vmatpush1.msra.mxu0 0.0
    %3509 = vmatprep.subr.mxu0 0.0
    %3510 = vmatpush1.msra.mxu0 0.0
    %3511 = vmatprep.subr.mxu0 0.0
    %3512 = vmatpush1.msra.mxu0 0.0
    %3513 = vmatprep.subr.mxu0 0.0
    %3514 = vmatpush1.msra.mxu0 0.0
    %3515 = vmatprep.subr.mxu0 0.0
    %3516 = vmatpush1.msra.mxu0 0.0
    %3517 = vmatprep.subr.mxu0 0.0
    %3518 = vmatpush1.msra.mxu0 0.0
    %3519 = vmatprep.subr.mxu0 0.0
    %3520 = vmatpush1.msra.mxu0 0.0
    %3521 = vmatprep.subr.mxu0 0.0
    %3522 = vmatpush1.msra.mxu0 0.0
    %3523 = vmatprep.subr.mxu0 0.0
    %3524 = vmatpush1.msra.mxu0 0.0
    %3525 = vmatprep.subr.mxu0 0.0
    %3526 = vmatpush1.msra.mxu0 0.0
    %3527 = vmatprep.subr.mxu0 0.0
    %3528 = vmatpush1.msra.mxu0 0.0
    %3529 = vmatprep.subr.mxu0 0.0
    %3530 = vmatpush1.msra.mxu0 0.0
    %3531 = vmatprep.subr.mxu0 0.0
    %3532 = vmatpush1.msra.mxu0 0.0
    %3533 = vmatprep.subr.mxu0 0.0
    %3534 = vmatpush1.msra.mxu0 0.0
    %3535 = vmatprep.subr.mxu0 0.0
    %3536 = vmatpush1.msra.mxu0 0.0
    %3537 = vmatprep.subr.mxu0 0.0
    %3538 = vmatpush1.msra.mxu0 0.0
    %3539 = vmatprep.subr.mxu0 0.0
    %3540 = vmatpush1.msra.mxu0 0.0
    %3541 = vmatprep.subr.mxu0 0.0
    %3542 = vmatpush1.msra.mxu0 0.0
    %3543 = vmatprep.subr.mxu0 0.0
    %3544 = vmatpush1.msra.mxu0 0.0
    %3545 = vmatprep.mubr.f32.mxu0 0.0
    %3546 = vmatmul.mubr.f32.gmra.mrb[0].mxu0 %v3315
    %v3547 = vpop.f32.mrb[0].mxu0
    %v3548 = vadd.f32 %v3409, %v3547
    %v3549 = vpop.f32.mrb[0].mxu0
    %3550 = vdwg.mxu0
    %v3551 = vadd.f32 %v3477, %v2213
    %v3552 = vadd.f32 %v3479, %v2217
    %v3553 = vadd.f32 %v3548, %v2221
    %3554 = vmatprep.subr.mxu0 %v226
    %3555 = vmatpush1.msra.mxu0 %v225
    %3556 = vmatprep.subr.mxu0 %v229
    %3557 = vmatpush1.msra.mxu0 %v228
    %3558 = vmatprep.subr.mxu0 %v232
    %3559 = vmatpush1.msra.mxu0 %v231
    %3560 = vmatprep.subr.mxu0 %v235
    %3561 = vmatpush1.msra.mxu0 %v234
    %3562 = vmatprep.subr.mxu0 %v238
    %3563 = vmatpush1.msra.mxu0 %v237
    %3564 = vmatprep.subr.mxu0 %v241
    %3565 = vmatpush1.msra.mxu0 %v240
    %3566 = vmatprep.subr.mxu0 %v244
    %3567 = vmatpush1.msra.mxu0 %v243
    %3568 = vmatprep.subr.mxu0 %v247
    %3569 = vmatpush1.msra.mxu0 %v246
    %3570 = vmatprep.subr.mxu0 %v250
    %3571 = vmatpush1.msra.mxu0 %v249
    %3572 = vmatprep.subr.mxu0 %v253
    %3573 = vmatpush1.msra.mxu0 %v252
    %3574 = vmatprep.subr.mxu0 %v256
    %3575 = vmatpush1.msra.mxu0 %v255
    %3576 = vmatprep.subr.mxu0 %v259
    %3577 = vmatpush1.msra.mxu0 %v258
    %3578 = vmatprep.subr.mxu0 %v262
    %3579 = vmatpush1.msra.mxu0 %v261
    %3580 = vmatprep.subr.mxu0 %v265
    %3581 = vmatpush1.msra.mxu0 %v264
    %3582 = vmatprep.subr.mxu0 %v268
    %3583 = vmatpush1.msra.mxu0 %v267
    %3584 = vmatprep.subr.mxu0 %v271
    %3585 = vmatpush1.msra.mxu0 %v270
    %3586 = vmatprep.subr.mxu0 0.0
    %3587 = vmatpush1.msra.mxu0 0.0
    %3588 = vmatprep.subr.mxu0 0.0
    %3589 = vmatpush1.msra.mxu0 0.0
    %3590 = vmatprep.subr.mxu0 0.0
    %3591 = vmatpush1.msra.mxu0 0.0
    %3592 = vmatprep.subr.mxu0 0.0
    %3593 = vmatpush1.msra.mxu0 0.0
    %3594 = vmatprep.subr.mxu0 0.0
    %3595 = vmatpush1.msra.mxu0 0.0
    %3596 = vmatprep.subr.mxu0 0.0
    %3597 = vmatpush1.msra.mxu0 0.0
    %3598 = vmatprep.subr.mxu0 0.0
    %3599 = vmatpush1.msra.mxu0 0.0
    %3600 = vmatprep.subr.mxu0 0.0
    %3601 = vmatpush1.msra.mxu0 0.0
    %3602 = vmatprep.subr.mxu0 0.0
    %3603 = vmatpush1.msra.mxu0 0.0
    %3604 = vmatprep.subr.mxu0 0.0
    %3605 = vmatpush1.msra.mxu0 0.0
    %3606 = vmatprep.subr.mxu0 0.0
    %3607 = vmatpush1.msra.mxu0 0.0
    %3608 = vmatprep.subr.mxu0 0.0
    %3609 = vmatpush1.msra.mxu0 0.0
    %3610 = vmatprep.subr.mxu0 0.0
    %3611 = vmatpush1.msra.mxu0 0.0
    %3612 = vmatprep.subr.mxu0 0.0
    %3613 = vmatpush1.msra.mxu0 0.0
    %3614 = vmatprep.subr.mxu0 0.0
    %3615 = vmatpush1.msra.mxu0 0.0
    %3616 = vmatprep.subr.mxu0 0.0
    %3617 = vmatpush1.msra.mxu0 0.0
    %3618 = vmatprep.mubr.f32.mxu0 0.0
    %3619 = vmatmul.mubr.f32.gmra.mrb[0].mxu0 %v3072
    %v3620 = vpop.f32.mrb[0].mxu0
    %v3621 = vadd.f32 %v2232, %v3620
    %v3622 = vpop.f32.mrb[0].mxu0
    %v3623 = vadd.f32 %v2236, %v3622
    %3624 = vdwg.mxu0
    %3625 = vmatprep.subr.mxu0 0.0
    %3626 = vmatpush1.msra.mxu0 %v227
    %3627 = vmatprep.subr.mxu0 0.0
    %3628 = vmatpush1.msra.mxu0 %v230
    %3629 = vmatprep.subr.mxu0 0.0
    %3630 = vmatpush1.msra.mxu0 %v233
    %3631 = vmatprep.subr.mxu0 0.0
    %3632 = vmatpush1.msra.mxu0 %v236
    %3633 = vmatprep.subr.mxu0 0.0
    %3634 = vmatpush1.msra.mxu0 %v239
    %3635 = vmatprep.subr.mxu0 0.0
    %3636 = vmatpush1.msra.mxu0 %v242
    %3637 = vmatprep.subr.mxu0 0.0
    %3638 = vmatpush1.msra.mxu0 %v245
    %3639 = vmatprep.subr.mxu0 0.0
    %3640 = vmatpush1.msra.mxu0 %v248
    %3641 = vmatprep.subr.mxu0 0.0
    %3642 = vmatpush1.msra.mxu0 %v251
    %3643 = vmatprep.subr.mxu0 0.0
    %3644 = vmatpush1.msra.mxu0 %v254
    %3645 = vmatprep.subr.mxu0 0.0
    %3646 = vmatpush1.msra.mxu0 %v257
    %3647 = vmatprep.subr.mxu0 0.0
    %3648 = vmatpush1.msra.mxu0 %v260
    %3649 = vmatprep.subr.mxu0 0.0
    %3650 = vmatpush1.msra.mxu0 %v263
    %3651 = vmatprep.subr.mxu0 0.0
    %3652 = vmatpush1.msra.mxu0 %v266
    %3653 = vmatprep.subr.mxu0 0.0
    %3654 = vmatpush1.msra.mxu0 %v269
    %3655 = vmatprep.subr.mxu0 0.0
    %3656 = vmatpush1.msra.mxu0 %v272
    %3657 = vmatprep.subr.mxu0 0.0
    %3658 = vmatpush1.msra.mxu0 0.0
    %3659 = vmatprep.subr.mxu0 0.0
    %3660 = vmatpush1.msra.mxu0 0.0
    %3661 = vmatprep.subr.mxu0 0.0
    %3662 = vmatpush1.msra.mxu0 0.0
    %3663 = vmatprep.subr.mxu0 0.0
    %3664 = vmatpush1.msra.mxu0 0.0
    %3665 = vmatprep.subr.mxu0 0.0
    %3666 = vmatpush1.msra.mxu0 0.0
    %3667 = vmatprep.subr.mxu0 0.0
    %3668 = vmatpush1.msra.mxu0 0.0
    %3669 = vmatprep.subr.mxu0 0.0
    %3670 = vmatpush1.msra.mxu0 0.0
    %3671 = vmatprep.subr.mxu0 0.0
    %3672 = vmatpush1.msra.mxu0 0.0
    %3673 = vmatprep.subr.mxu0 0.0
    %3674 = vmatpush1.msra.mxu0 0.0
    %3675 = vmatprep.subr.mxu0 0.0
    %3676 = vmatpush1.msra.mxu0 0.0
    %3677 = vmatprep.subr.mxu0 0.0
    %3678 = vmatpush1.msra.mxu0 0.0
    %3679 = vmatprep.subr.mxu0 0.0
    %3680 = vmatpush1.msra.mxu0 0.0
    %3681 = vmatprep.subr.mxu0 0.0
    %3682 = vmatpush1.msra.mxu0 0.0
    %3683 = vmatprep.subr.mxu0 0.0
    %3684 = vmatpush1.msra.mxu0 0.0
    %3685 = vmatprep.subr.mxu0 0.0
    %3686 = vmatpush1.msra.mxu0 0.0
    %3687 = vmatprep.subr.mxu0 0.0
    %3688 = vmatpush1.msra.mxu0 0.0
    %3689 = vmatprep.mubr.f32.mxu0 0.0
    %3690 = vmatmul.mubr.f32.gmra.mrb[0].mxu0 %v3072
    %v3691 = vpop.f32.mrb[0].mxu0
    %v3692 = vadd.f32 %v2240, %v3691
    %v3693 = vpop.f32.mrb[0].mxu0
    %3694 = vdwg.mxu0
    %v3695 = vadd.f32 %v3551, %v3621
    %v3696 = vxor.u32 %v3695, 2147483648
    %v3697 = vmul.f32 %v3696, 1.442695
    %v3698 = vpow.pop %v3697
    %v3699 = vadd.f32 %v3698, 1.0
    %v3700 = vrcp.pop %v3699
    %v3701 = vmul.f32 1.0, %v3700
    %v3702 = vadd.f32 %v3552, %v3623
    %v3703 = vxor.u32 %v3702, 2147483648
    %v3704 = vmul.f32 %v3703, 1.442695
    %v3705 = vpow.pop %v3704
    %v3706 = vadd.f32 %v3705, 1.0
    %v3707 = vrcp.pop %v3706
    %v3708 = vmul.f32 1.0, %v3707
    %v3709 = vmul.f32 %v3701, %v3692
    %v3710 = vadd.f32 %v3553, %v3709
    %v3711 = vtanh.pop %v3710
    %v3712 = vsub.f32 1.0, %v3708
    %v3713 = vmul.f32 %v3712, %v3711
    %v3714 = vmul.f32 %v3708, %v3072
    %v3715 = vadd.f32 %v3713, %v3714
    %3716 = vmatprep.subr.mxu0 0.0
    %3717 = vmatpush1.msra.mxu0 %v275
    %3718 = vmatprep.subr.mxu0 0.0
    %3719 = vmatpush1.msra.mxu0 %v276
    %3720 = vmatprep.subr.mxu0 0.0
    %3721 = vmatpush1.msra.mxu0 %v277
    %3722 = vmatprep.subr.mxu0 0.0
    %3723 = vmatpush1.msra.mxu0 %v278
    %3724 = vmatprep.subr.mxu0 0.0
    %3725 = vmatpush1.msra.mxu0 %v279
    %3726 = vmatprep.subr.mxu0 0.0
    %3727 = vmatpush1.msra.mxu0 %v280
    %3728 = vmatprep.subr.mxu0 0.0
    %3729 = vmatpush1.msra.mxu0 %v281
    %3730 = vmatprep.subr.mxu0 0.0
    %3731 = vmatpush1.msra.mxu0 %v282
    %3732 = vmatprep.subr.mxu0 0.0
    %3733 = vmatpush1.msra.mxu0 %v283
    %3734 = vmatprep.subr.mxu0 0.0
    %3735 = vmatpush1.msra.mxu0 %v284
    %3736 = vmatprep.subr.mxu0 0.0
    %3737 = vmatpush1.msra.mxu0 %v285
    %3738 = vmatprep.subr.mxu0 0.0
    %3739 = vmatpush1.msra.mxu0 %v286
    %3740 = vmatprep.subr.mxu0 0.0
    %3741 = vmatpush1.msra.mxu0 %v287
    %3742 = vmatprep.subr.mxu0 0.0
    %3743 = vmatpush1.msra.mxu0 %v288
    %3744 = vmatprep.subr.mxu0 0.0
    %3745 = vmatpush1.msra.mxu0 %v289
    %3746 = vmatprep.subr.mxu0 0.0
    %3747 = vmatpush1.msra.mxu0 %v290
    %3748 = vmatprep.subr.mxu0 0.0
    %3749 = vmatpush1.msra.mxu0 0.0
    %3750 = vmatprep.subr.mxu0 0.0
    %3751 = vmatpush1.msra.mxu0 0.0
    %3752 = vmatprep.subr.mxu0 0.0
    %3753 = vmatpush1.msra.mxu0 0.0
    %3754 = vmatprep.subr.mxu0 0.0
    %3755 = vmatpush1.msra.mxu0 0.0
    %3756 = vmatprep.subr.mxu0 0.0
    %3757 = vmatpush1.msra.mxu0 0.0
    %3758 = vmatprep.subr.mxu0 0.0
    %3759 = vmatpush1.msra.mxu0 0.0
    %3760 = vmatprep.subr.mxu0 0.0
    %3761 = vmatpush1.msra.mxu0 0.0
    %3762 = vmatprep.subr.mxu0 0.0
    %3763 = vmatpush1.msra.mxu0 0.0
    %3764 = vmatprep.subr.mxu0 0.0
    %3765 = vmatpush1.msra.mxu0 0.0
    %3766 = vmatprep.subr.mxu0 0.0
    %3767 = vmatpush1.msra.mxu0 0.0
    %3768 = vmatprep.subr.mxu0 0.0
    %3769 = vmatpush1.msra.mxu0 0.0
    %3770 = vmatprep.subr.mxu0 0.0
    %3771 = vmatpush1.msra.mxu0 0.0
    %3772 = vmatprep.subr.mxu0 0.0
    %3773 = vmatpush1.msra.mxu0 0.0
    %3774 = vmatprep.subr.mxu0 0.0
    %3775 = vmatpush1.msra.mxu0 0.0
    %3776 = vmatprep.subr.mxu0 0.0
    %3777 = vmatpush1.msra.mxu0 0.0
    %3778 = vmatprep.subr.mxu0 0.0
    %3779 = vmatpush1.msra.mxu0 0.0
    %3780 = vmatprep.mubr.f32.mxu0 0.0
    %3781 = vmatmul.mubr.f32.gmra.mrb[0].mxu0 %v3715
    %v3782 = vpop.f32.mrb[0].mxu0
    %v3783 = vadd.f32 %v2410, %v3782
    %v3784 = vpop.f32.mrb[0].mxu0
    %3785 = vdwg.mxu0
    %3786 = vmax.xlane.f32.xlu0 %v3783
    %v3787 = vpop.xlane.xlu0 %3786
    %vm3788 = vcmp.eq.f32.partialorder %v3783, %v3787
    %v3789 = vsel %vm3788, %v315, 128
    %v3790 = vand.u32 %v3789, 65535
    %v3791 = vshra.s32 %v3789, 16
    %v3792 = vcvt.s32.f32 %v3790
    %v3793 = vcvt.s32.f32 %v3791
    %3794 = vmin.xlane.f32.xlu0 %v3793
    %v3795 = vpop.xlane.xlu0 %3794
    %vm3796 = vcmp.eq.f32.partialorder %v3793, %v3795
    %v3797 = vsel %vm3796, %v3792, inf
    %3798 = vmin.xlane.f32.xlu0 %v3797
    %v3799 = vpop.xlane.xlu0 %3798
    %v3800 = vcvt.f32.s32 %v3799
    %v3801 = vcvt.f32.s32 %v3795
    %v3802 = vshll.u32 %v3801, 16
    %v3803 = vadd.s32 %v3802, %v3800
    %vm3804 = vcmp.eq.s32.totalorder %v315, %v3803
    %v3805 = vsel %vm3804, 1, 0
    %v3806 = vcvt.s32.f32 %v3805
    %v3807 = vsub.f32 %v3783, %v3787
    %v3808 = vmul.f32 %v3807, 1.442695
    %v3809 = vpow.pop %v3808
    %3810 = vadd.xlane.f32.xlu0 %v3809
    %v3811 = vpop.xlane.xlu0 %3810
    %v3812 = vlog2.pop %v3811
    %v3813 = vmul.f32 %v3812, 0.6931472
    %v3814 = vsub.f32 %v3807, %v3813
    %s3815 = scalar_lea.vmem [#allocation14], 24
    %3816 = vst [vmem:[%s3815] sm:$0xff] %v3814
    %3817 = vmatprep.subr.mxu0 0.0
    %3818 = vmatpush1.msra.mxu0 %v202
    %3819 = vmatprep.subr.mxu0 0.0
    %3820 = vmatpush1.msra.mxu0 %v203
    %3821 = vmatprep.subr.mxu0 0.0
    %3822 = vmatpush1.msra.mxu0 %v204
    %3823 = vmatprep.subr.mxu0 0.0
    %3824 = vmatpush1.msra.mxu0 %v205
    %3825 = vmatprep.subr.mxu0 0.0
    %3826 = vmatpush1.msra.mxu0 %v206
    %3827 = vmatprep.subr.mxu0 0.0
    %3828 = vmatpush1.msra.mxu0 %v207
    %3829 = vmatprep.subr.mxu0 0.0
    %3830 = vmatpush1.msra.mxu0 %v208
    %3831 = vmatprep.subr.mxu0 0.0
    %3832 = vmatpush1.msra.mxu0 %v209
    %3833 = vmatprep.subr.mxu0 0.0
    %3834 = vmatpush1.msra.mxu0 %v210
    %3835 = vmatprep.subr.mxu0 0.0
    %3836 = vmatpush1.msra.mxu0 %v211
    %3837 = vmatprep.subr.mxu0 0.0
    %3838 = vmatpush1.msra.mxu0 %v212
    %3839 = vmatprep.subr.mxu0 0.0
    %3840 = vmatpush1.msra.mxu0 %v213
    %3841 = vmatprep.subr.mxu0 0.0
    %3842 = vmatpush1.msra.mxu0 %v214
    %3843 = vmatprep.subr.mxu0 0.0
    %3844 = vmatpush1.msra.mxu0 %v215
    %3845 = vmatprep.subr.mxu0 0.0
    %3846 = vmatpush1.msra.mxu0 %v216
    %3847 = vmatprep.subr.mxu0 0.0
    %3848 = vmatpush1.msra.mxu0 %v217
    %3849 = vmatprep.subr.mxu0 0.0
    %3850 = vmatpush1.msra.mxu0 0.0
    %3851 = vmatprep.subr.mxu0 0.0
    %3852 = vmatpush1.msra.mxu0 0.0
    %3853 = vmatprep.subr.mxu0 0.0
    %3854 = vmatpush1.msra.mxu0 0.0
    %3855 = vmatprep.subr.mxu0 0.0
    %3856 = vmatpush1.msra.mxu0 0.0
    %3857 = vmatprep.subr.mxu0 0.0
    %3858 = vmatpush1.msra.mxu0 0.0
    %3859 = vmatprep.subr.mxu0 0.0
    %3860 = vmatpush1.msra.mxu0 0.0
    %3861 = vmatprep.subr.mxu0 0.0
    %3862 = vmatpush1.msra.mxu0 0.0
    %3863 = vmatprep.subr.mxu0 0.0
    %3864 = vmatpush1.msra.mxu0 0.0
    %3865 = vmatprep.subr.mxu0 0.0
    %3866 = vmatpush1.msra.mxu0 0.0
    %3867 = vmatprep.subr.mxu0 0.0
    %3868 = vmatpush1.msra.mxu0 0.0
    %3869 = vmatprep.subr.mxu0 0.0
    %3870 = vmatpush1.msra.mxu0 0.0
    %3871 = vmatprep.subr.mxu0 0.0
    %3872 = vmatpush1.msra.mxu0 0.0
    %3873 = vmatprep.subr.mxu0 0.0
    %3874 = vmatpush1.msra.mxu0 0.0
    %3875 = vmatprep.subr.mxu0 0.0
    %3876 = vmatpush1.msra.mxu0 0.0
    %3877 = vmatprep.subr.mxu0 0.0
    %3878 = vmatpush1.msra.mxu0 0.0
    %3879 = vmatprep.subr.mxu0 0.0
    %3880 = vmatpush1.msra.mxu0 0.0
    %3881 = vmatprep.mubr.f32.mxu0 0.0
    %3882 = vmatmul.mubr.f32.gmra.mrb[0].mxu0 %v3806
    %v3883 = vpop.f32.mrb[0].mxu0
    %v3884 = vadd.f32 0.0, %v3883
    %v3885 = vpop.f32.mrb[0].mxu0
    %3886 = vdwg.mxu0
    %3887 = vmatprep.subr.mxu0 0.0
    %3888 = vmatpush1.msra.mxu0 %v294
    %3889 = vmatprep.subr.mxu0 0.0
    %3890 = vmatpush1.msra.mxu0 %v295
    %3891 = vmatprep.subr.mxu0 0.0
    %3892 = vmatpush1.msra.mxu0 %v296
    %3893 = vmatprep.subr.mxu0 0.0
    %3894 = vmatpush1.msra.mxu0 %v297
    %3895 = vmatprep.subr.mxu0 0.0
    %3896 = vmatpush1.msra.mxu0 %v298
    %3897 = vmatprep.subr.mxu0 0.0
    %3898 = vmatpush1.msra.mxu0 %v299
    %3899 = vmatprep.subr.mxu0 0.0
    %3900 = vmatpush1.msra.mxu0 %v300
    %3901 = vmatprep.subr.mxu0 0.0
    %3902 = vmatpush1.msra.mxu0 %v301
    %3903 = vmatprep.subr.mxu0 0.0
    %3904 = vmatpush1.msra.mxu0 %v302
    %3905 = vmatprep.subr.mxu0 0.0
    %3906 = vmatpush1.msra.mxu0 %v303
    %3907 = vmatprep.subr.mxu0 0.0
    %3908 = vmatpush1.msra.mxu0 %v304
    %3909 = vmatprep.subr.mxu0 0.0
    %3910 = vmatpush1.msra.mxu0 %v305
    %3911 = vmatprep.subr.mxu0 0.0
    %3912 = vmatpush1.msra.mxu0 %v306
    %3913 = vmatprep.subr.mxu0 0.0
    %3914 = vmatpush1.msra.mxu0 %v307
    %3915 = vmatprep.subr.mxu0 0.0
    %3916 = vmatpush1.msra.mxu0 %v308
    %3917 = vmatprep.subr.mxu0 0.0
    %3918 = vmatpush1.msra.mxu0 %v309
    %3919 = vmatprep.subr.mxu0 0.0
    %3920 = vmatpush1.msra.mxu0 0.0
    %3921 = vmatprep.subr.mxu0 0.0
    %3922 = vmatpush1.msra.mxu0 0.0
    %3923 = vmatprep.subr.mxu0 0.0
    %3924 = vmatpush1.msra.mxu0 0.0
    %3925 = vmatprep.subr.mxu0 0.0
    %3926 = vmatpush1.msra.mxu0 0.0
    %3927 = vmatprep.subr.mxu0 0.0
    %3928 = vmatpush1.msra.mxu0 0.0
    %3929 = vmatprep.subr.mxu0 0.0
    %3930 = vmatpush1.msra.mxu0 0.0
    %3931 = vmatprep.subr.mxu0 0.0
    %3932 = vmatpush1.msra.mxu0 0.0
    %3933 = vmatprep.subr.mxu0 0.0
    %3934 = vmatpush1.msra.mxu0 0.0
    %3935 = vmatprep.subr.mxu0 0.0
    %3936 = vmatpush1.msra.mxu0 0.0
    %3937 = vmatprep.subr.mxu0 0.0
    %3938 = vmatpush1.msra.mxu0 0.0
    %3939 = vmatprep.subr.mxu0 0.0
    %3940 = vmatpush1.msra.mxu0 0.0
    %3941 = vmatprep.subr.mxu0 0.0
    %3942 = vmatpush1.msra.mxu0 0.0
    %3943 = vmatprep.subr.mxu0 0.0
    %3944 = vmatpush1.msra.mxu0 0.0
    %3945 = vmatprep.subr.mxu0 0.0
    %3946 = vmatpush1.msra.mxu0 0.0
    %3947 = vmatprep.subr.mxu0 0.0
    %3948 = vmatpush1.msra.mxu0 0.0
    %3949 = vmatprep.subr.mxu0 0.0
    %3950 = vmatpush1.msra.mxu0 0.0
    %3951 = vmatprep.mubr.f32.mxu0 0.0
    %3952 = vmatmul.mubr.f32.gmra.mrb[0].mxu0 %v3715
    %v3953 = vpop.f32.mrb[0].mxu0
    %v3954 = vadd.f32 0.0, %v3953
    %v3955 = vpop.f32.mrb[0].mxu0
    %3956 = vdwg.mxu0
    %v3958 = vsel %vm2064, %v3884, 0
    %3960 = vmatprep.subr.mxu0 0.0
    %3961 = vmatpush1.msra.mxu0 %v292
    %3962 = vmatprep.subr.mxu0 0.0
    %3963 = vmatpush1.msra.mxu0 %v293
    %3964 = vmatprep.subr.mxu0 0.0
    %3965 = vmatpush1.msra.mxu0 0.0
    %3966 = vmatprep.subr.mxu0 0.0
    %3967 = vmatpush1.msra.mxu0 0.0
    %3968 = vmatprep.subr.mxu0 0.0
    %3969 = vmatpush1.msra.mxu0 0.0
    %3970 = vmatprep.subr.mxu0 0.0
    %3971 = vmatpush1.msra.mxu0 0.0
    %3972 = vmatprep.subr.mxu0 0.0
    %3973 = vmatpush1.msra.mxu0 0.0
    %3974 = vmatprep.subr.mxu0 0.0
    %3975 = vmatpush1.msra.mxu0 0.0
    %3976 = vmatprep.subr.mxu0 0.0
    %3977 = vmatpush1.msra.mxu0 0.0
    %3978 = vmatprep.subr.mxu0 0.0
    %3979 = vmatpush1.msra.mxu0 0.0
    %3980 = vmatprep.subr.mxu0 0.0
    %3981 = vmatpush1.msra.mxu0 0.0
    %3982 = vmatprep.subr.mxu0 0.0
    %3983 = vmatpush1.msra.mxu0 0.0
    %3984 = vmatprep.subr.mxu0 0.0
    %3985 = vmatpush1.msra.mxu0 0.0
    %3986 = vmatprep.subr.mxu0 0.0
    %3987 = vmatpush1.msra.mxu0 0.0
    %3988 = vmatprep.subr.mxu0 0.0
    %3989 = vmatpush1.msra.mxu0 0.0
    %3990 = vmatprep.subr.mxu0 0.0
    %3991 = vmatpush1.msra.mxu0 0.0
    %3992 = vmatprep.subr.mxu0 0.0
    %3993 = vmatpush1.msra.mxu0 0.0
    %3994 = vmatprep.subr.mxu0 0.0
    %3995 = vmatpush1.msra.mxu0 0.0
    %3996 = vmatprep.subr.mxu0 0.0
    %3997 = vmatpush1.msra.mxu0 0.0
    %3998 = vmatprep.subr.mxu0 0.0
    %3999 = vmatpush1.msra.mxu0 0.0
    %4000 = vmatprep.subr.mxu0 0.0
    %4001 = vmatpush1.msra.mxu0 0.0
    %4002 = vmatprep.subr.mxu0 0.0
    %4003 = vmatpush1.msra.mxu0 0.0
    %4004 = vmatprep.subr.mxu0 0.0
    %4005 = vmatpush1.msra.mxu0 0.0
    %4006 = vmatprep.subr.mxu0 0.0
    %4007 = vmatpush1.msra.mxu0 0.0
    %4008 = vmatprep.subr.mxu0 0.0
    %4009 = vmatpush1.msra.mxu0 0.0
    %4010 = vmatprep.subr.mxu0 0.0
    %4011 = vmatpush1.msra.mxu0 0.0
    %4012 = vmatprep.subr.mxu0 0.0
    %4013 = vmatpush1.msra.mxu0 0.0
    %4014 = vmatprep.subr.mxu0 0.0
    %4015 = vmatpush1.msra.mxu0 0.0
    %4016 = vmatprep.subr.mxu0 0.0
    %4017 = vmatpush1.msra.mxu0 0.0
    %4018 = vmatprep.subr.mxu0 0.0
    %4019 = vmatpush1.msra.mxu0 0.0
    %4020 = vmatprep.subr.mxu0 0.0
    %4021 = vmatpush1.msra.mxu0 0.0
    %4022 = vmatprep.subr.mxu0 0.0
    %4023 = vmatpush1.msra.mxu0 0.0
    %4024 = vmatprep.mubr.f32.mxu0 0.0
    %4025 = vmatmul.mubr.f32.gmra.mrb[0].mxu0 %v3958
    %v4026 = vpop.f32.mrb[0].mxu0
    %v4027 = vadd.f32 %v3954, %v4026
    %v4028 = vpop.f32.mrb[0].mxu0
    %4029 = vdwg.mxu0
    %v4030 = vadd.f32 %v4027, %v2730
    %v4031 = vmax.f32 %v4030, 0.0
    %v4032 = vmul.f32 %v4031, %v2738
    %4033 = vadd.xlane.f32.xlu0 %v4032
    %v4034 = vpop.xlane.xlu0 %4033
    %v4035 = vadd.f32 %v4034, %v2747
    %v4036 = vxor.u32 %v4035, 2147483648
    %v4037 = vmul.f32 %v4036, 1.442695
    %v4038 = vpow.pop %v4037
    %v4039 = vadd.f32 %v4038, 1.0
    %v4040 = vrcp.pop %v4039
    %v4041 = vmul.f32 1.0, %v4040
    %vm4042 = vcmp.eq.s32.totalorder %v315, 3
    %4044 = vset.pattern.permute.xlu0 0
    %4045 = vperm.xlu0 %4044, %v4041
    %v4046 = vpop.permute.xlu0 %4045
    %v4048 = vsel %vm4042, %v4046, 0.0
    %v4049 = vadd.f32 %v3406, %v4048
    %v4050 = vmul.f32 %v4046, %v2049
    %v4051 = vmul.f32 %v4046, %v2053
    %v4052 = vmul.f32 %v4046, %v2057
    %4053 = vmatprep.subr.mxu0 %v219
    %4054 = vmatpush1.msra.mxu0 %v218
    %4055 = vmatprep.subr.mxu0 %v222
    %4056 = vmatpush1.msra.mxu0 %v221
    %4057 = vmatprep.subr.mxu0 0.0
    %4058 = vmatpush1.msra.mxu0 0.0
    %4059 = vmatprep.subr.mxu0 0.0
    %4060 = vmatpush1.msra.mxu0 0.0
    %4061 = vmatprep.subr.mxu0 0.0
    %4062 = vmatpush1.msra.mxu0 0.0
    %4063 = vmatprep.subr.mxu0 0.0
    %4064 = vmatpush1.msra.mxu0 0.0
    %4065 = vmatprep.subr.mxu0 0.0
    %4066 = vmatpush1.msra.mxu0 0.0
    %4067 = vmatprep.subr.mxu0 0.0
    %4068 = vmatpush1.msra.mxu0 0.0
    %4069 = vmatprep.subr.mxu0 0.0
    %4070 = vmatpush1.msra.mxu0 0.0
    %4071 = vmatprep.subr.mxu0 0.0
    %4072 = vmatpush1.msra.mxu0 0.0
    %4073 = vmatprep.subr.mxu0 0.0
    %4074 = vmatpush1.msra.mxu0 0.0
    %4075 = vmatprep.subr.mxu0 0.0
    %4076 = vmatpush1.msra.mxu0 0.0
    %4077 = vmatprep.subr.mxu0 0.0
    %4078 = vmatpush1.msra.mxu0 0.0
    %4079 = vmatprep.subr.mxu0 0.0
    %4080 = vmatpush1.msra.mxu0 0.0
    %4081 = vmatprep.subr.mxu0 0.0
    %4082 = vmatpush1.msra.mxu0 0.0
    %4083 = vmatprep.subr.mxu0 0.0
    %4084 = vmatpush1.msra.mxu0 0.0
    %4085 = vmatprep.subr.mxu0 0.0
    %4086 = vmatpush1.msra.mxu0 0.0
    %4087 = vmatprep.subr.mxu0 0.0
    %4088 = vmatpush1.msra.mxu0 0.0
    %4089 = vmatprep.subr.mxu0 0.0
    %4090 = vmatpush1.msra.mxu0 0.0
    %4091 = vmatprep.subr.mxu0 0.0
    %4092 = vmatpush1.msra.mxu0 0.0
    %4093 = vmatprep.subr.mxu0 0.0
    %4094 = vmatpush1.msra.mxu0 0.0
    %4095 = vmatprep.subr.mxu0 0.0
    %4096 = vmatpush1.msra.mxu0 0.0
    %4097 = vmatprep.subr.mxu0 0.0
    %4098 = vmatpush1.msra.mxu0 0.0
    %4099 = vmatprep.subr.mxu0 0.0
    %4100 = vmatpush1.msra.mxu0 0.0
    %4101 = vmatprep.subr.mxu0 0.0
    %4102 = vmatpush1.msra.mxu0 0.0
    %4103 = vmatprep.subr.mxu0 0.0
    %4104 = vmatpush1.msra.mxu0 0.0
    %4105 = vmatprep.subr.mxu0 0.0
    %4106 = vmatpush1.msra.mxu0 0.0
    %4107 = vmatprep.subr.mxu0 0.0
    %4108 = vmatpush1.msra.mxu0 0.0
    %4109 = vmatprep.subr.mxu0 0.0
    %4110 = vmatpush1.msra.mxu0 0.0
    %4111 = vmatprep.subr.mxu0 0.0
    %4112 = vmatpush1.msra.mxu0 0.0
    %4113 = vmatprep.subr.mxu0 0.0
    %4114 = vmatpush1.msra.mxu0 0.0
    %4115 = vmatprep.subr.mxu0 0.0
    %4116 = vmatpush1.msra.mxu0 0.0
    %4117 = vmatprep.mubr.f32.mxu0 0.0
    %4118 = vmatmul.mubr.f32.gmra.mrb[0].mxu0 %v3958
    %v4119 = vpop.f32.mrb[0].mxu0
    %v4120 = vadd.f32 %v4050, %v4119
    %v4121 = vpop.f32.mrb[0].mxu0
    %v4122 = vadd.f32 %v4051, %v4121
    %4123 = vdwg.mxu0
    %4124 = vmatprep.subr.mxu0 0.0
    %4125 = vmatpush1.msra.mxu0 %v220
    %4126 = vmatprep.subr.mxu0 0.0
    %4127 = vmatpush1.msra.mxu0 %v223
    %4128 = vmatprep.subr.mxu0 0.0
    %4129 = vmatpush1.msra.mxu0 0.0
    %4130 = vmatprep.subr.mxu0 0.0
    %4131 = vmatpush1.msra.mxu0 0.0
    %4132 = vmatprep.subr.mxu0 0.0
    %4133 = vmatpush1.msra.mxu0 0.0
    %4134 = vmatprep.subr.mxu0 0.0
    %4135 = vmatpush1.msra.mxu0 0.0
    %4136 = vmatprep.subr.mxu0 0.0
    %4137 = vmatpush1.msra.mxu0 0.0
    %4138 = vmatprep.subr.mxu0 0.0
    %4139 = vmatpush1.msra.mxu0 0.0
    %4140 = vmatprep.subr.mxu0 0.0
    %4141 = vmatpush1.msra.mxu0 0.0
    %4142 = vmatprep.subr.mxu0 0.0
    %4143 = vmatpush1.msra.mxu0 0.0
    %4144 = vmatprep.subr.mxu0 0.0
    %4145 = vmatpush1.msra.mxu0 0.0
    %4146 = vmatprep.subr.mxu0 0.0
    %4147 = vmatpush1.msra.mxu0 0.0
    %4148 = vmatprep.subr.mxu0 0.0
    %4149 = vmatpush1.msra.mxu0 0.0
    %4150 = vmatprep.subr.mxu0 0.0
    %4151 = vmatpush1.msra.mxu0 0.0
    %4152 = vmatprep.subr.mxu0 0.0
    %4153 = vmatpush1.msra.mxu0 0.0
    %4154 = vmatprep.subr.mxu0 0.0
    %4155 = vmatpush1.msra.mxu0 0.0
    %4156 = vmatprep.subr.mxu0 0.0
    %4157 = vmatpush1.msra.mxu0 0.0
    %4158 = vmatprep.subr.mxu0 0.0
    %4159 = vmatpush1.msra.mxu0 0.0
    %4160 = vmatprep.subr.mxu0 0.0
    %4161 = vmatpush1.msra.mxu0 0.0
    %4162 = vmatprep.subr.mxu0 0.0
    %4163 = vmatpush1.msra.mxu0 0.0
    %4164 = vmatprep.subr.mxu0 0.0
    %4165 = vmatpush1.msra.mxu0 0.0
    %4166 = vmatprep.subr.mxu0 0.0
    %4167 = vmatpush1.msra.mxu0 0.0
    %4168 = vmatprep.subr.mxu0 0.0
    %4169 = vmatpush1.msra.mxu0 0.0
    %4170 = vmatprep.subr.mxu0 0.0
    %4171 = vmatpush1.msra.mxu0 0.0
    %4172 = vmatprep.subr.mxu0 0.0
    %4173 = vmatpush1.msra.mxu0 0.0
    %4174 = vmatprep.subr.mxu0 0.0
    %4175 = vmatpush1.msra.mxu0 0.0
    %4176 = vmatprep.subr.mxu0 0.0
    %4177 = vmatpush1.msra.mxu0 0.0
    %4178 = vmatprep.subr.mxu0 0.0
    %4179 = vmatpush1.msra.mxu0 0.0
    %4180 = vmatprep.subr.mxu0 0.0
    %4181 = vmatpush1.msra.mxu0 0.0
    %4182 = vmatprep.subr.mxu0 0.0
    %4183 = vmatpush1.msra.mxu0 0.0
    %4184 = vmatprep.subr.mxu0 0.0
    %4185 = vmatpush1.msra.mxu0 0.0
    %4186 = vmatprep.subr.mxu0 0.0
    %4187 = vmatpush1.msra.mxu0 0.0
    %4188 = vmatprep.mubr.f32.mxu0 0.0
    %4189 = vmatmul.mubr.f32.gmra.mrb[0].mxu0 %v3958
    %v4190 = vpop.f32.mrb[0].mxu0
    %v4191 = vadd.f32 %v4052, %v4190
    %v4192 = vpop.f32.mrb[0].mxu0
    %4193 = vdwg.mxu0
    %v4194 = vadd.f32 %v4120, %v2213
    %v4195 = vadd.f32 %v4122, %v2217
    %v4196 = vadd.f32 %v4191, %v2221
    %4197 = vmatprep.subr.mxu0 %v226
    %4198 = vmatpush1.msra.mxu0 %v225
    %4199 = vmatprep.subr.mxu0 %v229
    %4200 = vmatpush1.msra.mxu0 %v228
    %4201 = vmatprep.subr.mxu0 %v232
    %4202 = vmatpush1.msra.mxu0 %v231
    %4203 = vmatprep.subr.mxu0 %v235
    %4204 = vmatpush1.msra.mxu0 %v234
    %4205 = vmatprep.subr.mxu0 %v238
    %4206 = vmatpush1.msra.mxu0 %v237
    %4207 = vmatprep.subr.mxu0 %v241
    %4208 = vmatpush1.msra.mxu0 %v240
    %4209 = vmatprep.subr.mxu0 %v244
    %4210 = vmatpush1.msra.mxu0 %v243
    %4211 = vmatprep.subr.mxu0 %v247
    %4212 = vmatpush1.msra.mxu0 %v246
    %4213 = vmatprep.subr.mxu0 %v250
    %4214 = vmatpush1.msra.mxu0 %v249
    %4215 = vmatprep.subr.mxu0 %v253
    %4216 = vmatpush1.msra.mxu0 %v252
    %4217 = vmatprep.subr.mxu0 %v256
    %4218 = vmatpush1.msra.mxu0 %v255
    %4219 = vmatprep.subr.mxu0 %v259
    %4220 = vmatpush1.msra.mxu0 %v258
    %4221 = vmatprep.subr.mxu0 %v262
    %4222 = vmatpush1.msra.mxu0 %v261
    %4223 = vmatprep.subr.mxu0 %v265
    %4224 = vmatpush1.msra.mxu0 %v264
    %4225 = vmatprep.subr.mxu0 %v268
    %4226 = vmatpush1.msra.mxu0 %v267
    %4227 = vmatprep.subr.mxu0 %v271
    %4228 = vmatpush1.msra.mxu0 %v270
    %4229 = vmatprep.subr.mxu0 0.0
    %4230 = vmatpush1.msra.mxu0 0.0
    %4231 = vmatprep.subr.mxu0 0.0
    %4232 = vmatpush1.msra.mxu0 0.0
    %4233 = vmatprep.subr.mxu0 0.0
    %4234 = vmatpush1.msra.mxu0 0.0
    %4235 = vmatprep.subr.mxu0 0.0
    %4236 = vmatpush1.msra.mxu0 0.0
    %4237 = vmatprep.subr.mxu0 0.0
    %4238 = vmatpush1.msra.mxu0 0.0
    %4239 = vmatprep.subr.mxu0 0.0
    %4240 = vmatpush1.msra.mxu0 0.0
    %4241 = vmatprep.subr.mxu0 0.0
    %4242 = vmatpush1.msra.mxu0 0.0
    %4243 = vmatprep.subr.mxu0 0.0
    %4244 = vmatpush1.msra.mxu0 0.0
    %4245 = vmatprep.subr.mxu0 0.0
    %4246 = vmatpush1.msra.mxu0 0.0
    %4247 = vmatprep.subr.mxu0 0.0
    %4248 = vmatpush1.msra.mxu0 0.0
    %4249 = vmatprep.subr.mxu0 0.0
    %4250 = vmatpush1.msra.mxu0 0.0
    %4251 = vmatprep.subr.mxu0 0.0
    %4252 = vmatpush1.msra.mxu0 0.0
    %4253 = vmatprep.subr.mxu0 0.0
    %4254 = vmatpush1.msra.mxu0 0.0
    %4255 = vmatprep.subr.mxu0 0.0
    %4256 = vmatpush1.msra.mxu0 0.0
    %4257 = vmatprep.subr.mxu0 0.0
    %4258 = vmatpush1.msra.mxu0 0.0
    %4259 = vmatprep.subr.mxu0 0.0
    %4260 = vmatpush1.msra.mxu0 0.0
    %4261 = vmatprep.mubr.f32.mxu0 0.0
    %4262 = vmatmul.mubr.f32.gmra.mrb[0].mxu0 %v3715
    %v4263 = vpop.f32.mrb[0].mxu0
    %v4264 = vadd.f32 %v2232, %v4263
    %v4265 = vpop.f32.mrb[0].mxu0
    %v4266 = vadd.f32 %v2236, %v4265
    %4267 = vdwg.mxu0
    %4268 = vmatprep.subr.mxu0 0.0
    %4269 = vmatpush1.msra.mxu0 %v227
    %4270 = vmatprep.subr.mxu0 0.0
    %4271 = vmatpush1.msra.mxu0 %v230
    %4272 = vmatprep.subr.mxu0 0.0
    %4273 = vmatpush1.msra.mxu0 %v233
    %4274 = vmatprep.subr.mxu0 0.0
    %4275 = vmatpush1.msra.mxu0 %v236
    %4276 = vmatprep.subr.mxu0 0.0
    %4277 = vmatpush1.msra.mxu0 %v239
    %4278 = vmatprep.subr.mxu0 0.0
    %4279 = vmatpush1.msra.mxu0 %v242
    %4280 = vmatprep.subr.mxu0 0.0
    %4281 = vmatpush1.msra.mxu0 %v245
    %4282 = vmatprep.subr.mxu0 0.0
    %4283 = vmatpush1.msra.mxu0 %v248
    %4284 = vmatprep.subr.mxu0 0.0
    %4285 = vmatpush1.msra.mxu0 %v251
    %4286 = vmatprep.subr.mxu0 0.0
    %4287 = vmatpush1.msra.mxu0 %v254
    %4288 = vmatprep.subr.mxu0 0.0
    %4289 = vmatpush1.msra.mxu0 %v257
    %4290 = vmatprep.subr.mxu0 0.0
    %4291 = vmatpush1.msra.mxu0 %v260
    %4292 = vmatprep.subr.mxu0 0.0
    %4293 = vmatpush1.msra.mxu0 %v263
    %4294 = vmatprep.subr.mxu0 0.0
    %4295 = vmatpush1.msra.mxu0 %v266
    %4296 = vmatprep.subr.mxu0 0.0
    %4297 = vmatpush1.msra.mxu0 %v269
    %4298 = vmatprep.subr.mxu0 0.0
    %4299 = vmatpush1.msra.mxu0 %v272
    %4300 = vmatprep.subr.mxu0 0.0
    %4301 = vmatpush1.msra.mxu0 0.0
    %4302 = vmatprep.subr.mxu0 0.0
    %4303 = vmatpush1.msra.mxu0 0.0
    %4304 = vmatprep.subr.mxu0 0.0
    %4305 = vmatpush1.msra.mxu0 0.0
    %4306 = vmatprep.subr.mxu0 0.0
    %4307 = vmatpush1.msra.mxu0 0.0
    %4308 = vmatprep.subr.mxu0 0.0
    %4309 = vmatpush1.msra.mxu0 0.0
    %4310 = vmatprep.subr.mxu0 0.0
    %4311 = vmatpush1.msra.mxu0 0.0
    %4312 = vmatprep.subr.mxu0 0.0
    %4313 = vmatpush1.msra.mxu0 0.0
    %4314 = vmatprep.subr.mxu0 0.0
    %4315 = vmatpush1.msra.mxu0 0.0
    %4316 = vmatprep.subr.mxu0 0.0
    %4317 = vmatpush1.msra.mxu0 0.0
    %4318 = vmatprep.subr.mxu0 0.0
    %4319 = vmatpush1.msra.mxu0 0.0
    %4320 = vmatprep.subr.mxu0 0.0
    %4321 = vmatpush1.msra.mxu0 0.0
    %4322 = vmatprep.subr.mxu0 0.0
    %4323 = vmatpush1.msra.mxu0 0.0
    %4324 = vmatprep.subr.mxu0 0.0
    %4325 = vmatpush1.msra.mxu0 0.0
    %4326 = vmatprep.subr.mxu0 0.0
    %4327 = vmatpush1.msra.mxu0 0.0
    %4328 = vmatprep.subr.mxu0 0.0
    %4329 = vmatpush1.msra.mxu0 0.0
    %4330 = vmatprep.subr.mxu0 0.0
    %4331 = vmatpush1.msra.mxu0 0.0
    %4332 = vmatprep.mubr.f32.mxu0 0.0
    %4333 = vmatmul.mubr.f32.gmra.mrb[0].mxu0 %v3715
    %v4334 = vpop.f32.mrb[0].mxu0
    %v4335 = vadd.f32 %v2240, %v4334
    %v4336 = vpop.f32.mrb[0].mxu0
    %4337 = vdwg.mxu0
    %v4338 = vadd.f32 %v4194, %v4264
    %v4339 = vxor.u32 %v4338, 2147483648
    %v4340 = vmul.f32 %v4339, 1.442695
    %v4341 = vpow.pop %v4340
    %v4342 = vadd.f32 %v4341, 1.0
    %v4343 = vrcp.pop %v4342
    %v4344 = vmul.f32 1.0, %v4343
    %v4345 = vadd.f32 %v4195, %v4266
    %v4346 = vxor.u32 %v4345, 2147483648
    %v4347 = vmul.f32 %v4346, 1.442695
    %v4348 = vpow.pop %v4347
    %v4349 = vadd.f32 %v4348, 1.0
    %v4350 = vrcp.pop %v4349
    %v4351 = vmul.f32 1.0, %v4350
    %v4352 = vmul.f32 %v4344, %v4335
    %v4353 = vadd.f32 %v4196, %v4352
    %v4354 = vtanh.pop %v4353
    %v4355 = vsub.f32 1.0, %v4351
    %v4356 = vmul.f32 %v4355, %v4354
    %v4357 = vmul.f32 %v4351, %v3715
    %v4358 = vadd.f32 %v4356, %v4357
    %4359 = vmatprep.subr.mxu0 0.0
    %4360 = vmatpush1.msra.mxu0 %v275
    %4361 = vmatprep.subr.mxu0 0.0
    %4362 = vmatpush1.msra.mxu0 %v276
    %4363 = vmatprep.subr.mxu0 0.0
    %4364 = vmatpush1.msra.mxu0 %v277
    %4365 = vmatprep.subr.mxu0 0.0
    %4366 = vmatpush1.msra.mxu0 %v278
    %4367 = vmatprep.subr.mxu0 0.0
    %4368 = vmatpush1.msra.mxu0 %v279
    %4369 = vmatprep.subr.mxu0 0.0
    %4370 = vmatpush1.msra.mxu0 %v280
    %4371 = vmatprep.subr.mxu0 0.0
    %4372 = vmatpush1.msra.mxu0 %v281
    %4373 = vmatprep.subr.mxu0 0.0
    %4374 = vmatpush1.msra.mxu0 %v282
    %4375 = vmatprep.subr.mxu0 0.0
    %4376 = vmatpush1.msra.mxu0 %v283
    %4377 = vmatprep.subr.mxu0 0.0
    %4378 = vmatpush1.msra.mxu0 %v284
    %4379 = vmatprep.subr.mxu0 0.0
    %4380 = vmatpush1.msra.mxu0 %v285
    %4381 = vmatprep.subr.mxu0 0.0
    %4382 = vmatpush1.msra.mxu0 %v286
    %4383 = vmatprep.subr.mxu0 0.0
    %4384 = vmatpush1.msra.mxu0 %v287
    %4385 = vmatprep.subr.mxu0 0.0
    %4386 = vmatpush1.msra.mxu0 %v288
    %4387 = vmatprep.subr.mxu0 0.0
    %4388 = vmatpush1.msra.mxu0 %v289
    %4389 = vmatprep.subr.mxu0 0.0
    %4390 = vmatpush1.msra.mxu0 %v290
    %4391 = vmatprep.subr.mxu0 0.0
    %4392 = vmatpush1.msra.mxu0 0.0
    %4393 = vmatprep.subr.mxu0 0.0
    %4394 = vmatpush1.msra.mxu0 0.0
    %4395 = vmatprep.subr.mxu0 0.0
    %4396 = vmatpush1.msra.mxu0 0.0
    %4397 = vmatprep.subr.mxu0 0.0
    %4398 = vmatpush1.msra.mxu0 0.0
    %4399 = vmatprep.subr.mxu0 0.0
    %4400 = vmatpush1.msra.mxu0 0.0
    %4401 = vmatprep.subr.mxu0 0.0
    %4402 = vmatpush1.msra.mxu0 0.0
    %4403 = vmatprep.subr.mxu0 0.0
    %4404 = vmatpush1.msra.mxu0 0.0
    %4405 = vmatprep.subr.mxu0 0.0
    %4406 = vmatpush1.msra.mxu0 0.0
    %4407 = vmatprep.subr.mxu0 0.0
    %4408 = vmatpush1.msra.mxu0 0.0
    %4409 = vmatprep.subr.mxu0 0.0
    %4410 = vmatpush1.msra.mxu0 0.0
    %4411 = vmatprep.subr.mxu0 0.0
    %4412 = vmatpush1.msra.mxu0 0.0
    %4413 = vmatprep.subr.mxu0 0.0
    %4414 = vmatpush1.msra.mxu0 0.0
    %4415 = vmatprep.subr.mxu0 0.0
    %4416 = vmatpush1.msra.mxu0 0.0
    %4417 = vmatprep.subr.mxu0 0.0
    %4418 = vmatpush1.msra.mxu0 0.0
    %4419 = vmatprep.subr.mxu0 0.0
    %4420 = vmatpush1.msra.mxu0 0.0
    %4421 = vmatprep.subr.mxu0 0.0
    %4422 = vmatpush1.msra.mxu0 0.0
    %4423 = vmatprep.mubr.f32.mxu0 0.0
    %4424 = vmatmul.mubr.f32.gmra.mrb[0].mxu0 %v4358
    %v4425 = vpop.f32.mrb[0].mxu0
    %v4426 = vadd.f32 %v2410, %v4425
    %v4427 = vpop.f32.mrb[0].mxu0
    %4428 = vdwg.mxu0
    %4429 = vmax.xlane.f32.xlu0 %v4426
    %v4430 = vpop.xlane.xlu0 %4429
    %vm4431 = vcmp.eq.f32.partialorder %v4426, %v4430
    %v4432 = vsel %vm4431, %v315, 128
    %v4433 = vand.u32 %v4432, 65535
    %v4434 = vshra.s32 %v4432, 16
    %v4435 = vcvt.s32.f32 %v4433
    %v4436 = vcvt.s32.f32 %v4434
    %4437 = vmin.xlane.f32.xlu0 %v4436
    %v4438 = vpop.xlane.xlu0 %4437
    %vm4439 = vcmp.eq.f32.partialorder %v4436, %v4438
    %v4440 = vsel %vm4439, %v4435, inf
    %4441 = vmin.xlane.f32.xlu0 %v4440
    %v4442 = vpop.xlane.xlu0 %4441
    %v4443 = vcvt.f32.s32 %v4442
    %v4444 = vcvt.f32.s32 %v4438
    %v4445 = vshll.u32 %v4444, 16
    %v4446 = vadd.s32 %v4445, %v4443
    %vm4447 = vcmp.eq.s32.totalorder %v315, %v4446
    %v4448 = vsel %vm4447, 1, 0
    %v4449 = vcvt.s32.f32 %v4448
    %v4450 = vsub.f32 %v4426, %v4430
    %v4451 = vmul.f32 %v4450, 1.442695
    %v4452 = vpow.pop %v4451
    %4453 = vadd.xlane.f32.xlu0 %v4452
    %v4454 = vpop.xlane.xlu0 %4453
    %v4455 = vlog2.pop %v4454
    %v4456 = vmul.f32 %v4455, 0.6931472
    %v4457 = vsub.f32 %v4450, %v4456
    %s4458 = scalar_lea.vmem [#allocation14], 32
    %4459 = vst [vmem:[%s4458] sm:$0xff] %v4457
    %4460 = vmatprep.subr.mxu0 0.0
    %4461 = vmatpush1.msra.mxu0 %v202
    %4462 = vmatprep.subr.mxu0 0.0
    %4463 = vmatpush1.msra.mxu0 %v203
    %4464 = vmatprep.subr.mxu0 0.0
    %4465 = vmatpush1.msra.mxu0 %v204
    %4466 = vmatprep.subr.mxu0 0.0
    %4467 = vmatpush1.msra.mxu0 %v205
    %4468 = vmatprep.subr.mxu0 0.0
    %4469 = vmatpush1.msra.mxu0 %v206
    %4470 = vmatprep.subr.mxu0 0.0
    %4471 = vmatpush1.msra.mxu0 %v207
    %4472 = vmatprep.subr.mxu0 0.0
    %4473 = vmatpush1.msra.mxu0 %v208
    %4474 = vmatprep.subr.mxu0 0.0
    %4475 = vmatpush1.msra.mxu0 %v209
    %4476 = vmatprep.subr.mxu0 0.0
    %4477 = vmatpush1.msra.mxu0 %v210
    %4478 = vmatprep.subr.mxu0 0.0
    %4479 = vmatpush1.msra.mxu0 %v211
    %4480 = vmatprep.subr.mxu0 0.0
    %4481 = vmatpush1.msra.mxu0 %v212
    %4482 = vmatprep.subr.mxu0 0.0
    %4483 = vmatpush1.msra.mxu0 %v213
    %4484 = vmatprep.subr.mxu0 0.0
    %4485 = vmatpush1.msra.mxu0 %v214
    %4486 = vmatprep.subr.mxu0 0.0
    %4487 = vmatpush1.msra.mxu0 %v215
    %4488 = vmatprep.subr.mxu0 0.0
    %4489 = vmatpush1.msra.mxu0 %v216
    %4490 = vmatprep.subr.mxu0 0.0
    %4491 = vmatpush1.msra.mxu0 %v217
    %4492 = vmatprep.subr.mxu0 0.0
    %4493 = vmatpush1.msra.mxu0 0.0
    %4494 = vmatprep.subr.mxu0 0.0
    %4495 = vmatpush1.msra.mxu0 0.0
    %4496 = vmatprep.subr.mxu0 0.0
    %4497 = vmatpush1.msra.mxu0 0.0
    %4498 = vmatprep.subr.mxu0 0.0
    %4499 = vmatpush1.msra.mxu0 0.0
    %4500 = vmatprep.subr.mxu0 0.0
    %4501 = vmatpush1.msra.mxu0 0.0
    %4502 = vmatprep.subr.mxu0 0.0
    %4503 = vmatpush1.msra.mxu0 0.0
    %4504 = vmatprep.subr.mxu0 0.0
    %4505 = vmatpush1.msra.mxu0 0.0
    %4506 = vmatprep.subr.mxu0 0.0
    %4507 = vmatpush1.msra.mxu0 0.0
    %4508 = vmatprep.subr.mxu0 0.0
    %4509 = vmatpush1.msra.mxu0 0.0
    %4510 = vmatprep.subr.mxu0 0.0
    %4511 = vmatpush1.msra.mxu0 0.0
    %4512 = vmatprep.subr.mxu0 0.0
    %4513 = vmatpush1.msra.mxu0 0.0
    %4514 = vmatprep.subr.mxu0 0.0
    %4515 = vmatpush1.msra.mxu0 0.0
    %4516 = vmatprep.subr.mxu0 0.0
    %4517 = vmatpush1.msra.mxu0 0.0
    %4518 = vmatprep.subr.mxu0 0.0
    %4519 = vmatpush1.msra.mxu0 0.0
    %4520 = vmatprep.subr.mxu0 0.0
    %4521 = vmatpush1.msra.mxu0 0.0
    %4522 = vmatprep.subr.mxu0 0.0
    %4523 = vmatpush1.msra.mxu0 0.0
    %4524 = vmatprep.mubr.f32.mxu0 0.0
    %4525 = vmatmul.mubr.f32.gmra.mrb[0].mxu0 %v4449
    %v4526 = vpop.f32.mrb[0].mxu0
    %v4527 = vadd.f32 0.0, %v4526
    %v4528 = vpop.f32.mrb[0].mxu0
    %4529 = vdwg.mxu0
    %4530 = vmatprep.subr.mxu0 0.0
    %4531 = vmatpush1.msra.mxu0 %v294
    %4532 = vmatprep.subr.mxu0 0.0
    %4533 = vmatpush1.msra.mxu0 %v295
    %4534 = vmatprep.subr.mxu0 0.0
    %4535 = vmatpush1.msra.mxu0 %v296
    %4536 = vmatprep.subr.mxu0 0.0
    %4537 = vmatpush1.msra.mxu0 %v297
    %4538 = vmatprep.subr.mxu0 0.0
    %4539 = vmatpush1.msra.mxu0 %v298
    %4540 = vmatprep.subr.mxu0 0.0
    %4541 = vmatpush1.msra.mxu0 %v299
    %4542 = vmatprep.subr.mxu0 0.0
    %4543 = vmatpush1.msra.mxu0 %v300
    %4544 = vmatprep.subr.mxu0 0.0
    %4545 = vmatpush1.msra.mxu0 %v301
    %4546 = vmatprep.subr.mxu0 0.0
    %4547 = vmatpush1.msra.mxu0 %v302
    %4548 = vmatprep.subr.mxu0 0.0
    %4549 = vmatpush1.msra.mxu0 %v303
    %4550 = vmatprep.subr.mxu0 0.0
    %4551 = vmatpush1.msra.mxu0 %v304
    %4552 = vmatprep.subr.mxu0 0.0
    %4553 = vmatpush1.msra.mxu0 %v305
    %4554 = vmatprep.subr.mxu0 0.0
    %4555 = vmatpush1.msra.mxu0 %v306
    %4556 = vmatprep.subr.mxu0 0.0
    %4557 = vmatpush1.msra.mxu0 %v307
    %4558 = vmatprep.subr.mxu0 0.0
    %4559 = vmatpush1.msra.mxu0 %v308
    %4560 = vmatprep.subr.mxu0 0.0
    %4561 = vmatpush1.msra.mxu0 %v309
    %4562 = vmatprep.subr.mxu0 0.0
    %4563 = vmatpush1.msra.mxu0 0.0
    %4564 = vmatprep.subr.mxu0 0.0
    %4565 = vmatpush1.msra.mxu0 0.0
    %4566 = vmatprep.subr.mxu0 0.0
    %4567 = vmatpush1.msra.mxu0 0.0
    %4568 = vmatprep.subr.mxu0 0.0
    %4569 = vmatpush1.msra.mxu0 0.0
    %4570 = vmatprep.subr.mxu0 0.0
    %4571 = vmatpush1.msra.mxu0 0.0
    %4572 = vmatprep.subr.mxu0 0.0
    %4573 = vmatpush1.msra.mxu0 0.0
    %4574 = vmatprep.subr.mxu0 0.0
    %4575 = vmatpush1.msra.mxu0 0.0
    %4576 = vmatprep.subr.mxu0 0.0
    %4577 = vmatpush1.msra.mxu0 0.0
    %4578 = vmatprep.subr.mxu0 0.0
    %4579 = vmatpush1.msra.mxu0 0.0
    %4580 = vmatprep.subr.mxu0 0.0
    %4581 = vmatpush1.msra.mxu0 0.0
    %4582 = vmatprep.subr.mxu0 0.0
    %4583 = vmatpush1.msra.mxu0 0.0
    %4584 = vmatprep.subr.mxu0 0.0
    %4585 = vmatpush1.msra.mxu0 0.0
    %4586 = vmatprep.subr.mxu0 0.0
    %4587 = vmatpush1.msra.mxu0 0.0
    %4588 = vmatprep.subr.mxu0 0.0
    %4589 = vmatpush1.msra.mxu0 0.0
    %4590 = vmatprep.subr.mxu0 0.0
    %4591 = vmatpush1.msra.mxu0 0.0
    %4592 = vmatprep.subr.mxu0 0.0
    %4593 = vmatpush1.msra.mxu0 0.0
    %4594 = vmatprep.mubr.f32.mxu0 0.0
    %4595 = vmatmul.mubr.f32.gmra.mrb[0].mxu0 %v4358
    %v4596 = vpop.f32.mrb[0].mxu0
    %v4597 = vadd.f32 0.0, %v4596
    %v4598 = vpop.f32.mrb[0].mxu0
    %4599 = vdwg.mxu0
    %v4601 = vsel %vm2064, %v4527, 0
    %4603 = vmatprep.subr.mxu0 0.0
    %4604 = vmatpush1.msra.mxu0 %v292
    %4605 = vmatprep.subr.mxu0 0.0
    %4606 = vmatpush1.msra.mxu0 %v293
    %4607 = vmatprep.subr.mxu0 0.0
    %4608 = vmatpush1.msra.mxu0 0.0
    %4609 = vmatprep.subr.mxu0 0.0
    %4610 = vmatpush1.msra.mxu0 0.0
    %4611 = vmatprep.subr.mxu0 0.0
    %4612 = vmatpush1.msra.mxu0 0.0
    %4613 = vmatprep.subr.mxu0 0.0
    %4614 = vmatpush1.msra.mxu0 0.0
    %4615 = vmatprep.subr.mxu0 0.0
    %4616 = vmatpush1.msra.mxu0 0.0
    %4617 = vmatprep.subr.mxu0 0.0
    %4618 = vmatpush1.msra.mxu0 0.0
    %4619 = vmatprep.subr.mxu0 0.0
    %4620 = vmatpush1.msra.mxu0 0.0
    %4621 = vmatprep.subr.mxu0 0.0
    %4622 = vmatpush1.msra.mxu0 0.0
    %4623 = vmatprep.subr.mxu0 0.0
    %4624 = vmatpush1.msra.mxu0 0.0
    %4625 = vmatprep.subr.mxu0 0.0
    %4626 = vmatpush1.msra.mxu0 0.0
    %4627 = vmatprep.subr.mxu0 0.0
    %4628 = vmatpush1.msra.mxu0 0.0
    %4629 = vmatprep.subr.mxu0 0.0
    %4630 = vmatpush1.msra.mxu0 0.0
    %4631 = vmatprep.subr.mxu0 0.0
    %4632 = vmatpush1.msra.mxu0 0.0
    %4633 = vmatprep.subr.mxu0 0.0
    %4634 = vmatpush1.msra.mxu0 0.0
    %4635 = vmatprep.subr.mxu0 0.0
    %4636 = vmatpush1.msra.mxu0 0.0
    %4637 = vmatprep.subr.mxu0 0.0
    %4638 = vmatpush1.msra.mxu0 0.0
    %4639 = vmatprep.subr.mxu0 0.0
    %4640 = vmatpush1.msra.mxu0 0.0
    %4641 = vmatprep.subr.mxu0 0.0
    %4642 = vmatpush1.msra.mxu0 0.0
    %4643 = vmatprep.subr.mxu0 0.0
    %4644 = vmatpush1.msra.mxu0 0.0
    %4645 = vmatprep.subr.mxu0 0.0
    %4646 = vmatpush1.msra.mxu0 0.0
    %4647 = vmatprep.subr.mxu0 0.0
    %4648 = vmatpush1.msra.mxu0 0.0
    %4649 = vmatprep.subr.mxu0 0.0
    %4650 = vmatpush1.msra.mxu0 0.0
    %4651 = vmatprep.subr.mxu0 0.0
    %4652 = vmatpush1.msra.mxu0 0.0
    %4653 = vmatprep.subr.mxu0 0.0
    %4654 = vmatpush1.msra.mxu0 0.0
    %4655 = vmatprep.subr.mxu0 0.0
    %4656 = vmatpush1.msra.mxu0 0.0
    %4657 = vmatprep.subr.mxu0 0.0
    %4658 = vmatpush1.msra.mxu0 0.0
    %4659 = vmatprep.subr.mxu0 0.0
    %4660 = vmatpush1.msra.mxu0 0.0
    %4661 = vmatprep.subr.mxu0 0.0
    %4662 = vmatpush1.msra.mxu0 0.0
    %4663 = vmatprep.subr.mxu0 0.0
    %4664 = vmatpush1.msra.mxu0 0.0
    %4665 = vmatprep.subr.mxu0 0.0
    %4666 = vmatpush1.msra.mxu0 0.0
    %4667 = vmatprep.mubr.f32.mxu0 0.0
    %4668 = vmatmul.mubr.f32.gmra.mrb[0].mxu0 %v4601
    %v4669 = vpop.f32.mrb[0].mxu0
    %v4670 = vadd.f32 %v4597, %v4669
    %v4671 = vpop.f32.mrb[0].mxu0
    %4672 = vdwg.mxu0
    %v4673 = vadd.f32 %v4670, %v2730
    %v4674 = vmax.f32 %v4673, 0.0
    %v4675 = vmul.f32 %v4674, %v2738
    %4676 = vadd.xlane.f32.xlu0 %v4675
    %v4677 = vpop.xlane.xlu0 %4676
    %v4678 = vadd.f32 %v4677, %v2747
    %v4679 = vxor.u32 %v4678, 2147483648
    %v4680 = vmul.f32 %v4679, 1.442695
    %v4681 = vpow.pop %v4680
    %v4682 = vadd.f32 %v4681, 1.0
    %v4683 = vrcp.pop %v4682
    %v4684 = vmul.f32 1.0, %v4683
    %vm4685 = vcmp.eq.s32.totalorder %v315, 4
    %4687 = vset.pattern.permute.xlu0 0
    %4688 = vperm.xlu0 %4687, %v4684
    %v4689 = vpop.permute.xlu0 %4688
    %v4691 = vsel %vm4685, %v4689, 0.0
    %v4692 = vadd.f32 %v4049, %v4691
    %v4693 = vmul.f32 %v4689, %v2049
    %v4694 = vmul.f32 %v4689, %v2053
    %v4695 = vmul.f32 %v4689, %v2057
    %4696 = vmatprep.subr.mxu0 %v219
    %4697 = vmatpush1.msra.mxu0 %v218
    %4698 = vmatprep.subr.mxu0 %v222
    %4699 = vmatpush1.msra.mxu0 %v221
    %4700 = vmatprep.subr.mxu0 0.0
    %4701 = vmatpush1.msra.mxu0 0.0
    %4702 = vmatprep.subr.mxu0 0.0
    %4703 = vmatpush1.msra.mxu0 0.0
    %4704 = vmatprep.subr.mxu0 0.0
    %4705 = vmatpush1.msra.mxu0 0.0
    %4706 = vmatprep.subr.mxu0 0.0
    %4707 = vmatpush1.msra.mxu0 0.0
    %4708 = vmatprep.subr.mxu0 0.0
    %4709 = vmatpush1.msra.mxu0 0.0
    %4710 = vmatprep.subr.mxu0 0.0
    %4711 = vmatpush1.msra.mxu0 0.0
    %4712 = vmatprep.subr.mxu0 0.0
    %4713 = vmatpush1.msra.mxu0 0.0
    %4714 = vmatprep.subr.mxu0 0.0
    %4715 = vmatpush1.msra.mxu0 0.0
    %4716 = vmatprep.subr.mxu0 0.0
    %4717 = vmatpush1.msra.mxu0 0.0
    %4718 = vmatprep.subr.mxu0 0.0
    %4719 = vmatpush1.msra.mxu0 0.0
    %4720 = vmatprep.subr.mxu0 0.0
    %4721 = vmatpush1.msra.mxu0 0.0
    %4722 = vmatprep.subr.mxu0 0.0
    %4723 = vmatpush1.msra.mxu0 0.0
    %4724 = vmatprep.subr.mxu0 0.0
    %4725 = vmatpush1.msra.mxu0 0.0
    %4726 = vmatprep.subr.mxu0 0.0
    %4727 = vmatpush1.msra.mxu0 0.0
    %4728 = vmatprep.subr.mxu0 0.0
    %4729 = vmatpush1.msra.mxu0 0.0
    %4730 = vmatprep.subr.mxu0 0.0
    %4731 = vmatpush1.msra.mxu0 0.0
    %4732 = vmatprep.subr.mxu0 0.0
    %4733 = vmatpush1.msra.mxu0 0.0
    %4734 = vmatprep.subr.mxu0 0.0
    %4735 = vmatpush1.msra.mxu0 0.0
    %4736 = vmatprep.subr.mxu0 0.0
    %4737 = vmatpush1.msra.mxu0 0.0
    %4738 = vmatprep.subr.mxu0 0.0
    %4739 = vmatpush1.msra.mxu0 0.0
    %4740 = vmatprep.subr.mxu0 0.0
    %4741 = vmatpush1.msra.mxu0 0.0
    %4742 = vmatprep.subr.mxu0 0.0
    %4743 = vmatpush1.msra.mxu0 0.0
    %4744 = vmatprep.subr.mxu0 0.0
    %4745 = vmatpush1.msra.mxu0 0.0
    %4746 = vmatprep.subr.mxu0 0.0
    %4747 = vmatpush1.msra.mxu0 0.0
    %4748 = vmatprep.subr.mxu0 0.0
    %4749 = vmatpush1.msra.mxu0 0.0
    %4750 = vmatprep.subr.mxu0 0.0
    %4751 = vmatpush1.msra.mxu0 0.0
    %4752 = vmatprep.subr.mxu0 0.0
    %4753 = vmatpush1.msra.mxu0 0.0
    %4754 = vmatprep.subr.mxu0 0.0
    %4755 = vmatpush1.msra.mxu0 0.0
    %4756 = vmatprep.subr.mxu0 0.0
    %4757 = vmatpush1.msra.mxu0 0.0
    %4758 = vmatprep.subr.mxu0 0.0
    %4759 = vmatpush1.msra.mxu0 0.0
    %4760 = vmatprep.mubr.f32.mxu0 0.0
    %4761 = vmatmul.mubr.f32.gmra.mrb[0].mxu0 %v4601
    %v4762 = vpop.f32.mrb[0].mxu0
    %v4763 = vadd.f32 %v4693, %v4762
    %v4764 = vpop.f32.mrb[0].mxu0
    %v4765 = vadd.f32 %v4694, %v4764
    %4766 = vdwg.mxu0
    %4767 = vmatprep.subr.mxu0 0.0
    %4768 = vmatpush1.msra.mxu0 %v220
    %4769 = vmatprep.subr.mxu0 0.0
    %4770 = vmatpush1.msra.mxu0 %v223
    %4771 = vmatprep.subr.mxu0 0.0
    %4772 = vmatpush1.msra.mxu0 0.0
    %4773 = vmatprep.subr.mxu0 0.0
    %4774 = vmatpush1.msra.mxu0 0.0
    %4775 = vmatprep.subr.mxu0 0.0
    %4776 = vmatpush1.msra.mxu0 0.0
    %4777 = vmatprep.subr.mxu0 0.0
    %4778 = vmatpush1.msra.mxu0 0.0
    %4779 = vmatprep.subr.mxu0 0.0
    %4780 = vmatpush1.msra.mxu0 0.0
    %4781 = vmatprep.subr.mxu0 0.0
    %4782 = vmatpush1.msra.mxu0 0.0
    %4783 = vmatprep.subr.mxu0 0.0
    %4784 = vmatpush1.msra.mxu0 0.0
    %4785 = vmatprep.subr.mxu0 0.0
    %4786 = vmatpush1.msra.mxu0 0.0
    %4787 = vmatprep.subr.mxu0 0.0
    %4788 = vmatpush1.msra.mxu0 0.0
    %4789 = vmatprep.subr.mxu0 0.0
    %4790 = vmatpush1.msra.mxu0 0.0
    %4791 = vmatprep.subr.mxu0 0.0
    %4792 = vmatpush1.msra.mxu0 0.0
    %4793 = vmatprep.subr.mxu0 0.0
    %4794 = vmatpush1.msra.mxu0 0.0
    %4795 = vmatprep.subr.mxu0 0.0
    %4796 = vmatpush1.msra.mxu0 0.0
    %4797 = vmatprep.subr.mxu0 0.0
    %4798 = vmatpush1.msra.mxu0 0.0
    %4799 = vmatprep.subr.mxu0 0.0
    %4800 = vmatpush1.msra.mxu0 0.0
    %4801 = vmatprep.subr.mxu0 0.0
    %4802 = vmatpush1.msra.mxu0 0.0
    %4803 = vmatprep.subr.mxu0 0.0
    %4804 = vmatpush1.msra.mxu0 0.0
    %4805 = vmatprep.subr.mxu0 0.0
    %4806 = vmatpush1.msra.mxu0 0.0
    %4807 = vmatprep.subr.mxu0 0.0
    %4808 = vmatpush1.msra.mxu0 0.0
    %4809 = vmatprep.subr.mxu0 0.0
    %4810 = vmatpush1.msra.mxu0 0.0
    %4811 = vmatprep.subr.mxu0 0.0
    %4812 = vmatpush1.msra.mxu0 0.0
    %4813 = vmatprep.subr.mxu0 0.0
    %4814 = vmatpush1.msra.mxu0 0.0
    %4815 = vmatprep.subr.mxu0 0.0
    %4816 = vmatpush1.msra.mxu0 0.0
    %4817 = vmatprep.subr.mxu0 0.0
    %4818 = vmatpush1.msra.mxu0 0.0
    %4819 = vmatprep.subr.mxu0 0.0
    %4820 = vmatpush1.msra.mxu0 0.0
    %4821 = vmatprep.subr.mxu0 0.0
    %4822 = vmatpush1.msra.mxu0 0.0
    %4823 = vmatprep.subr.mxu0 0.0
    %4824 = vmatpush1.msra.mxu0 0.0
    %4825 = vmatprep.subr.mxu0 0.0
    %4826 = vmatpush1.msra.mxu0 0.0
    %4827 = vmatprep.subr.mxu0 0.0
    %4828 = vmatpush1.msra.mxu0 0.0
    %4829 = vmatprep.subr.mxu0 0.0
    %4830 = vmatpush1.msra.mxu0 0.0
    %4831 = vmatprep.mubr.f32.mxu0 0.0
    %4832 = vmatmul.mubr.f32.gmra.mrb[0].mxu0 %v4601
    %v4833 = vpop.f32.mrb[0].mxu0
    %v4834 = vadd.f32 %v4695, %v4833
    %v4835 = vpop.f32.mrb[0].mxu0
    %4836 = vdwg.mxu0
    %v4837 = vadd.f32 %v4763, %v2213
    %v4838 = vadd.f32 %v4765, %v2217
    %v4839 = vadd.f32 %v4834, %v2221
    %4840 = vmatprep.subr.mxu0 %v226
    %4841 = vmatpush1.msra.mxu0 %v225
    %4842 = vmatprep.subr.mxu0 %v229
    %4843 = vmatpush1.msra.mxu0 %v228
    %4844 = vmatprep.subr.mxu0 %v232
    %4845 = vmatpush1.msra.mxu0 %v231
    %4846 = vmatprep.subr.mxu0 %v235
    %4847 = vmatpush1.msra.mxu0 %v234
    %4848 = vmatprep.subr.mxu0 %v238
    %4849 = vmatpush1.msra.mxu0 %v237
    %4850 = vmatprep.subr.mxu0 %v241
    %4851 = vmatpush1.msra.mxu0 %v240
    %4852 = vmatprep.subr.mxu0 %v244
    %4853 = vmatpush1.msra.mxu0 %v243
    %4854 = vmatprep.subr.mxu0 %v247
    %4855 = vmatpush1.msra.mxu0 %v246
    %4856 = vmatprep.subr.mxu0 %v250
    %4857 = vmatpush1.msra.mxu0 %v249
    %4858 = vmatprep.subr.mxu0 %v253
    %4859 = vmatpush1.msra.mxu0 %v252
    %4860 = vmatprep.subr.mxu0 %v256
    %4861 = vmatpush1.msra.mxu0 %v255
    %4862 = vmatprep.subr.mxu0 %v259
    %4863 = vmatpush1.msra.mxu0 %v258
    %4864 = vmatprep.subr.mxu0 %v262
    %4865 = vmatpush1.msra.mxu0 %v261
    %4866 = vmatprep.subr.mxu0 %v265
    %4867 = vmatpush1.msra.mxu0 %v264
    %4868 = vmatprep.subr.mxu0 %v268
    %4869 = vmatpush1.msra.mxu0 %v267
    %4870 = vmatprep.subr.mxu0 %v271
    %4871 = vmatpush1.msra.mxu0 %v270
    %4872 = vmatprep.subr.mxu0 0.0
    %4873 = vmatpush1.msra.mxu0 0.0
    %4874 = vmatprep.subr.mxu0 0.0
    %4875 = vmatpush1.msra.mxu0 0.0
    %4876 = vmatprep.subr.mxu0 0.0
    %4877 = vmatpush1.msra.mxu0 0.0
    %4878 = vmatprep.subr.mxu0 0.0
    %4879 = vmatpush1.msra.mxu0 0.0
    %4880 = vmatprep.subr.mxu0 0.0
    %4881 = vmatpush1.msra.mxu0 0.0
    %4882 = vmatprep.subr.mxu0 0.0
    %4883 = vmatpush1.msra.mxu0 0.0
    %4884 = vmatprep.subr.mxu0 0.0
    %4885 = vmatpush1.msra.mxu0 0.0
    %4886 = vmatprep.subr.mxu0 0.0
    %4887 = vmatpush1.msra.mxu0 0.0
    %4888 = vmatprep.subr.mxu0 0.0
    %4889 = vmatpush1.msra.mxu0 0.0
    %4890 = vmatprep.subr.mxu0 0.0
    %4891 = vmatpush1.msra.mxu0 0.0
    %4892 = vmatprep.subr.mxu0 0.0
    %4893 = vmatpush1.msra.mxu0 0.0
    %4894 = vmatprep.subr.mxu0 0.0
    %4895 = vmatpush1.msra.mxu0 0.0
    %4896 = vmatprep.subr.mxu0 0.0
    %4897 = vmatpush1.msra.mxu0 0.0
    %4898 = vmatprep.subr.mxu0 0.0
    %4899 = vmatpush1.msra.mxu0 0.0
    %4900 = vmatprep.subr.mxu0 0.0
    %4901 = vmatpush1.msra.mxu0 0.0
    %4902 = vmatprep.subr.mxu0 0.0
    %4903 = vmatpush1.msra.mxu0 0.0
    %4904 = vmatprep.mubr.f32.mxu0 0.0
    %4905 = vmatmul.mubr.f32.gmra.mrb[0].mxu0 %v4358
    %v4906 = vpop.f32.mrb[0].mxu0
    %v4907 = vadd.f32 %v2232, %v4906
    %v4908 = vpop.f32.mrb[0].mxu0
    %v4909 = vadd.f32 %v2236, %v4908
    %4910 = vdwg.mxu0
    %4911 = vmatprep.subr.mxu0 0.0
    %4912 = vmatpush1.msra.mxu0 %v227
    %4913 = vmatprep.subr.mxu0 0.0
    %4914 = vmatpush1.msra.mxu0 %v230
    %4915 = vmatprep.subr.mxu0 0.0
    %4916 = vmatpush1.msra.mxu0 %v233
    %4917 = vmatprep.subr.mxu0 0.0
    %4918 = vmatpush1.msra.mxu0 %v236
    %4919 = vmatprep.subr.mxu0 0.0
    %4920 = vmatpush1.msra.mxu0 %v239
    %4921 = vmatprep.subr.mxu0 0.0
    %4922 = vmatpush1.msra.mxu0 %v242
    %4923 = vmatprep.subr.mxu0 0.0
    %4924 = vmatpush1.msra.mxu0 %v245
    %4925 = vmatprep.subr.mxu0 0.0
    %4926 = vmatpush1.msra.mxu0 %v248
    %4927 = vmatprep.subr.mxu0 0.0
    %4928 = vmatpush1.msra.mxu0 %v251
    %4929 = vmatprep.subr.mxu0 0.0
    %4930 = vmatpush1.msra.mxu0 %v254
    %4931 = vmatprep.subr.mxu0 0.0
    %4932 = vmatpush1.msra.mxu0 %v257
    %4933 = vmatprep.subr.mxu0 0.0
    %4934 = vmatpush1.msra.mxu0 %v260
    %4935 = vmatprep.subr.mxu0 0.0
    %4936 = vmatpush1.msra.mxu0 %v263
    %4937 = vmatprep.subr.mxu0 0.0
    %4938 = vmatpush1.msra.mxu0 %v266
    %4939 = vmatprep.subr.mxu0 0.0
    %4940 = vmatpush1.msra.mxu0 %v269
    %4941 = vmatprep.subr.mxu0 0.0
    %4942 = vmatpush1.msra.mxu0 %v272
    %4943 = vmatprep.subr.mxu0 0.0
    %4944 = vmatpush1.msra.mxu0 0.0
    %4945 = vmatprep.subr.mxu0 0.0
    %4946 = vmatpush1.msra.mxu0 0.0
    %4947 = vmatprep.subr.mxu0 0.0
    %4948 = vmatpush1.msra.mxu0 0.0
    %4949 = vmatprep.subr.mxu0 0.0
    %4950 = vmatpush1.msra.mxu0 0.0
    %4951 = vmatprep.subr.mxu0 0.0
    %4952 = vmatpush1.msra.mxu0 0.0
    %4953 = vmatprep.subr.mxu0 0.0
    %4954 = vmatpush1.msra.mxu0 0.0
    %4955 = vmatprep.subr.mxu0 0.0
    %4956 = vmatpush1.msra.mxu0 0.0
    %4957 = vmatprep.subr.mxu0 0.0
    %4958 = vmatpush1.msra.mxu0 0.0
    %4959 = vmatprep.subr.mxu0 0.0
    %4960 = vmatpush1.msra.mxu0 0.0
    %4961 = vmatprep.subr.mxu0 0.0
    %4962 = vmatpush1.msra.mxu0 0.0
    %4963 = vmatprep.subr.mxu0 0.0
    %4964 = vmatpush1.msra.mxu0 0.0
    %4965 = vmatprep.subr.mxu0 0.0
    %4966 = vmatpush1.msra.mxu0 0.0
    %4967 = vmatprep.subr.mxu0 0.0
    %4968 = vmatpush1.msra.mxu0 0.0
    %4969 = vmatprep.subr.mxu0 0.0
    %4970 = vmatpush1.msra.mxu0 0.0
    %4971 = vmatprep.subr.mxu0 0.0
    %4972 = vmatpush1.msra.mxu0 0.0
    %4973 = vmatprep.subr.mxu0 0.0
    %4974 = vmatpush1.msra.mxu0 0.0
    %4975 = vmatprep.mubr.f32.mxu0 0.0
    %4976 = vmatmul.mubr.f32.gmra.mrb[0].mxu0 %v4358
    %v4977 = vpop.f32.mrb[0].mxu0
    %v4978 = vadd.f32 %v2240, %v4977
    %v4979 = vpop.f32.mrb[0].mxu0
    %4980 = vdwg.mxu0
    %v4981 = vadd.f32 %v4837, %v4907
    %v4982 = vxor.u32 %v4981, 2147483648
    %v4983 = vmul.f32 %v4982, 1.442695
    %v4984 = vpow.pop %v4983
    %v4985 = vadd.f32 %v4984, 1.0
    %v4986 = vrcp.pop %v4985
    %v4987 = vmul.f32 1.0, %v4986
    %v4988 = vadd.f32 %v4838, %v4909
    %v4989 = vxor.u32 %v4988, 2147483648
    %v4990 = vmul.f32 %v4989, 1.442695
    %v4991 = vpow.pop %v4990
    %v4992 = vadd.f32 %v4991, 1.0
    %v4993 = vrcp.pop %v4992
    %v4994 = vmul.f32 1.0, %v4993
    %v4995 = vmul.f32 %v4987, %v4978
    %v4996 = vadd.f32 %v4839, %v4995
    %v4997 = vtanh.pop %v4996
    %v4998 = vsub.f32 1.0, %v4994
    %v4999 = vmul.f32 %v4998, %v4997
    %v5000 = vmul.f32 %v4994, %v4358
    %v5001 = vadd.f32 %v4999, %v5000
    %5002 = vmatprep.subr.mxu0 0.0
    %5003 = vmatpush1.msra.mxu0 %v275
    %5004 = vmatprep.subr.mxu0 0.0
    %5005 = vmatpush1.msra.mxu0 %v276
    %5006 = vmatprep.subr.mxu0 0.0
    %5007 = vmatpush1.msra.mxu0 %v277
    %5008 = vmatprep.subr.mxu0 0.0
    %5009 = vmatpush1.msra.mxu0 %v278
    %5010 = vmatprep.subr.mxu0 0.0
    %5011 = vmatpush1.msra.mxu0 %v279
    %5012 = vmatprep.subr.mxu0 0.0
    %5013 = vmatpush1.msra.mxu0 %v280
    %5014 = vmatprep.subr.mxu0 0.0
    %5015 = vmatpush1.msra.mxu0 %v281
    %5016 = vmatprep.subr.mxu0 0.0
    %5017 = vmatpush1.msra.mxu0 %v282
    %5018 = vmatprep.subr.mxu0 0.0
    %5019 = vmatpush1.msra.mxu0 %v283
    %5020 = vmatprep.subr.mxu0 0.0
    %5021 = vmatpush1.msra.mxu0 %v284
    %5022 = vmatprep.subr.mxu0 0.0
    %5023 = vmatpush1.msra.mxu0 %v285
    %5024 = vmatprep.subr.mxu0 0.0
    %5025 = vmatpush1.msra.mxu0 %v286
    %5026 = vmatprep.subr.mxu0 0.0
    %5027 = vmatpush1.msra.mxu0 %v287
    %5028 = vmatprep.subr.mxu0 0.0
    %5029 = vmatpush1.msra.mxu0 %v288
    %5030 = vmatprep.subr.mxu0 0.0
    %5031 = vmatpush1.msra.mxu0 %v289
    %5032 = vmatprep.subr.mxu0 0.0
    %5033 = vmatpush1.msra.mxu0 %v290
    %5034 = vmatprep.subr.mxu0 0.0
    %5035 = vmatpush1.msra.mxu0 0.0
    %5036 = vmatprep.subr.mxu0 0.0
    %5037 = vmatpush1.msra.mxu0 0.0
    %5038 = vmatprep.subr.mxu0 0.0
    %5039 = vmatpush1.msra.mxu0 0.0
    %5040 = vmatprep.subr.mxu0 0.0
    %5041 = vmatpush1.msra.mxu0 0.0
    %5042 = vmatprep.subr.mxu0 0.0
    %5043 = vmatpush1.msra.mxu0 0.0
    %5044 = vmatprep.subr.mxu0 0.0
    %5045 = vmatpush1.msra.mxu0 0.0
    %5046 = vmatprep.subr.mxu0 0.0
    %5047 = vmatpush1.msra.mxu0 0.0
    %5048 = vmatprep.subr.mxu0 0.0
    %5049 = vmatpush1.msra.mxu0 0.0
    %5050 = vmatprep.subr.mxu0 0.0
    %5051 = vmatpush1.msra.mxu0 0.0
    %5052 = vmatprep.subr.mxu0 0.0
    %5053 = vmatpush1.msra.mxu0 0.0
    %5054 = vmatprep.subr.mxu0 0.0
    %5055 = vmatpush1.msra.mxu0 0.0
    %5056 = vmatprep.subr.mxu0 0.0
    %5057 = vmatpush1.msra.mxu0 0.0
    %5058 = vmatprep.subr.mxu0 0.0
    %5059 = vmatpush1.msra.mxu0 0.0
    %5060 = vmatprep.subr.mxu0 0.0
    %5061 = vmatpush1.msra.mxu0 0.0
    %5062 = vmatprep.subr.mxu0 0.0
    %5063 = vmatpush1.msra.mxu0 0.0
    %5064 = vmatprep.subr.mxu0 0.0
    %5065 = vmatpush1.msra.mxu0 0.0
    %5066 = vmatprep.mubr.f32.mxu0 0.0
    %5067 = vmatmul.mubr.f32.gmra.mrb[0].mxu0 %v5001
    %v5068 = vpop.f32.mrb[0].mxu0
    %v5069 = vadd.f32 %v2410, %v5068
    %v5070 = vpop.f32.mrb[0].mxu0
    %5071 = vdwg.mxu0
    %5072 = vmax.xlane.f32.xlu0 %v5069
    %v5073 = vpop.xlane.xlu0 %5072
    %vm5074 = vcmp.eq.f32.partialorder %v5069, %v5073
    %v5075 = vsel %vm5074, %v315, 128
    %v5076 = vand.u32 %v5075, 65535
    %v5077 = vshra.s32 %v5075, 16
    %v5078 = vcvt.s32.f32 %v5076
    %v5079 = vcvt.s32.f32 %v5077
    %5080 = vmin.xlane.f32.xlu0 %v5079
    %v5081 = vpop.xlane.xlu0 %5080
    %vm5082 = vcmp.eq.f32.partialorder %v5079, %v5081
    %v5083 = vsel %vm5082, %v5078, inf
    %5084 = vmin.xlane.f32.xlu0 %v5083
    %v5085 = vpop.xlane.xlu0 %5084
    %v5086 = vcvt.f32.s32 %v5085
    %v5087 = vcvt.f32.s32 %v5081
    %v5088 = vshll.u32 %v5087, 16
    %v5089 = vadd.s32 %v5088, %v5086
    %vm5090 = vcmp.eq.s32.totalorder %v315, %v5089
    %v5091 = vsel %vm5090, 1, 0
    %v5092 = vcvt.s32.f32 %v5091
    %v5093 = vsub.f32 %v5069, %v5073
    %v5094 = vmul.f32 %v5093, 1.442695
    %v5095 = vpow.pop %v5094
    %5096 = vadd.xlane.f32.xlu0 %v5095
    %v5097 = vpop.xlane.xlu0 %5096
    %v5098 = vlog2.pop %v5097
    %v5099 = vmul.f32 %v5098, 0.6931472
    %v5100 = vsub.f32 %v5093, %v5099
    %s5101 = scalar_lea.vmem [#allocation14], 40
    %5102 = vst [vmem:[%s5101] sm:$0xff] %v5100
    %5103 = vmatprep.subr.mxu0 0.0
    %5104 = vmatpush1.msra.mxu0 %v202
    %5105 = vmatprep.subr.mxu0 0.0
    %5106 = vmatpush1.msra.mxu0 %v203
    %5107 = vmatprep.subr.mxu0 0.0
    %5108 = vmatpush1.msra.mxu0 %v204
    %5109 = vmatprep.subr.mxu0 0.0
    %5110 = vmatpush1.msra.mxu0 %v205
    %5111 = vmatprep.subr.mxu0 0.0
    %5112 = vmatpush1.msra.mxu0 %v206
    %5113 = vmatprep.subr.mxu0 0.0
    %5114 = vmatpush1.msra.mxu0 %v207
    %5115 = vmatprep.subr.mxu0 0.0
    %5116 = vmatpush1.msra.mxu0 %v208
    %5117 = vmatprep.subr.mxu0 0.0
    %5118 = vmatpush1.msra.mxu0 %v209
    %5119 = vmatprep.subr.mxu0 0.0
    %5120 = vmatpush1.msra.mxu0 %v210
    %5121 = vmatprep.subr.mxu0 0.0
    %5122 = vmatpush1.msra.mxu0 %v211
    %5123 = vmatprep.subr.mxu0 0.0
    %5124 = vmatpush1.msra.mxu0 %v212
    %5125 = vmatprep.subr.mxu0 0.0
    %5126 = vmatpush1.msra.mxu0 %v213
    %5127 = vmatprep.subr.mxu0 0.0
    %5128 = vmatpush1.msra.mxu0 %v214
    %5129 = vmatprep.subr.mxu0 0.0
    %5130 = vmatpush1.msra.mxu0 %v215
    %5131 = vmatprep.subr.mxu0 0.0
    %5132 = vmatpush1.msra.mxu0 %v216
    %5133 = vmatprep.subr.mxu0 0.0
    %5134 = vmatpush1.msra.mxu0 %v217
    %5135 = vmatprep.subr.mxu0 0.0
    %5136 = vmatpush1.msra.mxu0 0.0
    %5137 = vmatprep.subr.mxu0 0.0
    %5138 = vmatpush1.msra.mxu0 0.0
    %5139 = vmatprep.subr.mxu0 0.0
    %5140 = vmatpush1.msra.mxu0 0.0
    %5141 = vmatprep.subr.mxu0 0.0
    %5142 = vmatpush1.msra.mxu0 0.0
    %5143 = vmatprep.subr.mxu0 0.0
    %5144 = vmatpush1.msra.mxu0 0.0
    %5145 = vmatprep.subr.mxu0 0.0
    %5146 = vmatpush1.msra.mxu0 0.0
    %5147 = vmatprep.subr.mxu0 0.0
    %5148 = vmatpush1.msra.mxu0 0.0
    %5149 = vmatprep.subr.mxu0 0.0
    %5150 = vmatpush1.msra.mxu0 0.0
    %5151 = vmatprep.subr.mxu0 0.0
    %5152 = vmatpush1.msra.mxu0 0.0
    %5153 = vmatprep.subr.mxu0 0.0
    %5154 = vmatpush1.msra.mxu0 0.0
    %5155 = vmatprep.subr.mxu0 0.0
    %5156 = vmatpush1.msra.mxu0 0.0
    %5157 = vmatprep.subr.mxu0 0.0
    %5158 = vmatpush1.msra.mxu0 0.0
    %5159 = vmatprep.subr.mxu0 0.0
    %5160 = vmatpush1.msra.mxu0 0.0
    %5161 = vmatprep.subr.mxu0 0.0
    %5162 = vmatpush1.msra.mxu0 0.0
    %5163 = vmatprep.subr.mxu0 0.0
    %5164 = vmatpush1.msra.mxu0 0.0
    %5165 = vmatprep.subr.mxu0 0.0
    %5166 = vmatpush1.msra.mxu0 0.0
    %5167 = vmatprep.mubr.f32.mxu0 0.0
    %5168 = vmatmul.mubr.f32.gmra.mrb[0].mxu0 %v5092
    %v5169 = vpop.f32.mrb[0].mxu0
    %v5170 = vadd.f32 0.0, %v5169
    %v5171 = vpop.f32.mrb[0].mxu0
    %5172 = vdwg.mxu0
    %5173 = vmatprep.subr.mxu0 0.0
    %5174 = vmatpush1.msra.mxu0 %v294
    %5175 = vmatprep.subr.mxu0 0.0
    %5176 = vmatpush1.msra.mxu0 %v295
    %5177 = vmatprep.subr.mxu0 0.0
    %5178 = vmatpush1.msra.mxu0 %v296
    %5179 = vmatprep.subr.mxu0 0.0
    %5180 = vmatpush1.msra.mxu0 %v297
    %5181 = vmatprep.subr.mxu0 0.0
    %5182 = vmatpush1.msra.mxu0 %v298
    %5183 = vmatprep.subr.mxu0 0.0
    %5184 = vmatpush1.msra.mxu0 %v299
    %5185 = vmatprep.subr.mxu0 0.0
    %5186 = vmatpush1.msra.mxu0 %v300
    %5187 = vmatprep.subr.mxu0 0.0
    %5188 = vmatpush1.msra.mxu0 %v301
    %5189 = vmatprep.subr.mxu0 0.0
    %5190 = vmatpush1.msra.mxu0 %v302
    %5191 = vmatprep.subr.mxu0 0.0
    %5192 = vmatpush1.msra.mxu0 %v303
    %5193 = vmatprep.subr.mxu0 0.0
    %5194 = vmatpush1.msra.mxu0 %v304
    %5195 = vmatprep.subr.mxu0 0.0
    %5196 = vmatpush1.msra.mxu0 %v305
    %5197 = vmatprep.subr.mxu0 0.0
    %5198 = vmatpush1.msra.mxu0 %v306
    %5199 = vmatprep.subr.mxu0 0.0
    %5200 = vmatpush1.msra.mxu0 %v307
    %5201 = vmatprep.subr.mxu0 0.0
    %5202 = vmatpush1.msra.mxu0 %v308
    %5203 = vmatprep.subr.mxu0 0.0
    %5204 = vmatpush1.msra.mxu0 %v309
    %5205 = vmatprep.subr.mxu0 0.0
    %5206 = vmatpush1.msra.mxu0 0.0
    %5207 = vmatprep.subr.mxu0 0.0
    %5208 = vmatpush1.msra.mxu0 0.0
    %5209 = vmatprep.subr.mxu0 0.0
    %5210 = vmatpush1.msra.mxu0 0.0
    %5211 = vmatprep.subr.mxu0 0.0
    %5212 = vmatpush1.msra.mxu0 0.0
    %5213 = vmatprep.subr.mxu0 0.0
    %5214 = vmatpush1.msra.mxu0 0.0
    %5215 = vmatprep.subr.mxu0 0.0
    %5216 = vmatpush1.msra.mxu0 0.0
    %5217 = vmatprep.subr.mxu0 0.0
    %5218 = vmatpush1.msra.mxu0 0.0
    %5219 = vmatprep.subr.mxu0 0.0
    %5220 = vmatpush1.msra.mxu0 0.0
    %5221 = vmatprep.subr.mxu0 0.0
    %5222 = vmatpush1.msra.mxu0 0.0
    %5223 = vmatprep.subr.mxu0 0.0
    %5224 = vmatpush1.msra.mxu0 0.0
    %5225 = vmatprep.subr.mxu0 0.0
    %5226 = vmatpush1.msra.mxu0 0.0
    %5227 = vmatprep.subr.mxu0 0.0
    %5228 = vmatpush1.msra.mxu0 0.0
    %5229 = vmatprep.subr.mxu0 0.0
    %5230 = vmatpush1.msra.mxu0 0.0
    %5231 = vmatprep.subr.mxu0 0.0
    %5232 = vmatpush1.msra.mxu0 0.0
    %5233 = vmatprep.subr.mxu0 0.0
    %5234 = vmatpush1.msra.mxu0 0.0
    %5235 = vmatprep.subr.mxu0 0.0
    %5236 = vmatpush1.msra.mxu0 0.0
    %5237 = vmatprep.mubr.f32.mxu0 0.0
    %5238 = vmatmul.mubr.f32.gmra.mrb[0].mxu0 %v5001
    %v5239 = vpop.f32.mrb[0].mxu0
    %v5240 = vadd.f32 0.0, %v5239
    %v5241 = vpop.f32.mrb[0].mxu0
    %5242 = vdwg.mxu0
    %v5244 = vsel %vm2064, %v5170, 0
    %5246 = vmatprep.subr.mxu0 0.0
    %5247 = vmatpush1.msra.mxu0 %v292
    %5248 = vmatprep.subr.mxu0 0.0
    %5249 = vmatpush1.msra.mxu0 %v293
    %5250 = vmatprep.subr.mxu0 0.0
    %5251 = vmatpush1.msra.mxu0 0.0
    %5252 = vmatprep.subr.mxu0 0.0
    %5253 = vmatpush1.msra.mxu0 0.0
    %5254 = vmatprep.subr.mxu0 0.0
    %5255 = vmatpush1.msra.mxu0 0.0
    %5256 = vmatprep.subr.mxu0 0.0
    %5257 = vmatpush1.msra.mxu0 0.0
    %5258 = vmatprep.subr.mxu0 0.0
    %5259 = vmatpush1.msra.mxu0 0.0
    %5260 = vmatprep.subr.mxu0 0.0
    %5261 = vmatpush1.msra.mxu0 0.0
    %5262 = vmatprep.subr.mxu0 0.0
    %5263 = vmatpush1.msra.mxu0 0.0
    %5264 = vmatprep.subr.mxu0 0.0
    %5265 = vmatpush1.msra.mxu0 0.0
    %5266 = vmatprep.subr.mxu0 0.0
    %5267 = vmatpush1.msra.mxu0 0.0
    %5268 = vmatprep.subr.mxu0 0.0
    %5269 = vmatpush1.msra.mxu0 0.0
    %5270 = vmatprep.subr.mxu0 0.0
    %5271 = vmatpush1.msra.mxu0 0.0
    %5272 = vmatprep.subr.mxu0 0.0
    %5273 = vmatpush1.msra.mxu0 0.0
    %5274 = vmatprep.subr.mxu0 0.0
    %5275 = vmatpush1.msra.mxu0 0.0
    %5276 = vmatprep.subr.mxu0 0.0
    %5277 = vmatpush1.msra.mxu0 0.0
    %5278 = vmatprep.subr.mxu0 0.0
    %5279 = vmatpush1.msra.mxu0 0.0
    %5280 = vmatprep.subr.mxu0 0.0
    %5281 = vmatpush1.msra.mxu0 0.0
    %5282 = vmatprep.subr.mxu0 0.0
    %5283 = vmatpush1.msra.mxu0 0.0
    %5284 = vmatprep.subr.mxu0 0.0
    %5285 = vmatpush1.msra.mxu0 0.0
    %5286 = vmatprep.subr.mxu0 0.0
    %5287 = vmatpush1.msra.mxu0 0.0
    %5288 = vmatprep.subr.mxu0 0.0
    %5289 = vmatpush1.msra.mxu0 0.0
    %5290 = vmatprep.subr.mxu0 0.0
    %5291 = vmatpush1.msra.mxu0 0.0
    %5292 = vmatprep.subr.mxu0 0.0
    %5293 = vmatpush1.msra.mxu0 0.0
    %5294 = vmatprep.subr.mxu0 0.0
    %5295 = vmatpush1.msra.mxu0 0.0
    %5296 = vmatprep.subr.mxu0 0.0
    %5297 = vmatpush1.msra.mxu0 0.0
    %5298 = vmatprep.subr.mxu0 0.0
    %5299 = vmatpush1.msra.mxu0 0.0
    %5300 = vmatprep.subr.mxu0 0.0
    %5301 = vmatpush1.msra.mxu0 0.0
    %5302 = vmatprep.subr.mxu0 0.0
    %5303 = vmatpush1.msra.mxu0 0.0
    %5304 = vmatprep.subr.mxu0 0.0
    %5305 = vmatpush1.msra.mxu0 0.0
    %5306 = vmatprep.subr.mxu0 0.0
    %5307 = vmatpush1.msra.mxu0 0.0
    %5308 = vmatprep.subr.mxu0 0.0
    %5309 = vmatpush1.msra.mxu0 0.0
    %5310 = vmatprep.mubr.f32.mxu0 0.0
    %5311 = vmatmul.mubr.f32.gmra.mrb[0].mxu0 %v5244
    %v5312 = vpop.f32.mrb[0].mxu0
    %v5313 = vadd.f32 %v5240, %v5312
    %v5314 = vpop.f32.mrb[0].mxu0
    %5315 = vdwg.mxu0
    %v5316 = vadd.f32 %v5313, %v2730
    %v5317 = vmax.f32 %v5316, 0.0
    %v5318 = vmul.f32 %v5317, %v2738
    %5319 = vadd.xlane.f32.xlu0 %v5318
    %v5320 = vpop.xlane.xlu0 %5319
    %v5321 = vadd.f32 %v5320, %v2747
    %v5322 = vxor.u32 %v5321, 2147483648
    %v5323 = vmul.f32 %v5322, 1.442695
    %v5324 = vpow.pop %v5323
    %v5325 = vadd.f32 %v5324, 1.0
    %v5326 = vrcp.pop %v5325
    %v5327 = vmul.f32 1.0, %v5326
    %vm5328 = vcmp.eq.s32.totalorder %v315, 5
    %5330 = vset.pattern.permute.xlu0 0
    %5331 = vperm.xlu0 %5330, %v5327
    %v5332 = vpop.permute.xlu0 %5331
    %v5334 = vsel %vm5328, %v5332, 0.0
    %v5335 = vadd.f32 %v4692, %v5334
    %v5336 = vmul.f32 %v5332, %v2049
    %v5337 = vmul.f32 %v5332, %v2053
    %v5338 = vmul.f32 %v5332, %v2057
    %5339 = vmatprep.subr.mxu0 %v219
    %5340 = vmatpush1.msra.mxu0 %v218
    %5341 = vmatprep.subr.mxu0 %v222
    %5342 = vmatpush1.msra.mxu0 %v221
    %5343 = vmatprep.subr.mxu0 0.0
    %5344 = vmatpush1.msra.mxu0 0.0
    %5345 = vmatprep.subr.mxu0 0.0
    %5346 = vmatpush1.msra.mxu0 0.0
    %5347 = vmatprep.subr.mxu0 0.0
    %5348 = vmatpush1.msra.mxu0 0.0
    %5349 = vmatprep.subr.mxu0 0.0
    %5350 = vmatpush1.msra.mxu0 0.0
    %5351 = vmatprep.subr.mxu0 0.0
    %5352 = vmatpush1.msra.mxu0 0.0
    %5353 = vmatprep.subr.mxu0 0.0
    %5354 = vmatpush1.msra.mxu0 0.0
    %5355 = vmatprep.subr.mxu0 0.0
    %5356 = vmatpush1.msra.mxu0 0.0
    %5357 = vmatprep.subr.mxu0 0.0
    %5358 = vmatpush1.msra.mxu0 0.0
    %5359 = vmatprep.subr.mxu0 0.0
    %5360 = vmatpush1.msra.mxu0 0.0
    %5361 = vmatprep.subr.mxu0 0.0
    %5362 = vmatpush1.msra.mxu0 0.0
    %5363 = vmatprep.subr.mxu0 0.0
    %5364 = vmatpush1.msra.mxu0 0.0
    %5365 = vmatprep.subr.mxu0 0.0
    %5366 = vmatpush1.msra.mxu0 0.0
    %5367 = vmatprep.subr.mxu0 0.0
    %5368 = vmatpush1.msra.mxu0 0.0
    %5369 = vmatprep.subr.mxu0 0.0
    %5370 = vmatpush1.msra.mxu0 0.0
    %5371 = vmatprep.subr.mxu0 0.0
    %5372 = vmatpush1.msra.mxu0 0.0
    %5373 = vmatprep.subr.mxu0 0.0
    %5374 = vmatpush1.msra.mxu0 0.0
    %5375 = vmatprep.subr.mxu0 0.0
    %5376 = vmatpush1.msra.mxu0 0.0
    %5377 = vmatprep.subr.mxu0 0.0
    %5378 = vmatpush1.msra.mxu0 0.0
    %5379 = vmatprep.subr.mxu0 0.0
    %5380 = vmatpush1.msra.mxu0 0.0
    %5381 = vmatprep.subr.mxu0 0.0
    %5382 = vmatpush1.msra.mxu0 0.0
    %5383 = vmatprep.subr.mxu0 0.0
    %5384 = vmatpush1.msra.mxu0 0.0
    %5385 = vmatprep.subr.mxu0 0.0
    %5386 = vmatpush1.msra.mxu0 0.0
    %5387 = vmatprep.subr.mxu0 0.0
    %5388 = vmatpush1.msra.mxu0 0.0
    %5389 = vmatprep.subr.mxu0 0.0
    %5390 = vmatpush1.msra.mxu0 0.0
    %5391 = vmatprep.subr.mxu0 0.0
    %5392 = vmatpush1.msra.mxu0 0.0
    %5393 = vmatprep.subr.mxu0 0.0
    %5394 = vmatpush1.msra.mxu0 0.0
    %5395 = vmatprep.subr.mxu0 0.0
    %5396 = vmatpush1.msra.mxu0 0.0
    %5397 = vmatprep.subr.mxu0 0.0
    %5398 = vmatpush1.msra.mxu0 0.0
    %5399 = vmatprep.subr.mxu0 0.0
    %5400 = vmatpush1.msra.mxu0 0.0
    %5401 = vmatprep.subr.mxu0 0.0
    %5402 = vmatpush1.msra.mxu0 0.0
    %5403 = vmatprep.mubr.f32.mxu0 0.0
    %5404 = vmatmul.mubr.f32.gmra.mrb[0].mxu0 %v5244
    %v5405 = vpop.f32.mrb[0].mxu0
    %v5406 = vadd.f32 %v5336, %v5405
    %v5407 = vpop.f32.mrb[0].mxu0
    %v5408 = vadd.f32 %v5337, %v5407
    %5409 = vdwg.mxu0
    %5410 = vmatprep.subr.mxu0 0.0
    %5411 = vmatpush1.msra.mxu0 %v220
    %5412 = vmatprep.subr.mxu0 0.0
    %5413 = vmatpush1.msra.mxu0 %v223
    %5414 = vmatprep.subr.mxu0 0.0
    %5415 = vmatpush1.msra.mxu0 0.0
    %5416 = vmatprep.subr.mxu0 0.0
    %5417 = vmatpush1.msra.mxu0 0.0
    %5418 = vmatprep.subr.mxu0 0.0
    %5419 = vmatpush1.msra.mxu0 0.0
    %5420 = vmatprep.subr.mxu0 0.0
    %5421 = vmatpush1.msra.mxu0 0.0
    %5422 = vmatprep.subr.mxu0 0.0
    %5423 = vmatpush1.msra.mxu0 0.0
    %5424 = vmatprep.subr.mxu0 0.0
    %5425 = vmatpush1.msra.mxu0 0.0
    %5426 = vmatprep.subr.mxu0 0.0
    %5427 = vmatpush1.msra.mxu0 0.0
    %5428 = vmatprep.subr.mxu0 0.0
    %5429 = vmatpush1.msra.mxu0 0.0
    %5430 = vmatprep.subr.mxu0 0.0
    %5431 = vmatpush1.msra.mxu0 0.0
    %5432 = vmatprep.subr.mxu0 0.0
    %5433 = vmatpush1.msra.mxu0 0.0
    %5434 = vmatprep.subr.mxu0 0.0
    %5435 = vmatpush1.msra.mxu0 0.0
    %5436 = vmatprep.subr.mxu0 0.0
    %5437 = vmatpush1.msra.mxu0 0.0
    %5438 = vmatprep.subr.mxu0 0.0
    %5439 = vmatpush1.msra.mxu0 0.0
    %5440 = vmatprep.subr.mxu0 0.0
    %5441 = vmatpush1.msra.mxu0 0.0
    %5442 = vmatprep.subr.mxu0 0.0
    %5443 = vmatpush1.msra.mxu0 0.0
    %5444 = vmatprep.subr.mxu0 0.0
    %5445 = vmatpush1.msra.mxu0 0.0
    %5446 = vmatprep.subr.mxu0 0.0
    %5447 = vmatpush1.msra.mxu0 0.0
    %5448 = vmatprep.subr.mxu0 0.0
    %5449 = vmatpush1.msra.mxu0 0.0
    %5450 = vmatprep.subr.mxu0 0.0
    %5451 = vmatpush1.msra.mxu0 0.0
    %5452 = vmatprep.subr.mxu0 0.0
    %5453 = vmatpush1.msra.mxu0 0.0
    %5454 = vmatprep.subr.mxu0 0.0
    %5455 = vmatpush1.msra.mxu0 0.0
    %5456 = vmatprep.subr.mxu0 0.0
    %5457 = vmatpush1.msra.mxu0 0.0
    %5458 = vmatprep.subr.mxu0 0.0
    %5459 = vmatpush1.msra.mxu0 0.0
    %5460 = vmatprep.subr.mxu0 0.0
    %5461 = vmatpush1.msra.mxu0 0.0
    %5462 = vmatprep.subr.mxu0 0.0
    %5463 = vmatpush1.msra.mxu0 0.0
    %5464 = vmatprep.subr.mxu0 0.0
    %5465 = vmatpush1.msra.mxu0 0.0
    %5466 = vmatprep.subr.mxu0 0.0
    %5467 = vmatpush1.msra.mxu0 0.0
    %5468 = vmatprep.subr.mxu0 0.0
    %5469 = vmatpush1.msra.mxu0 0.0
    %5470 = vmatprep.subr.mxu0 0.0
    %5471 = vmatpush1.msra.mxu0 0.0
    %5472 = vmatprep.subr.mxu0 0.0
    %5473 = vmatpush1.msra.mxu0 0.0
    %5474 = vmatprep.mubr.f32.mxu0 0.0
    %5475 = vmatmul.mubr.f32.gmra.mrb[0].mxu0 %v5244
    %v5476 = vpop.f32.mrb[0].mxu0
    %v5477 = vadd.f32 %v5338, %v5476
    %v5478 = vpop.f32.mrb[0].mxu0
    %5479 = vdwg.mxu0
    %v5480 = vadd.f32 %v5406, %v2213
    %v5481 = vadd.f32 %v5408, %v2217
    %v5482 = vadd.f32 %v5477, %v2221
    %5483 = vmatprep.subr.mxu0 %v226
    %5484 = vmatpush1.msra.mxu0 %v225
    %5485 = vmatprep.subr.mxu0 %v229
    %5486 = vmatpush1.msra.mxu0 %v228
    %5487 = vmatprep.subr.mxu0 %v232
    %5488 = vmatpush1.msra.mxu0 %v231
    %5489 = vmatprep.subr.mxu0 %v235
    %5490 = vmatpush1.msra.mxu0 %v234
    %5491 = vmatprep.subr.mxu0 %v238
    %5492 = vmatpush1.msra.mxu0 %v237
    %5493 = vmatprep.subr.mxu0 %v241
    %5494 = vmatpush1.msra.mxu0 %v240
    %5495 = vmatprep.subr.mxu0 %v244
    %5496 = vmatpush1.msra.mxu0 %v243
    %5497 = vmatprep.subr.mxu0 %v247
    %5498 = vmatpush1.msra.mxu0 %v246
    %5499 = vmatprep.subr.mxu0 %v250
    %5500 = vmatpush1.msra.mxu0 %v249
    %5501 = vmatprep.subr.mxu0 %v253
    %5502 = vmatpush1.msra.mxu0 %v252
    %5503 = vmatprep.subr.mxu0 %v256
    %5504 = vmatpush1.msra.mxu0 %v255
    %5505 = vmatprep.subr.mxu0 %v259
    %5506 = vmatpush1.msra.mxu0 %v258
    %5507 = vmatprep.subr.mxu0 %v262
    %5508 = vmatpush1.msra.mxu0 %v261
    %5509 = vmatprep.subr.mxu0 %v265
    %5510 = vmatpush1.msra.mxu0 %v264
    %5511 = vmatprep.subr.mxu0 %v268
    %5512 = vmatpush1.msra.mxu0 %v267
    %5513 = vmatprep.subr.mxu0 %v271
    %5514 = vmatpush1.msra.mxu0 %v270
    %5515 = vmatprep.subr.mxu0 0.0
    %5516 = vmatpush1.msra.mxu0 0.0
    %5517 = vmatprep.subr.mxu0 0.0
    %5518 = vmatpush1.msra.mxu0 0.0
    %5519 = vmatprep.subr.mxu0 0.0
    %5520 = vmatpush1.msra.mxu0 0.0
    %5521 = vmatprep.subr.mxu0 0.0
    %5522 = vmatpush1.msra.mxu0 0.0
    %5523 = vmatprep.subr.mxu0 0.0
    %5524 = vmatpush1.msra.mxu0 0.0
    %5525 = vmatprep.subr.mxu0 0.0
    %5526 = vmatpush1.msra.mxu0 0.0
    %5527 = vmatprep.subr.mxu0 0.0
    %5528 = vmatpush1.msra.mxu0 0.0
    %5529 = vmatprep.subr.mxu0 0.0
    %5530 = vmatpush1.msra.mxu0 0.0
    %5531 = vmatprep.subr.mxu0 0.0
    %5532 = vmatpush1.msra.mxu0 0.0
    %5533 = vmatprep.subr.mxu0 0.0
    %5534 = vmatpush1.msra.mxu0 0.0
    %5535 = vmatprep.subr.mxu0 0.0
    %5536 = vmatpush1.msra.mxu0 0.0
    %5537 = vmatprep.subr.mxu0 0.0
    %5538 = vmatpush1.msra.mxu0 0.0
    %5539 = vmatprep.subr.mxu0 0.0
    %5540 = vmatpush1.msra.mxu0 0.0
    %5541 = vmatprep.subr.mxu0 0.0
    %5542 = vmatpush1.msra.mxu0 0.0
    %5543 = vmatprep.subr.mxu0 0.0
    %5544 = vmatpush1.msra.mxu0 0.0
    %5545 = vmatprep.subr.mxu0 0.0
    %5546 = vmatpush1.msra.mxu0 0.0
    %5547 = vmatprep.mubr.f32.mxu0 0.0
    %5548 = vmatmul.mubr.f32.gmra.mrb[0].mxu0 %v5001
    %v5549 = vpop.f32.mrb[0].mxu0
    %v5550 = vadd.f32 %v2232, %v5549
    %v5551 = vpop.f32.mrb[0].mxu0
    %v5552 = vadd.f32 %v2236, %v5551
    %5553 = vdwg.mxu0
    %5554 = vmatprep.subr.mxu0 0.0
    %5555 = vmatpush1.msra.mxu0 %v227
    %5556 = vmatprep.subr.mxu0 0.0
    %5557 = vmatpush1.msra.mxu0 %v230
    %5558 = vmatprep.subr.mxu0 0.0
    %5559 = vmatpush1.msra.mxu0 %v233
    %5560 = vmatprep.subr.mxu0 0.0
    %5561 = vmatpush1.msra.mxu0 %v236
    %5562 = vmatprep.subr.mxu0 0.0
    %5563 = vmatpush1.msra.mxu0 %v239
    %5564 = vmatprep.subr.mxu0 0.0
    %5565 = vmatpush1.msra.mxu0 %v242
    %5566 = vmatprep.subr.mxu0 0.0
    %5567 = vmatpush1.msra.mxu0 %v245
    %5568 = vmatprep.subr.mxu0 0.0
    %5569 = vmatpush1.msra.mxu0 %v248
    %5570 = vmatprep.subr.mxu0 0.0
    %5571 = vmatpush1.msra.mxu0 %v251
    %5572 = vmatprep.subr.mxu0 0.0
    %5573 = vmatpush1.msra.mxu0 %v254
    %5574 = vmatprep.subr.mxu0 0.0
    %5575 = vmatpush1.msra.mxu0 %v257
    %5576 = vmatprep.subr.mxu0 0.0
    %5577 = vmatpush1.msra.mxu0 %v260
    %5578 = vmatprep.subr.mxu0 0.0
    %5579 = vmatpush1.msra.mxu0 %v263
    %5580 = vmatprep.subr.mxu0 0.0
    %5581 = vmatpush1.msra.mxu0 %v266
    %5582 = vmatprep.subr.mxu0 0.0
    %5583 = vmatpush1.msra.mxu0 %v269
    %5584 = vmatprep.subr.mxu0 0.0
    %5585 = vmatpush1.msra.mxu0 %v272
    %5586 = vmatprep.subr.mxu0 0.0
    %5587 = vmatpush1.msra.mxu0 0.0
    %5588 = vmatprep.subr.mxu0 0.0
    %5589 = vmatpush1.msra.mxu0 0.0
    %5590 = vmatprep.subr.mxu0 0.0
    %5591 = vmatpush1.msra.mxu0 0.0
    %5592 = vmatprep.subr.mxu0 0.0
    %5593 = vmatpush1.msra.mxu0 0.0
    %5594 = vmatprep.subr.mxu0 0.0
    %5595 = vmatpush1.msra.mxu0 0.0
    %5596 = vmatprep.subr.mxu0 0.0
    %5597 = vmatpush1.msra.mxu0 0.0
    %5598 = vmatprep.subr.mxu0 0.0
    %5599 = vmatpush1.msra.mxu0 0.0
    %5600 = vmatprep.subr.mxu0 0.0
    %5601 = vmatpush1.msra.mxu0 0.0
    %5602 = vmatprep.subr.mxu0 0.0
    %5603 = vmatpush1.msra.mxu0 0.0
    %5604 = vmatprep.subr.mxu0 0.0
    %5605 = vmatpush1.msra.mxu0 0.0
    %5606 = vmatprep.subr.mxu0 0.0
    %5607 = vmatpush1.msra.mxu0 0.0
    %5608 = vmatprep.subr.mxu0 0.0
    %5609 = vmatpush1.msra.mxu0 0.0
    %5610 = vmatprep.subr.mxu0 0.0
    %5611 = vmatpush1.msra.mxu0 0.0
    %5612 = vmatprep.subr.mxu0 0.0
    %5613 = vmatpush1.msra.mxu0 0.0
    %5614 = vmatprep.subr.mxu0 0.0
    %5615 = vmatpush1.msra.mxu0 0.0
    %5616 = vmatprep.subr.mxu0 0.0
    %5617 = vmatpush1.msra.mxu0 0.0
    %5618 = vmatprep.mubr.f32.mxu0 0.0
    %5619 = vmatmul.mubr.f32.gmra.mrb[0].mxu0 %v5001
    %v5620 = vpop.f32.mrb[0].mxu0
    %v5621 = vadd.f32 %v2240, %v5620
    %v5622 = vpop.f32.mrb[0].mxu0
    %5623 = vdwg.mxu0
    %v5624 = vadd.f32 %v5480, %v5550
    %v5625 = vxor.u32 %v5624, 2147483648
    %v5626 = vmul.f32 %v5625, 1.442695
    %v5627 = vpow.pop %v5626
    %v5628 = vadd.f32 %v5627, 1.0
    %v5629 = vrcp.pop %v5628
    %v5630 = vmul.f32 1.0, %v5629
    %v5631 = vadd.f32 %v5481, %v5552
    %v5632 = vxor.u32 %v5631, 2147483648
    %v5633 = vmul.f32 %v5632, 1.442695
    %v5634 = vpow.pop %v5633
    %v5635 = vadd.f32 %v5634, 1.0
    %v5636 = vrcp.pop %v5635
    %v5637 = vmul.f32 1.0, %v5636
    %v5638 = vmul.f32 %v5630, %v5621
    %v5639 = vadd.f32 %v5482, %v5638
    %v5640 = vtanh.pop %v5639
    %v5641 = vsub.f32 1.0, %v5637
    %v5642 = vmul.f32 %v5641, %v5640
    %v5643 = vmul.f32 %v5637, %v5001
    %v5644 = vadd.f32 %v5642, %v5643
    %5645 = vmatprep.subr.mxu0 0.0
    %5646 = vmatpush1.msra.mxu0 %v275
    %5647 = vmatprep.subr.mxu0 0.0
    %5648 = vmatpush1.msra.mxu0 %v276
    %5649 = vmatprep.subr.mxu0 0.0
    %5650 = vmatpush1.msra.mxu0 %v277
    %5651 = vmatprep.subr.mxu0 0.0
    %5652 = vmatpush1.msra.mxu0 %v278
    %5653 = vmatprep.subr.mxu0 0.0
    %5654 = vmatpush1.msra.mxu0 %v279
    %5655 = vmatprep.subr.mxu0 0.0
    %5656 = vmatpush1.msra.mxu0 %v280
    %5657 = vmatprep.subr.mxu0 0.0
    %5658 = vmatpush1.msra.mxu0 %v281
    %5659 = vmatprep.subr.mxu0 0.0
    %5660 = vmatpush1.msra.mxu0 %v282
    %5661 = vmatprep.subr.mxu0 0.0
    %5662 = vmatpush1.msra.mxu0 %v283
    %5663 = vmatprep.subr.mxu0 0.0
    %5664 = vmatpush1.msra.mxu0 %v284
    %5665 = vmatprep.subr.mxu0 0.0
    %5666 = vmatpush1.msra.mxu0 %v285
    %5667 = vmatprep.subr.mxu0 0.0
    %5668 = vmatpush1.msra.mxu0 %v286
    %5669 = vmatprep.subr.mxu0 0.0
    %5670 = vmatpush1.msra.mxu0 %v287
    %5671 = vmatprep.subr.mxu0 0.0
    %5672 = vmatpush1.msra.mxu0 %v288
    %5673 = vmatprep.subr.mxu0 0.0
    %5674 = vmatpush1.msra.mxu0 %v289
    %5675 = vmatprep.subr.mxu0 0.0
    %5676 = vmatpush1.msra.mxu0 %v290
    %5677 = vmatprep.subr.mxu0 0.0
    %5678 = vmatpush1.msra.mxu0 0.0
    %5679 = vmatprep.subr.mxu0 0.0
    %5680 = vmatpush1.msra.mxu0 0.0
    %5681 = vmatprep.subr.mxu0 0.0
    %5682 = vmatpush1.msra.mxu0 0.0
    %5683 = vmatprep.subr.mxu0 0.0
    %5684 = vmatpush1.msra.mxu0 0.0
    %5685 = vmatprep.subr.mxu0 0.0
    %5686 = vmatpush1.msra.mxu0 0.0
    %5687 = vmatprep.subr.mxu0 0.0
    %5688 = vmatpush1.msra.mxu0 0.0
    %5689 = vmatprep.subr.mxu0 0.0
    %5690 = vmatpush1.msra.mxu0 0.0
    %5691 = vmatprep.subr.mxu0 0.0
    %5692 = vmatpush1.msra.mxu0 0.0
    %5693 = vmatprep.subr.mxu0 0.0
    %5694 = vmatpush1.msra.mxu0 0.0
    %5695 = vmatprep.subr.mxu0 0.0
    %5696 = vmatpush1.msra.mxu0 0.0
    %5697 = vmatprep.subr.mxu0 0.0
    %5698 = vmatpush1.msra.mxu0 0.0
    %5699 = vmatprep.subr.mxu0 0.0
    %5700 = vmatpush1.msra.mxu0 0.0
    %5701 = vmatprep.subr.mxu0 0.0
    %5702 = vmatpush1.msra.mxu0 0.0
    %5703 = vmatprep.subr.mxu0 0.0
    %5704 = vmatpush1.msra.mxu0 0.0
    %5705 = vmatprep.subr.mxu0 0.0
    %5706 = vmatpush1.msra.mxu0 0.0
    %5707 = vmatprep.subr.mxu0 0.0
    %5708 = vmatpush1.msra.mxu0 0.0
    %5709 = vmatprep.mubr.f32.mxu0 0.0
    %5710 = vmatmul.mubr.f32.gmra.mrb[0].mxu0 %v5644
    %v5711 = vpop.f32.mrb[0].mxu0
    %v5712 = vadd.f32 %v2410, %v5711
    %v5713 = vpop.f32.mrb[0].mxu0
    %5714 = vdwg.mxu0
    %5715 = vmax.xlane.f32.xlu0 %v5712
    %v5716 = vpop.xlane.xlu0 %5715
    %vm5717 = vcmp.eq.f32.partialorder %v5712, %v5716
    %v5718 = vsel %vm5717, %v315, 128
    %v5719 = vand.u32 %v5718, 65535
    %v5720 = vshra.s32 %v5718, 16
    %v5721 = vcvt.s32.f32 %v5719
    %v5722 = vcvt.s32.f32 %v5720
    %5723 = vmin.xlane.f32.xlu0 %v5722
    %v5724 = vpop.xlane.xlu0 %5723
    %vm5725 = vcmp.eq.f32.partialorder %v5722, %v5724
    %v5726 = vsel %vm5725, %v5721, inf
    %5727 = vmin.xlane.f32.xlu0 %v5726
    %v5728 = vpop.xlane.xlu0 %5727
    %v5729 = vcvt.f32.s32 %v5728
    %v5730 = vcvt.f32.s32 %v5724
    %v5731 = vshll.u32 %v5730, 16
    %v5732 = vadd.s32 %v5731, %v5729
    %vm5733 = vcmp.eq.s32.totalorder %v315, %v5732
    %v5734 = vsel %vm5733, 1, 0
    %v5735 = vcvt.s32.f32 %v5734
    %v5736 = vsub.f32 %v5712, %v5716
    %v5737 = vmul.f32 %v5736, 1.442695
    %v5738 = vpow.pop %v5737
    %5739 = vadd.xlane.f32.xlu0 %v5738
    %v5740 = vpop.xlane.xlu0 %5739
    %v5741 = vlog2.pop %v5740
    %v5742 = vmul.f32 %v5741, 0.6931472
    %v5743 = vsub.f32 %v5736, %v5742
    %s5744 = scalar_lea.vmem [#allocation14], 48
    %5745 = vst [vmem:[%s5744] sm:$0xff] %v5743
    %5746 = vmatprep.subr.mxu0 0.0
    %5747 = vmatpush1.msra.mxu0 %v202
    %5748 = vmatprep.subr.mxu0 0.0
    %5749 = vmatpush1.msra.mxu0 %v203
    %5750 = vmatprep.subr.mxu0 0.0
    %5751 = vmatpush1.msra.mxu0 %v204
    %5752 = vmatprep.subr.mxu0 0.0
    %5753 = vmatpush1.msra.mxu0 %v205
    %5754 = vmatprep.subr.mxu0 0.0
    %5755 = vmatpush1.msra.mxu0 %v206
    %5756 = vmatprep.subr.mxu0 0.0
    %5757 = vmatpush1.msra.mxu0 %v207
    %5758 = vmatprep.subr.mxu0 0.0
    %5759 = vmatpush1.msra.mxu0 %v208
    %5760 = vmatprep.subr.mxu0 0.0
    %5761 = vmatpush1.msra.mxu0 %v209
    %5762 = vmatprep.subr.mxu0 0.0
    %5763 = vmatpush1.msra.mxu0 %v210
    %5764 = vmatprep.subr.mxu0 0.0
    %5765 = vmatpush1.msra.mxu0 %v211
    %5766 = vmatprep.subr.mxu0 0.0
    %5767 = vmatpush1.msra.mxu0 %v212
    %5768 = vmatprep.subr.mxu0 0.0
    %5769 = vmatpush1.msra.mxu0 %v213
    %5770 = vmatprep.subr.mxu0 0.0
    %5771 = vmatpush1.msra.mxu0 %v214
    %5772 = vmatprep.subr.mxu0 0.0
    %5773 = vmatpush1.msra.mxu0 %v215
    %5774 = vmatprep.subr.mxu0 0.0
    %5775 = vmatpush1.msra.mxu0 %v216
    %5776 = vmatprep.subr.mxu0 0.0
    %5777 = vmatpush1.msra.mxu0 %v217
    %5778 = vmatprep.subr.mxu0 0.0
    %5779 = vmatpush1.msra.mxu0 0.0
    %5780 = vmatprep.subr.mxu0 0.0
    %5781 = vmatpush1.msra.mxu0 0.0
    %5782 = vmatprep.subr.mxu0 0.0
    %5783 = vmatpush1.msra.mxu0 0.0
    %5784 = vmatprep.subr.mxu0 0.0
    %5785 = vmatpush1.msra.mxu0 0.0
    %5786 = vmatprep.subr.mxu0 0.0
    %5787 = vmatpush1.msra.mxu0 0.0
    %5788 = vmatprep.subr.mxu0 0.0
    %5789 = vmatpush1.msra.mxu0 0.0
    %5790 = vmatprep.subr.mxu0 0.0
    %5791 = vmatpush1.msra.mxu0 0.0
    %5792 = vmatprep.subr.mxu0 0.0
    %5793 = vmatpush1.msra.mxu0 0.0
    %5794 = vmatprep.subr.mxu0 0.0
    %5795 = vmatpush1.msra.mxu0 0.0
    %5796 = vmatprep.subr.mxu0 0.0
    %5797 = vmatpush1.msra.mxu0 0.0
    %5798 = vmatprep.subr.mxu0 0.0
    %5799 = vmatpush1.msra.mxu0 0.0
    %5800 = vmatprep.subr.mxu0 0.0
    %5801 = vmatpush1.msra.mxu0 0.0
    %5802 = vmatprep.subr.mxu0 0.0
    %5803 = vmatpush1.msra.mxu0 0.0
    %5804 = vmatprep.subr.mxu0 0.0
    %5805 = vmatpush1.msra.mxu0 0.0
    %5806 = vmatprep.subr.mxu0 0.0
    %5807 = vmatpush1.msra.mxu0 0.0
    %5808 = vmatprep.subr.mxu0 0.0
    %5809 = vmatpush1.msra.mxu0 0.0
    %5810 = vmatprep.mubr.f32.mxu0 0.0
    %5811 = vmatmul.mubr.f32.gmra.mrb[0].mxu0 %v5735
    %v5812 = vpop.f32.mrb[0].mxu0
    %v5813 = vadd.f32 0.0, %v5812
    %v5814 = vpop.f32.mrb[0].mxu0
    %5815 = vdwg.mxu0
    %5816 = vmatprep.subr.mxu0 0.0
    %5817 = vmatpush1.msra.mxu0 %v294
    %5818 = vmatprep.subr.mxu0 0.0
    %5819 = vmatpush1.msra.mxu0 %v295
    %5820 = vmatprep.subr.mxu0 0.0
    %5821 = vmatpush1.msra.mxu0 %v296
    %5822 = vmatprep.subr.mxu0 0.0
    %5823 = vmatpush1.msra.mxu0 %v297
    %5824 = vmatprep.subr.mxu0 0.0
    %5825 = vmatpush1.msra.mxu0 %v298
    %5826 = vmatprep.subr.mxu0 0.0
    %5827 = vmatpush1.msra.mxu0 %v299
    %5828 = vmatprep.subr.mxu0 0.0
    %5829 = vmatpush1.msra.mxu0 %v300
    %5830 = vmatprep.subr.mxu0 0.0
    %5831 = vmatpush1.msra.mxu0 %v301
    %5832 = vmatprep.subr.mxu0 0.0
    %5833 = vmatpush1.msra.mxu0 %v302
    %5834 = vmatprep.subr.mxu0 0.0
    %5835 = vmatpush1.msra.mxu0 %v303
    %5836 = vmatprep.subr.mxu0 0.0
    %5837 = vmatpush1.msra.mxu0 %v304
    %5838 = vmatprep.subr.mxu0 0.0
    %5839 = vmatpush1.msra.mxu0 %v305
    %5840 = vmatprep.subr.mxu0 0.0
    %5841 = vmatpush1.msra.mxu0 %v306
    %5842 = vmatprep.subr.mxu0 0.0
    %5843 = vmatpush1.msra.mxu0 %v307
    %5844 = vmatprep.subr.mxu0 0.0
    %5845 = vmatpush1.msra.mxu0 %v308
    %5846 = vmatprep.subr.mxu0 0.0
    %5847 = vmatpush1.msra.mxu0 %v309
    %5848 = vmatprep.subr.mxu0 0.0
    %5849 = vmatpush1.msra.mxu0 0.0
    %5850 = vmatprep.subr.mxu0 0.0
    %5851 = vmatpush1.msra.mxu0 0.0
    %5852 = vmatprep.subr.mxu0 0.0
    %5853 = vmatpush1.msra.mxu0 0.0
    %5854 = vmatprep.subr.mxu0 0.0
    %5855 = vmatpush1.msra.mxu0 0.0
    %5856 = vmatprep.subr.mxu0 0.0
    %5857 = vmatpush1.msra.mxu0 0.0
    %5858 = vmatprep.subr.mxu0 0.0
    %5859 = vmatpush1.msra.mxu0 0.0
    %5860 = vmatprep.subr.mxu0 0.0
    %5861 = vmatpush1.msra.mxu0 0.0
    %5862 = vmatprep.subr.mxu0 0.0
    %5863 = vmatpush1.msra.mxu0 0.0
    %5864 = vmatprep.subr.mxu0 0.0
    %5865 = vmatpush1.msra.mxu0 0.0
    %5866 = vmatprep.subr.mxu0 0.0
    %5867 = vmatpush1.msra.mxu0 0.0
    %5868 = vmatprep.subr.mxu0 0.0
    %5869 = vmatpush1.msra.mxu0 0.0
    %5870 = vmatprep.subr.mxu0 0.0
    %5871 = vmatpush1.msra.mxu0 0.0
    %5872 = vmatprep.subr.mxu0 0.0
    %5873 = vmatpush1.msra.mxu0 0.0
    %5874 = vmatprep.subr.mxu0 0.0
    %5875 = vmatpush1.msra.mxu0 0.0
    %5876 = vmatprep.subr.mxu0 0.0
    %5877 = vmatpush1.msra.mxu0 0.0
    %5878 = vmatprep.subr.mxu0 0.0
    %5879 = vmatpush1.msra.mxu0 0.0
    %5880 = vmatprep.mubr.f32.mxu0 0.0
    %5881 = vmatmul.mubr.f32.gmra.mrb[0].mxu0 %v5644
    %v5882 = vpop.f32.mrb[0].mxu0
    %v5883 = vadd.f32 0.0, %v5882
    %v5884 = vpop.f32.mrb[0].mxu0
    %5885 = vdwg.mxu0
    %v5887 = vsel %vm2064, %v5813, 0
    %5889 = vmatprep.subr.mxu0 0.0
    %5890 = vmatpush1.msra.mxu0 %v292
    %5891 = vmatprep.subr.mxu0 0.0
    %5892 = vmatpush1.msra.mxu0 %v293
    %5893 = vmatprep.subr.mxu0 0.0
    %5894 = vmatpush1.msra.mxu0 0.0
    %5895 = vmatprep.subr.mxu0 0.0
    %5896 = vmatpush1.msra.mxu0 0.0
    %5897 = vmatprep.subr.mxu0 0.0
    %5898 = vmatpush1.msra.mxu0 0.0
    %5899 = vmatprep.subr.mxu0 0.0
    %5900 = vmatpush1.msra.mxu0 0.0
    %5901 = vmatprep.subr.mxu0 0.0
    %5902 = vmatpush1.msra.mxu0 0.0
    %5903 = vmatprep.subr.mxu0 0.0
    %5904 = vmatpush1.msra.mxu0 0.0
    %5905 = vmatprep.subr.mxu0 0.0
    %5906 = vmatpush1.msra.mxu0 0.0
    %5907 = vmatprep.subr.mxu0 0.0
    %5908 = vmatpush1.msra.mxu0 0.0
    %5909 = vmatprep.subr.mxu0 0.0
    %5910 = vmatpush1.msra.mxu0 0.0
    %5911 = vmatprep.subr.mxu0 0.0
    %5912 = vmatpush1.msra.mxu0 0.0
    %5913 = vmatprep.subr.mxu0 0.0
    %5914 = vmatpush1.msra.mxu0 0.0
    %5915 = vmatprep.subr.mxu0 0.0
    %5916 = vmatpush1.msra.mxu0 0.0
    %5917 = vmatprep.subr.mxu0 0.0
    %5918 = vmatpush1.msra.mxu0 0.0
    %5919 = vmatprep.subr.mxu0 0.0
    %5920 = vmatpush1.msra.mxu0 0.0
    %5921 = vmatprep.subr.mxu0 0.0
    %5922 = vmatpush1.msra.mxu0 0.0
    %5923 = vmatprep.subr.mxu0 0.0
    %5924 = vmatpush1.msra.mxu0 0.0
    %5925 = vmatprep.subr.mxu0 0.0
    %5926 = vmatpush1.msra.mxu0 0.0
    %5927 = vmatprep.subr.mxu0 0.0
    %5928 = vmatpush1.msra.mxu0 0.0
    %5929 = vmatprep.subr.mxu0 0.0
    %5930 = vmatpush1.msra.mxu0 0.0
    %5931 = vmatprep.subr.mxu0 0.0
    %5932 = vmatpush1.msra.mxu0 0.0
    %5933 = vmatprep.subr.mxu0 0.0
    %5934 = vmatpush1.msra.mxu0 0.0
    %5935 = vmatprep.subr.mxu0 0.0
    %5936 = vmatpush1.msra.mxu0 0.0
    %5937 = vmatprep.subr.mxu0 0.0
    %5938 = vmatpush1.msra.mxu0 0.0
    %5939 = vmatprep.subr.mxu0 0.0
    %5940 = vmatpush1.msra.mxu0 0.0
    %5941 = vmatprep.subr.mxu0 0.0
    %5942 = vmatpush1.msra.mxu0 0.0
    %5943 = vmatprep.subr.mxu0 0.0
    %5944 = vmatpush1.msra.mxu0 0.0
    %5945 = vmatprep.subr.mxu0 0.0
    %5946 = vmatpush1.msra.mxu0 0.0
    %5947 = vmatprep.subr.mxu0 0.0
    %5948 = vmatpush1.msra.mxu0 0.0
    %5949 = vmatprep.subr.mxu0 0.0
    %5950 = vmatpush1.msra.mxu0 0.0
    %5951 = vmatprep.subr.mxu0 0.0
    %5952 = vmatpush1.msra.mxu0 0.0
    %5953 = vmatprep.mubr.f32.mxu0 0.0
    %5954 = vmatmul.mubr.f32.gmra.mrb[0].mxu0 %v5887
    %v5955 = vpop.f32.mrb[0].mxu0
    %v5956 = vadd.f32 %v5883, %v5955
    %v5957 = vpop.f32.mrb[0].mxu0
    %5958 = vdwg.mxu0
    %v5959 = vadd.f32 %v5956, %v2730
    %v5960 = vmax.f32 %v5959, 0.0
    %v5961 = vmul.f32 %v5960, %v2738
    %5962 = vadd.xlane.f32.xlu0 %v5961
    %v5963 = vpop.xlane.xlu0 %5962
    %v5964 = vadd.f32 %v5963, %v2747
    %v5965 = vxor.u32 %v5964, 2147483648
    %v5966 = vmul.f32 %v5965, 1.442695
    %v5967 = vpow.pop %v5966
    %v5968 = vadd.f32 %v5967, 1.0
    %v5969 = vrcp.pop %v5968
    %v5970 = vmul.f32 1.0, %v5969
    %vm5971 = vcmp.eq.s32.totalorder %v315, 6
    %5973 = vset.pattern.permute.xlu0 0
    %5974 = vperm.xlu0 %5973, %v5970
    %v5975 = vpop.permute.xlu0 %5974
    %v5977 = vsel %vm5971, %v5975, 0.0
    %v5978 = vadd.f32 %v5335, %v5977
    %v5979 = vmul.f32 %v5975, %v2049
    %v5980 = vmul.f32 %v5975, %v2053
    %v5981 = vmul.f32 %v5975, %v2057
    %5982 = vmatprep.subr.mxu0 %v219
    %5983 = vmatpush1.msra.mxu0 %v218
    %5984 = vmatprep.subr.mxu0 %v222
    %5985 = vmatpush1.msra.mxu0 %v221
    %5986 = vmatprep.subr.mxu0 0.0
    %5987 = vmatpush1.msra.mxu0 0.0
    %5988 = vmatprep.subr.mxu0 0.0
    %5989 = vmatpush1.msra.mxu0 0.0
    %5990 = vmatprep.subr.mxu0 0.0
    %5991 = vmatpush1.msra.mxu0 0.0
    %5992 = vmatprep.subr.mxu0 0.0
    %5993 = vmatpush1.msra.mxu0 0.0
    %5994 = vmatprep.subr.mxu0 0.0
    %5995 = vmatpush1.msra.mxu0 0.0
    %5996 = vmatprep.subr.mxu0 0.0
    %5997 = vmatpush1.msra.mxu0 0.0
    %5998 = vmatprep.subr.mxu0 0.0
    %5999 = vmatpush1.msra.mxu0 0.0
    %6000 = vmatprep.subr.mxu0 0.0
    %6001 = vmatpush1.msra.mxu0 0.0
    %6002 = vmatprep.subr.mxu0 0.0
    %6003 = vmatpush1.msra.mxu0 0.0
    %6004 = vmatprep.subr.mxu0 0.0
    %6005 = vmatpush1.msra.mxu0 0.0
    %6006 = vmatprep.subr.mxu0 0.0
    %6007 = vmatpush1.msra.mxu0 0.0
    %6008 = vmatprep.subr.mxu0 0.0
    %6009 = vmatpush1.msra.mxu0 0.0
    %6010 = vmatprep.subr.mxu0 0.0
    %6011 = vmatpush1.msra.mxu0 0.0
    %6012 = vmatprep.subr.mxu0 0.0
    %6013 = vmatpush1.msra.mxu0 0.0
    %6014 = vmatprep.subr.mxu0 0.0
    %6015 = vmatpush1.msra.mxu0 0.0
    %6016 = vmatprep.subr.mxu0 0.0
    %6017 = vmatpush1.msra.mxu0 0.0
    %6018 = vmatprep.subr.mxu0 0.0
    %6019 = vmatpush1.msra.mxu0 0.0
    %6020 = vmatprep.subr.mxu0 0.0
    %6021 = vmatpush1.msra.mxu0 0.0
    %6022 = vmatprep.subr.mxu0 0.0
    %6023 = vmatpush1.msra.mxu0 0.0
    %6024 = vmatprep.subr.mxu0 0.0
    %6025 = vmatpush1.msra.mxu0 0.0
    %6026 = vmatprep.subr.mxu0 0.0
    %6027 = vmatpush1.msra.mxu0 0.0
    %6028 = vmatprep.subr.mxu0 0.0
    %6029 = vmatpush1.msra.mxu0 0.0
    %6030 = vmatprep.subr.mxu0 0.0
    %6031 = vmatpush1.msra.mxu0 0.0
    %6032 = vmatprep.subr.mxu0 0.0
    %6033 = vmatpush1.msra.mxu0 0.0
    %6034 = vmatprep.subr.mxu0 0.0
    %6035 = vmatpush1.msra.mxu0 0.0
    %6036 = vmatprep.subr.mxu0 0.0
    %6037 = vmatpush1.msra.mxu0 0.0
    %6038 = vmatprep.subr.mxu0 0.0
    %6039 = vmatpush1.msra.mxu0 0.0
    %6040 = vmatprep.subr.mxu0 0.0
    %6041 = vmatpush1.msra.mxu0 0.0
    %6042 = vmatprep.subr.mxu0 0.0
    %6043 = vmatpush1.msra.mxu0 0.0
    %6044 = vmatprep.subr.mxu0 0.0
    %6045 = vmatpush1.msra.mxu0 0.0
    %6046 = vmatprep.mubr.f32.mxu0 0.0
    %6047 = vmatmul.mubr.f32.gmra.mrb[0].mxu0 %v5887
    %v6048 = vpop.f32.mrb[0].mxu0
    %v6049 = vadd.f32 %v5979, %v6048
    %v6050 = vpop.f32.mrb[0].mxu0
    %v6051 = vadd.f32 %v5980, %v6050
    %6052 = vdwg.mxu0
    %6053 = vmatprep.subr.mxu0 0.0
    %6054 = vmatpush1.msra.mxu0 %v220
    %6055 = vmatprep.subr.mxu0 0.0
    %6056 = vmatpush1.msra.mxu0 %v223
    %6057 = vmatprep.subr.mxu0 0.0
    %6058 = vmatpush1.msra.mxu0 0.0
    %6059 = vmatprep.subr.mxu0 0.0
    %6060 = vmatpush1.msra.mxu0 0.0
    %6061 = vmatprep.subr.mxu0 0.0
    %6062 = vmatpush1.msra.mxu0 0.0
    %6063 = vmatprep.subr.mxu0 0.0
    %6064 = vmatpush1.msra.mxu0 0.0
    %6065 = vmatprep.subr.mxu0 0.0
    %6066 = vmatpush1.msra.mxu0 0.0
    %6067 = vmatprep.subr.mxu0 0.0
    %6068 = vmatpush1.msra.mxu0 0.0
    %6069 = vmatprep.subr.mxu0 0.0
    %6070 = vmatpush1.msra.mxu0 0.0
    %6071 = vmatprep.subr.mxu0 0.0
    %6072 = vmatpush1.msra.mxu0 0.0
    %6073 = vmatprep.subr.mxu0 0.0
    %6074 = vmatpush1.msra.mxu0 0.0
    %6075 = vmatprep.subr.mxu0 0.0
    %6076 = vmatpush1.msra.mxu0 0.0
    %6077 = vmatprep.subr.mxu0 0.0
    %6078 = vmatpush1.msra.mxu0 0.0
    %6079 = vmatprep.subr.mxu0 0.0
    %6080 = vmatpush1.msra.mxu0 0.0
    %6081 = vmatprep.subr.mxu0 0.0
    %6082 = vmatpush1.msra.mxu0 0.0
    %6083 = vmatprep.subr.mxu0 0.0
    %6084 = vmatpush1.msra.mxu0 0.0
    %6085 = vmatprep.subr.mxu0 0.0
    %6086 = vmatpush1.msra.mxu0 0.0
    %6087 = vmatprep.subr.mxu0 0.0
    %6088 = vmatpush1.msra.mxu0 0.0
    %6089 = vmatprep.subr.mxu0 0.0
    %6090 = vmatpush1.msra.mxu0 0.0
    %6091 = vmatprep.subr.mxu0 0.0
    %6092 = vmatpush1.msra.mxu0 0.0
    %6093 = vmatprep.subr.mxu0 0.0
    %6094 = vmatpush1.msra.mxu0 0.0
    %6095 = vmatprep.subr.mxu0 0.0
    %6096 = vmatpush1.msra.mxu0 0.0
    %6097 = vmatprep.subr.mxu0 0.0
    %6098 = vmatpush1.msra.mxu0 0.0
    %6099 = vmatprep.subr.mxu0 0.0
    %6100 = vmatpush1.msra.mxu0 0.0
    %6101 = vmatprep.subr.mxu0 0.0
    %6102 = vmatpush1.msra.mxu0 0.0
    %6103 = vmatprep.subr.mxu0 0.0
    %6104 = vmatpush1.msra.mxu0 0.0
    %6105 = vmatprep.subr.mxu0 0.0
    %6106 = vmatpush1.msra.mxu0 0.0
    %6107 = vmatprep.subr.mxu0 0.0
    %6108 = vmatpush1.msra.mxu0 0.0
    %6109 = vmatprep.subr.mxu0 0.0
    %6110 = vmatpush1.msra.mxu0 0.0
    %6111 = vmatprep.subr.mxu0 0.0
    %6112 = vmatpush1.msra.mxu0 0.0
    %6113 = vmatprep.subr.mxu0 0.0
    %6114 = vmatpush1.msra.mxu0 0.0
    %6115 = vmatprep.subr.mxu0 0.0
    %6116 = vmatpush1.msra.mxu0 0.0
    %6117 = vmatprep.mubr.f32.mxu0 0.0
    %6118 = vmatmul.mubr.f32.gmra.mrb[0].mxu0 %v5887
    %v6119 = vpop.f32.mrb[0].mxu0
    %v6120 = vadd.f32 %v5981, %v6119
    %v6121 = vpop.f32.mrb[0].mxu0
    %6122 = vdwg.mxu0
    %v6123 = vadd.f32 %v6049, %v2213
    %v6124 = vadd.f32 %v6051, %v2217
    %v6125 = vadd.f32 %v6120, %v2221
    %6126 = vmatprep.subr.mxu0 %v226
    %6127 = vmatpush1.msra.mxu0 %v225
    %6128 = vmatprep.subr.mxu0 %v229
    %6129 = vmatpush1.msra.mxu0 %v228
    %6130 = vmatprep.subr.mxu0 %v232
    %6131 = vmatpush1.msra.mxu0 %v231
    %6132 = vmatprep.subr.mxu0 %v235
    %6133 = vmatpush1.msra.mxu0 %v234
    %6134 = vmatprep.subr.mxu0 %v238
    %6135 = vmatpush1.msra.mxu0 %v237
    %6136 = vmatprep.subr.mxu0 %v241
    %6137 = vmatpush1.msra.mxu0 %v240
    %6138 = vmatprep.subr.mxu0 %v244
    %6139 = vmatpush1.msra.mxu0 %v243
    %6140 = vmatprep.subr.mxu0 %v247
    %6141 = vmatpush1.msra.mxu0 %v246
    %6142 = vmatprep.subr.mxu0 %v250
    %6143 = vmatpush1.msra.mxu0 %v249
    %6144 = vmatprep.subr.mxu0 %v253
    %6145 = vmatpush1.msra.mxu0 %v252
    %6146 = vmatprep.subr.mxu0 %v256
    %6147 = vmatpush1.msra.mxu0 %v255
    %6148 = vmatprep.subr.mxu0 %v259
    %6149 = vmatpush1.msra.mxu0 %v258
    %6150 = vmatprep.subr.mxu0 %v262
    %6151 = vmatpush1.msra.mxu0 %v261
    %6152 = vmatprep.subr.mxu0 %v265
    %6153 = vmatpush1.msra.mxu0 %v264
    %6154 = vmatprep.subr.mxu0 %v268
    %6155 = vmatpush1.msra.mxu0 %v267
    %6156 = vmatprep.subr.mxu0 %v271
    %6157 = vmatpush1.msra.mxu0 %v270
    %6158 = vmatprep.subr.mxu0 0.0
    %6159 = vmatpush1.msra.mxu0 0.0
    %6160 = vmatprep.subr.mxu0 0.0
    %6161 = vmatpush1.msra.mxu0 0.0
    %6162 = vmatprep.subr.mxu0 0.0
    %6163 = vmatpush1.msra.mxu0 0.0
    %6164 = vmatprep.subr.mxu0 0.0
    %6165 = vmatpush1.msra.mxu0 0.0
    %6166 = vmatprep.subr.mxu0 0.0
    %6167 = vmatpush1.msra.mxu0 0.0
    %6168 = vmatprep.subr.mxu0 0.0
    %6169 = vmatpush1.msra.mxu0 0.0
    %6170 = vmatprep.subr.mxu0 0.0
    %6171 = vmatpush1.msra.mxu0 0.0
    %6172 = vmatprep.subr.mxu0 0.0
    %6173 = vmatpush1.msra.mxu0 0.0
    %6174 = vmatprep.subr.mxu0 0.0
    %6175 = vmatpush1.msra.mxu0 0.0
    %6176 = vmatprep.subr.mxu0 0.0
    %6177 = vmatpush1.msra.mxu0 0.0
    %6178 = vmatprep.subr.mxu0 0.0
    %6179 = vmatpush1.msra.mxu0 0.0
    %6180 = vmatprep.subr.mxu0 0.0
    %6181 = vmatpush1.msra.mxu0 0.0
    %6182 = vmatprep.subr.mxu0 0.0
    %6183 = vmatpush1.msra.mxu0 0.0
    %6184 = vmatprep.subr.mxu0 0.0
    %6185 = vmatpush1.msra.mxu0 0.0
    %6186 = vmatprep.subr.mxu0 0.0
    %6187 = vmatpush1.msra.mxu0 0.0
    %6188 = vmatprep.subr.mxu0 0.0
    %6189 = vmatpush1.msra.mxu0 0.0
    %6190 = vmatprep.mubr.f32.mxu0 0.0
    %6191 = vmatmul.mubr.f32.gmra.mrb[0].mxu0 %v5644
    %v6192 = vpop.f32.mrb[0].mxu0
    %v6193 = vadd.f32 %v2232, %v6192
    %v6194 = vpop.f32.mrb[0].mxu0
    %v6195 = vadd.f32 %v2236, %v6194
    %6196 = vdwg.mxu0
    %6197 = vmatprep.subr.mxu0 0.0
    %6198 = vmatpush1.msra.mxu0 %v227
    %6199 = vmatprep.subr.mxu0 0.0
    %6200 = vmatpush1.msra.mxu0 %v230
    %6201 = vmatprep.subr.mxu0 0.0
    %6202 = vmatpush1.msra.mxu0 %v233
    %6203 = vmatprep.subr.mxu0 0.0
    %6204 = vmatpush1.msra.mxu0 %v236
    %6205 = vmatprep.subr.mxu0 0.0
    %6206 = vmatpush1.msra.mxu0 %v239
    %6207 = vmatprep.subr.mxu0 0.0
    %6208 = vmatpush1.msra.mxu0 %v242
    %6209 = vmatprep.subr.mxu0 0.0
    %6210 = vmatpush1.msra.mxu0 %v245
    %6211 = vmatprep.subr.mxu0 0.0
    %6212 = vmatpush1.msra.mxu0 %v248
    %6213 = vmatprep.subr.mxu0 0.0
    %6214 = vmatpush1.msra.mxu0 %v251
    %6215 = vmatprep.subr.mxu0 0.0
    %6216 = vmatpush1.msra.mxu0 %v254
    %6217 = vmatprep.subr.mxu0 0.0
    %6218 = vmatpush1.msra.mxu0 %v257
    %6219 = vmatprep.subr.mxu0 0.0
    %6220 = vmatpush1.msra.mxu0 %v260
    %6221 = vmatprep.subr.mxu0 0.0
    %6222 = vmatpush1.msra.mxu0 %v263
    %6223 = vmatprep.subr.mxu0 0.0
    %6224 = vmatpush1.msra.mxu0 %v266
    %6225 = vmatprep.subr.mxu0 0.0
    %6226 = vmatpush1.msra.mxu0 %v269
    %6227 = vmatprep.subr.mxu0 0.0
    %6228 = vmatpush1.msra.mxu0 %v272
    %6229 = vmatprep.subr.mxu0 0.0
    %6230 = vmatpush1.msra.mxu0 0.0
    %6231 = vmatprep.subr.mxu0 0.0
    %6232 = vmatpush1.msra.mxu0 0.0
    %6233 = vmatprep.subr.mxu0 0.0
    %6234 = vmatpush1.msra.mxu0 0.0
    %6235 = vmatprep.subr.mxu0 0.0
    %6236 = vmatpush1.msra.mxu0 0.0
    %6237 = vmatprep.subr.mxu0 0.0
    %6238 = vmatpush1.msra.mxu0 0.0
    %6239 = vmatprep.subr.mxu0 0.0
    %6240 = vmatpush1.msra.mxu0 0.0
    %6241 = vmatprep.subr.mxu0 0.0
    %6242 = vmatpush1.msra.mxu0 0.0
    %6243 = vmatprep.subr.mxu0 0.0
    %6244 = vmatpush1.msra.mxu0 0.0
    %6245 = vmatprep.subr.mxu0 0.0
    %6246 = vmatpush1.msra.mxu0 0.0
    %6247 = vmatprep.subr.mxu0 0.0
    %6248 = vmatpush1.msra.mxu0 0.0
    %6249 = vmatprep.subr.mxu0 0.0
    %6250 = vmatpush1.msra.mxu0 0.0
    %6251 = vmatprep.subr.mxu0 0.0
    %6252 = vmatpush1.msra.mxu0 0.0
    %6253 = vmatprep.subr.mxu0 0.0
    %6254 = vmatpush1.msra.mxu0 0.0
    %6255 = vmatprep.subr.mxu0 0.0
    %6256 = vmatpush1.msra.mxu0 0.0
    %6257 = vmatprep.subr.mxu0 0.0
    %6258 = vmatpush1.msra.mxu0 0.0
    %6259 = vmatprep.subr.mxu0 0.0
    %6260 = vmatpush1.msra.mxu0 0.0
    %6261 = vmatprep.mubr.f32.mxu0 0.0
    %6262 = vmatmul.mubr.f32.gmra.mrb[0].mxu0 %v5644
    %v6263 = vpop.f32.mrb[0].mxu0
    %v6264 = vadd.f32 %v2240, %v6263
    %v6265 = vpop.f32.mrb[0].mxu0
    %6266 = vdwg.mxu0
    %v6267 = vadd.f32 %v6123, %v6193
    %v6268 = vxor.u32 %v6267, 2147483648
    %v6269 = vmul.f32 %v6268, 1.442695
    %v6270 = vpow.pop %v6269
    %v6271 = vadd.f32 %v6270, 1.0
    %v6272 = vrcp.pop %v6271
    %v6273 = vmul.f32 1.0, %v6272
    %v6274 = vadd.f32 %v6124, %v6195
    %v6275 = vxor.u32 %v6274, 2147483648
    %v6276 = vmul.f32 %v6275, 1.442695
    %v6277 = vpow.pop %v6276
    %v6278 = vadd.f32 %v6277, 1.0
    %v6279 = vrcp.pop %v6278
    %v6280 = vmul.f32 1.0, %v6279
    %v6281 = vmul.f32 %v6273, %v6264
    %v6282 = vadd.f32 %v6125, %v6281
    %v6283 = vtanh.pop %v6282
    %v6284 = vsub.f32 1.0, %v6280
    %v6285 = vmul.f32 %v6284, %v6283
    %v6286 = vmul.f32 %v6280, %v5644
    %v6287 = vadd.f32 %v6285, %v6286
    %6288 = vmatprep.subr.mxu0 0.0
    %6289 = vmatpush1.msra.mxu0 %v275
    %6290 = vmatprep.subr.mxu0 0.0
    %6291 = vmatpush1.msra.mxu0 %v276
    %6292 = vmatprep.subr.mxu0 0.0
    %6293 = vmatpush1.msra.mxu0 %v277
    %6294 = vmatprep.subr.mxu0 0.0
    %6295 = vmatpush1.msra.mxu0 %v278
    %6296 = vmatprep.subr.mxu0 0.0
    %6297 = vmatpush1.msra.mxu0 %v279
    %6298 = vmatprep.subr.mxu0 0.0
    %6299 = vmatpush1.msra.mxu0 %v280
    %6300 = vmatprep.subr.mxu0 0.0
    %6301 = vmatpush1.msra.mxu0 %v281
    %6302 = vmatprep.subr.mxu0 0.0
    %6303 = vmatpush1.msra.mxu0 %v282
    %6304 = vmatprep.subr.mxu0 0.0
    %6305 = vmatpush1.msra.mxu0 %v283
    %6306 = vmatprep.subr.mxu0 0.0
    %6307 = vmatpush1.msra.mxu0 %v284
    %6308 = vmatprep.subr.mxu0 0.0
    %6309 = vmatpush1.msra.mxu0 %v285
    %6310 = vmatprep.subr.mxu0 0.0
    %6311 = vmatpush1.msra.mxu0 %v286
    %6312 = vmatprep.subr.mxu0 0.0
    %6313 = vmatpush1.msra.mxu0 %v287
    %6314 = vmatprep.subr.mxu0 0.0
    %6315 = vmatpush1.msra.mxu0 %v288
    %6316 = vmatprep.subr.mxu0 0.0
    %6317 = vmatpush1.msra.mxu0 %v289
    %6318 = vmatprep.subr.mxu0 0.0
    %6319 = vmatpush1.msra.mxu0 %v290
    %6320 = vmatprep.subr.mxu0 0.0
    %6321 = vmatpush1.msra.mxu0 0.0
    %6322 = vmatprep.subr.mxu0 0.0
    %6323 = vmatpush1.msra.mxu0 0.0
    %6324 = vmatprep.subr.mxu0 0.0
    %6325 = vmatpush1.msra.mxu0 0.0
    %6326 = vmatprep.subr.mxu0 0.0
    %6327 = vmatpush1.msra.mxu0 0.0
    %6328 = vmatprep.subr.mxu0 0.0
    %6329 = vmatpush1.msra.mxu0 0.0
    %6330 = vmatprep.subr.mxu0 0.0
    %6331 = vmatpush1.msra.mxu0 0.0
    %6332 = vmatprep.subr.mxu0 0.0
    %6333 = vmatpush1.msra.mxu0 0.0
    %6334 = vmatprep.subr.mxu0 0.0
    %6335 = vmatpush1.msra.mxu0 0.0
    %6336 = vmatprep.subr.mxu0 0.0
    %6337 = vmatpush1.msra.mxu0 0.0
    %6338 = vmatprep.subr.mxu0 0.0
    %6339 = vmatpush1.msra.mxu0 0.0
    %6340 = vmatprep.subr.mxu0 0.0
    %6341 = vmatpush1.msra.mxu0 0.0
    %6342 = vmatprep.subr.mxu0 0.0
    %6343 = vmatpush1.msra.mxu0 0.0
    %6344 = vmatprep.subr.mxu0 0.0
    %6345 = vmatpush1.msra.mxu0 0.0
    %6346 = vmatprep.subr.mxu0 0.0
    %6347 = vmatpush1.msra.mxu0 0.0
    %6348 = vmatprep.subr.mxu0 0.0
    %6349 = vmatpush1.msra.mxu0 0.0
    %6350 = vmatprep.subr.mxu0 0.0
    %6351 = vmatpush1.msra.mxu0 0.0
    %6352 = vmatprep.mubr.f32.mxu0 0.0
    %6353 = vmatmul.mubr.f32.gmra.mrb[0].mxu0 %v6287
    %v6354 = vpop.f32.mrb[0].mxu0
    %v6355 = vadd.f32 %v2410, %v6354
    %v6356 = vpop.f32.mrb[0].mxu0
    %6357 = vdwg.mxu0
    %6358 = vmax.xlane.f32.xlu0 %v6355
    %v6359 = vpop.xlane.xlu0 %6358
    %vm6360 = vcmp.eq.f32.partialorder %v6355, %v6359
    %v6361 = vsel %vm6360, %v315, 128
    %v6362 = vand.u32 %v6361, 65535
    %v6363 = vshra.s32 %v6361, 16
    %v6364 = vcvt.s32.f32 %v6362
    %v6365 = vcvt.s32.f32 %v6363
    %6366 = vmin.xlane.f32.xlu0 %v6365
    %v6367 = vpop.xlane.xlu0 %6366
    %vm6368 = vcmp.eq.f32.partialorder %v6365, %v6367
    %v6369 = vsel %vm6368, %v6364, inf
    %6370 = vmin.xlane.f32.xlu0 %v6369
    %v6371 = vpop.xlane.xlu0 %6370
    %v6372 = vcvt.f32.s32 %v6371
    %v6373 = vcvt.f32.s32 %v6367
    %v6374 = vshll.u32 %v6373, 16
    %v6375 = vadd.s32 %v6374, %v6372
    %vm6376 = vcmp.eq.s32.totalorder %v315, %v6375
    %v6377 = vsel %vm6376, 1, 0
    %v6378 = vcvt.s32.f32 %v6377
    %v6379 = vsub.f32 %v6355, %v6359
    %v6380 = vmul.f32 %v6379, 1.442695
    %v6381 = vpow.pop %v6380
    %6382 = vadd.xlane.f32.xlu0 %v6381
    %v6383 = vpop.xlane.xlu0 %6382
    %v6384 = vlog2.pop %v6383
    %v6385 = vmul.f32 %v6384, 0.6931472
    %v6386 = vsub.f32 %v6379, %v6385
    %s6387 = scalar_lea.vmem [#allocation14], 56
    %6388 = vst [vmem:[%s6387] sm:$0xff] %v6386
    %6389 = vmatprep.subr.mxu0 0.0
    %6390 = vmatpush1.msra.mxu0 %v202
    %6391 = vmatprep.subr.mxu0 0.0
    %6392 = vmatpush1.msra.mxu0 %v203
    %6393 = vmatprep.subr.mxu0 0.0
    %6394 = vmatpush1.msra.mxu0 %v204
    %6395 = vmatprep.subr.mxu0 0.0
    %6396 = vmatpush1.msra.mxu0 %v205
    %6397 = vmatprep.subr.mxu0 0.0
    %6398 = vmatpush1.msra.mxu0 %v206
    %6399 = vmatprep.subr.mxu0 0.0
    %6400 = vmatpush1.msra.mxu0 %v207
    %6401 = vmatprep.subr.mxu0 0.0
    %6402 = vmatpush1.msra.mxu0 %v208
    %6403 = vmatprep.subr.mxu0 0.0
    %6404 = vmatpush1.msra.mxu0 %v209
    %6405 = vmatprep.subr.mxu0 0.0
    %6406 = vmatpush1.msra.mxu0 %v210
    %6407 = vmatprep.subr.mxu0 0.0
    %6408 = vmatpush1.msra.mxu0 %v211
    %6409 = vmatprep.subr.mxu0 0.0
    %6410 = vmatpush1.msra.mxu0 %v212
    %6411 = vmatprep.subr.mxu0 0.0
    %6412 = vmatpush1.msra.mxu0 %v213
    %6413 = vmatprep.subr.mxu0 0.0
    %6414 = vmatpush1.msra.mxu0 %v214
    %6415 = vmatprep.subr.mxu0 0.0
    %6416 = vmatpush1.msra.mxu0 %v215
    %6417 = vmatprep.subr.mxu0 0.0
    %6418 = vmatpush1.msra.mxu0 %v216
    %6419 = vmatprep.subr.mxu0 0.0
    %6420 = vmatpush1.msra.mxu0 %v217
    %6421 = vmatprep.subr.mxu0 0.0
    %6422 = vmatpush1.msra.mxu0 0.0
    %6423 = vmatprep.subr.mxu0 0.0
    %6424 = vmatpush1.msra.mxu0 0.0
    %6425 = vmatprep.subr.mxu0 0.0
    %6426 = vmatpush1.msra.mxu0 0.0
    %6427 = vmatprep.subr.mxu0 0.0
    %6428 = vmatpush1.msra.mxu0 0.0
    %6429 = vmatprep.subr.mxu0 0.0
    %6430 = vmatpush1.msra.mxu0 0.0
    %6431 = vmatprep.subr.mxu0 0.0
    %6432 = vmatpush1.msra.mxu0 0.0
    %6433 = vmatprep.subr.mxu0 0.0
    %6434 = vmatpush1.msra.mxu0 0.0
    %6435 = vmatprep.subr.mxu0 0.0
    %6436 = vmatpush1.msra.mxu0 0.0
    %6437 = vmatprep.subr.mxu0 0.0
    %6438 = vmatpush1.msra.mxu0 0.0
    %6439 = vmatprep.subr.mxu0 0.0
    %6440 = vmatpush1.msra.mxu0 0.0
    %6441 = vmatprep.subr.mxu0 0.0
    %6442 = vmatpush1.msra.mxu0 0.0
    %6443 = vmatprep.subr.mxu0 0.0
    %6444 = vmatpush1.msra.mxu0 0.0
    %6445 = vmatprep.subr.mxu0 0.0
    %6446 = vmatpush1.msra.mxu0 0.0
    %6447 = vmatprep.subr.mxu0 0.0
    %6448 = vmatpush1.msra.mxu0 0.0
    %6449 = vmatprep.subr.mxu0 0.0
    %6450 = vmatpush1.msra.mxu0 0.0
    %6451 = vmatprep.subr.mxu0 0.0
    %6452 = vmatpush1.msra.mxu0 0.0
    %6453 = vmatprep.mubr.f32.mxu0 0.0
    %6454 = vmatmul.mubr.f32.gmra.mrb[0].mxu0 %v6378
    %v6455 = vpop.f32.mrb[0].mxu0
    %v6456 = vadd.f32 0.0, %v6455
    %v6457 = vpop.f32.mrb[0].mxu0
    %6458 = vdwg.mxu0
    %6459 = vmatprep.subr.mxu0 0.0
    %6460 = vmatpush1.msra.mxu0 %v294
    %6461 = vmatprep.subr.mxu0 0.0
    %6462 = vmatpush1.msra.mxu0 %v295
    %6463 = vmatprep.subr.mxu0 0.0
    %6464 = vmatpush1.msra.mxu0 %v296
    %6465 = vmatprep.subr.mxu0 0.0
    %6466 = vmatpush1.msra.mxu0 %v297
    %6467 = vmatprep.subr.mxu0 0.0
    %6468 = vmatpush1.msra.mxu0 %v298
    %6469 = vmatprep.subr.mxu0 0.0
    %6470 = vmatpush1.msra.mxu0 %v299
    %6471 = vmatprep.subr.mxu0 0.0
    %6472 = vmatpush1.msra.mxu0 %v300
    %6473 = vmatprep.subr.mxu0 0.0
    %6474 = vmatpush1.msra.mxu0 %v301
    %6475 = vmatprep.subr.mxu0 0.0
    %6476 = vmatpush1.msra.mxu0 %v302
    %6477 = vmatprep.subr.mxu0 0.0
    %6478 = vmatpush1.msra.mxu0 %v303
    %6479 = vmatprep.subr.mxu0 0.0
    %6480 = vmatpush1.msra.mxu0 %v304
    %6481 = vmatprep.subr.mxu0 0.0
    %6482 = vmatpush1.msra.mxu0 %v305
    %6483 = vmatprep.subr.mxu0 0.0
    %6484 = vmatpush1.msra.mxu0 %v306
    %6485 = vmatprep.subr.mxu0 0.0
    %6486 = vmatpush1.msra.mxu0 %v307
    %6487 = vmatprep.subr.mxu0 0.0
    %6488 = vmatpush1.msra.mxu0 %v308
    %6489 = vmatprep.subr.mxu0 0.0
    %6490 = vmatpush1.msra.mxu0 %v309
    %6491 = vmatprep.subr.mxu0 0.0
    %6492 = vmatpush1.msra.mxu0 0.0
    %6493 = vmatprep.subr.mxu0 0.0
    %6494 = vmatpush1.msra.mxu0 0.0
    %6495 = vmatprep.subr.mxu0 0.0
    %6496 = vmatpush1.msra.mxu0 0.0
    %6497 = vmatprep.subr.mxu0 0.0
    %6498 = vmatpush1.msra.mxu0 0.0
    %6499 = vmatprep.subr.mxu0 0.0
    %6500 = vmatpush1.msra.mxu0 0.0
    %6501 = vmatprep.subr.mxu0 0.0
    %6502 = vmatpush1.msra.mxu0 0.0
    %6503 = vmatprep.subr.mxu0 0.0
    %6504 = vmatpush1.msra.mxu0 0.0
    %6505 = vmatprep.subr.mxu0 0.0
    %6506 = vmatpush1.msra.mxu0 0.0
    %6507 = vmatprep.subr.mxu0 0.0
    %6508 = vmatpush1.msra.mxu0 0.0
    %6509 = vmatprep.subr.mxu0 0.0
    %6510 = vmatpush1.msra.mxu0 0.0
    %6511 = vmatprep.subr.mxu0 0.0
    %6512 = vmatpush1.msra.mxu0 0.0
    %6513 = vmatprep.subr.mxu0 0.0
    %6514 = vmatpush1.msra.mxu0 0.0
    %6515 = vmatprep.subr.mxu0 0.0
    %6516 = vmatpush1.msra.mxu0 0.0
    %6517 = vmatprep.subr.mxu0 0.0
    %6518 = vmatpush1.msra.mxu0 0.0
    %6519 = vmatprep.subr.mxu0 0.0
    %6520 = vmatpush1.msra.mxu0 0.0
    %6521 = vmatprep.subr.mxu0 0.0
    %6522 = vmatpush1.msra.mxu0 0.0
    %6523 = vmatprep.mubr.f32.mxu0 0.0
    %6524 = vmatmul.mubr.f32.gmra.mrb[0].mxu0 %v6287
    %v6525 = vpop.f32.mrb[0].mxu0
    %v6526 = vadd.f32 0.0, %v6525
    %v6527 = vpop.f32.mrb[0].mxu0
    %6528 = vdwg.mxu0
    %v6530 = vsel %vm2064, %v6456, 0
    %6532 = vmatprep.subr.mxu0 0.0
    %6533 = vmatpush1.msra.mxu0 %v292
    %6534 = vmatprep.subr.mxu0 0.0
    %6535 = vmatpush1.msra.mxu0 %v293
    %6536 = vmatprep.subr.mxu0 0.0
    %6537 = vmatpush1.msra.mxu0 0.0
    %6538 = vmatprep.subr.mxu0 0.0
    %6539 = vmatpush1.msra.mxu0 0.0
    %6540 = vmatprep.subr.mxu0 0.0
    %6541 = vmatpush1.msra.mxu0 0.0
    %6542 = vmatprep.subr.mxu0 0.0
    %6543 = vmatpush1.msra.mxu0 0.0
    %6544 = vmatprep.subr.mxu0 0.0
    %6545 = vmatpush1.msra.mxu0 0.0
    %6546 = vmatprep.subr.mxu0 0.0
    %6547 = vmatpush1.msra.mxu0 0.0
    %6548 = vmatprep.subr.mxu0 0.0
    %6549 = vmatpush1.msra.mxu0 0.0
    %6550 = vmatprep.subr.mxu0 0.0
    %6551 = vmatpush1.msra.mxu0 0.0
    %6552 = vmatprep.subr.mxu0 0.0
    %6553 = vmatpush1.msra.mxu0 0.0
    %6554 = vmatprep.subr.mxu0 0.0
    %6555 = vmatpush1.msra.mxu0 0.0
    %6556 = vmatprep.subr.mxu0 0.0
    %6557 = vmatpush1.msra.mxu0 0.0
    %6558 = vmatprep.subr.mxu0 0.0
    %6559 = vmatpush1.msra.mxu0 0.0
    %6560 = vmatprep.subr.mxu0 0.0
    %6561 = vmatpush1.msra.mxu0 0.0
    %6562 = vmatprep.subr.mxu0 0.0
    %6563 = vmatpush1.msra.mxu0 0.0
    %6564 = vmatprep.subr.mxu0 0.0
    %6565 = vmatpush1.msra.mxu0 0.0
    %6566 = vmatprep.subr.mxu0 0.0
    %6567 = vmatpush1.msra.mxu0 0.0
    %6568 = vmatprep.subr.mxu0 0.0
    %6569 = vmatpush1.msra.mxu0 0.0
    %6570 = vmatprep.subr.mxu0 0.0
    %6571 = vmatpush1.msra.mxu0 0.0
    %6572 = vmatprep.subr.mxu0 0.0
    %6573 = vmatpush1.msra.mxu0 0.0
    %6574 = vmatprep.subr.mxu0 0.0
    %6575 = vmatpush1.msra.mxu0 0.0
    %6576 = vmatprep.subr.mxu0 0.0
    %6577 = vmatpush1.msra.mxu0 0.0
    %6578 = vmatprep.subr.mxu0 0.0
    %6579 = vmatpush1.msra.mxu0 0.0
    %6580 = vmatprep.subr.mxu0 0.0
    %6581 = vmatpush1.msra.mxu0 0.0
    %6582 = vmatprep.subr.mxu0 0.0
    %6583 = vmatpush1.msra.mxu0 0.0
    %6584 = vmatprep.subr.mxu0 0.0
    %6585 = vmatpush1.msra.mxu0 0.0
    %6586 = vmatprep.subr.mxu0 0.0
    %6587 = vmatpush1.msra.mxu0 0.0
    %6588 = vmatprep.subr.mxu0 0.0
    %6589 = vmatpush1.msra.mxu0 0.0
    %6590 = vmatprep.subr.mxu0 0.0
    %6591 = vmatpush1.msra.mxu0 0.0
    %6592 = vmatprep.subr.mxu0 0.0
    %6593 = vmatpush1.msra.mxu0 0.0
    %6594 = vmatprep.subr.mxu0 0.0
    %6595 = vmatpush1.msra.mxu0 0.0
    %6596 = vmatprep.mubr.f32.mxu0 0.0
    %6597 = vmatmul.mubr.f32.gmra.mrb[0].mxu0 %v6530
    %v6598 = vpop.f32.mrb[0].mxu0
    %v6599 = vadd.f32 %v6526, %v6598
    %v6600 = vpop.f32.mrb[0].mxu0
    %6601 = vdwg.mxu0
    %v6602 = vadd.f32 %v6599, %v2730
    %v6603 = vmax.f32 %v6602, 0.0
    %v6604 = vmul.f32 %v6603, %v2738
    %6605 = vadd.xlane.f32.xlu0 %v6604
    %v6606 = vpop.xlane.xlu0 %6605
    %v6607 = vadd.f32 %v6606, %v2747
    %v6608 = vxor.u32 %v6607, 2147483648
    %v6609 = vmul.f32 %v6608, 1.442695
    %v6610 = vpow.pop %v6609
    %v6611 = vadd.f32 %v6610, 1.0
    %v6612 = vrcp.pop %v6611
    %v6613 = vmul.f32 1.0, %v6612
    %vm6614 = vcmp.eq.s32.totalorder %v315, 7
    %6616 = vset.pattern.permute.xlu0 0
    %6617 = vperm.xlu0 %6616, %v6613
    %v6618 = vpop.permute.xlu0 %6617
    %v6620 = vsel %vm6614, %v6618, 0.0
    %v6621 = vadd.f32 %v5978, %v6620
    %vm6622 = vcmask 64512
    %6623 = vst.msk [vmem:[#allocation15] sm:$0xff] %vm6622, %v6621
    // Predicated region
    $region110: #{tpu_custom_call.1} parent=1 // pred_check
      _
    $region111: #{tpu_custom_call.1} parent=1 // pred_check_branch
      %6625 = sbr.rel (0) target = $region113
    $region112: #{tpu_custom_call.1} parent=1 // pred_region
      %s6627 = ssub.s32 1024, 1024
      %6628 = vsyncadd [#allocation5], %s6627
      %s6629 = sshll.u32 [#allocation14], 4
      %s6630 = int_to_ptr.vmem [resolvable:$true] %s6629
      %6635 = dma.vmem_to_hbm [thread:$0]  %s6630, 1024, %s21, [#allocation5], 128, 128, 8
    $region113: #{tpu_custom_call.1} parent=1 // pred_fallthru
      _
    // Predicated region
    $region114: #{tpu_custom_call.1} parent=1 // pred_check
      _
    $region115: #{tpu_custom_call.1} parent=1 // pred_check_branch
      %6637 = sbr.rel (0) target = $region117
    $region116: #{tpu_custom_call.1} parent=1 // pred_region
      %s6639 = ssub.s32 128, 128
      %6640 = vsyncadd [#allocation16], %s6639
      %s6642 = sshll.u32 [#allocation15], 4
      %s6643 = int_to_ptr.vmem [resolvable:$true] %s6642
      %6645 = dma.vmem_to_hbm [thread:$0]  %s6643, 128, %s22, [#allocation16]
    $region117: #{tpu_custom_call.1} parent=1 // pred_fallthru
      _
    // Predicated region
    $region118: #{tpu_custom_call.1} parent=1 // pred_check
      _
    $region119: #{tpu_custom_call.1} parent=1 // pred_check_branch
      %6647 = sbr.rel (0) target = $region121
    $region120: #{tpu_custom_call.1} parent=1 // pred_region
      %6648 = dma.done [#allocation5], 1024
    $region121: #{tpu_custom_call.1} parent=1 // pred_fallthru
      _
    // Predicated region
    $region122: #{tpu_custom_call.1} parent=1 // pred_check
      _
    $region123: #{tpu_custom_call.1} parent=1 // pred_check_branch
      %6650 = sbr.rel (0) target = $region125
    $region124: #{tpu_custom_call.1} parent=1 // pred_region
      %6651 = dma.done [#allocation16], 128
    $region125: #{tpu_custom_call.1} parent=1 // pred_fallthru
      _
    %6652 = vsyncpa [#allocation4], 1
    %6653 = vsyncpa [#allocation7], 1
    %6654 = vsyncpa [#allocation10], 1
    %6655 = vsyncpa [#allocation13], 1
    %6656 = vsyncpa [#allocation5], 1
    %6657 = vsyncpa [#allocation16], 1

</llo_original>
